<compile_context>
chip_gen: v5e
topology: v5e:2x2
jax: 0.10.0
libtpu: 0.0.40
codegen_flags: <defaults>
</compile_context>

<pallas_src>
import math

import jax
import jax.numpy as jnp
from jax import lax
from jax.experimental import pallas as pl
from jax.experimental.pallas import tpu as pltpu

NUM_HEADS = 4
CHOICE_PAD = 128          # lane-padded width for the choice-logit output


# ----------------------------- shared math helpers -----------------------------
def _layernorm(x, g, b, eps=1e-5):
    mu = jnp.mean(x, axis=-1, keepdims=True)
    var = jnp.mean(jnp.square(x - mu), axis=-1, keepdims=True)
    return (x - mu) * lax.rsqrt(var + eps) * g + b


def _gelu(x):
    # TODO(synk): RoBERTa uses exact erf-GELU; tanh approximation used for robust TPU lowering.
    c = 0.7978845608028654
    return 0.5 * x * (1.0 + jnp.tanh(c * (x + 0.044715 * x * x * x)))


def _softmax(x):
    # exact softmax (host-side reference)
    m = jnp.max(x, axis=-1, keepdims=True)
    e = jnp.exp(x - m)
    return e / jnp.sum(e, axis=-1, keepdims=True)


def _softmax_approx(x):
    # kernel-side softmax: reciprocal on the (otherwise idle) EUP slot
    m = jnp.max(x, axis=-1, keepdims=True)
    e = jnp.exp(x - m)
    return e * pl.reciprocal(jnp.sum(e, axis=-1, keepdims=True), approx=True)


# --------------------------------- the kernel ----------------------------------
def _make_kernel(num_heads):
    nh = num_heads

    def kernel(emb_ref, mask_ref, onehot_ref,
               embln_g, embln_b,
               wqkv, bqkv, wo, bo,
               ln1_g, ln1_b,
               wf1, bf1, wf2, bf2,
               ln2_g, ln2_b,
               wd, bd, lmln_g, lmln_b,
               wdec_ref, bdec_ref,
               out_ref):
        f32, bf16 = jnp.float32, jnp.bfloat16
        Bt, S, H = emb_ref.shape
        M = Bt * S
        hd = H // nh
        scale = 1.0 / math.sqrt(hd)

        # ---- embedding layernorm, flattened to (M, H) so all dense matmuls see M=Bt*S rows ----
        x = _layernorm(emb_ref[...].reshape(M, H), embln_g[...], embln_b[...])

        # ---- fused QKV: one (M,H)x(H,3H) matmul (bf16 operands, f32 accumulation) ----
        qkv = (jnp.dot(x.astype(bf16), wqkv[...], preferred_element_type=f32)
               + bqkv[...]).astype(bf16)                               # (M, 3H)

        mask_bias = (1.0 - mask_ref[...])[:, None, :] * (-1e9)         # (Bt, 1, S) key mask

        # ---- attention: static per-head loop, batched over the Bt sequences of the block ----
        ctx_cols = []
        for h in range(nh):
            qh = qkv[:, h * hd:(h + 1) * hd].reshape(Bt, S, hd)
            kh = qkv[:, H + h * hd:H + (h + 1) * hd].reshape(Bt, S, hd)
            vh = qkv[:, 2 * H + h * hd:2 * H + (h + 1) * hd].reshape(Bt, S, hd)
            sc = jnp.einsum('bqd,bkd->bqk', qh, kh,
                            preferred_element_type=f32) * scale + mask_bias   # (Bt,S,S) f32
            p = _softmax_approx(sc)
            ch = jnp.einsum('bqk,bkd->bqd', p.astype(bf16), vh,
                            preferred_element_type=f32)                       # (Bt,S,hd) f32
            ctx_cols.append(ch.reshape(M, hd))
        ctx = jnp.concatenate(ctx_cols, axis=-1)                       # (M, H); head order == wo rows

        # ---- attention output projection: one (M,H)x(H,H) matmul (head-sum folded into K) ----
        attn = jnp.dot(ctx.astype(bf16), wo[...], preferred_element_type=f32) + bo[...]
        x = _layernorm(x + attn, ln1_g[...], ln1_b[...])

        # ---- feed-forward ----
        h1 = _gelu(jnp.dot(x.astype(bf16), wf1[...], preferred_element_type=f32) + bf1[...])
        h2 = jnp.dot(h1.astype(bf16), wf2[...], preferred_element_type=f32) + bf2[...]
        x = _layernorm(x + h2, ln2_g[...], ln2_b[...])

        # ---- answer-row selection: one-hot multiply + reduce over seq (no scratch, no OOB) ----
        x_ans = jnp.sum(x.reshape(Bt, S, H) * onehot_ref[...][:, :, None], axis=1)   # (Bt, H)

        # ---- RobertaLMHead on Bt rows, decoder restricted to the gathered choice columns ----
        t = _gelu(jnp.dot(x_ans.astype(bf16), wd[...], preferred_element_type=f32) + bd[...])
        t = _layernorm(t, lmln_g[...], lmln_b[...])
        cl = jnp.einsum('bqh,bhc->bqc', t.reshape(Bt, 1, H).astype(bf16), wdec_ref[...],
                        preferred_element_type=f32)[:, 0, :] + bdec_ref[...]          # (Bt, CP)
        out_ref[...] = cl

    return kernel


# --------------------------------- the wrapper ----------------------------------
def prompt_encoder_forward(params, input_ids, attention_mask, ans_pos, choice_label, labels,
                           batch_block=16):
    B, S = input_ids.shape
    H = params["wq"].shape[0]
    C = choice_label.shape[1]
    nh = NUM_HEADS
    CP = CHOICE_PAD
    Bt = batch_block
    f32, bf16 = jnp.float32, jnp.bfloat16

    assert B % Bt == 0, "batch must be divisible by the batch block"
    assert Bt % 8 == 0 or Bt == B, "batch block must satisfy the (8,128) sublane rule"

    # ----- plain-JAX glue: embedding gather, masks, masked_select ordering, column gather -----
    emb = (params["word_emb"][input_ids]
           + params["pos_emb"][jnp.arange(S)][None, :, :]).astype(f32)          # (B, S, H)
    mask2 = attention_mask.astype(f32)                                          # (B, S)
    # one-hot of the answer position == the module's scatter(1, ans_pos, 1) over seq
    onehot = (jnp.arange(S)[None, :] == ans_pos.reshape(B, 1)).astype(f32)      # (B, S)
    choice_sorted = jnp.sort(choice_label.astype(jnp.int32), axis=1)            # masked_select order
    choice_padded = jnp.concatenate(
        [choice_sorted, jnp.zeros((B, CP - C), jnp.int32)], axis=1)             # pad -> sliced off later
    # only the C (lane-padded to 128) decoder columns that are actually consumed
    wdec_cols = jnp.transpose(jnp.take(params["wdec"], choice_padded, axis=1),
                              (1, 0, 2)).astype(bf16)                           # (B, H, CP)
    bdec_cols = params["bdec"][0][choice_padded].astype(f32)                    # (B, CP)

    # fused QKV weight / bias
    wqkv = jnp.concatenate([params["wq"], params["wk"], params["wv"]], axis=1).astype(bf16)
    bqkv = jnp.concatenate([params["bq"], params["bk"], params["bv"]], axis=1).astype(f32)

    weights = [
        params["emb_ln_g"], params["emb_ln_b"],
        wqkv, bqkv,
        params["wo"].astype(bf16), params["bo"],
        params["ln1_g"], params["ln1_b"],
        params["wf1"].astype(bf16), params["bf1"],
        params["wf2"].astype(bf16), params["bf2"],
        params["ln2_g"], params["ln2_b"],
        params["wd"].astype(bf16), params["bd"],
        params["lm_ln_g"], params["lm_ln_b"],
    ]

    # Grid-invariant weight blocks: constant index_map, so Pallas does not re-DMA them per step.
    # TODO(synk): at production scale (H=768, F=3072) use pipeline_mode=pl.Buffered(1) on these
    # (or stage once via pl.ANY + make_async_copy) to fit v7x's 64 MiB VMEM.
    def _const_spec(a):
        nd = a.ndim
        return pl.BlockSpec(a.shape, lambda b, nd=nd: (0,) * nd)

    emb_spec = pl.BlockSpec((Bt, S, H), lambda b: (b, 0, 0))
    mask_spec = pl.BlockSpec((Bt, S), lambda b: (b, 0))
    onehot_spec = pl.BlockSpec((Bt, S), lambda b: (b, 0))
    wdec_spec = pl.BlockSpec((Bt, H, CP), lambda b: (b, 0, 0))
    bdec_spec = pl.BlockSpec((Bt, CP), lambda b: (b, 0))
    out_spec = pl.BlockSpec((Bt, CP), lambda b: (b, 0))

    choice_pad = pl.pallas_call(
        _make_kernel(nh),
        out_shape=jax.ShapeDtypeStruct((B, CP), f32),
        grid=(B // Bt,),
        in_specs=[emb_spec, mask_spec, onehot_spec]
                 + [_const_spec(w) for w in weights]
                 + [wdec_spec, bdec_spec],
        out_specs=out_spec,
        compiler_params=pltpu.CompilerParams(
            dimension_semantics=("parallel",),       # no cross-step state -> v7x shards the batch grid
            vmem_limit_bytes=48 * 1024 * 1024),      # > 32 MiB default, still within v7x's 64 MiB
    )(emb, mask2, onehot, *weights, wdec_cols, bdec_cols)

    choice_logits = choice_pad[:, :C]
    # BCE-with-logits + mean in the wrapper (trivial elementwise work; XLA fuses it for free)
    y = labels.astype(f32)
    bce = (jnp.maximum(choice_logits, 0.0) - choice_logits * y
           + jnp.log1p(jnp.exp(-jnp.abs(choice_logits))))
    return jnp.mean(bce), choice_logits


# ------------------------------ params & reference ------------------------------
def init_params(key, vocab, max_seq, hidden, ffn):
    ks = jax.random.split(key, 9)
    std = 0.02
    n = lambda k, shape: jax.random.normal(k, shape, jnp.float32) * std
    z = lambda s: jnp.zeros(s, jnp.float32)
    o = lambda s: jnp.ones(s, jnp.float32)
    p = {}
    p["word_emb"] = n(ks[0], (vocab, hidden))
    p["pos_emb"] = n(ks[1], (max_seq, hidden))
    p["emb_ln_g"], p["emb_ln_b"] = o((1, hidden)), z((1, hidden))
    p["wq"], p["bq"] = n(ks[2], (hidden, hidden)), z((1, hidden))
    p["wk"], p["bk"] = n(ks[3], (hidden, hidden)), z((1, hidden))
    p["wv"], p["bv"] = n(ks[4], (hidden, hidden)), z((1, hidden))
    p["wo"], p["bo"] = n(ks[5], (hidden, hidden)), z((1, hidden))
    p["ln1_g"], p["ln1_b"] = o((1, hidden)), z((1, hidden))
    p["wf1"], p["bf1"] = n(ks[6], (hidden, ffn)), z((1, ffn))
    p["wf2"], p["bf2"] = n(ks[7], (ffn, hidden)), z((1, hidden))
    p["ln2_g"], p["ln2_b"] = o((1, hidden)), z((1, hidden))
    p["wd"], p["bd"] = n(ks[8], (hidden, hidden)), z((1, hidden))
    p["lm_ln_g"], p["lm_ln_b"] = o((1, hidden)), z((1, hidden))
    p["wdec"] = p["word_emb"].T          # tied decoder weight (RobertaLMHead)
    p["bdec"] = z((1, vocab))
    return p


def reference_forward(params, input_ids, attention_mask, ans_pos, choice_label, labels):
    prec = lax.Precision.HIGHEST
    # the kernel receives bf16-rounded matmul weights; apply the same rounding here so the
    # remaining mismatch is only in-kernel activation rounding / approx reciprocal
    rb = lambda w: w.astype(jnp.bfloat16).astype(jnp.float32)
    B, S = input_ids.shape
    H = params["wq"].shape[0]
    hd = H // NUM_HEADS
    scale = 1.0 / math.sqrt(hd)
    emb = params["word_emb"][input_ids] + params["pos_emb"][jnp.arange(S)][None]
    choice_sorted = jnp.sort(choice_label.astype(jnp.int32), axis=1)
    mask = attention_mask.astype(jnp.float32)
    rows = []
    for b in range(B):
        x = _layernorm(emb[b], params["emb_ln_g"], params["emb_ln_b"])
        qx = jnp.dot(x, rb(params["wq"]), precision=prec) + params["bq"]
        kx = jnp.dot(x, rb(params["wk"]), precision=prec) + params["bk"]
        vx = jnp.dot(x, rb(params["wv"]), precision=prec) + params["bv"]
        mask_bias = (1.0 - mask[b])[None, :] * (-1e9)
        heads = []
        for h in range(NUM_HEADS):
            sl = slice(h * hd, (h + 1) * hd)
            sc = jnp.dot(qx[:, sl], kx[:, sl].T, precision=prec) * scale + mask_bias
            heads.append(jnp.dot(_softmax(sc), vx[:, sl], precision=prec))
        ctx = jnp.concatenate(heads, axis=-1)
        x = _layernorm(x + jnp.dot(ctx, rb(params["wo"]), precision=prec) + params["bo"],
                       params["ln1_g"], params["ln1_b"])
        h1 = _gelu(jnp.dot(x, rb(params["wf1"]), precision=prec) + params["bf1"])
        x = _layernorm(x + jnp.dot(h1, rb(params["wf2"]), precision=prec) + params["bf2"],
                       params["ln2_g"], params["ln2_b"])
        xr = x[ans_pos[b, 0]][None, :]
        t = _gelu(jnp.dot(xr, rb(params["wd"]), precision=prec) + params["bd"])
        t = _layernorm(t, params["lm_ln_g"], params["lm_ln_b"])
        scores = jnp.dot(t, rb(params["wdec"]), precision=prec) + params["bdec"]
        rows.append(scores[0, choice_sorted[b]])
    cl = jnp.stack(rows)
    y = labels.astype(jnp.float32)
    bce = jnp.maximum(cl, 0.0) - cl * y + jnp.log1p(jnp.exp(-jnp.abs(cl)))
    return jnp.mean(bce), cl


# ------------------------------------- main -------------------------------------
if __name__ == "__main__":
    # Bt*S = 128 MXU rows per grid step (v5e M target); grid = B/Bt = 2 (even -> both v7x TCs busy).
    B, S, H, F, V, C = 32, 8, 128, 256, 64, 2      # V = small "vocab + 20" stand-in
    BT = 16
    key = jax.random.PRNGKey(0)
    kp, k1, k2, k3, k4, k5, k6 = jax.random.split(key, 7)
    params = init_params(kp, V, S, H, F)

    input_ids = jax.random.randint(k1, (B, S), 0, V, dtype=jnp.int32)
    lens = jax.random.randint(k2, (B,), S // 2, S + 1, dtype=jnp.int32)
    attention_mask = (jnp.arange(S)[None, :] < lens[:, None]).astype(jnp.int32)
    ans_pos = jax.random.randint(k3, (B, 1), 0, S // 2, dtype=jnp.int32)   # <mask> position, always unmasked
    c0 = jax.random.randint(k4, (B, 1), 0, V // 2, dtype=jnp.int32)
    c1 = jax.random.randint(k5, (B, 1), V // 2, V, dtype=jnp.int32)
    choice_label = jnp.concatenate([c0, c1], axis=1)                        # distinct choice ids per row
    labels = jax.random.bernoulli(k6, 0.5, (B, C)).astype(jnp.float32)

    loss, choice_logits = prompt_encoder_forward(
        params, input_ids, attention_mask, ans_pos, choice_label, labels, batch_block=BT)
    jax.block_until_ready((loss, choice_logits))

    ref_loss, ref_cl = reference_forward(
        params, input_ids, attention_mask, ans_pos, choice_label, labels)
    # bf16 MXU operands + approximate softmax reciprocal -> compare at bf16-level tolerance
    assert jnp.allclose(choice_logits, ref_cl, atol=2e-2, rtol=2e-2), (choice_logits, ref_cl)
    assert jnp.allclose(loss, ref_loss, atol=2e-2, rtol=2e-2), (loss, ref_loss)

    print("KERNEL_OK")
</pallas_src>

<mosaic_0001>
module attributes {stable_mosaic.version = 11 : i64} {
  func.func @kernel(%arg0: i32, %arg1: memref<16x8x128xf32, #tpu.memory_space<vmem>>, %arg2: memref<16x8xf32, #tpu.memory_space<vmem>>, %arg3: memref<16x8xf32, #tpu.memory_space<vmem>>, %arg4: memref<1x128xf32, #tpu.memory_space<vmem>>, %arg5: memref<1x128xf32, #tpu.memory_space<vmem>>, %arg6: memref<128x384xbf16, #tpu.memory_space<vmem>>, %arg7: memref<1x384xf32, #tpu.memory_space<vmem>>, %arg8: memref<128x128xbf16, #tpu.memory_space<vmem>>, %arg9: memref<1x128xf32, #tpu.memory_space<vmem>>, %arg10: memref<1x128xf32, #tpu.memory_space<vmem>>, %arg11: memref<1x128xf32, #tpu.memory_space<vmem>>, %arg12: memref<128x256xbf16, #tpu.memory_space<vmem>>, %arg13: memref<1x256xf32, #tpu.memory_space<vmem>>, %arg14: memref<256x128xbf16, #tpu.memory_space<vmem>>, %arg15: memref<1x128xf32, #tpu.memory_space<vmem>>, %arg16: memref<1x128xf32, #tpu.memory_space<vmem>>, %arg17: memref<1x128xf32, #tpu.memory_space<vmem>>, %arg18: memref<128x128xbf16, #tpu.memory_space<vmem>>, %arg19: memref<1x128xf32, #tpu.memory_space<vmem>>, %arg20: memref<1x128xf32, #tpu.memory_space<vmem>>, %arg21: memref<1x128xf32, #tpu.memory_space<vmem>>, %arg22: memref<16x128x128xbf16, #tpu.memory_space<vmem>>, %arg23: memref<16x128xf32, #tpu.memory_space<vmem>>, %arg24: memref<16x128xf32, #tpu.memory_space<vmem>>) attributes {dimension_semantics = [#tpu.dimension_semantics<parallel>], iteration_bounds = array<i64: 2>, scalar_prefetch = 0 : i64, scratch_operands = 0 : i64, tpu.core_type = #tpu.core_type<tc>, window_params = [{transform_indices = @transform_0, window_bounds = array<i64: 16, 8, 128>}, {transform_indices = @transform_1, window_bounds = array<i64: 16, 8>}, {transform_indices = @transform_2, window_bounds = array<i64: 16, 8>}, {pipeline_mode = #tpu.pipeline_mode<synchronous>, transform_indices = @transform_3, window_bounds = array<i64: 1, 128>}, {pipeline_mode = #tpu.pipeline_mode<synchronous>, transform_indices = @transform_4, window_bounds = array<i64: 1, 128>}, {pipeline_mode = #tpu.pipeline_mode<synchronous>, transform_indices = @transform_5, window_bounds = array<i64: 128, 384>}, {pipeline_mode = #tpu.pipeline_mode<synchronous>, transform_indices = @transform_6, window_bounds = array<i64: 1, 384>}, {pipeline_mode = #tpu.pipeline_mode<synchronous>, transform_indices = @transform_7, window_bounds = array<i64: 128, 128>}, {pipeline_mode = #tpu.pipeline_mode<synchronous>, transform_indices = @transform_8, window_bounds = array<i64: 1, 128>}, {pipeline_mode = #tpu.pipeline_mode<synchronous>, transform_indices = @transform_9, window_bounds = array<i64: 1, 128>}, {pipeline_mode = #tpu.pipeline_mode<synchronous>, transform_indices = @transform_10, window_bounds = array<i64: 1, 128>}, {pipeline_mode = #tpu.pipeline_mode<synchronous>, transform_indices = @transform_11, window_bounds = array<i64: 128, 256>}, {pipeline_mode = #tpu.pipeline_mode<synchronous>, transform_indices = @transform_12, window_bounds = array<i64: 1, 256>}, {pipeline_mode = #tpu.pipeline_mode<synchronous>, transform_indices = @transform_13, window_bounds = array<i64: 256, 128>}, {pipeline_mode = #tpu.pipeline_mode<synchronous>, transform_indices = @transform_14, window_bounds = array<i64: 1, 128>}, {pipeline_mode = #tpu.pipeline_mode<synchronous>, transform_indices = @transform_15, window_bounds = array<i64: 1, 128>}, {pipeline_mode = #tpu.pipeline_mode<synchronous>, transform_indices = @transform_16, window_bounds = array<i64: 1, 128>}, {pipeline_mode = #tpu.pipeline_mode<synchronous>, transform_indices = @transform_17, window_bounds = array<i64: 128, 128>}, {pipeline_mode = #tpu.pipeline_mode<synchronous>, transform_indices = @transform_18, window_bounds = array<i64: 1, 128>}, {pipeline_mode = #tpu.pipeline_mode<synchronous>, transform_indices = @transform_19, window_bounds = array<i64: 1, 128>}, {pipeline_mode = #tpu.pipeline_mode<synchronous>, transform_indices = @transform_20, window_bounds = array<i64: 1, 128>}, {transform_indices = @transform_21, window_bounds = array<i64: 16, 128, 128>}, {transform_indices = @transform_22, window_bounds = array<i64: 16, 128>}, {transform_indices = @transform_23, window_bounds = array<i64: 16, 128>}]} {
    %c0 = arith.constant 0 : index
    %c0_0 = arith.constant 0 : index
    %c0_1 = arith.constant 0 : index
    %0 = vector.load %arg1[%c0, %c0_0, %c0_1] : memref<16x8x128xf32, #tpu.memory_space<vmem>>, vector<16x8x128xf32>
    %1 = vector.shape_cast %0 : vector<16x8x128xf32> to vector<128x128xf32>
    %c0_2 = arith.constant 0 : index
    %c0_3 = arith.constant 0 : index
    %2 = vector.load %arg4[%c0_2, %c0_3] : memref<1x128xf32, #tpu.memory_space<vmem>>, vector<1x128xf32>
    %c0_4 = arith.constant 0 : index
    %c0_5 = arith.constant 0 : index
    %3 = vector.load %arg5[%c0_4, %c0_5] : memref<1x128xf32, #tpu.memory_space<vmem>>, vector<1x128xf32>
    %cst = arith.constant dense<0.000000e+00> : vector<128xf32>
    %4 = vector.multi_reduction <add>, %1, %cst [1] : vector<128x128xf32> to vector<128xf32>
    %5 = vector.shape_cast %4 : vector<128xf32> to vector<128x1xf32>
    %cst_6 = arith.constant 1.280000e+02 : f32
    %6 = vector.broadcast %cst_6 : f32 to vector<128x1xf32>
    %7 = arith.divf %5, %6 : vector<128x1xf32>
    %8 = vector.broadcast %7 : vector<128x1xf32> to vector<128x128xf32>
    %9 = arith.subf %1, %8 : vector<128x128xf32>
    %10 = arith.mulf %9, %9 : vector<128x128xf32>
    %cst_7 = arith.constant dense<0.000000e+00> : vector<128xf32>
    %11 = vector.multi_reduction <add>, %10, %cst_7 [1] : vector<128x128xf32> to vector<128xf32>
    %12 = vector.shape_cast %11 : vector<128xf32> to vector<128x1xf32>
    %cst_8 = arith.constant 1.280000e+02 : f32
    %13 = vector.broadcast %cst_8 : f32 to vector<128x1xf32>
    %14 = arith.divf %12, %13 : vector<128x1xf32>
    %15 = vector.broadcast %7 : vector<128x1xf32> to vector<128x128xf32>
    %16 = arith.subf %1, %15 : vector<128x128xf32>
    %cst_9 = arith.constant 9.99999974E-6 : f32
    %17 = vector.broadcast %cst_9 : f32 to vector<128x1xf32>
    %18 = arith.addf %14, %17 : vector<128x1xf32>
    %19 = math.rsqrt %18 : vector<128x1xf32>
    %20 = vector.broadcast %19 : vector<128x1xf32> to vector<128x128xf32>
    %21 = arith.mulf %16, %20 : vector<128x128xf32>
    %22 = vector.broadcast %2 : vector<1x128xf32> to vector<128x128xf32>
    %23 = arith.mulf %21, %22 : vector<128x128xf32>
    %24 = vector.broadcast %3 : vector<1x128xf32> to vector<128x128xf32>
    %25 = arith.addf %23, %24 : vector<128x128xf32>
    %26 = arith.truncf %25 : vector<128x128xf32> to vector<128x128xbf16>
    %c0_10 = arith.constant 0 : index
    %c0_11 = arith.constant 0 : index
    %27 = vector.load %arg6[%c0_10, %c0_11] : memref<128x384xbf16, #tpu.memory_space<vmem>>, vector<128x384xbf16>
    %cst_12 = arith.constant dense<0.000000e+00> : vector<128x384xf32>
    %28 = tpu.matmul %26, %27, %cst_12 {dimension_numbers = #tpu.dot_dimension_numbers<[1], [0], [0], [1], [0, 0, 1, 1], [], []>} : vector<128x128xbf16>, vector<128x384xbf16>, vector<128x384xf32> -> vector<128x384xf32>
    %c0_13 = arith.constant 0 : index
    %c0_14 = arith.constant 0 : index
    %29 = vector.load %arg7[%c0_13, %c0_14] : memref<1x384xf32, #tpu.memory_space<vmem>>, vector<1x384xf32>
    %30 = vector.broadcast %29 : vector<1x384xf32> to vector<128x384xf32>
    %31 = arith.addf %28, %30 : vector<128x384xf32>
    %32 = arith.truncf %31 : vector<128x384xf32> to vector<128x384xbf16>
    %c0_15 = arith.constant 0 : index
    %c0_16 = arith.constant 0 : index
    %33 = vector.load %arg2[%c0_15, %c0_16] : memref<16x8xf32, #tpu.memory_space<vmem>>, vector<16x8xf32>
    %cst_17 = arith.constant 1.000000e+00 : f32
    %34 = vector.broadcast %cst_17 : f32 to vector<16x8xf32>
    %35 = arith.subf %34, %33 : vector<16x8xf32>
    %36 = vector.shape_cast %35 : vector<16x8xf32> to vector<16x1x8xf32>
    %cst_18 = arith.constant -1.000000e+09 : f32
    %37 = vector.broadcast %cst_18 : f32 to vector<16x1x8xf32>
    %38 = arith.mulf %36, %37 : vector<16x1x8xf32>
    %39 = vector.extract_strided_slice %32 {offsets = [0, 0], sizes = [128, 32], strides = [1, 1]} : vector<128x384xbf16> to vector<128x32xbf16>
    %40 = vector.shape_cast %39 : vector<128x32xbf16> to vector<16x8x32xbf16>
    %41 = vector.extract_strided_slice %32 {offsets = [0, 128], sizes = [128, 32], strides = [1, 1]} : vector<128x384xbf16> to vector<128x32xbf16>
    %42 = vector.shape_cast %41 : vector<128x32xbf16> to vector<16x8x32xbf16>
    %43 = vector.extract_strided_slice %32 {offsets = [0, 256], sizes = [128, 32], strides = [1, 1]} : vector<128x384xbf16> to vector<128x32xbf16>
    %44 = vector.shape_cast %43 : vector<128x32xbf16> to vector<16x8x32xbf16>
    "tpu.trace_start"() <{level = 10 : i32, message = "bqd,bkd->bqk"}> : () -> ()
    %cst_19 = arith.constant dense<0.000000e+00> : vector<16x8x8xf32>
    %45 = tpu.matmul %40, %42, %cst_19 {dimension_numbers = #tpu.dot_dimension_numbers<[2], [2], [1], [1], [0, 0, 0, 1, 1, 1], [0], [0]>} : vector<16x8x32xbf16>, vector<16x8x32xbf16>, vector<16x8x8xf32> -> vector<16x8x8xf32>
    "tpu.trace_stop"() : () -> ()
    %cst_20 = arith.constant 0.176776692 : f32
    %46 = vector.broadcast %cst_20 : f32 to vector<16x8x8xf32>
    %47 = arith.mulf %45, %46 : vector<16x8x8xf32>
    %48 = vector.broadcast %38 : vector<16x1x8xf32> to vector<16x8x8xf32>
    %49 = arith.addf %47, %48 : vector<16x8x8xf32>
    %cst_21 = arith.constant dense<0xFF800000> : vector<16x8xf32>
    %50 = vector.multi_reduction <maximumf>, %49, %cst_21 [2] : vector<16x8x8xf32> to vector<16x8xf32>
    %51 = vector.shape_cast %50 : vector<16x8xf32> to vector<16x8x1xf32>
    %52 = vector.broadcast %51 : vector<16x8x1xf32> to vector<16x8x8xf32>
    %53 = arith.subf %49, %52 : vector<16x8x8xf32>
    %54 = math.exp %53 : vector<16x8x8xf32>
    %cst_22 = arith.constant dense<0.000000e+00> : vector<16x8xf32>
    %55 = vector.multi_reduction <add>, %54, %cst_22 [2] : vector<16x8x8xf32> to vector<16x8xf32>
    %56 = vector.shape_cast %55 : vector<16x8xf32> to vector<16x8x1xf32>
    %57 = tpu.reciprocal %56 {approx = true} : vector<16x8x1xf32> -> vector<16x8x1xf32>
    %58 = vector.broadcast %57 : vector<16x8x1xf32> to vector<16x8x8xf32>
    %59 = arith.mulf %54, %58 : vector<16x8x8xf32>
    %60 = arith.truncf %59 : vector<16x8x8xf32> to vector<16x8x8xbf16>
    "tpu.trace_start"() <{level = 10 : i32, message = "bqk,bkd->bqd"}> : () -> ()
    %cst_23 = arith.constant dense<0.000000e+00> : vector<16x8x32xf32>
    %61 = tpu.matmul %60, %44, %cst_23 {dimension_numbers = #tpu.dot_dimension_numbers<[2], [1], [1], [2], [0, 0, 0, 1, 1, 2], [0], [0]>} : vector<16x8x8xbf16>, vector<16x8x32xbf16>, vector<16x8x32xf32> -> vector<16x8x32xf32>
    "tpu.trace_stop"() : () -> ()
    %62 = vector.shape_cast %61 : vector<16x8x32xf32> to vector<128x32xf32>
    %63 = vector.extract_strided_slice %32 {offsets = [0, 32], sizes = [128, 32], strides = [1, 1]} : vector<128x384xbf16> to vector<128x32xbf16>
    %64 = vector.shape_cast %63 : vector<128x32xbf16> to vector<16x8x32xbf16>
    %65 = vector.extract_strided_slice %32 {offsets = [0, 160], sizes = [128, 32], strides = [1, 1]} : vector<128x384xbf16> to vector<128x32xbf16>
    %66 = vector.shape_cast %65 : vector<128x32xbf16> to vector<16x8x32xbf16>
    %67 = vector.extract_strided_slice %32 {offsets = [0, 288], sizes = [128, 32], strides = [1, 1]} : vector<128x384xbf16> to vector<128x32xbf16>
    %68 = vector.shape_cast %67 : vector<128x32xbf16> to vector<16x8x32xbf16>
    "tpu.trace_start"() <{level = 10 : i32, message = "bqd,bkd->bqk"}> : () -> ()
    %cst_24 = arith.constant dense<0.000000e+00> : vector<16x8x8xf32>
    %69 = tpu.matmul %64, %66, %cst_24 {dimension_numbers = #tpu.dot_dimension_numbers<[2], [2], [1], [1], [0, 0, 0, 1, 1, 1], [0], [0]>} : vector<16x8x32xbf16>, vector<16x8x32xbf16>, vector<16x8x8xf32> -> vector<16x8x8xf32>
    "tpu.trace_stop"() : () -> ()
    %cst_25 = arith.constant 0.176776692 : f32
    %70 = vector.broadcast %cst_25 : f32 to vector<16x8x8xf32>
    %71 = arith.mulf %69, %70 : vector<16x8x8xf32>
    %72 = vector.broadcast %38 : vector<16x1x8xf32> to vector<16x8x8xf32>
    %73 = arith.addf %71, %72 : vector<16x8x8xf32>
    %cst_26 = arith.constant dense<0xFF800000> : vector<16x8xf32>
    %74 = vector.multi_reduction <maximumf>, %73, %cst_26 [2] : vector<16x8x8xf32> to vector<16x8xf32>
    %75 = vector.shape_cast %74 : vector<16x8xf32> to vector<16x8x1xf32>
    %76 = vector.broadcast %75 : vector<16x8x1xf32> to vector<16x8x8xf32>
    %77 = arith.subf %73, %76 : vector<16x8x8xf32>
    %78 = math.exp %77 : vector<16x8x8xf32>
    %cst_27 = arith.constant dense<0.000000e+00> : vector<16x8xf32>
    %79 = vector.multi_reduction <add>, %78, %cst_27 [2] : vector<16x8x8xf32> to vector<16x8xf32>
    %80 = vector.shape_cast %79 : vector<16x8xf32> to vector<16x8x1xf32>
    %81 = tpu.reciprocal %80 {approx = true} : vector<16x8x1xf32> -> vector<16x8x1xf32>
    %82 = vector.broadcast %81 : vector<16x8x1xf32> to vector<16x8x8xf32>
    %83 = arith.mulf %78, %82 : vector<16x8x8xf32>
    %84 = arith.truncf %83 : vector<16x8x8xf32> to vector<16x8x8xbf16>
    "tpu.trace_start"() <{level = 10 : i32, message = "bqk,bkd->bqd"}> : () -> ()
    %cst_28 = arith.constant dense<0.000000e+00> : vector<16x8x32xf32>
    %85 = tpu.matmul %84, %68, %cst_28 {dimension_numbers = #tpu.dot_dimension_numbers<[2], [1], [1], [2], [0, 0, 0, 1, 1, 2], [0], [0]>} : vector<16x8x8xbf16>, vector<16x8x32xbf16>, vector<16x8x32xf32> -> vector<16x8x32xf32>
    "tpu.trace_stop"() : () -> ()
    %86 = vector.shape_cast %85 : vector<16x8x32xf32> to vector<128x32xf32>
    %87 = vector.extract_strided_slice %32 {offsets = [0, 64], sizes = [128, 32], strides = [1, 1]} : vector<128x384xbf16> to vector<128x32xbf16>
    %88 = vector.shape_cast %87 : vector<128x32xbf16> to vector<16x8x32xbf16>
    %89 = vector.extract_strided_slice %32 {offsets = [0, 192], sizes = [128, 32], strides = [1, 1]} : vector<128x384xbf16> to vector<128x32xbf16>
    %90 = vector.shape_cast %89 : vector<128x32xbf16> to vector<16x8x32xbf16>
    %91 = vector.extract_strided_slice %32 {offsets = [0, 320], sizes = [128, 32], strides = [1, 1]} : vector<128x384xbf16> to vector<128x32xbf16>
    %92 = vector.shape_cast %91 : vector<128x32xbf16> to vector<16x8x32xbf16>
    "tpu.trace_start"() <{level = 10 : i32, message = "bqd,bkd->bqk"}> : () -> ()
    %cst_29 = arith.constant dense<0.000000e+00> : vector<16x8x8xf32>
    %93 = tpu.matmul %88, %90, %cst_29 {dimension_numbers = #tpu.dot_dimension_numbers<[2], [2], [1], [1], [0, 0, 0, 1, 1, 1], [0], [0]>} : vector<16x8x32xbf16>, vector<16x8x32xbf16>, vector<16x8x8xf32> -> vector<16x8x8xf32>
    "tpu.trace_stop"() : () -> ()
    %cst_30 = arith.constant 0.176776692 : f32
    %94 = vector.broadcast %cst_30 : f32 to vector<16x8x8xf32>
    %95 = arith.mulf %93, %94 : vector<16x8x8xf32>
    %96 = vector.broadcast %38 : vector<16x1x8xf32> to vector<16x8x8xf32>
    %97 = arith.addf %95, %96 : vector<16x8x8xf32>
    %cst_31 = arith.constant dense<0xFF800000> : vector<16x8xf32>
    %98 = vector.multi_reduction <maximumf>, %97, %cst_31 [2] : vector<16x8x8xf32> to vector<16x8xf32>
    %99 = vector.shape_cast %98 : vector<16x8xf32> to vector<16x8x1xf32>
    %100 = vector.broadcast %99 : vector<16x8x1xf32> to vector<16x8x8xf32>
    %101 = arith.subf %97, %100 : vector<16x8x8xf32>
    %102 = math.exp %101 : vector<16x8x8xf32>
    %cst_32 = arith.constant dense<0.000000e+00> : vector<16x8xf32>
    %103 = vector.multi_reduction <add>, %102, %cst_32 [2] : vector<16x8x8xf32> to vector<16x8xf32>
    %104 = vector.shape_cast %103 : vector<16x8xf32> to vector<16x8x1xf32>
    %105 = tpu.reciprocal %104 {approx = true} : vector<16x8x1xf32> -> vector<16x8x1xf32>
    %106 = vector.broadcast %105 : vector<16x8x1xf32> to vector<16x8x8xf32>
    %107 = arith.mulf %102, %106 : vector<16x8x8xf32>
    %108 = arith.truncf %107 : vector<16x8x8xf32> to vector<16x8x8xbf16>
    "tpu.trace_start"() <{level = 10 : i32, message = "bqk,bkd->bqd"}> : () -> ()
    %cst_33 = arith.constant dense<0.000000e+00> : vector<16x8x32xf32>
    %109 = tpu.matmul %108, %92, %cst_33 {dimension_numbers = #tpu.dot_dimension_numbers<[2], [1], [1], [2], [0, 0, 0, 1, 1, 2], [0], [0]>} : vector<16x8x8xbf16>, vector<16x8x32xbf16>, vector<16x8x32xf32> -> vector<16x8x32xf32>
    "tpu.trace_stop"() : () -> ()
    %110 = vector.shape_cast %109 : vector<16x8x32xf32> to vector<128x32xf32>
    %111 = vector.extract_strided_slice %32 {offsets = [0, 96], sizes = [128, 32], strides = [1, 1]} : vector<128x384xbf16> to vector<128x32xbf16>
    %112 = vector.shape_cast %111 : vector<128x32xbf16> to vector<16x8x32xbf16>
    %113 = vector.extract_strided_slice %32 {offsets = [0, 224], sizes = [128, 32], strides = [1, 1]} : vector<128x384xbf16> to vector<128x32xbf16>
    %114 = vector.shape_cast %113 : vector<128x32xbf16> to vector<16x8x32xbf16>
    %115 = vector.extract_strided_slice %32 {offsets = [0, 352], sizes = [128, 32], strides = [1, 1]} : vector<128x384xbf16> to vector<128x32xbf16>
    %116 = vector.shape_cast %115 : vector<128x32xbf16> to vector<16x8x32xbf16>
    "tpu.trace_start"() <{level = 10 : i32, message = "bqd,bkd->bqk"}> : () -> ()
    %cst_34 = arith.constant dense<0.000000e+00> : vector<16x8x8xf32>
    %117 = tpu.matmul %112, %114, %cst_34 {dimension_numbers = #tpu.dot_dimension_numbers<[2], [2], [1], [1], [0, 0, 0, 1, 1, 1], [0], [0]>} : vector<16x8x32xbf16>, vector<16x8x32xbf16>, vector<16x8x8xf32> -> vector<16x8x8xf32>
    "tpu.trace_stop"() : () -> ()
    %cst_35 = arith.constant 0.176776692 : f32
    %118 = vector.broadcast %cst_35 : f32 to vector<16x8x8xf32>
    %119 = arith.mulf %117, %118 : vector<16x8x8xf32>
    %120 = vector.broadcast %38 : vector<16x1x8xf32> to vector<16x8x8xf32>
    %121 = arith.addf %119, %120 : vector<16x8x8xf32>
    %cst_36 = arith.constant dense<0xFF800000> : vector<16x8xf32>
    %122 = vector.multi_reduction <maximumf>, %121, %cst_36 [2] : vector<16x8x8xf32> to vector<16x8xf32>
    %123 = vector.shape_cast %122 : vector<16x8xf32> to vector<16x8x1xf32>
    %124 = vector.broadcast %123 : vector<16x8x1xf32> to vector<16x8x8xf32>
    %125 = arith.subf %121, %124 : vector<16x8x8xf32>
    %126 = math.exp %125 : vector<16x8x8xf32>
    %cst_37 = arith.constant dense<0.000000e+00> : vector<16x8xf32>
    %127 = vector.multi_reduction <add>, %126, %cst_37 [2] : vector<16x8x8xf32> to vector<16x8xf32>
    %128 = vector.shape_cast %127 : vector<16x8xf32> to vector<16x8x1xf32>
    %129 = tpu.reciprocal %128 {approx = true} : vector<16x8x1xf32> -> vector<16x8x1xf32>
    %130 = vector.broadcast %129 : vector<16x8x1xf32> to vector<16x8x8xf32>
    %131 = arith.mulf %126, %130 : vector<16x8x8xf32>
    %132 = arith.truncf %131 : vector<16x8x8xf32> to vector<16x8x8xbf16>
    "tpu.trace_start"() <{level = 10 : i32, message = "bqk,bkd->bqd"}> : () -> ()
    %cst_38 = arith.constant dense<0.000000e+00> : vector<16x8x32xf32>
    %133 = tpu.matmul %132, %116, %cst_38 {dimension_numbers = #tpu.dot_dimension_numbers<[2], [1], [1], [2], [0, 0, 0, 1, 1, 2], [0], [0]>} : vector<16x8x8xbf16>, vector<16x8x32xbf16>, vector<16x8x32xf32> -> vector<16x8x32xf32>
    "tpu.trace_stop"() : () -> ()
    %134 = vector.shape_cast %133 : vector<16x8x32xf32> to vector<128x32xf32>
    %135 = tpu.concatenate %62, %86, %110, %134 in 1 : vector<128x32xf32>, vector<128x32xf32>, vector<128x32xf32>, vector<128x32xf32> -> vector<128x128xf32>
    %136 = arith.truncf %135 : vector<128x128xf32> to vector<128x128xbf16>
    %c0_39 = arith.constant 0 : index
    %c0_40 = arith.constant 0 : index
    %137 = vector.load %arg8[%c0_39, %c0_40] : memref<128x128xbf16, #tpu.memory_space<vmem>>, vector<128x128xbf16>
    %cst_41 = arith.constant dense<0.000000e+00> : vector<128x128xf32>
    %138 = tpu.matmul %136, %137, %cst_41 {dimension_numbers = #tpu.dot_dimension_numbers<[1], [0], [0], [1], [0, 0, 1, 1], [], []>} : vector<128x128xbf16>, vector<128x128xbf16>, vector<128x128xf32> -> vector<128x128xf32>
    %c0_42 = arith.constant 0 : index
    %c0_43 = arith.constant 0 : index
    %139 = vector.load %arg9[%c0_42, %c0_43] : memref<1x128xf32, #tpu.memory_space<vmem>>, vector<1x128xf32>
    %140 = vector.broadcast %139 : vector<1x128xf32> to vector<128x128xf32>
    %141 = arith.addf %138, %140 : vector<128x128xf32>
    %142 = arith.addf %25, %141 : vector<128x128xf32>
    %c0_44 = arith.constant 0 : index
    %c0_45 = arith.constant 0 : index
    %143 = vector.load %arg10[%c0_44, %c0_45] : memref<1x128xf32, #tpu.memory_space<vmem>>, vector<1x128xf32>
    %c0_46 = arith.constant 0 : index
    %c0_47 = arith.constant 0 : index
    %144 = vector.load %arg11[%c0_46, %c0_47] : memref<1x128xf32, #tpu.memory_space<vmem>>, vector<1x128xf32>
    %cst_48 = arith.constant dense<0.000000e+00> : vector<128xf32>
    %145 = vector.multi_reduction <add>, %142, %cst_48 [1] : vector<128x128xf32> to vector<128xf32>
    %146 = vector.shape_cast %145 : vector<128xf32> to vector<128x1xf32>
    %cst_49 = arith.constant 1.280000e+02 : f32
    %147 = vector.broadcast %cst_49 : f32 to vector<128x1xf32>
    %148 = arith.divf %146, %147 : vector<128x1xf32>
    %149 = vector.broadcast %148 : vector<128x1xf32> to vector<128x128xf32>
    %150 = arith.subf %142, %149 : vector<128x128xf32>
    %151 = arith.mulf %150, %150 : vector<128x128xf32>
    %cst_50 = arith.constant dense<0.000000e+00> : vector<128xf32>
    %152 = vector.multi_reduction <add>, %151, %cst_50 [1] : vector<128x128xf32> to vector<128xf32>
    %153 = vector.shape_cast %152 : vector<128xf32> to vector<128x1xf32>
    %cst_51 = arith.constant 1.280000e+02 : f32
    %154 = vector.broadcast %cst_51 : f32 to vector<128x1xf32>
    %155 = arith.divf %153, %154 : vector<128x1xf32>
    %156 = vector.broadcast %148 : vector<128x1xf32> to vector<128x128xf32>
    %157 = arith.subf %142, %156 : vector<128x128xf32>
    %cst_52 = arith.constant 9.99999974E-6 : f32
    %158 = vector.broadcast %cst_52 : f32 to vector<128x1xf32>
    %159 = arith.addf %155, %158 : vector<128x1xf32>
    %160 = math.rsqrt %159 : vector<128x1xf32>
    %161 = vector.broadcast %160 : vector<128x1xf32> to vector<128x128xf32>
    %162 = arith.mulf %157, %161 : vector<128x128xf32>
    %163 = vector.broadcast %143 : vector<1x128xf32> to vector<128x128xf32>
    %164 = arith.mulf %162, %163 : vector<128x128xf32>
    %165 = vector.broadcast %144 : vector<1x128xf32> to vector<128x128xf32>
    %166 = arith.addf %164, %165 : vector<128x128xf32>
    %167 = arith.truncf %166 : vector<128x128xf32> to vector<128x128xbf16>
    %c0_53 = arith.constant 0 : index
    %c0_54 = arith.constant 0 : index
    %168 = vector.load %arg12[%c0_53, %c0_54] : memref<128x256xbf16, #tpu.memory_space<vmem>>, vector<128x256xbf16>
    %cst_55 = arith.constant dense<0.000000e+00> : vector<128x256xf32>
    %169 = tpu.matmul %167, %168, %cst_55 {dimension_numbers = #tpu.dot_dimension_numbers<[1], [0], [0], [1], [0, 0, 1, 1], [], []>} : vector<128x128xbf16>, vector<128x256xbf16>, vector<128x256xf32> -> vector<128x256xf32>
    %c0_56 = arith.constant 0 : index
    %c0_57 = arith.constant 0 : index
    %170 = vector.load %arg13[%c0_56, %c0_57] : memref<1x256xf32, #tpu.memory_space<vmem>>, vector<1x256xf32>
    %171 = vector.broadcast %170 : vector<1x256xf32> to vector<128x256xf32>
    %172 = arith.addf %169, %171 : vector<128x256xf32>
    %cst_58 = arith.constant 5.000000e-01 : f32
    %173 = vector.broadcast %cst_58 : f32 to vector<128x256xf32>
    %174 = arith.mulf %173, %172 : vector<128x256xf32>
    %cst_59 = arith.constant 4.471500e-02 : f32
    %175 = vector.broadcast %cst_59 : f32 to vector<128x256xf32>
    %176 = arith.mulf %175, %172 : vector<128x256xf32>
    %177 = arith.mulf %176, %172 : vector<128x256xf32>
    %178 = arith.mulf %177, %172 : vector<128x256xf32>
    %179 = arith.addf %172, %178 : vector<128x256xf32>
    %cst_60 = arith.constant 0.797884583 : f32
    %180 = vector.broadcast %cst_60 : f32 to vector<128x256xf32>
    %181 = arith.mulf %180, %179 : vector<128x256xf32>
    %182 = math.tanh %181 : vector<128x256xf32>
    %cst_61 = arith.constant 1.000000e+00 : f32
    %183 = vector.broadcast %cst_61 : f32 to vector<128x256xf32>
    %184 = arith.addf %183, %182 : vector<128x256xf32>
    %185 = arith.mulf %174, %184 : vector<128x256xf32>
    %186 = arith.truncf %185 : vector<128x256xf32> to vector<128x256xbf16>
    %c0_62 = arith.constant 0 : index
    %c0_63 = arith.constant 0 : index
    %187 = vector.load %arg14[%c0_62, %c0_63] : memref<256x128xbf16, #tpu.memory_space<vmem>>, vector<256x128xbf16>
    %cst_64 = arith.constant dense<0.000000e+00> : vector<128x128xf32>
    %188 = tpu.matmul %186, %187, %cst_64 {dimension_numbers = #tpu.dot_dimension_numbers<[1], [0], [0], [1], [0, 0, 1, 1], [], []>} : vector<128x256xbf16>, vector<256x128xbf16>, vector<128x128xf32> -> vector<128x128xf32>
    %c0_65 = arith.constant 0 : index
    %c0_66 = arith.constant 0 : index
    %189 = vector.load %arg15[%c0_65, %c0_66] : memref<1x128xf32, #tpu.memory_space<vmem>>, vector<1x128xf32>
    %190 = vector.broadcast %189 : vector<1x128xf32> to vector<128x128xf32>
    %191 = arith.addf %188, %190 : vector<128x128xf32>
    %192 = arith.addf %166, %191 : vector<128x128xf32>
    %c0_67 = arith.constant 0 : index
    %c0_68 = arith.constant 0 : index
    %193 = vector.load %arg16[%c0_67, %c0_68] : memref<1x128xf32, #tpu.memory_space<vmem>>, vector<1x128xf32>
    %c0_69 = arith.constant 0 : index
    %c0_70 = arith.constant 0 : index
    %194 = vector.load %arg17[%c0_69, %c0_70] : memref<1x128xf32, #tpu.memory_space<vmem>>, vector<1x128xf32>
    %cst_71 = arith.constant dense<0.000000e+00> : vector<128xf32>
    %195 = vector.multi_reduction <add>, %192, %cst_71 [1] : vector<128x128xf32> to vector<128xf32>
    %196 = vector.shape_cast %195 : vector<128xf32> to vector<128x1xf32>
    %cst_72 = arith.constant 1.280000e+02 : f32
    %197 = vector.broadcast %cst_72 : f32 to vector<128x1xf32>
    %198 = arith.divf %196, %197 : vector<128x1xf32>
    %199 = vector.broadcast %198 : vector<128x1xf32> to vector<128x128xf32>
    %200 = arith.subf %192, %199 : vector<128x128xf32>
    %201 = arith.mulf %200, %200 : vector<128x128xf32>
    %cst_73 = arith.constant dense<0.000000e+00> : vector<128xf32>
    %202 = vector.multi_reduction <add>, %201, %cst_73 [1] : vector<128x128xf32> to vector<128xf32>
    %203 = vector.shape_cast %202 : vector<128xf32> to vector<128x1xf32>
    %cst_74 = arith.constant 1.280000e+02 : f32
    %204 = vector.broadcast %cst_74 : f32 to vector<128x1xf32>
    %205 = arith.divf %203, %204 : vector<128x1xf32>
    %206 = vector.broadcast %198 : vector<128x1xf32> to vector<128x128xf32>
    %207 = arith.subf %192, %206 : vector<128x128xf32>
    %cst_75 = arith.constant 9.99999974E-6 : f32
    %208 = vector.broadcast %cst_75 : f32 to vector<128x1xf32>
    %209 = arith.addf %205, %208 : vector<128x1xf32>
    %210 = math.rsqrt %209 : vector<128x1xf32>
    %211 = vector.broadcast %210 : vector<128x1xf32> to vector<128x128xf32>
    %212 = arith.mulf %207, %211 : vector<128x128xf32>
    %213 = vector.broadcast %193 : vector<1x128xf32> to vector<128x128xf32>
    %214 = arith.mulf %212, %213 : vector<128x128xf32>
    %215 = vector.broadcast %194 : vector<1x128xf32> to vector<128x128xf32>
    %216 = arith.addf %214, %215 : vector<128x128xf32>
    %217 = vector.shape_cast %216 : vector<128x128xf32> to vector<16x8x128xf32>
    %c0_76 = arith.constant 0 : index
    %c0_77 = arith.constant 0 : index
    %218 = vector.load %arg3[%c0_76, %c0_77] : memref<16x8xf32, #tpu.memory_space<vmem>>, vector<16x8xf32>
    %219 = vector.shape_cast %218 : vector<16x8xf32> to vector<16x8x1xf32>
    %220 = vector.broadcast %219 : vector<16x8x1xf32> to vector<16x8x128xf32>
    %221 = arith.mulf %217, %220 : vector<16x8x128xf32>
    %cst_78 = arith.constant dense<0.000000e+00> : vector<16x128xf32>
    %222 = vector.multi_reduction <add>, %221, %cst_78 [1] : vector<16x8x128xf32> to vector<16x128xf32>
    %223 = arith.truncf %222 : vector<16x128xf32> to vector<16x128xbf16>
    %c0_79 = arith.constant 0 : index
    %c0_80 = arith.constant 0 : index
    %224 = vector.load %arg18[%c0_79, %c0_80] : memref<128x128xbf16, #tpu.memory_space<vmem>>, vector<128x128xbf16>
    %cst_81 = arith.constant dense<0.000000e+00> : vector<16x128xf32>
    %225 = tpu.matmul %223, %224, %cst_81 {dimension_numbers = #tpu.dot_dimension_numbers<[1], [0], [0], [1], [0, 0, 1, 1], [], []>} : vector<16x128xbf16>, vector<128x128xbf16>, vector<16x128xf32> -> vector<16x128xf32>
    %c0_82 = arith.constant 0 : index
    %c0_83 = arith.constant 0 : index
    %226 = vector.load %arg19[%c0_82, %c0_83] : memref<1x128xf32, #tpu.memory_space<vmem>>, vector<1x128xf32>
    %227 = vector.broadcast %226 : vector<1x128xf32> to vector<16x128xf32>
    %228 = arith.addf %225, %227 : vector<16x128xf32>
    %cst_84 = arith.constant 5.000000e-01 : f32
    %229 = vector.broadcast %cst_84 : f32 to vector<16x128xf32>
    %230 = arith.mulf %229, %228 : vector<16x128xf32>
    %cst_85 = arith.constant 4.471500e-02 : f32
    %231 = vector.broadcast %cst_85 : f32 to vector<16x128xf32>
    %232 = arith.mulf %231, %228 : vector<16x128xf32>
    %233 = arith.mulf %232, %228 : vector<16x128xf32>
    %234 = arith.mulf %233, %228 : vector<16x128xf32>
    %235 = arith.addf %228, %234 : vector<16x128xf32>
    %cst_86 = arith.constant 0.797884583 : f32
    %236 = vector.broadcast %cst_86 : f32 to vector<16x128xf32>
    %237 = arith.mulf %236, %235 : vector<16x128xf32>
    %238 = math.tanh %237 : vector<16x128xf32>
    %cst_87 = arith.constant 1.000000e+00 : f32
    %239 = vector.broadcast %cst_87 : f32 to vector<16x128xf32>
    %240 = arith.addf %239, %238 : vector<16x128xf32>
    %241 = arith.mulf %230, %240 : vector<16x128xf32>
    %c0_88 = arith.constant 0 : index
    %c0_89 = arith.constant 0 : index
    %242 = vector.load %arg20[%c0_88, %c0_89] : memref<1x128xf32, #tpu.memory_space<vmem>>, vector<1x128xf32>
    %c0_90 = arith.constant 0 : index
    %c0_91 = arith.constant 0 : index
    %243 = vector.load %arg21[%c0_90, %c0_91] : memref<1x128xf32, #tpu.memory_space<vmem>>, vector<1x128xf32>
    %cst_92 = arith.constant dense<0.000000e+00> : vector<16xf32>
    %244 = vector.multi_reduction <add>, %241, %cst_92 [1] : vector<16x128xf32> to vector<16xf32>
    %245 = vector.shape_cast %244 : vector<16xf32> to vector<16x1xf32>
    %cst_93 = arith.constant 1.280000e+02 : f32
    %246 = vector.broadcast %cst_93 : f32 to vector<16x1xf32>
    %247 = arith.divf %245, %246 : vector<16x1xf32>
    %248 = vector.broadcast %247 : vector<16x1xf32> to vector<16x128xf32>
    %249 = arith.subf %241, %248 : vector<16x128xf32>
    %250 = arith.mulf %249, %249 : vector<16x128xf32>
    %cst_94 = arith.constant dense<0.000000e+00> : vector<16xf32>
    %251 = vector.multi_reduction <add>, %250, %cst_94 [1] : vector<16x128xf32> to vector<16xf32>
    %252 = vector.shape_cast %251 : vector<16xf32> to vector<16x1xf32>
    %cst_95 = arith.constant 1.280000e+02 : f32
    %253 = vector.broadcast %cst_95 : f32 to vector<16x1xf32>
    %254 = arith.divf %252, %253 : vector<16x1xf32>
    %255 = vector.broadcast %247 : vector<16x1xf32> to vector<16x128xf32>
    %256 = arith.subf %241, %255 : vector<16x128xf32>
    %cst_96 = arith.constant 9.99999974E-6 : f32
    %257 = vector.broadcast %cst_96 : f32 to vector<16x1xf32>
    %258 = arith.addf %254, %257 : vector<16x1xf32>
    %259 = math.rsqrt %258 : vector<16x1xf32>
    %260 = vector.broadcast %259 : vector<16x1xf32> to vector<16x128xf32>
    %261 = arith.mulf %256, %260 : vector<16x128xf32>
    %262 = vector.broadcast %242 : vector<1x128xf32> to vector<16x128xf32>
    %263 = arith.mulf %261, %262 : vector<16x128xf32>
    %264 = vector.broadcast %243 : vector<1x128xf32> to vector<16x128xf32>
    %265 = arith.addf %263, %264 : vector<16x128xf32>
    %266 = vector.shape_cast %265 : vector<16x128xf32> to vector<16x1x128xf32>
    %267 = arith.truncf %266 : vector<16x1x128xf32> to vector<16x1x128xbf16>
    %c0_97 = arith.constant 0 : index
    %c0_98 = arith.constant 0 : index
    %c0_99 = arith.constant 0 : index
    %268 = vector.load %arg22[%c0_97, %c0_98, %c0_99] : memref<16x128x128xbf16, #tpu.memory_space<vmem>>, vector<16x128x128xbf16>
    "tpu.trace_start"() <{level = 10 : i32, message = "bqh,bhc->bqc"}> : () -> ()
    %cst_100 = arith.constant dense<0.000000e+00> : vector<16x1x128xf32>
    %269 = tpu.matmul %267, %268, %cst_100 {dimension_numbers = #tpu.dot_dimension_numbers<[2], [1], [1], [2], [0, 0, 0, 1, 1, 2], [0], [0]>} : vector<16x1x128xbf16>, vector<16x128x128xbf16>, vector<16x1x128xf32> -> vector<16x1x128xf32>
    "tpu.trace_stop"() : () -> ()
    %270 = vector.shape_cast %269 : vector<16x1x128xf32> to vector<16x128xf32>
    %c0_101 = arith.constant 0 : index
    %c0_102 = arith.constant 0 : index
    %271 = vector.load %arg23[%c0_101, %c0_102] : memref<16x128xf32, #tpu.memory_space<vmem>>, vector<16x128xf32>
    %272 = arith.addf %270, %271 : vector<16x128xf32>
    %c0_103 = arith.constant 0 : index
    %c0_104 = arith.constant 0 : index
    %273 = vector.load %arg24[%c0_103, %c0_104] : memref<16x128xf32, #tpu.memory_space<vmem>>, vector<16x128xf32>
    tpu.vector_store %arg24[%c0_103, %c0_104], %272 {strides = array<i32>} : memref<16x128xf32, #tpu.memory_space<vmem>>, vector<16x128xf32>,
    return
  }
  func.func @transform_0(%arg0: i32) -> (i32, i32, i32) {
    %c0_i32 = arith.constant 0 : i32
    %c0_i32_0 = arith.constant 0 : i32
    %c0_i32_1 = arith.constant 0 : i32
    return %arg0, %c0_i32, %c0_i32_0 : i32, i32, i32
  }
  func.func @transform_1(%arg0: i32) -> (i32, i32) {
    %c0_i32 = arith.constant 0 : i32
    %c0_i32_0 = arith.constant 0 : i32
    return %arg0, %c0_i32 : i32, i32
  }
  func.func @transform_2(%arg0: i32) -> (i32, i32) {
    %c0_i32 = arith.constant 0 : i32
    %c0_i32_0 = arith.constant 0 : i32
    return %arg0, %c0_i32 : i32, i32
  }
  func.func @transform_3(%arg0: i32) -> (i32, i32) {
    %c0_i32 = arith.constant 0 : i32
    %c0_i32_0 = arith.constant 0 : i32
    %c0_i32_1 = arith.constant 0 : i32
    return %c0_i32, %c0_i32_0 : i32, i32
  }
  func.func @transform_4(%arg0: i32) -> (i32, i32) {
    %c0_i32 = arith.constant 0 : i32
    %c0_i32_0 = arith.constant 0 : i32
    %c0_i32_1 = arith.constant 0 : i32
    return %c0_i32, %c0_i32_0 : i32, i32
  }
  func.func @transform_5(%arg0: i32) -> (i32, i32) {
    %c0_i32 = arith.constant 0 : i32
    %c0_i32_0 = arith.constant 0 : i32
    %c0_i32_1 = arith.constant 0 : i32
    return %c0_i32, %c0_i32_0 : i32, i32
  }
  func.func @transform_6(%arg0: i32) -> (i32, i32) {
    %c0_i32 = arith.constant 0 : i32
    %c0_i32_0 = arith.constant 0 : i32
    %c0_i32_1 = arith.constant 0 : i32
    return %c0_i32, %c0_i32_0 : i32, i32
  }
  func.func @transform_7(%arg0: i32) -> (i32, i32) {
    %c0_i32 = arith.constant 0 : i32
    %c0_i32_0 = arith.constant 0 : i32
    %c0_i32_1 = arith.constant 0 : i32
    return %c0_i32, %c0_i32_0 : i32, i32
  }
  func.func @transform_8(%arg0: i32) -> (i32, i32) {
    %c0_i32 = arith.constant 0 : i32
    %c0_i32_0 = arith.constant 0 : i32
    %c0_i32_1 = arith.constant 0 : i32
    return %c0_i32, %c0_i32_0 : i32, i32
  }
  func.func @transform_9(%arg0: i32) -> (i32, i32) {
    %c0_i32 = arith.constant 0 : i32
    %c0_i32_0 = arith.constant 0 : i32
    %c0_i32_1 = arith.constant 0 : i32
    return %c0_i32, %c0_i32_0 : i32, i32
  }
  func.func @transform_10(%arg0: i32) -> (i32, i32) {
    %c0_i32 = arith.constant 0 : i32
    %c0_i32_0 = arith.constant 0 : i32
    %c0_i32_1 = arith.constant 0 : i32
    return %c0_i32, %c0_i32_0 : i32, i32
  }
  func.func @transform_11(%arg0: i32) -> (i32, i32) {
    %c0_i32 = arith.constant 0 : i32
    %c0_i32_0 = arith.constant 0 : i32
    %c0_i32_1 = arith.constant 0 : i32
    return %c0_i32, %c0_i32_0 : i32, i32
  }
  func.func @transform_12(%arg0: i32) -> (i32, i32) {
    %c0_i32 = arith.constant 0 : i32
    %c0_i32_0 = arith.constant 0 : i32
    %c0_i32_1 = arith.constant 0 : i32
    return %c0_i32, %c0_i32_0 : i32, i32
  }
  func.func @transform_13(%arg0: i32) -> (i32, i32) {
    %c0_i32 = arith.constant 0 : i32
    %c0_i32_0 = arith.constant 0 : i32
    %c0_i32_1 = arith.constant 0 : i32
    return %c0_i32, %c0_i32_0 : i32, i32
  }
  func.func @transform_14(%arg0: i32) -> (i32, i32) {
    %c0_i32 = arith.constant 0 : i32
    %c0_i32_0 = arith.constant 0 : i32
    %c0_i32_1 = arith.constant 0 : i32
    return %c0_i32, %c0_i32_0 : i32, i32
  }
  func.func @transform_15(%arg0: i32) -> (i32, i32) {
    %c0_i32 = arith.constant 0 : i32
    %c0_i32_0 = arith.constant 0 : i32
    %c0_i32_1 = arith.constant 0 : i32
    return %c0_i32, %c0_i32_0 : i32, i32
  }
  func.func @transform_16(%arg0: i32) -> (i32, i32) {
    %c0_i32 = arith.constant 0 : i32
    %c0_i32_0 = arith.constant 0 : i32
    %c0_i32_1 = arith.constant 0 : i32
    return %c0_i32, %c0_i32_0 : i32, i32
  }
  func.func @transform_17(%arg0: i32) -> (i32, i32) {
    %c0_i32 = arith.constant 0 : i32
    %c0_i32_0 = arith.constant 0 : i32
    %c0_i32_1 = arith.constant 0 : i32
    return %c0_i32, %c0_i32_0 : i32, i32
  }
  func.func @transform_18(%arg0: i32) -> (i32, i32) {
    %c0_i32 = arith.constant 0 : i32
    %c0_i32_0 = arith.constant 0 : i32
    %c0_i32_1 = arith.constant 0 : i32
    return %c0_i32, %c0_i32_0 : i32, i32
  }
  func.func @transform_19(%arg0: i32) -> (i32, i32) {
    %c0_i32 = arith.constant 0 : i32
    %c0_i32_0 = arith.constant 0 : i32
    %c0_i32_1 = arith.constant 0 : i32
    return %c0_i32, %c0_i32_0 : i32, i32
  }
  func.func @transform_20(%arg0: i32) -> (i32, i32) {
    %c0_i32 = arith.constant 0 : i32
    %c0_i32_0 = arith.constant 0 : i32
    %c0_i32_1 = arith.constant 0 : i32
    return %c0_i32, %c0_i32_0 : i32, i32
  }
  func.func @transform_21(%arg0: i32) -> (i32, i32, i32) {
    %c0_i32 = arith.constant 0 : i32
    %c0_i32_0 = arith.constant 0 : i32
    %c0_i32_1 = arith.constant 0 : i32
    return %arg0, %c0_i32, %c0_i32_0 : i32, i32, i32
  }
  func.func @transform_22(%arg0: i32) -> (i32, i32) {
    %c0_i32 = arith.constant 0 : i32
    %c0_i32_0 = arith.constant 0 : i32
    return %arg0, %c0_i32 : i32, i32
  }
  func.func @transform_23(%arg0: i32) -> (i32, i32) {
    %c0_i32 = arith.constant 0 : i32
    %c0_i32_0 = arith.constant 0 : i32
    return %arg0, %c0_i32 : i32, i32
  }
}

</mosaic_0001>

<llo_original>
// kernel: tpu_custom_call.1
$region0: #{tpu_custom_call.1}
  #allocation0 [shape = 'u32[]', space=smem, size = 0x4, offset = 0x4, fixed_abs, tag = 'smem constant byte address 0x4 - core index']
  #allocation1 [shape = 'u32[72,128]{1,0:T(1,128)}', space=vmem, size = 0x9000, scoped, tag = 'internal scratch']
  %s0 = inlined_call_operand.hbm [shape: f32[32,8,128], index: 0, kind: input, shape index: {}]
  %s1 = inlined_call_operand.vmem [shape: f32[32,8], index: 1, kind: input, shape index: {}]
  %s2 = inlined_call_operand.vmem [shape: f32[32,8], index: 2, kind: input, shape index: {}]
  %s3 = inlined_call_operand.vmem [shape: f32[1,128], index: 3, kind: input, shape index: {}]
  %s4 = inlined_call_operand.vmem [shape: f32[1,128], index: 4, kind: input, shape index: {}]
  %s5 = inlined_call_operand.hbm [shape: bf16[128,384], index: 5, kind: input, shape index: {}]
  %s6 = inlined_call_operand.vmem [shape: f32[1,384], index: 6, kind: input, shape index: {}]
  %s7 = inlined_call_operand.vmem [shape: bf16[128,128], index: 7, kind: input, shape index: {}]
  %s8 = inlined_call_operand.vmem [shape: f32[1,128], index: 8, kind: input, shape index: {}]
  %s9 = inlined_call_operand.vmem [shape: f32[1,128], index: 9, kind: input, shape index: {}]
  %s10 = inlined_call_operand.vmem [shape: f32[1,128], index: 10, kind: input, shape index: {}]
  %s11 = inlined_call_operand.hbm [shape: bf16[128,256], index: 11, kind: input, shape index: {}]
  %s12 = inlined_call_operand.vmem [shape: f32[1,256], index: 12, kind: input, shape index: {}]
  %s13 = inlined_call_operand.hbm [shape: bf16[256,128], index: 13, kind: input, shape index: {}]
  %s14 = inlined_call_operand.vmem [shape: f32[1,128], index: 14, kind: input, shape index: {}]
  %s15 = inlined_call_operand.vmem [shape: f32[1,128], index: 15, kind: input, shape index: {}]
  %s16 = inlined_call_operand.vmem [shape: f32[1,128], index: 16, kind: input, shape index: {}]
  %s17 = inlined_call_operand.hbm [shape: bf16[128,128], index: 17, kind: input, shape index: {}]
  %s18 = inlined_call_operand.vmem [shape: f32[1,128], index: 18, kind: input, shape index: {}]
  %s19 = inlined_call_operand.vmem [shape: f32[1,128], index: 19, kind: input, shape index: {}]
  %s20 = inlined_call_operand.vmem [shape: f32[1,128], index: 20, kind: input, shape index: {}]
  %s21 = inlined_call_operand.hbm [shape: bf16[32,128,128], index: 21, kind: input, shape index: {}]
  %s22 = inlined_call_operand.hbm [shape: f32[32,128], index: 22, kind: input, shape index: {}]
  %s23 = inlined_call_operand.hbm [shape: f32[32,128], index: 23, kind: output, shape index: {}]
  %s24 = sld [smem:[#allocation0]]
  $region153: #{tpu_custom_call.1} parent=0
    _
  %s26 = ssub.s32 1, %s24
  %s27 = scalar_select 0, %s26, %s24
  $region1: #{tpu_custom_call.1} parent=0
    #allocation2 [shape = 'u8[131072]{0}', space=vmem, size = 0x20000, scoped, tag = 'input window, operand 0']
    #allocation3 [shape = 's32[2]{0}', space=sflag, size = 0x8, scoped, tag = 'scoped memory for tpu_custom_call.1']
    #allocation4 [shape = 's32[2]{0}', space=sflag, size = 0x8, scoped, tag = 'scoped memory for tpu_custom_call.1']
    #allocation5 [shape = 'u8[98304]{0}', space=vmem, size = 0x18000, scoped, tag = 'input window, operand 5, single buffered']
    #allocation6 [shape = 's32[1]{0}', space=sflag, size = 0x4, scoped, tag = 'scoped memory for tpu_custom_call.1']
    #allocation7 [shape = 'u8[65536]{0}', space=vmem, size = 0x10000, scoped, tag = 'input window, operand 11, single buffered']
    #allocation8 [shape = 'u8[65536]{0}', space=vmem, size = 0x10000, scoped, tag = 'input window, operand 13, single buffered']
    #allocation9 [shape = 's32[1]{0}', space=sflag, size = 0x4, scoped, tag = 'scoped memory for tpu_custom_call.1']
    #allocation10 [shape = 'u8[32768]{0}', space=vmem, size = 0x8000, scoped, tag = 'input window, operand 17, single buffered']
    #allocation11 [shape = 'u8[1048576]{0}', space=vmem, size = 0x100000, scoped, tag = 'input window, operand 21']
    #allocation12 [shape = 's32[2]{0}', space=sflag, size = 0x8, scoped, tag = 'scoped memory for tpu_custom_call.1']
    #allocation13 [shape = 'u8[16384]{0}', space=vmem, size = 0x4000, scoped, tag = 'input window, operand 22']
    #allocation14 [shape = 'u8[16384]{0}', space=vmem, size = 0x4000, scoped, tag = 'output window, operand 0']
    %28 = vsyncpa [#allocation3], 0
    %s29 = scalar_lea.sflag [#allocation3], 1
    %30 = vsyncpa %s29, 0
    %31 = vsyncpa [#allocation6], 0
    %32 = vsyncpa [#allocation9], 0
    %33 = vsyncpa [#allocation12], 0
    %s34 = scalar_lea.sflag [#allocation12], 1
    %35 = vsyncpa %s34, 0
    %36 = vsyncpa [#allocation4], 0
    %s37 = scalar_lea.sflag [#allocation4], 1
    %38 = vsyncpa %s37, 0
    loop: start=0, step=1, limit=4
    $region2: #{tpu_custom_call.1} parent=1 // loop_pre_header
      _
    $region3: #{tpu_custom_call.1} parent=1 // loop_header
      %s40 = sphi 0, %s44
      %p41 = scmp.ge.s32.totalorder %s40, 4
      %s50 = sphi 0, %s52
      %s53 = sphi 0, %s50
      %s54 = sphi 0, %s53
      %s70 = sphi 0, %s54
      %s76 = sphi 0, %s78
      %s79 = sphi 0, %s76
      %s80 = sphi 0, %s79
      %s96 = sphi 0, %s80
      %s102 = sphi 0, %s104
      %s105 = sphi 0, %s102
      %s106 = sphi 0, %s105
      %s122 = sphi 0, %s106
      %s126 = sphi 0, %s126
      %s128 = sphi 0, %s126
      %s129 = sphi 0, %s128
      %s143 = sphi 0, %s129
      %s147 = sphi 0, %s147
      %s149 = sphi 0, %s147
      %s150 = sphi 0, %s149
      %s164 = sphi 0, %s150
      %s168 = sphi 0, %s168
      %s170 = sphi 0, %s168
      %s171 = sphi 0, %s170
      %s185 = sphi 0, %s171
      %s189 = sphi 0, %s189
      %s191 = sphi 0, %s189
      %s192 = sphi 0, %s191
      %s206 = sphi 0, %s192
      %s210 = sphi 0, %s210
      %s212 = sphi 0, %s210
      %s213 = sphi 0, %s212
      %s227 = sphi 0, %s213
      %s231 = sphi 0, %s231
      %s233 = sphi 0, %s231
      %s234 = sphi 0, %s233
      %s248 = sphi 0, %s234
      %s252 = sphi 0, %s252
      %s254 = sphi 0, %s252
      %s255 = sphi 0, %s254
      %s269 = sphi 0, %s255
      %s273 = sphi 0, %s273
      %s275 = sphi 0, %s273
      %s276 = sphi 0, %s275
      %s290 = sphi 0, %s276
      %s294 = sphi 0, %s294
      %s296 = sphi 0, %s294
      %s297 = sphi 0, %s296
      %s311 = sphi 0, %s297
      %s315 = sphi 0, %s315
      %s317 = sphi 0, %s315
      %s318 = sphi 0, %s317
      %s332 = sphi 0, %s318
      %s336 = sphi 0, %s336
      %s338 = sphi 0, %s336
      %s339 = sphi 0, %s338
      %s353 = sphi 0, %s339
      %s357 = sphi 0, %s357
      %s359 = sphi 0, %s357
      %s360 = sphi 0, %s359
      %s374 = sphi 0, %s360
      %s378 = sphi 0, %s378
      %s380 = sphi 0, %s378
      %s381 = sphi 0, %s380
      %s395 = sphi 0, %s381
      %s399 = sphi 0, %s399
      %s401 = sphi 0, %s399
      %s402 = sphi 0, %s401
      %s416 = sphi 0, %s402
      %s420 = sphi 0, %s420
      %s422 = sphi 0, %s420
      %s423 = sphi 0, %s422
      %s437 = sphi 0, %s423
      %s441 = sphi 0, %s441
      %s443 = sphi 0, %s441
      %s444 = sphi 0, %s443
      %s458 = sphi 0, %s444
      %s462 = sphi 0, %s462
      %s464 = sphi 0, %s462
      %s465 = sphi 0, %s464
      %s479 = sphi 0, %s465
      %s483 = sphi 0, %s483
      %s485 = sphi 0, %s483
      %s486 = sphi 0, %s485
      %s500 = sphi 0, %s486
      %s506 = sphi 0, %s508
      %s509 = sphi 0, %s506
      %s510 = sphi 0, %s509
      %s526 = sphi 0, %s510
      %s532 = sphi 0, %s534
      %s535 = sphi 0, %s532
      %s536 = sphi 0, %s535
      %s552 = sphi 0, %s536
      %s558 = sphi 0, %s560
      %s561 = sphi 0, %s558
      %s562 = sphi 0, %s561
      %s578 = sphi 0, %s562
    $region4: #{tpu_custom_call.1} parent=1 // loop_header_branch
      %43 = sbr.rel (%p41) target = $region8
    $region5: #{tpu_custom_call.1} parent=1 // loop_body
      %s45 = ssub.s32 %s40, 1
      %s46 = ssub.s32 %s40, 2
      %s47 = sadd.s32 %s40, 1
      %s48 = ssub.s32 %s40, %s47
      %p49 = scmp.eq.s32.totalorder %s48, 0
      %s51 = sadd.s32 %s50, 1
      %s52 = scalar_select %p49, %s50, %s51
      %p55 = pneg %p49
      %p56 = scmp.eq.s32.totalorder %s40, 1
      %p57 = por %p55, %p56
      %p58 = scmp.ne.s32.totalorder %s50, %s53
      %p59 = scmp.eq.s32.totalorder %s40, 0
      %p60 = por %p58, %p59
      %p61 = scmp.ne.s32.totalorder %s50, %s53
      %p62 = scmp.eq.s32.totalorder %s45, 1
      %p63 = por %p61, %p62
      %p64 = scmp.ne.s32.totalorder %s53, %s54
      %p65 = scmp.eq.s32.totalorder %s45, 0
      %p66 = por %p64, %p65
      %p67 = scmp.ne.s32.totalorder %s53, %s54
      %p68 = scmp.eq.s32.totalorder %s46, 1
      %p69 = por %p67, %p68
      %p71 = scmp.ne.s32.totalorder %s54, %s70
      %p72 = scmp.eq.s32.totalorder %s46, 0
      %p73 = por %p71, %p72
      %s74 = ssub.s32 %s40, %s47
      %p75 = scmp.eq.s32.totalorder %s74, 0
      %s77 = sadd.s32 %s76, 1
      %s78 = scalar_select %p75, %s76, %s77
      %p81 = pneg %p75
      %p82 = scmp.eq.s32.totalorder %s40, 1
      %p83 = por %p81, %p82
      %p84 = scmp.ne.s32.totalorder %s76, %s79
      %p85 = scmp.eq.s32.totalorder %s40, 0
      %p86 = por %p84, %p85
      %p87 = scmp.ne.s32.totalorder %s76, %s79
      %p88 = scmp.eq.s32.totalorder %s45, 1
      %p89 = por %p87, %p88
      %p90 = scmp.ne.s32.totalorder %s79, %s80
      %p91 = scmp.eq.s32.totalorder %s45, 0
      %p92 = por %p90, %p91
      %p93 = scmp.ne.s32.totalorder %s79, %s80
      %p94 = scmp.eq.s32.totalorder %s46, 1
      %p95 = por %p93, %p94
      %p97 = scmp.ne.s32.totalorder %s80, %s96
      %p98 = scmp.eq.s32.totalorder %s46, 0
      %p99 = por %p97, %p98
      %s100 = ssub.s32 %s40, %s47
      %p101 = scmp.eq.s32.totalorder %s100, 0
      %s103 = sadd.s32 %s102, 1
      %s104 = scalar_select %p101, %s102, %s103
      %p107 = pneg %p101
      %p108 = scmp.eq.s32.totalorder %s40, 1
      %p109 = por %p107, %p108
      %p110 = scmp.ne.s32.totalorder %s102, %s105
      %p111 = scmp.eq.s32.totalorder %s40, 0
      %p112 = por %p110, %p111
      %p113 = scmp.ne.s32.totalorder %s102, %s105
      %p114 = scmp.eq.s32.totalorder %s45, 1
      %p115 = por %p113, %p114
      %p116 = scmp.ne.s32.totalorder %s105, %s106
      %p117 = scmp.eq.s32.totalorder %s45, 0
      %p118 = por %p116, %p117
      %p119 = scmp.ne.s32.totalorder %s105, %s106
      %p120 = scmp.eq.s32.totalorder %s46, 1
      %p121 = por %p119, %p120
      %p123 = scmp.ne.s32.totalorder %s106, %s122
      %p124 = scmp.eq.s32.totalorder %s46, 0
      %p125 = por %p123, %p124
      %s127 = sadd.s32 %s126, 1
      %p130 = scmp.eq.s32.totalorder %s40, 1
      %p131 = scmp.ne.s32.totalorder %s126, %s128
      %p132 = scmp.eq.s32.totalorder %s40, 0
      %p133 = por %p131, %p132
      %p134 = scmp.ne.s32.totalorder %s126, %s128
      %p135 = scmp.eq.s32.totalorder %s45, 1
      %p136 = por %p134, %p135
      %p137 = scmp.ne.s32.totalorder %s128, %s129
      %p138 = scmp.eq.s32.totalorder %s45, 0
      %p139 = por %p137, %p138
      %p140 = scmp.ne.s32.totalorder %s128, %s129
      %p141 = scmp.eq.s32.totalorder %s46, 1
      %p142 = por %p140, %p141
      %p144 = scmp.ne.s32.totalorder %s129, %s143
      %p145 = scmp.eq.s32.totalorder %s46, 0
      %p146 = por %p144, %p145
      %s148 = sadd.s32 %s147, 1
      %p151 = scmp.eq.s32.totalorder %s40, 1
      %p152 = scmp.ne.s32.totalorder %s147, %s149
      %p153 = scmp.eq.s32.totalorder %s40, 0
      %p154 = por %p152, %p153
      %p155 = scmp.ne.s32.totalorder %s147, %s149
      %p156 = scmp.eq.s32.totalorder %s45, 1
      %p157 = por %p155, %p156
      %p158 = scmp.ne.s32.totalorder %s149, %s150
      %p159 = scmp.eq.s32.totalorder %s45, 0
      %p160 = por %p158, %p159
      %p161 = scmp.ne.s32.totalorder %s149, %s150
      %p162 = scmp.eq.s32.totalorder %s46, 1
      %p163 = por %p161, %p162
      %p165 = scmp.ne.s32.totalorder %s150, %s164
      %p166 = scmp.eq.s32.totalorder %s46, 0
      %p167 = por %p165, %p166
      %s169 = sadd.s32 %s168, 1
      %p172 = scmp.eq.s32.totalorder %s40, 1
      %p173 = scmp.ne.s32.totalorder %s168, %s170
      %p174 = scmp.eq.s32.totalorder %s40, 0
      %p175 = por %p173, %p174
      %p176 = scmp.ne.s32.totalorder %s168, %s170
      %p177 = scmp.eq.s32.totalorder %s45, 1
      %p178 = por %p176, %p177
      %p179 = scmp.ne.s32.totalorder %s170, %s171
      %p180 = scmp.eq.s32.totalorder %s45, 0
      %p181 = por %p179, %p180
      %p182 = scmp.ne.s32.totalorder %s170, %s171
      %p183 = scmp.eq.s32.totalorder %s46, 1
      %p184 = por %p182, %p183
      %p186 = scmp.ne.s32.totalorder %s171, %s185
      %p187 = scmp.eq.s32.totalorder %s46, 0
      %p188 = por %p186, %p187
      %s190 = sadd.s32 %s189, 1
      %p193 = scmp.eq.s32.totalorder %s40, 1
      %p194 = scmp.ne.s32.totalorder %s189, %s191
      %p195 = scmp.eq.s32.totalorder %s40, 0
      %p196 = por %p194, %p195
      %p197 = scmp.ne.s32.totalorder %s189, %s191
      %p198 = scmp.eq.s32.totalorder %s45, 1
      %p199 = por %p197, %p198
      %p200 = scmp.ne.s32.totalorder %s191, %s192
      %p201 = scmp.eq.s32.totalorder %s45, 0
      %p202 = por %p200, %p201
      %p203 = scmp.ne.s32.totalorder %s191, %s192
      %p204 = scmp.eq.s32.totalorder %s46, 1
      %p205 = por %p203, %p204
      %p207 = scmp.ne.s32.totalorder %s192, %s206
      %p208 = scmp.eq.s32.totalorder %s46, 0
      %p209 = por %p207, %p208
      %s211 = sadd.s32 %s210, 1
      %p214 = scmp.eq.s32.totalorder %s40, 1
      %p215 = scmp.ne.s32.totalorder %s210, %s212
      %p216 = scmp.eq.s32.totalorder %s40, 0
      %p217 = por %p215, %p216
      %p218 = scmp.ne.s32.totalorder %s210, %s212
      %p219 = scmp.eq.s32.totalorder %s45, 1
      %p220 = por %p218, %p219
      %p221 = scmp.ne.s32.totalorder %s212, %s213
      %p222 = scmp.eq.s32.totalorder %s45, 0
      %p223 = por %p221, %p222
      %p224 = scmp.ne.s32.totalorder %s212, %s213
      %p225 = scmp.eq.s32.totalorder %s46, 1
      %p226 = por %p224, %p225
      %p228 = scmp.ne.s32.totalorder %s213, %s227
      %p229 = scmp.eq.s32.totalorder %s46, 0
      %p230 = por %p228, %p229
      %s232 = sadd.s32 %s231, 1
      %p235 = scmp.eq.s32.totalorder %s40, 1
      %p236 = scmp.ne.s32.totalorder %s231, %s233
      %p237 = scmp.eq.s32.totalorder %s40, 0
      %p238 = por %p236, %p237
      %p239 = scmp.ne.s32.totalorder %s231, %s233
      %p240 = scmp.eq.s32.totalorder %s45, 1
      %p241 = por %p239, %p240
      %p242 = scmp.ne.s32.totalorder %s233, %s234
      %p243 = scmp.eq.s32.totalorder %s45, 0
      %p244 = por %p242, %p243
      %p245 = scmp.ne.s32.totalorder %s233, %s234
      %p246 = scmp.eq.s32.totalorder %s46, 1
      %p247 = por %p245, %p246
      %p249 = scmp.ne.s32.totalorder %s234, %s248
      %p250 = scmp.eq.s32.totalorder %s46, 0
      %p251 = por %p249, %p250
      %s253 = sadd.s32 %s252, 1
      %p256 = scmp.eq.s32.totalorder %s40, 1
      %p257 = scmp.ne.s32.totalorder %s252, %s254
      %p258 = scmp.eq.s32.totalorder %s40, 0
      %p259 = por %p257, %p258
      %p260 = scmp.ne.s32.totalorder %s252, %s254
      %p261 = scmp.eq.s32.totalorder %s45, 1
      %p262 = por %p260, %p261
      %p263 = scmp.ne.s32.totalorder %s254, %s255
      %p264 = scmp.eq.s32.totalorder %s45, 0
      %p265 = por %p263, %p264
      %p266 = scmp.ne.s32.totalorder %s254, %s255
      %p267 = scmp.eq.s32.totalorder %s46, 1
      %p268 = por %p266, %p267
      %p270 = scmp.ne.s32.totalorder %s255, %s269
      %p271 = scmp.eq.s32.totalorder %s46, 0
      %p272 = por %p270, %p271
      %s274 = sadd.s32 %s273, 1
      %p277 = scmp.eq.s32.totalorder %s40, 1
      %p278 = scmp.ne.s32.totalorder %s273, %s275
      %p279 = scmp.eq.s32.totalorder %s40, 0
      %p280 = por %p278, %p279
      %p281 = scmp.ne.s32.totalorder %s273, %s275
      %p282 = scmp.eq.s32.totalorder %s45, 1
      %p283 = por %p281, %p282
      %p284 = scmp.ne.s32.totalorder %s275, %s276
      %p285 = scmp.eq.s32.totalorder %s45, 0
      %p286 = por %p284, %p285
      %p287 = scmp.ne.s32.totalorder %s275, %s276
      %p288 = scmp.eq.s32.totalorder %s46, 1
      %p289 = por %p287, %p288
      %p291 = scmp.ne.s32.totalorder %s276, %s290
      %p292 = scmp.eq.s32.totalorder %s46, 0
      %p293 = por %p291, %p292
      %s295 = sadd.s32 %s294, 1
      %p298 = scmp.eq.s32.totalorder %s40, 1
      %p299 = scmp.ne.s32.totalorder %s294, %s296
      %p300 = scmp.eq.s32.totalorder %s40, 0
      %p301 = por %p299, %p300
      %p302 = scmp.ne.s32.totalorder %s294, %s296
      %p303 = scmp.eq.s32.totalorder %s45, 1
      %p304 = por %p302, %p303
      %p305 = scmp.ne.s32.totalorder %s296, %s297
      %p306 = scmp.eq.s32.totalorder %s45, 0
      %p307 = por %p305, %p306
      %p308 = scmp.ne.s32.totalorder %s296, %s297
      %p309 = scmp.eq.s32.totalorder %s46, 1
      %p310 = por %p308, %p309
      %p312 = scmp.ne.s32.totalorder %s297, %s311
      %p313 = scmp.eq.s32.totalorder %s46, 0
      %p314 = por %p312, %p313
      %s316 = sadd.s32 %s315, 1
      %p319 = scmp.eq.s32.totalorder %s40, 1
      %p320 = scmp.ne.s32.totalorder %s315, %s317
      %p321 = scmp.eq.s32.totalorder %s40, 0
      %p322 = por %p320, %p321
      %p323 = scmp.ne.s32.totalorder %s315, %s317
      %p324 = scmp.eq.s32.totalorder %s45, 1
      %p325 = por %p323, %p324
      %p326 = scmp.ne.s32.totalorder %s317, %s318
      %p327 = scmp.eq.s32.totalorder %s45, 0
      %p328 = por %p326, %p327
      %p329 = scmp.ne.s32.totalorder %s317, %s318
      %p330 = scmp.eq.s32.totalorder %s46, 1
      %p331 = por %p329, %p330
      %p333 = scmp.ne.s32.totalorder %s318, %s332
      %p334 = scmp.eq.s32.totalorder %s46, 0
      %p335 = por %p333, %p334
      %s337 = sadd.s32 %s336, 1
      %p340 = scmp.eq.s32.totalorder %s40, 1
      %p341 = scmp.ne.s32.totalorder %s336, %s338
      %p342 = scmp.eq.s32.totalorder %s40, 0
      %p343 = por %p341, %p342
      %p344 = scmp.ne.s32.totalorder %s336, %s338
      %p345 = scmp.eq.s32.totalorder %s45, 1
      %p346 = por %p344, %p345
      %p347 = scmp.ne.s32.totalorder %s338, %s339
      %p348 = scmp.eq.s32.totalorder %s45, 0
      %p349 = por %p347, %p348
      %p350 = scmp.ne.s32.totalorder %s338, %s339
      %p351 = scmp.eq.s32.totalorder %s46, 1
      %p352 = por %p350, %p351
      %p354 = scmp.ne.s32.totalorder %s339, %s353
      %p355 = scmp.eq.s32.totalorder %s46, 0
      %p356 = por %p354, %p355
      %s358 = sadd.s32 %s357, 1
      %p361 = scmp.eq.s32.totalorder %s40, 1
      %p362 = scmp.ne.s32.totalorder %s357, %s359
      %p363 = scmp.eq.s32.totalorder %s40, 0
      %p364 = por %p362, %p363
      %p365 = scmp.ne.s32.totalorder %s357, %s359
      %p366 = scmp.eq.s32.totalorder %s45, 1
      %p367 = por %p365, %p366
      %p368 = scmp.ne.s32.totalorder %s359, %s360
      %p369 = scmp.eq.s32.totalorder %s45, 0
      %p370 = por %p368, %p369
      %p371 = scmp.ne.s32.totalorder %s359, %s360
      %p372 = scmp.eq.s32.totalorder %s46, 1
      %p373 = por %p371, %p372
      %p375 = scmp.ne.s32.totalorder %s360, %s374
      %p376 = scmp.eq.s32.totalorder %s46, 0
      %p377 = por %p375, %p376
      %s379 = sadd.s32 %s378, 1
      %p382 = scmp.eq.s32.totalorder %s40, 1
      %p383 = scmp.ne.s32.totalorder %s378, %s380
      %p384 = scmp.eq.s32.totalorder %s40, 0
      %p385 = por %p383, %p384
      %p386 = scmp.ne.s32.totalorder %s378, %s380
      %p387 = scmp.eq.s32.totalorder %s45, 1
      %p388 = por %p386, %p387
      %p389 = scmp.ne.s32.totalorder %s380, %s381
      %p390 = scmp.eq.s32.totalorder %s45, 0
      %p391 = por %p389, %p390
      %p392 = scmp.ne.s32.totalorder %s380, %s381
      %p393 = scmp.eq.s32.totalorder %s46, 1
      %p394 = por %p392, %p393
      %p396 = scmp.ne.s32.totalorder %s381, %s395
      %p397 = scmp.eq.s32.totalorder %s46, 0
      %p398 = por %p396, %p397
      %s400 = sadd.s32 %s399, 1
      %p403 = scmp.eq.s32.totalorder %s40, 1
      %p404 = scmp.ne.s32.totalorder %s399, %s401
      %p405 = scmp.eq.s32.totalorder %s40, 0
      %p406 = por %p404, %p405
      %p407 = scmp.ne.s32.totalorder %s399, %s401
      %p408 = scmp.eq.s32.totalorder %s45, 1
      %p409 = por %p407, %p408
      %p410 = scmp.ne.s32.totalorder %s401, %s402
      %p411 = scmp.eq.s32.totalorder %s45, 0
      %p412 = por %p410, %p411
      %p413 = scmp.ne.s32.totalorder %s401, %s402
      %p414 = scmp.eq.s32.totalorder %s46, 1
      %p415 = por %p413, %p414
      %p417 = scmp.ne.s32.totalorder %s402, %s416
      %p418 = scmp.eq.s32.totalorder %s46, 0
      %p419 = por %p417, %p418
      %s421 = sadd.s32 %s420, 1
      %p424 = scmp.eq.s32.totalorder %s40, 1
      %p425 = scmp.ne.s32.totalorder %s420, %s422
      %p426 = scmp.eq.s32.totalorder %s40, 0
      %p427 = por %p425, %p426
      %p428 = scmp.ne.s32.totalorder %s420, %s422
      %p429 = scmp.eq.s32.totalorder %s45, 1
      %p430 = por %p428, %p429
      %p431 = scmp.ne.s32.totalorder %s422, %s423
      %p432 = scmp.eq.s32.totalorder %s45, 0
      %p433 = por %p431, %p432
      %p434 = scmp.ne.s32.totalorder %s422, %s423
      %p435 = scmp.eq.s32.totalorder %s46, 1
      %p436 = por %p434, %p435
      %p438 = scmp.ne.s32.totalorder %s423, %s437
      %p439 = scmp.eq.s32.totalorder %s46, 0
      %p440 = por %p438, %p439
      %s442 = sadd.s32 %s441, 1
      %p445 = scmp.eq.s32.totalorder %s40, 1
      %p446 = scmp.ne.s32.totalorder %s441, %s443
      %p447 = scmp.eq.s32.totalorder %s40, 0
      %p448 = por %p446, %p447
      %p449 = scmp.ne.s32.totalorder %s441, %s443
      %p450 = scmp.eq.s32.totalorder %s45, 1
      %p451 = por %p449, %p450
      %p452 = scmp.ne.s32.totalorder %s443, %s444
      %p453 = scmp.eq.s32.totalorder %s45, 0
      %p454 = por %p452, %p453
      %p455 = scmp.ne.s32.totalorder %s443, %s444
      %p456 = scmp.eq.s32.totalorder %s46, 1
      %p457 = por %p455, %p456
      %p459 = scmp.ne.s32.totalorder %s444, %s458
      %p460 = scmp.eq.s32.totalorder %s46, 0
      %p461 = por %p459, %p460
      %s463 = sadd.s32 %s462, 1
      %p466 = scmp.eq.s32.totalorder %s40, 1
      %p467 = scmp.ne.s32.totalorder %s462, %s464
      %p468 = scmp.eq.s32.totalorder %s40, 0
      %p469 = por %p467, %p468
      %p470 = scmp.ne.s32.totalorder %s462, %s464
      %p471 = scmp.eq.s32.totalorder %s45, 1
      %p472 = por %p470, %p471
      %p473 = scmp.ne.s32.totalorder %s464, %s465
      %p474 = scmp.eq.s32.totalorder %s45, 0
      %p475 = por %p473, %p474
      %p476 = scmp.ne.s32.totalorder %s464, %s465
      %p477 = scmp.eq.s32.totalorder %s46, 1
      %p478 = por %p476, %p477
      %p480 = scmp.ne.s32.totalorder %s465, %s479
      %p481 = scmp.eq.s32.totalorder %s46, 0
      %p482 = por %p480, %p481
      %s484 = sadd.s32 %s483, 1
      %p487 = scmp.eq.s32.totalorder %s40, 1
      %p488 = scmp.ne.s32.totalorder %s483, %s485
      %p489 = scmp.eq.s32.totalorder %s40, 0
      %p490 = por %p488, %p489
      %p491 = scmp.ne.s32.totalorder %s483, %s485
      %p492 = scmp.eq.s32.totalorder %s45, 1
      %p493 = por %p491, %p492
      %p494 = scmp.ne.s32.totalorder %s485, %s486
      %p495 = scmp.eq.s32.totalorder %s45, 0
      %p496 = por %p494, %p495
      %p497 = scmp.ne.s32.totalorder %s485, %s486
      %p498 = scmp.eq.s32.totalorder %s46, 1
      %p499 = por %p497, %p498
      %p501 = scmp.ne.s32.totalorder %s486, %s500
      %p502 = scmp.eq.s32.totalorder %s46, 0
      %p503 = por %p501, %p502
      %s504 = ssub.s32 %s40, %s47
      %p505 = scmp.eq.s32.totalorder %s504, 0
      %s507 = sadd.s32 %s506, 1
      %s508 = scalar_select %p505, %s506, %s507
      %p511 = pneg %p505
      %p512 = scmp.eq.s32.totalorder %s40, 1
      %p513 = por %p511, %p512
      %p514 = scmp.ne.s32.totalorder %s506, %s509
      %p515 = scmp.eq.s32.totalorder %s40, 0
      %p516 = por %p514, %p515
      %p517 = scmp.ne.s32.totalorder %s506, %s509
      %p518 = scmp.eq.s32.totalorder %s45, 1
      %p519 = por %p517, %p518
      %p520 = scmp.ne.s32.totalorder %s509, %s510
      %p521 = scmp.eq.s32.totalorder %s45, 0
      %p522 = por %p520, %p521
      %p523 = scmp.ne.s32.totalorder %s509, %s510
      %p524 = scmp.eq.s32.totalorder %s46, 1
      %p525 = por %p523, %p524
      %p527 = scmp.ne.s32.totalorder %s510, %s526
      %p528 = scmp.eq.s32.totalorder %s46, 0
      %p529 = por %p527, %p528
      %s530 = ssub.s32 %s40, %s47
      %p531 = scmp.eq.s32.totalorder %s530, 0
      %s533 = sadd.s32 %s532, 1
      %s534 = scalar_select %p531, %s532, %s533
      %p537 = pneg %p531
      %p538 = scmp.eq.s32.totalorder %s40, 1
      %p539 = por %p537, %p538
      %p540 = scmp.ne.s32.totalorder %s532, %s535
      %p541 = scmp.eq.s32.totalorder %s40, 0
      %p542 = por %p540, %p541
      %p543 = scmp.ne.s32.totalorder %s532, %s535
      %p544 = scmp.eq.s32.totalorder %s45, 1
      %p545 = por %p543, %p544
      %p546 = scmp.ne.s32.totalorder %s535, %s536
      %p547 = scmp.eq.s32.totalorder %s45, 0
      %p548 = por %p546, %p547
      %p549 = scmp.ne.s32.totalorder %s535, %s536
      %p550 = scmp.eq.s32.totalorder %s46, 1
      %p551 = por %p549, %p550
      %p553 = scmp.ne.s32.totalorder %s536, %s552
      %p554 = scmp.eq.s32.totalorder %s46, 0
      %p555 = por %p553, %p554
      %s556 = ssub.s32 %s40, %s47
      %p557 = scmp.eq.s32.totalorder %s556, 0
      %s559 = sadd.s32 %s558, 1
      %s560 = scalar_select %p557, %s558, %s559
      %p563 = pneg %p557
      %p564 = scmp.eq.s32.totalorder %s40, 1
      %p565 = por %p563, %p564
      %p566 = scmp.ne.s32.totalorder %s558, %s561
      %p567 = scmp.eq.s32.totalorder %s40, 0
      %p568 = por %p566, %p567
      %p569 = scmp.ne.s32.totalorder %s558, %s561
      %p570 = scmp.eq.s32.totalorder %s45, 1
      %p571 = por %p569, %p570
      %p572 = scmp.ne.s32.totalorder %s561, %s562
      %p573 = scmp.eq.s32.totalorder %s45, 0
      %p574 = por %p572, %p573
      %p575 = scmp.ne.s32.totalorder %s561, %s562
      %p576 = scmp.eq.s32.totalorder %s46, 1
      %p577 = por %p575, %p576
      %p579 = scmp.ne.s32.totalorder %s562, %s578
      %p580 = scmp.eq.s32.totalorder %s46, 0
      %p581 = por %p579, %p580
      %p582 = scmp.le.s32.totalorder 1, %s40
      %p583 = scmp.lt.s32.totalorder %s40, 3
      %p584 = pnand %p582, %p583
      %p585 = pneg %p584
      // Predicated region
      $region9: #{tpu_custom_call.1} parent=5 // pred_check
        _
      $region10: #{tpu_custom_call.1} parent=5 // pred_check_branch
        %587 = sbr.rel (%p584) target = $region12
      $region11: #{tpu_custom_call.1} parent=5 // pred_region
        %s588 = ssub.s32 %s40, 1
        // Predicated region
        $region13: #{tpu_custom_call.1} parent=11 // pred_check
          %p589 = pneg %p139
        $region14: #{tpu_custom_call.1} parent=11 // pred_check_branch
          %591 = sbr.rel (%p589) target = $region16
        $region15: #{tpu_custom_call.1} parent=11 // pred_region
          _
        $region16: #{tpu_custom_call.1} parent=11 // pred_fallthru
          _
        // Predicated region
        $region17: #{tpu_custom_call.1} parent=11 // pred_check
          %p592 = pneg %p160
        $region18: #{tpu_custom_call.1} parent=11 // pred_check_branch
          %594 = sbr.rel (%p592) target = $region20
        $region19: #{tpu_custom_call.1} parent=11 // pred_region
          _
        $region20: #{tpu_custom_call.1} parent=11 // pred_fallthru
          _
        // Predicated region
        $region21: #{tpu_custom_call.1} parent=11 // pred_check
          %p595 = pneg %p181
        $region22: #{tpu_custom_call.1} parent=11 // pred_check_branch
          %597 = sbr.rel (%p595) target = $region24
        $region23: #{tpu_custom_call.1} parent=11 // pred_region
          %599 = vsyncadd [#allocation6], 0
          %s600 = sshll.u32 %s5, 4
          %s601 = int_to_ptr.hbm [resolvable:$true] %s600
          %s602 = sshll.u32 [#allocation5], 4
          %s603 = int_to_ptr.vmem [resolvable:$true] %s602
          %608 = dma.hbm_to_vmem [thread:$0]  %s601, 3072, %s603, [#allocation6], 192, 192, 12
        $region24: #{tpu_custom_call.1} parent=11 // pred_fallthru
          _
        // Predicated region
        $region25: #{tpu_custom_call.1} parent=11 // pred_check
          %p609 = pneg %p202
        $region26: #{tpu_custom_call.1} parent=11 // pred_check_branch
          %611 = sbr.rel (%p609) target = $region28
        $region27: #{tpu_custom_call.1} parent=11 // pred_region
          _
        $region28: #{tpu_custom_call.1} parent=11 // pred_fallthru
          _
        // Predicated region
        $region29: #{tpu_custom_call.1} parent=11 // pred_check
          %p612 = pneg %p223
        $region30: #{tpu_custom_call.1} parent=11 // pred_check_branch
          %614 = sbr.rel (%p612) target = $region32
        $region31: #{tpu_custom_call.1} parent=11 // pred_region
          _
        $region32: #{tpu_custom_call.1} parent=11 // pred_fallthru
          _
        // Predicated region
        $region33: #{tpu_custom_call.1} parent=11 // pred_check
          %p615 = pneg %p244
        $region34: #{tpu_custom_call.1} parent=11 // pred_check_branch
          %617 = sbr.rel (%p615) target = $region36
        $region35: #{tpu_custom_call.1} parent=11 // pred_region
          _
        $region36: #{tpu_custom_call.1} parent=11 // pred_fallthru
          _
        // Predicated region
        $region37: #{tpu_custom_call.1} parent=11 // pred_check
          %p618 = pneg %p265
        $region38: #{tpu_custom_call.1} parent=11 // pred_check_branch
          %620 = sbr.rel (%p618) target = $region40
        $region39: #{tpu_custom_call.1} parent=11 // pred_region
          _
        $region40: #{tpu_custom_call.1} parent=11 // pred_fallthru
          _
        // Predicated region
        $region41: #{tpu_custom_call.1} parent=11 // pred_check
          %p621 = pneg %p286
        $region42: #{tpu_custom_call.1} parent=11 // pred_check_branch
          %623 = sbr.rel (%p621) target = $region44
        $region43: #{tpu_custom_call.1} parent=11 // pred_region
          _
        $region44: #{tpu_custom_call.1} parent=11 // pred_fallthru
          _
        // Predicated region
        $region45: #{tpu_custom_call.1} parent=11 // pred_check
          %p624 = pneg %p307
        $region46: #{tpu_custom_call.1} parent=11 // pred_check_branch
          %626 = sbr.rel (%p624) target = $region48
        $region47: #{tpu_custom_call.1} parent=11 // pred_region
          %628 = vsyncadd [#allocation6], 0
          %s629 = sshll.u32 %s11, 4
          %s630 = int_to_ptr.hbm [resolvable:$true] %s629
          %s631 = sshll.u32 [#allocation7], 4
          %s632 = int_to_ptr.vmem [resolvable:$true] %s631
          %637 = dma.hbm_to_vmem [thread:$0]  %s630, 2048, %s632, [#allocation6], 128, 128, 8
        $region48: #{tpu_custom_call.1} parent=11 // pred_fallthru
          _
        // Predicated region
        $region49: #{tpu_custom_call.1} parent=11 // pred_check
          %p638 = pneg %p328
        $region50: #{tpu_custom_call.1} parent=11 // pred_check_branch
          %640 = sbr.rel (%p638) target = $region52
        $region51: #{tpu_custom_call.1} parent=11 // pred_region
          _
        $region52: #{tpu_custom_call.1} parent=11 // pred_fallthru
          _
        // Predicated region
        $region53: #{tpu_custom_call.1} parent=11 // pred_check
          %p641 = pneg %p349
        $region54: #{tpu_custom_call.1} parent=11 // pred_check_branch
          %643 = sbr.rel (%p641) target = $region56
        $region55: #{tpu_custom_call.1} parent=11 // pred_region
          %645 = vsyncadd [#allocation9], 0
          %s646 = sshll.u32 %s13, 4
          %s647 = int_to_ptr.hbm [resolvable:$true] %s646
          %s648 = sshll.u32 [#allocation8], 4
          %s649 = int_to_ptr.vmem [resolvable:$true] %s648
          %654 = dma.hbm_to_vmem [thread:$0]  %s647, 2048, %s649, [#allocation9], 64, 64, 4
        $region56: #{tpu_custom_call.1} parent=11 // pred_fallthru
          _
        // Predicated region
        $region57: #{tpu_custom_call.1} parent=11 // pred_check
          %p655 = pneg %p370
        $region58: #{tpu_custom_call.1} parent=11 // pred_check_branch
          %657 = sbr.rel (%p655) target = $region60
        $region59: #{tpu_custom_call.1} parent=11 // pred_region
          _
        $region60: #{tpu_custom_call.1} parent=11 // pred_fallthru
          _
        // Predicated region
        $region61: #{tpu_custom_call.1} parent=11 // pred_check
          %p658 = pneg %p391
        $region62: #{tpu_custom_call.1} parent=11 // pred_check_branch
          %660 = sbr.rel (%p658) target = $region64
        $region63: #{tpu_custom_call.1} parent=11 // pred_region
          _
        $region64: #{tpu_custom_call.1} parent=11 // pred_fallthru
          _
        // Predicated region
        $region65: #{tpu_custom_call.1} parent=11 // pred_check
          %p661 = pneg %p412
        $region66: #{tpu_custom_call.1} parent=11 // pred_check_branch
          %663 = sbr.rel (%p661) target = $region68
        $region67: #{tpu_custom_call.1} parent=11 // pred_region
          _
        $region68: #{tpu_custom_call.1} parent=11 // pred_fallthru
          _
        // Predicated region
        $region69: #{tpu_custom_call.1} parent=11 // pred_check
          %p664 = pneg %p433
        $region70: #{tpu_custom_call.1} parent=11 // pred_check_branch
          %666 = sbr.rel (%p664) target = $region72
        $region71: #{tpu_custom_call.1} parent=11 // pred_region
          %668 = vsyncadd [#allocation9], 0
          %s669 = sshll.u32 %s17, 4
          %s670 = int_to_ptr.hbm [resolvable:$true] %s669
          %s671 = sshll.u32 [#allocation10], 4
          %s672 = int_to_ptr.vmem [resolvable:$true] %s671
          %677 = dma.hbm_to_vmem [thread:$0]  %s670, 1024, %s672, [#allocation9], 64, 64, 4
        $region72: #{tpu_custom_call.1} parent=11 // pred_fallthru
          _
        // Predicated region
        $region73: #{tpu_custom_call.1} parent=11 // pred_check
          %p678 = pneg %p454
        $region74: #{tpu_custom_call.1} parent=11 // pred_check_branch
          %680 = sbr.rel (%p678) target = $region76
        $region75: #{tpu_custom_call.1} parent=11 // pred_region
          _
        $region76: #{tpu_custom_call.1} parent=11 // pred_fallthru
          _
        // Predicated region
        $region77: #{tpu_custom_call.1} parent=11 // pred_check
          %p681 = pneg %p475
        $region78: #{tpu_custom_call.1} parent=11 // pred_check_branch
          %683 = sbr.rel (%p681) target = $region80
        $region79: #{tpu_custom_call.1} parent=11 // pred_region
          _
        $region80: #{tpu_custom_call.1} parent=11 // pred_fallthru
          _
        // Predicated region
        $region81: #{tpu_custom_call.1} parent=11 // pred_check
          %p684 = pneg %p496
        $region82: #{tpu_custom_call.1} parent=11 // pred_check_branch
          %686 = sbr.rel (%p684) target = $region84
        $region83: #{tpu_custom_call.1} parent=11 // pred_region
          _
        $region84: #{tpu_custom_call.1} parent=11 // pred_fallthru
          _
      $region12: #{tpu_custom_call.1} parent=5 // pred_fallthru
        _
      %p687 = scmp.lt.s32.totalorder %s40, 2
      // Predicated region
      $region85: #{tpu_custom_call.1} parent=5 // pred_check
        %p688 = pneg %p687
      $region86: #{tpu_custom_call.1} parent=5 // pred_check_branch
        %690 = sbr.rel (%p688) target = $region88
      $region87: #{tpu_custom_call.1} parent=5 // pred_region
        // Predicated region
        $region89: #{tpu_custom_call.1} parent=87 // pred_check
          %p691 = pneg %p60
        $region90: #{tpu_custom_call.1} parent=87 // pred_check_branch
          %693 = sbr.rel (%p691) target = $region92
        $region91: #{tpu_custom_call.1} parent=87 // pred_region
          %s694 = sand.u32 %s50, 1
          %s695 = scalar_lea.sflag [#allocation3], %s694
          %s696 = sand.u32 %s50, 1
          %s697 = smul.addr %s696, 128
          %s698 = scalar_lea.vmem [#allocation2], %s697
          %s699 = smul.u32 16, %s40
          %701 = vsyncadd %s695, 0
          %s702 = smul.addr %s699, 8
          %s703 = scalar_lea.hbm %s0, %s702
          %s704 = sshll.u32 %s703, 4
          %s705 = int_to_ptr.hbm [resolvable:$true] %s704
          %s706 = sshll.u32 %s698, 4
          %s707 = int_to_ptr.vmem [resolvable:$true] %s706
          %712 = dma.hbm_to_vmem [thread:$0]  %s705, 2048, %s707, %s695, 128, 128, 8
        $region92: #{tpu_custom_call.1} parent=87 // pred_fallthru
          _
        // Predicated region
        $region93: #{tpu_custom_call.1} parent=87 // pred_check
          %p713 = pneg %p86
        $region94: #{tpu_custom_call.1} parent=87 // pred_check_branch
          %715 = sbr.rel (%p713) target = $region96
        $region95: #{tpu_custom_call.1} parent=87 // pred_region
          %s716 = smul.u32 2, %s40
          %p717 = scmp.lt.s32.totalorder %s716, 3
          %s718 = scalar_select %p717, %s716, 3
          %s719 = smul.addr %s718, 8
          %s720 = scalar_lea.vmem %s1, %s719
          %s721 = smul.u32 2, %s40
        $region96: #{tpu_custom_call.1} parent=87 // pred_fallthru
          _
        // Predicated region
        $region97: #{tpu_custom_call.1} parent=87 // pred_check
          %p722 = pneg %p112
        $region98: #{tpu_custom_call.1} parent=87 // pred_check_branch
          %724 = sbr.rel (%p722) target = $region100
        $region99: #{tpu_custom_call.1} parent=87 // pred_region
          %s725 = smul.u32 2, %s40
          %p726 = scmp.lt.s32.totalorder %s725, 3
          %s727 = scalar_select %p726, %s725, 3
          %s728 = smul.addr %s727, 8
          %s729 = scalar_lea.vmem %s2, %s728
          %s730 = smul.u32 2, %s40
        $region100: #{tpu_custom_call.1} parent=87 // pred_fallthru
          _
        // Predicated region
        $region101: #{tpu_custom_call.1} parent=87 // pred_check
          %p731 = pneg %p516
        $region102: #{tpu_custom_call.1} parent=87 // pred_check_branch
          %733 = sbr.rel (%p731) target = $region104
        $region103: #{tpu_custom_call.1} parent=87 // pred_region
          %s734 = sand.u32 %s40, 1
          %s735 = scalar_lea.sflag [#allocation12], %s734
          %s736 = sand.u32 %s506, 1
          %s737 = smul.addr %s736, 1024
          %s738 = scalar_lea.vmem [#allocation11], %s737
          %s739 = smul.u32 16, %s40
          %741 = vsyncadd %s735, 0
          %s742 = smul.addr %s739, 16
          %s743 = smul.addr %s742, 4
          %s744 = scalar_lea.hbm %s21, %s743
          %s745 = sshll.u32 %s744, 4
          %s746 = int_to_ptr.hbm [resolvable:$true] %s745
          %s747 = sshll.u32 %s738, 4
          %s748 = int_to_ptr.vmem [resolvable:$true] %s747
          %753 = dma.hbm_to_vmem [thread:$0]  %s746, 16384, %s748, %s735, 64, 64, 4
        $region104: #{tpu_custom_call.1} parent=87 // pred_fallthru
          _
        // Predicated region
        $region105: #{tpu_custom_call.1} parent=87 // pred_check
          %p754 = pneg %p542
        $region106: #{tpu_custom_call.1} parent=87 // pred_check_branch
          %756 = sbr.rel (%p754) target = $region108
        $region107: #{tpu_custom_call.1} parent=87 // pred_region
          %s757 = sand.u32 %s40, 1
          %s758 = scalar_lea.sflag [#allocation12], %s757
          %s759 = sand.u32 %s532, 1
          %s760 = smul.addr %s759, 16
          %s761 = scalar_lea.vmem [#allocation13], %s760
          %s762 = smul.u32 2, %s40
          %764 = vsyncadd %s758, 0
          %s765 = smul.addr %s762, 8
          %s766 = scalar_lea.hbm %s22, %s765
          %s767 = sshll.u32 %s766, 4
          %s768 = int_to_ptr.hbm [resolvable:$true] %s767
          %s769 = sshll.u32 %s761, 4
          %s770 = int_to_ptr.vmem [resolvable:$true] %s769
          %775 = dma.hbm_to_vmem [thread:$0]  %s768, 256, %s770, %s758, 128, 128, 8
        $region108: #{tpu_custom_call.1} parent=87 // pred_fallthru
          _
      $region88: #{tpu_custom_call.1} parent=5 // pred_fallthru
        _
      %p776 = scmp.le.s32.totalorder 1, %s40
      %p777 = scmp.lt.s32.totalorder %s40, 3
      %p778 = pnand %p776, %p777
      %p779 = pneg %p778
      // Predicated region
      $region109: #{tpu_custom_call.1} parent=5 // pred_check
        _
      $region110: #{tpu_custom_call.1} parent=5 // pred_check_branch
        %781 = sbr.rel (%p778) target = $region112
      $region111: #{tpu_custom_call.1} parent=5 // pred_region
        %s782 = ssub.s32 %s40, 1
        %s783 = sand.u32 %s53, 1
        %s784 = scalar_lea.sflag [#allocation3], %s783
        %s785 = sand.u32 %s53, 1
        %s786 = smul.addr %s785, 128
        %s787 = scalar_lea.vmem [#allocation2], %s786
        // Predicated region
        $region113: #{tpu_custom_call.1} parent=111 // pred_check
          %p788 = pneg %p66
        $region114: #{tpu_custom_call.1} parent=111 // pred_check_branch
          %790 = sbr.rel (%p788) target = $region116
        $region115: #{tpu_custom_call.1} parent=111 // pred_region
          %792 = dma.done %s784, 2048
        $region116: #{tpu_custom_call.1} parent=111 // pred_fallthru
          _
        // Predicated region
        $region117: #{tpu_custom_call.1} parent=111 // pred_check
          %p793 = pneg %p181
        $region118: #{tpu_custom_call.1} parent=111 // pred_check_branch
          %795 = sbr.rel (%p793) target = $region120
        $region119: #{tpu_custom_call.1} parent=111 // pred_region
          %797 = dma.done [#allocation6], 3072
        $region120: #{tpu_custom_call.1} parent=111 // pred_fallthru
          _
        // Predicated region
        $region121: #{tpu_custom_call.1} parent=111 // pred_check
          %p798 = pneg %p307
        $region122: #{tpu_custom_call.1} parent=111 // pred_check_branch
          %800 = sbr.rel (%p798) target = $region124
        $region123: #{tpu_custom_call.1} parent=111 // pred_region
          %802 = dma.done [#allocation6], 2048
        $region124: #{tpu_custom_call.1} parent=111 // pred_fallthru
          _
        // Predicated region
        $region125: #{tpu_custom_call.1} parent=111 // pred_check
          %p803 = pneg %p349
        $region126: #{tpu_custom_call.1} parent=111 // pred_check_branch
          %805 = sbr.rel (%p803) target = $region128
        $region127: #{tpu_custom_call.1} parent=111 // pred_region
          %807 = dma.done [#allocation9], 2048
        $region128: #{tpu_custom_call.1} parent=111 // pred_fallthru
          _
        // Predicated region
        $region129: #{tpu_custom_call.1} parent=111 // pred_check
          %p808 = pneg %p433
        $region130: #{tpu_custom_call.1} parent=111 // pred_check_branch
          %810 = sbr.rel (%p808) target = $region132
        $region131: #{tpu_custom_call.1} parent=111 // pred_region
          %812 = dma.done [#allocation9], 1024
        $region132: #{tpu_custom_call.1} parent=111 // pred_fallthru
          _
        %s813 = sand.u32 %s45, 1
        %s814 = scalar_lea.sflag [#allocation12], %s813
        %s815 = sand.u32 %s509, 1
        %s816 = smul.addr %s815, 1024
        %s817 = scalar_lea.vmem [#allocation11], %s816
        // Predicated region
        $region133: #{tpu_custom_call.1} parent=111 // pred_check
          %p818 = pneg %p522
        $region134: #{tpu_custom_call.1} parent=111 // pred_check_branch
          %820 = sbr.rel (%p818) target = $region136
        $region135: #{tpu_custom_call.1} parent=111 // pred_region
          %822 = dma.done %s814, 16384
        $region136: #{tpu_custom_call.1} parent=111 // pred_fallthru
          _
        %s823 = sand.u32 %s45, 1
        %s824 = scalar_lea.sflag [#allocation12], %s823
        %s825 = sand.u32 %s535, 1
        %s826 = smul.addr %s825, 16
        %s827 = scalar_lea.vmem [#allocation13], %s826
        // Predicated region
        $region137: #{tpu_custom_call.1} parent=111 // pred_check
          %p828 = pneg %p548
        $region138: #{tpu_custom_call.1} parent=111 // pred_check_branch
          %830 = sbr.rel (%p828) target = $region140
        $region139: #{tpu_custom_call.1} parent=111 // pred_region
          %832 = dma.done %s824, 256
        $region140: #{tpu_custom_call.1} parent=111 // pred_fallthru
          _
        %s833 = sand.u32 %s53, 1
        %s834 = scalar_lea.sflag [#allocation3], %s833
        %s835 = sand.u32 %s53, 1
        %s836 = smul.addr %s835, 128
        %s837 = scalar_lea.vmem [#allocation2], %s836
        %p838 = pneg %p66
        %p839 = pneg %p63
        %s840 = smul.u32 2, %s45
        %p841 = scmp.lt.s32.totalorder %s840, 3
        %s842 = scalar_select %p841, %s840, 3
        %s843 = smul.addr %s842, 8
        %s844 = scalar_lea.vmem %s1, %s843
        %p845 = pneg %p92
        %p846 = pneg %p89
        %s847 = smul.u32 2, %s45
        %p848 = scmp.lt.s32.totalorder %s847, 3
        %s849 = scalar_select %p848, %s847, 3
        %s850 = smul.addr %s849, 8
        %s851 = scalar_lea.vmem %s2, %s850
        %p852 = pneg %p118
        %p853 = pneg %p115
        %p854 = pneg %p139
        %p855 = pneg %p136
        %p856 = pneg %p160
        %p857 = pneg %p157
        %p858 = pneg %p181
        %p859 = pneg %p178
        %p860 = pneg %p202
        %p861 = pneg %p199
        %p862 = pneg %p223
        %p863 = pneg %p220
        %p864 = pneg %p244
        %p865 = pneg %p241
        %p866 = pneg %p265
        %p867 = pneg %p262
        %p868 = pneg %p286
        %p869 = pneg %p283
        %p870 = pneg %p307
        %p871 = pneg %p304
        %p872 = pneg %p328
        %p873 = pneg %p325
        %p874 = pneg %p349
        %p875 = pneg %p346
        %p876 = pneg %p370
        %p877 = pneg %p367
        %p878 = pneg %p391
        %p879 = pneg %p388
        %p880 = pneg %p412
        %p881 = pneg %p409
        %p882 = pneg %p433
        %p883 = pneg %p430
        %p884 = pneg %p454
        %p885 = pneg %p451
        %p886 = pneg %p475
        %p887 = pneg %p472
        %p888 = pneg %p496
        %p889 = pneg %p493
        %s890 = sand.u32 %s45, 1
        %s891 = scalar_lea.sflag [#allocation12], %s890
        %s892 = sand.u32 %s509, 1
        %s893 = smul.addr %s892, 1024
        %s894 = scalar_lea.vmem [#allocation11], %s893
        %p895 = pneg %p522
        %p896 = pneg %p519
        %s897 = sand.u32 %s45, 1
        %s898 = scalar_lea.sflag [#allocation12], %s897
        %s899 = sand.u32 %s535, 1
        %s900 = smul.addr %s899, 16
        %s901 = scalar_lea.vmem [#allocation13], %s900
        %p902 = pneg %p548
        %p903 = pneg %p545
        %p904 = pneg %p574
        %p905 = pneg %p571
        %s906 = sand.u32 %s561, 1
        %s907 = scalar_lea.sflag [#allocation4], %s906
        %s908 = sand.u32 %s561, 1
        %s909 = smul.addr %s908, 16
        %s910 = scalar_lea.vmem [#allocation14], %s909
        %s911 = smul.u32 16, %s45
        %s912 = smul.u32 2, %s45
        %p913 = scmp.lt.s32.totalorder %s912, 3
        %s914 = scalar_select %p913, %s912, 3
        %s915 = smul.addr %s914, 8
        %s916 = scalar_lea.vmem %s1, %s915
        %s917 = smul.u32 2, %s45
        %s918 = smul.u32 2, %s45
        %p919 = scmp.lt.s32.totalorder %s918, 3
        %s920 = scalar_select %p919, %s918, 3
        %s921 = smul.addr %s920, 8
        %s922 = scalar_lea.vmem %s2, %s921
        %s923 = smul.u32 2, %s45
        %s924 = smul.u32 16, %s45
        %s925 = smul.u32 2, %s45
        %s926 = smul.u32 2, %s45
        %v928 = vld [vmem:[%s787] sm:$0xff]
        %v929 = vld [vmem:[%s787 + $0x8] sm:$0xff]
        %v930 = vld [vmem:[%s787 + $0x10] sm:$0xff]
        %v931 = vld [vmem:[%s787 + $0x18] sm:$0xff]
        %v932 = vld [vmem:[%s787 + $0x20] sm:$0xff]
        %v933 = vld [vmem:[%s787 + $0x28] sm:$0xff]
        %v934 = vld [vmem:[%s787 + $0x30] sm:$0xff]
        %v935 = vld [vmem:[%s787 + $0x38] sm:$0xff]
        %v936 = vld [vmem:[%s787 + $0x40] sm:$0xff]
        %v937 = vld [vmem:[%s787 + $0x48] sm:$0xff]
        %v938 = vld [vmem:[%s787 + $0x50] sm:$0xff]
        %v939 = vld [vmem:[%s787 + $0x58] sm:$0xff]
        %v940 = vld [vmem:[%s787 + $0x60] sm:$0xff]
        %v941 = vld [vmem:[%s787 + $0x68] sm:$0xff]
        %v942 = vld [vmem:[%s787 + $0x70] sm:$0xff]
        %v943 = vld [vmem:[%s787 + $0x78] sm:$0xff]
        %v944 = vld [vmem:[%s3] sm:$0x1]
        %v945 = vld [vmem:[%s4] sm:$0x1]
        %946 = vadd.xlane.f32.xlu0 %v928
        %v947 = vpop.xlane.xlu0 %946
        %948 = vadd.xlane.f32.xlu0 %v929
        %v949 = vpop.xlane.xlu0 %948
        %950 = vadd.xlane.f32.xlu0 %v930
        %v951 = vpop.xlane.xlu0 %950
        %952 = vadd.xlane.f32.xlu0 %v931
        %v953 = vpop.xlane.xlu0 %952
        %954 = vadd.xlane.f32.xlu0 %v932
        %v955 = vpop.xlane.xlu0 %954
        %956 = vadd.xlane.f32.xlu0 %v933
        %v957 = vpop.xlane.xlu0 %956
        %958 = vadd.xlane.f32.xlu0 %v934
        %v959 = vpop.xlane.xlu0 %958
        %960 = vadd.xlane.f32.xlu0 %v935
        %v961 = vpop.xlane.xlu0 %960
        %962 = vadd.xlane.f32.xlu0 %v936
        %v963 = vpop.xlane.xlu0 %962
        %964 = vadd.xlane.f32.xlu0 %v937
        %v965 = vpop.xlane.xlu0 %964
        %966 = vadd.xlane.f32.xlu0 %v938
        %v967 = vpop.xlane.xlu0 %966
        %968 = vadd.xlane.f32.xlu0 %v939
        %v969 = vpop.xlane.xlu0 %968
        %970 = vadd.xlane.f32.xlu0 %v940
        %v971 = vpop.xlane.xlu0 %970
        %972 = vadd.xlane.f32.xlu0 %v941
        %v973 = vpop.xlane.xlu0 %972
        %974 = vadd.xlane.f32.xlu0 %v942
        %v975 = vpop.xlane.xlu0 %974
        %976 = vadd.xlane.f32.xlu0 %v943
        %v977 = vpop.xlane.xlu0 %976
        %v978 = vrcp.pop 128.0
        %v979 = vmul.f32 128.0, %v978
        %v980 = vsub.f32 1.0, %v979
        %v981 = vmul.f32 %v978, %v980
        %v982 = vadd.f32 %v978, %v981
        %vm983 = vweird.f32 %v978
        %v984 = vsel %vm983, %v978, %v982
        %v985 = vmul.f32 %v947, %v984
        %v986 = vmul.f32 %v949, %v984
        %v987 = vmul.f32 %v951, %v984
        %v988 = vmul.f32 %v953, %v984
        %v989 = vmul.f32 %v955, %v984
        %v990 = vmul.f32 %v957, %v984
        %v991 = vmul.f32 %v959, %v984
        %v992 = vmul.f32 %v961, %v984
        %v993 = vmul.f32 %v963, %v984
        %v994 = vmul.f32 %v965, %v984
        %v995 = vmul.f32 %v967, %v984
        %v996 = vmul.f32 %v969, %v984
        %v997 = vmul.f32 %v971, %v984
        %v998 = vmul.f32 %v973, %v984
        %v999 = vmul.f32 %v975, %v984
        %v1000 = vmul.f32 %v977, %v984
        %v1001 = vsub.f32 %v928, %v985
        %v1002 = vsub.f32 %v929, %v986
        %v1003 = vsub.f32 %v930, %v987
        %v1004 = vsub.f32 %v931, %v988
        %v1005 = vsub.f32 %v932, %v989
        %v1006 = vsub.f32 %v933, %v990
        %v1007 = vsub.f32 %v934, %v991
        %v1008 = vsub.f32 %v935, %v992
        %v1009 = vsub.f32 %v936, %v993
        %v1010 = vsub.f32 %v937, %v994
        %v1011 = vsub.f32 %v938, %v995
        %v1012 = vsub.f32 %v939, %v996
        %v1013 = vsub.f32 %v940, %v997
        %v1014 = vsub.f32 %v941, %v998
        %v1015 = vsub.f32 %v942, %v999
        %v1016 = vsub.f32 %v943, %v1000
        %v1017 = vmul.f32 %v1001, %v1001
        %v1018 = vmul.f32 %v1002, %v1002
        %v1019 = vmul.f32 %v1003, %v1003
        %v1020 = vmul.f32 %v1004, %v1004
        %v1021 = vmul.f32 %v1005, %v1005
        %v1022 = vmul.f32 %v1006, %v1006
        %v1023 = vmul.f32 %v1007, %v1007
        %v1024 = vmul.f32 %v1008, %v1008
        %v1025 = vmul.f32 %v1009, %v1009
        %v1026 = vmul.f32 %v1010, %v1010
        %v1027 = vmul.f32 %v1011, %v1011
        %v1028 = vmul.f32 %v1012, %v1012
        %v1029 = vmul.f32 %v1013, %v1013
        %v1030 = vmul.f32 %v1014, %v1014
        %v1031 = vmul.f32 %v1015, %v1015
        %v1032 = vmul.f32 %v1016, %v1016
        %1033 = vadd.xlane.f32.xlu0 %v1017
        %v1034 = vpop.xlane.xlu0 %1033
        %1035 = vadd.xlane.f32.xlu0 %v1018
        %v1036 = vpop.xlane.xlu0 %1035
        %1037 = vadd.xlane.f32.xlu0 %v1019
        %v1038 = vpop.xlane.xlu0 %1037
        %1039 = vadd.xlane.f32.xlu0 %v1020
        %v1040 = vpop.xlane.xlu0 %1039
        %1041 = vadd.xlane.f32.xlu0 %v1021
        %v1042 = vpop.xlane.xlu0 %1041
        %1043 = vadd.xlane.f32.xlu0 %v1022
        %v1044 = vpop.xlane.xlu0 %1043
        %1045 = vadd.xlane.f32.xlu0 %v1023
        %v1046 = vpop.xlane.xlu0 %1045
        %1047 = vadd.xlane.f32.xlu0 %v1024
        %v1048 = vpop.xlane.xlu0 %1047
        %1049 = vadd.xlane.f32.xlu0 %v1025
        %v1050 = vpop.xlane.xlu0 %1049
        %1051 = vadd.xlane.f32.xlu0 %v1026
        %v1052 = vpop.xlane.xlu0 %1051
        %1053 = vadd.xlane.f32.xlu0 %v1027
        %v1054 = vpop.xlane.xlu0 %1053
        %1055 = vadd.xlane.f32.xlu0 %v1028
        %v1056 = vpop.xlane.xlu0 %1055
        %1057 = vadd.xlane.f32.xlu0 %v1029
        %v1058 = vpop.xlane.xlu0 %1057
        %1059 = vadd.xlane.f32.xlu0 %v1030
        %v1060 = vpop.xlane.xlu0 %1059
        %1061 = vadd.xlane.f32.xlu0 %v1031
        %v1062 = vpop.xlane.xlu0 %1061
        %1063 = vadd.xlane.f32.xlu0 %v1032
        %v1064 = vpop.xlane.xlu0 %1063
        %v1065 = vmul.f32 %v1034, %v984
        %v1066 = vmul.f32 %v1036, %v984
        %v1067 = vmul.f32 %v1038, %v984
        %v1068 = vmul.f32 %v1040, %v984
        %v1069 = vmul.f32 %v1042, %v984
        %v1070 = vmul.f32 %v1044, %v984
        %v1071 = vmul.f32 %v1046, %v984
        %v1072 = vmul.f32 %v1048, %v984
        %v1073 = vmul.f32 %v1050, %v984
        %v1074 = vmul.f32 %v1052, %v984
        %v1075 = vmul.f32 %v1054, %v984
        %v1076 = vmul.f32 %v1056, %v984
        %v1077 = vmul.f32 %v1058, %v984
        %v1078 = vmul.f32 %v1060, %v984
        %v1079 = vmul.f32 %v1062, %v984
        %v1080 = vmul.f32 %v1064, %v984
        %v1081 = vadd.f32 %v1065, 1e-05
        %v1082 = vadd.f32 %v1066, 1e-05
        %v1083 = vadd.f32 %v1067, 1e-05
        %v1084 = vadd.f32 %v1068, 1e-05
        %v1085 = vadd.f32 %v1069, 1e-05
        %v1086 = vadd.f32 %v1070, 1e-05
        %v1087 = vadd.f32 %v1071, 1e-05
        %v1088 = vadd.f32 %v1072, 1e-05
        %v1089 = vadd.f32 %v1073, 1e-05
        %v1090 = vadd.f32 %v1074, 1e-05
        %v1091 = vadd.f32 %v1075, 1e-05
        %v1092 = vadd.f32 %v1076, 1e-05
        %v1093 = vadd.f32 %v1077, 1e-05
        %v1094 = vadd.f32 %v1078, 1e-05
        %v1095 = vadd.f32 %v1079, 1e-05
        %v1096 = vadd.f32 %v1080, 1e-05
        %v1097 = vrsqrt.pop %v1081
        %v1098 = vmul.f32 %v1097, %v1081
        %v1099 = vmul.f32 %v1098, %v1097
        %v1100 = vmul.f32 0.5, %v1099
        %v1101 = vsub.f32 1.5, %v1100
        %v1102 = vmul.f32 %v1097, %v1101
        %vm1103 = vweird.f32 %v1081
        %vm1104 = vweird.f32 %v1097
        %vm1105 = vmor %vm1103, %vm1104
        %v1106 = vsel %vm1105, %v1097, %v1102
        %v1107 = vrsqrt.pop %v1082
        %v1108 = vmul.f32 %v1107, %v1082
        %v1109 = vmul.f32 %v1108, %v1107
        %v1110 = vmul.f32 0.5, %v1109
        %v1111 = vsub.f32 1.5, %v1110
        %v1112 = vmul.f32 %v1107, %v1111
        %vm1113 = vweird.f32 %v1082
        %vm1114 = vweird.f32 %v1107
        %vm1115 = vmor %vm1113, %vm1114
        %v1116 = vsel %vm1115, %v1107, %v1112
        %v1117 = vrsqrt.pop %v1083
        %v1118 = vmul.f32 %v1117, %v1083
        %v1119 = vmul.f32 %v1118, %v1117
        %v1120 = vmul.f32 0.5, %v1119
        %v1121 = vsub.f32 1.5, %v1120
        %v1122 = vmul.f32 %v1117, %v1121
        %vm1123 = vweird.f32 %v1083
        %vm1124 = vweird.f32 %v1117
        %vm1125 = vmor %vm1123, %vm1124
        %v1126 = vsel %vm1125, %v1117, %v1122
        %v1127 = vrsqrt.pop %v1084
        %v1128 = vmul.f32 %v1127, %v1084
        %v1129 = vmul.f32 %v1128, %v1127
        %v1130 = vmul.f32 0.5, %v1129
        %v1131 = vsub.f32 1.5, %v1130
        %v1132 = vmul.f32 %v1127, %v1131
        %vm1133 = vweird.f32 %v1084
        %vm1134 = vweird.f32 %v1127
        %vm1135 = vmor %vm1133, %vm1134
        %v1136 = vsel %vm1135, %v1127, %v1132
        %v1137 = vrsqrt.pop %v1085
        %v1138 = vmul.f32 %v1137, %v1085
        %v1139 = vmul.f32 %v1138, %v1137
        %v1140 = vmul.f32 0.5, %v1139
        %v1141 = vsub.f32 1.5, %v1140
        %v1142 = vmul.f32 %v1137, %v1141
        %vm1143 = vweird.f32 %v1085
        %vm1144 = vweird.f32 %v1137
        %vm1145 = vmor %vm1143, %vm1144
        %v1146 = vsel %vm1145, %v1137, %v1142
        %v1147 = vrsqrt.pop %v1086
        %v1148 = vmul.f32 %v1147, %v1086
        %v1149 = vmul.f32 %v1148, %v1147
        %v1150 = vmul.f32 0.5, %v1149
        %v1151 = vsub.f32 1.5, %v1150
        %v1152 = vmul.f32 %v1147, %v1151
        %vm1153 = vweird.f32 %v1086
        %vm1154 = vweird.f32 %v1147
        %vm1155 = vmor %vm1153, %vm1154
        %v1156 = vsel %vm1155, %v1147, %v1152
        %v1157 = vrsqrt.pop %v1087
        %v1158 = vmul.f32 %v1157, %v1087
        %v1159 = vmul.f32 %v1158, %v1157
        %v1160 = vmul.f32 0.5, %v1159
        %v1161 = vsub.f32 1.5, %v1160
        %v1162 = vmul.f32 %v1157, %v1161
        %vm1163 = vweird.f32 %v1087
        %vm1164 = vweird.f32 %v1157
        %vm1165 = vmor %vm1163, %vm1164
        %v1166 = vsel %vm1165, %v1157, %v1162
        %v1167 = vrsqrt.pop %v1088
        %v1168 = vmul.f32 %v1167, %v1088
        %v1169 = vmul.f32 %v1168, %v1167
        %v1170 = vmul.f32 0.5, %v1169
        %v1171 = vsub.f32 1.5, %v1170
        %v1172 = vmul.f32 %v1167, %v1171
        %vm1173 = vweird.f32 %v1088
        %vm1174 = vweird.f32 %v1167
        %vm1175 = vmor %vm1173, %vm1174
        %v1176 = vsel %vm1175, %v1167, %v1172
        %v1177 = vrsqrt.pop %v1089
        %v1178 = vmul.f32 %v1177, %v1089
        %v1179 = vmul.f32 %v1178, %v1177
        %v1180 = vmul.f32 0.5, %v1179
        %v1181 = vsub.f32 1.5, %v1180
        %v1182 = vmul.f32 %v1177, %v1181
        %vm1183 = vweird.f32 %v1089
        %vm1184 = vweird.f32 %v1177
        %vm1185 = vmor %vm1183, %vm1184
        %v1186 = vsel %vm1185, %v1177, %v1182
        %v1187 = vrsqrt.pop %v1090
        %v1188 = vmul.f32 %v1187, %v1090
        %v1189 = vmul.f32 %v1188, %v1187
        %v1190 = vmul.f32 0.5, %v1189
        %v1191 = vsub.f32 1.5, %v1190
        %v1192 = vmul.f32 %v1187, %v1191
        %vm1193 = vweird.f32 %v1090
        %vm1194 = vweird.f32 %v1187
        %vm1195 = vmor %vm1193, %vm1194
        %v1196 = vsel %vm1195, %v1187, %v1192
        %v1197 = vrsqrt.pop %v1091
        %v1198 = vmul.f32 %v1197, %v1091
        %v1199 = vmul.f32 %v1198, %v1197
        %v1200 = vmul.f32 0.5, %v1199
        %v1201 = vsub.f32 1.5, %v1200
        %v1202 = vmul.f32 %v1197, %v1201
        %vm1203 = vweird.f32 %v1091
        %vm1204 = vweird.f32 %v1197
        %vm1205 = vmor %vm1203, %vm1204
        %v1206 = vsel %vm1205, %v1197, %v1202
        %v1207 = vrsqrt.pop %v1092
        %v1208 = vmul.f32 %v1207, %v1092
        %v1209 = vmul.f32 %v1208, %v1207
        %v1210 = vmul.f32 0.5, %v1209
        %v1211 = vsub.f32 1.5, %v1210
        %v1212 = vmul.f32 %v1207, %v1211
        %vm1213 = vweird.f32 %v1092
        %vm1214 = vweird.f32 %v1207
        %vm1215 = vmor %vm1213, %vm1214
        %v1216 = vsel %vm1215, %v1207, %v1212
        %v1217 = vrsqrt.pop %v1093
        %v1218 = vmul.f32 %v1217, %v1093
        %v1219 = vmul.f32 %v1218, %v1217
        %v1220 = vmul.f32 0.5, %v1219
        %v1221 = vsub.f32 1.5, %v1220
        %v1222 = vmul.f32 %v1217, %v1221
        %vm1223 = vweird.f32 %v1093
        %vm1224 = vweird.f32 %v1217
        %vm1225 = vmor %vm1223, %vm1224
        %v1226 = vsel %vm1225, %v1217, %v1222
        %v1227 = vrsqrt.pop %v1094
        %v1228 = vmul.f32 %v1227, %v1094
        %v1229 = vmul.f32 %v1228, %v1227
        %v1230 = vmul.f32 0.5, %v1229
        %v1231 = vsub.f32 1.5, %v1230
        %v1232 = vmul.f32 %v1227, %v1231
        %vm1233 = vweird.f32 %v1094
        %vm1234 = vweird.f32 %v1227
        %vm1235 = vmor %vm1233, %vm1234
        %v1236 = vsel %vm1235, %v1227, %v1232
        %v1237 = vrsqrt.pop %v1095
        %v1238 = vmul.f32 %v1237, %v1095
        %v1239 = vmul.f32 %v1238, %v1237
        %v1240 = vmul.f32 0.5, %v1239
        %v1241 = vsub.f32 1.5, %v1240
        %v1242 = vmul.f32 %v1237, %v1241
        %vm1243 = vweird.f32 %v1095
        %vm1244 = vweird.f32 %v1237
        %vm1245 = vmor %vm1243, %vm1244
        %v1246 = vsel %vm1245, %v1237, %v1242
        %v1247 = vrsqrt.pop %v1096
        %v1248 = vmul.f32 %v1247, %v1096
        %v1249 = vmul.f32 %v1248, %v1247
        %v1250 = vmul.f32 0.5, %v1249
        %v1251 = vsub.f32 1.5, %v1250
        %v1252 = vmul.f32 %v1247, %v1251
        %vm1253 = vweird.f32 %v1096
        %vm1254 = vweird.f32 %v1247
        %vm1255 = vmor %vm1253, %vm1254
        %v1256 = vsel %vm1255, %v1247, %v1252
        %v1257 = vmul.f32 %v1001, %v1106
        %v1258 = vmul.f32 %v1002, %v1116
        %v1259 = vmul.f32 %v1003, %v1126
        %v1260 = vmul.f32 %v1004, %v1136
        %v1261 = vmul.f32 %v1005, %v1146
        %v1262 = vmul.f32 %v1006, %v1156
        %v1263 = vmul.f32 %v1007, %v1166
        %v1264 = vmul.f32 %v1008, %v1176
        %v1265 = vmul.f32 %v1009, %v1186
        %v1266 = vmul.f32 %v1010, %v1196
        %v1267 = vmul.f32 %v1011, %v1206
        %v1268 = vmul.f32 %v1012, %v1216
        %v1269 = vmul.f32 %v1013, %v1226
        %v1270 = vmul.f32 %v1014, %v1236
        %v1271 = vmul.f32 %v1015, %v1246
        %v1272 = vmul.f32 %v1016, %v1256
        %v1274 = vperm.slane %v944, 0
        %v1276 = vmul.f32 %v1257, %v1274
        %v1277 = vmul.f32 %v1258, %v1274
        %v1278 = vmul.f32 %v1259, %v1274
        %v1279 = vmul.f32 %v1260, %v1274
        %v1280 = vmul.f32 %v1261, %v1274
        %v1281 = vmul.f32 %v1262, %v1274
        %v1282 = vmul.f32 %v1263, %v1274
        %v1283 = vmul.f32 %v1264, %v1274
        %v1284 = vmul.f32 %v1265, %v1274
        %v1285 = vmul.f32 %v1266, %v1274
        %v1286 = vmul.f32 %v1267, %v1274
        %v1287 = vmul.f32 %v1268, %v1274
        %v1288 = vmul.f32 %v1269, %v1274
        %v1289 = vmul.f32 %v1270, %v1274
        %v1290 = vmul.f32 %v1271, %v1274
        %v1291 = vmul.f32 %v1272, %v1274
        %v1293 = vperm.slane %v945, 0
        %v1295 = vadd.f32 %v1276, %v1293
        %v1296 = vadd.f32 %v1277, %v1293
        %v1297 = vadd.f32 %v1278, %v1293
        %v1298 = vadd.f32 %v1279, %v1293
        %v1299 = vadd.f32 %v1280, %v1293
        %v1300 = vadd.f32 %v1281, %v1293
        %v1301 = vadd.f32 %v1282, %v1293
        %v1302 = vadd.f32 %v1283, %v1293
        %v1303 = vadd.f32 %v1284, %v1293
        %v1304 = vadd.f32 %v1285, %v1293
        %v1305 = vadd.f32 %v1286, %v1293
        %v1306 = vadd.f32 %v1287, %v1293
        %v1307 = vadd.f32 %v1288, %v1293
        %v1308 = vadd.f32 %v1289, %v1293
        %v1309 = vadd.f32 %v1290, %v1293
        %v1310 = vadd.f32 %v1291, %v1293
        %v1311 = vpack.c.bf16 %v1296, %v1295
        %v1312 = vpack.c.bf16 %v1298, %v1297
        %v1313 = vpack.c.bf16 %v1300, %v1299
        %v1314 = vpack.c.bf16 %v1302, %v1301
        %v1315 = vpack.c.bf16 %v1304, %v1303
        %v1316 = vpack.c.bf16 %v1306, %v1305
        %v1317 = vpack.c.bf16 %v1308, %v1307
        %v1318 = vpack.c.bf16 %v1310, %v1309
        %v1319 = vld [vmem:[#allocation5] sm:$0xff]
        %v1320 = vld [vmem:[#allocation5 + $0x8] sm:$0xf]
        %v1321 = vld [vmem:[#allocation5 + $0xc] sm:$0xff]
        %v1322 = vld [vmem:[#allocation5 + $0x14] sm:$0xf]
        %v1323 = vld [vmem:[#allocation5 + $0x18] sm:$0xff]
        %v1324 = vld [vmem:[#allocation5 + $0x20] sm:$0xf]
        %v1325 = vld [vmem:[#allocation5 + $0x24] sm:$0xff]
        %v1326 = vld [vmem:[#allocation5 + $0x2c] sm:$0xf]
        %v1327 = vld [vmem:[#allocation5 + $0x30] sm:$0xff]
        %v1328 = vld [vmem:[#allocation5 + $0x38] sm:$0xf]
        %v1329 = vld [vmem:[#allocation5 + $0x3c] sm:$0xff]
        %v1330 = vld [vmem:[#allocation5 + $0x44] sm:$0xf]
        %v1331 = vld [vmem:[#allocation5 + $0x48] sm:$0xff]
        %v1332 = vld [vmem:[#allocation5 + $0x50] sm:$0xf]
        %v1333 = vld [vmem:[#allocation5 + $0x54] sm:$0xff]
        %v1334 = vld [vmem:[#allocation5 + $0x5c] sm:$0xf]
        %v1335 = vld [vmem:[#allocation5 + $0x60] sm:$0xff]
        %v1336 = vld [vmem:[#allocation5 + $0x68] sm:$0xf]
        %v1337 = vld [vmem:[#allocation5 + $0x6c] sm:$0xff]
        %v1338 = vld [vmem:[#allocation5 + $0x74] sm:$0xf]
        %v1339 = vld [vmem:[#allocation5 + $0x78] sm:$0xff]
        %v1340 = vld [vmem:[#allocation5 + $0x80] sm:$0xf]
        %v1341 = vld [vmem:[#allocation5 + $0x84] sm:$0xff]
        %v1342 = vld [vmem:[#allocation5 + $0x8c] sm:$0xf]
        %v1343 = vld [vmem:[#allocation5 + $0x90] sm:$0xff]
        %v1344 = vld [vmem:[#allocation5 + $0x98] sm:$0xf]
        %v1345 = vld [vmem:[#allocation5 + $0x9c] sm:$0xff]
        %v1346 = vld [vmem:[#allocation5 + $0xa4] sm:$0xf]
        %v1347 = vld [vmem:[#allocation5 + $0xa8] sm:$0xff]
        %v1348 = vld [vmem:[#allocation5 + $0xb0] sm:$0xf]
        %v1349 = vld [vmem:[#allocation5 + $0xb4] sm:$0xff]
        %v1350 = vld [vmem:[#allocation5 + $0xbc] sm:$0xf]
        %v1351 = vld [vmem:[%s6] sm:$0x7]
        %v1353 = vperm.slane %v1351, 0
        %v1354 = vperm.slane %v1351, 1
        %v1355 = vperm.slane %v1351, 2
        %v1391 = vunpack.c.l.b16 %v1319
        %v1392 = vunpack.c.h.b16 %v1319
        %v1393 = vunpack.c.l.b16 %v1320
        %v1394 = vunpack.c.l.b16 %v1321
        %v1395 = vunpack.c.h.b16 %v1321
        %v1396 = vunpack.c.l.b16 %v1322
        %v1397 = vunpack.c.l.b16 %v1323
        %v1398 = vunpack.c.h.b16 %v1323
        %v1399 = vunpack.c.l.b16 %v1324
        %v1400 = vunpack.c.l.b16 %v1325
        %v1401 = vunpack.c.h.b16 %v1325
        %v1402 = vunpack.c.l.b16 %v1326
        %v1403 = vunpack.c.l.b16 %v1327
        %v1404 = vunpack.c.h.b16 %v1327
        %v1405 = vunpack.c.l.b16 %v1328
        %v1406 = vunpack.c.l.b16 %v1329
        %v1407 = vunpack.c.h.b16 %v1329
        %v1408 = vunpack.c.l.b16 %v1330
        %v1409 = vunpack.c.l.b16 %v1331
        %v1410 = vunpack.c.h.b16 %v1331
        %v1411 = vunpack.c.l.b16 %v1332
        %v1412 = vunpack.c.l.b16 %v1333
        %v1413 = vunpack.c.h.b16 %v1333
        %v1414 = vunpack.c.l.b16 %v1334
        %v1415 = vunpack.c.l.b16 %v1335
        %v1416 = vunpack.c.h.b16 %v1335
        %v1417 = vunpack.c.l.b16 %v1336
        %v1418 = vunpack.c.l.b16 %v1337
        %v1419 = vunpack.c.h.b16 %v1337
        %v1420 = vunpack.c.l.b16 %v1338
        %v1421 = vunpack.c.l.b16 %v1339
        %v1422 = vunpack.c.h.b16 %v1339
        %v1423 = vunpack.c.l.b16 %v1340
        %v1424 = vunpack.c.l.b16 %v1341
        %v1425 = vunpack.c.h.b16 %v1341
        %v1426 = vunpack.c.l.b16 %v1342
        %v1427 = vunpack.c.l.b16 %v1343
        %v1428 = vunpack.c.h.b16 %v1343
        %v1429 = vunpack.c.l.b16 %v1344
        %v1430 = vunpack.c.l.b16 %v1345
        %v1431 = vunpack.c.h.b16 %v1345
        %v1432 = vunpack.c.l.b16 %v1346
        %v1433 = vunpack.c.l.b16 %v1347
        %v1434 = vunpack.c.h.b16 %v1347
        %v1435 = vunpack.c.l.b16 %v1348
        %v1436 = vunpack.c.l.b16 %v1349
        %v1437 = vunpack.c.h.b16 %v1349
        %v1438 = vunpack.c.l.b16 %v1350
        %v1439 = vpack.c.b16 %v1394, %v1391
        %v1440 = vpack.c.b16 %v1395, %v1392
        %v1441 = vpack.c.b16 %v1396, %v1393
        %v1442 = vpack.c.b16 %v1400, %v1397
        %v1443 = vpack.c.b16 %v1401, %v1398
        %v1444 = vpack.c.b16 %v1402, %v1399
        %v1445 = vpack.c.b16 %v1406, %v1403
        %v1446 = vpack.c.b16 %v1407, %v1404
        %v1447 = vpack.c.b16 %v1408, %v1405
        %v1448 = vpack.c.b16 %v1412, %v1409
        %v1449 = vpack.c.b16 %v1413, %v1410
        %v1450 = vpack.c.b16 %v1414, %v1411
        %v1451 = vpack.c.b16 %v1418, %v1415
        %v1452 = vpack.c.b16 %v1419, %v1416
        %v1453 = vpack.c.b16 %v1420, %v1417
        %v1454 = vpack.c.b16 %v1424, %v1421
        %v1455 = vpack.c.b16 %v1425, %v1422
        %v1456 = vpack.c.b16 %v1426, %v1423
        %v1457 = vpack.c.b16 %v1430, %v1427
        %v1458 = vpack.c.b16 %v1431, %v1428
        %v1459 = vpack.c.b16 %v1432, %v1429
        %v1460 = vpack.c.b16 %v1436, %v1433
        %v1461 = vpack.c.b16 %v1437, %v1434
        %v1462 = vpack.c.b16 %v1438, %v1435
        %1487 = vmatpush.bf16.msra.mxu0 %v1460
        %1488 = vmatpush.bf16.msra.mxu0 %v1457
        %1489 = vmatpush.bf16.msra.mxu0 %v1454
        %1490 = vmatpush.bf16.msra.mxu0 %v1451
        %1491 = vmatpush.bf16.msra.mxu0 %v1448
        %1492 = vmatpush.bf16.msra.mxu0 %v1445
        %1493 = vmatpush.bf16.msra.mxu0 %v1442
        %1494 = vmatpush.bf16.msra.mxu0 %v1439
        %1495 = vmatmul.bf16.gmra.mxu0 %v1311
        %v1496 = vpop.f32.mrf.mxu0
        %v1497 = vadd.f32 %v1353, %v1496
        %v1498 = vpop.f32.mrf.mxu0
        %v1499 = vadd.f32 %v1353, %v1498
        %1500 = vmatmul.bf16.gmra.mxu0 %v1312
        %v1501 = vpop.f32.mrf.mxu0
        %v1502 = vadd.f32 %v1353, %v1501
        %v1503 = vpop.f32.mrf.mxu0
        %v1504 = vadd.f32 %v1353, %v1503
        %1505 = vmatmul.bf16.gmra.mxu0 %v1313
        %v1506 = vpop.f32.mrf.mxu0
        %v1507 = vadd.f32 %v1353, %v1506
        %v1508 = vpop.f32.mrf.mxu0
        %v1509 = vadd.f32 %v1353, %v1508
        %1510 = vmatmul.bf16.gmra.mxu0 %v1314
        %v1511 = vpop.f32.mrf.mxu0
        %v1512 = vadd.f32 %v1353, %v1511
        %v1513 = vpop.f32.mrf.mxu0
        %v1514 = vadd.f32 %v1353, %v1513
        %1515 = vmatmul.bf16.gmra.mxu0 %v1315
        %v1516 = vpop.f32.mrf.mxu0
        %v1517 = vadd.f32 %v1353, %v1516
        %v1518 = vpop.f32.mrf.mxu0
        %v1519 = vadd.f32 %v1353, %v1518
        %1520 = vmatmul.bf16.gmra.mxu0 %v1316
        %v1521 = vpop.f32.mrf.mxu0
        %v1522 = vadd.f32 %v1353, %v1521
        %v1523 = vpop.f32.mrf.mxu0
        %v1524 = vadd.f32 %v1353, %v1523
        %1525 = vmatmul.bf16.gmra.mxu0 %v1317
        %v1526 = vpop.f32.mrf.mxu0
        %v1527 = vadd.f32 %v1353, %v1526
        %v1528 = vpop.f32.mrf.mxu0
        %v1529 = vadd.f32 %v1353, %v1528
        %1530 = vmatmul.bf16.gmra.mxu0 %v1318
        %v1531 = vpop.f32.mrf.mxu0
        %v1532 = vadd.f32 %v1353, %v1531
        %v1533 = vpop.f32.mrf.mxu0
        %v1534 = vadd.f32 %v1353, %v1533
        %1535 = vdwg.mxu0
        %1536 = vmatpush.bf16.msra.mxu0 %v1461
        %1537 = vmatpush.bf16.msra.mxu0 %v1458
        %1538 = vmatpush.bf16.msra.mxu0 %v1455
        %1539 = vmatpush.bf16.msra.mxu0 %v1452
        %1540 = vmatpush.bf16.msra.mxu0 %v1449
        %1541 = vmatpush.bf16.msra.mxu0 %v1446
        %1542 = vmatpush.bf16.msra.mxu0 %v1443
        %1543 = vmatpush.bf16.msra.mxu0 %v1440
        %1544 = vmatmul.bf16.gmra.mxu0 %v1311
        %v1545 = vpop.f32.mrf.mxu0
        %v1546 = vadd.f32 %v1354, %v1545
        %v1547 = vpop.f32.mrf.mxu0
        %v1548 = vadd.f32 %v1354, %v1547
        %1549 = vmatmul.bf16.gmra.mxu0 %v1312
        %v1550 = vpop.f32.mrf.mxu0
        %v1551 = vadd.f32 %v1354, %v1550
        %v1552 = vpop.f32.mrf.mxu0
        %v1553 = vadd.f32 %v1354, %v1552
        %1554 = vmatmul.bf16.gmra.mxu0 %v1313
        %v1555 = vpop.f32.mrf.mxu0
        %v1556 = vadd.f32 %v1354, %v1555
        %v1557 = vpop.f32.mrf.mxu0
        %v1558 = vadd.f32 %v1354, %v1557
        %1559 = vmatmul.bf16.gmra.mxu0 %v1314
        %v1560 = vpop.f32.mrf.mxu0
        %v1561 = vadd.f32 %v1354, %v1560
        %v1562 = vpop.f32.mrf.mxu0
        %v1563 = vadd.f32 %v1354, %v1562
        %1564 = vmatmul.bf16.gmra.mxu0 %v1315
        %v1565 = vpop.f32.mrf.mxu0
        %v1566 = vadd.f32 %v1354, %v1565
        %v1567 = vpop.f32.mrf.mxu0
        %v1568 = vadd.f32 %v1354, %v1567
        %1569 = vmatmul.bf16.gmra.mxu0 %v1316
        %v1570 = vpop.f32.mrf.mxu0
        %v1571 = vadd.f32 %v1354, %v1570
        %v1572 = vpop.f32.mrf.mxu0
        %v1573 = vadd.f32 %v1354, %v1572
        %1574 = vmatmul.bf16.gmra.mxu0 %v1317
        %v1575 = vpop.f32.mrf.mxu0
        %v1576 = vadd.f32 %v1354, %v1575
        %v1577 = vpop.f32.mrf.mxu0
        %v1578 = vadd.f32 %v1354, %v1577
        %1579 = vmatmul.bf16.gmra.mxu0 %v1318
        %v1580 = vpop.f32.mrf.mxu0
        %v1581 = vadd.f32 %v1354, %v1580
        %v1582 = vpop.f32.mrf.mxu0
        %v1583 = vadd.f32 %v1354, %v1582
        %1584 = vdwg.mxu0
        %1585 = vmatpush.bf16.msra.mxu0 %v1462
        %1586 = vmatpush.bf16.msra.mxu0 %v1459
        %1587 = vmatpush.bf16.msra.mxu0 %v1456
        %1588 = vmatpush.bf16.msra.mxu0 %v1453
        %1589 = vmatpush.bf16.msra.mxu0 %v1450
        %1590 = vmatpush.bf16.msra.mxu0 %v1447
        %1591 = vmatpush.bf16.msra.mxu0 %v1444
        %1592 = vmatpush.bf16.msra.mxu0 %v1441
        %1593 = vmatmul.bf16.gmra.mxu0 %v1311
        %v1594 = vpop.f32.mrf.mxu0
        %v1595 = vadd.f32 %v1355, %v1594
        %v1596 = vpop.f32.mrf.mxu0
        %v1597 = vadd.f32 %v1355, %v1596
        %1598 = vmatmul.bf16.gmra.mxu0 %v1312
        %v1599 = vpop.f32.mrf.mxu0
        %v1600 = vadd.f32 %v1355, %v1599
        %v1601 = vpop.f32.mrf.mxu0
        %v1602 = vadd.f32 %v1355, %v1601
        %1603 = vmatmul.bf16.gmra.mxu0 %v1313
        %v1604 = vpop.f32.mrf.mxu0
        %v1605 = vadd.f32 %v1355, %v1604
        %v1606 = vpop.f32.mrf.mxu0
        %v1607 = vadd.f32 %v1355, %v1606
        %1608 = vmatmul.bf16.gmra.mxu0 %v1314
        %v1609 = vpop.f32.mrf.mxu0
        %v1610 = vadd.f32 %v1355, %v1609
        %v1611 = vpop.f32.mrf.mxu0
        %v1612 = vadd.f32 %v1355, %v1611
        %1613 = vmatmul.bf16.gmra.mxu0 %v1315
        %v1614 = vpop.f32.mrf.mxu0
        %v1615 = vadd.f32 %v1355, %v1614
        %v1616 = vpop.f32.mrf.mxu0
        %v1617 = vadd.f32 %v1355, %v1616
        %1618 = vmatmul.bf16.gmra.mxu0 %v1316
        %v1619 = vpop.f32.mrf.mxu0
        %v1620 = vadd.f32 %v1355, %v1619
        %v1621 = vpop.f32.mrf.mxu0
        %v1622 = vadd.f32 %v1355, %v1621
        %1623 = vmatmul.bf16.gmra.mxu0 %v1317
        %v1624 = vpop.f32.mrf.mxu0
        %v1625 = vadd.f32 %v1355, %v1624
        %v1626 = vpop.f32.mrf.mxu0
        %v1627 = vadd.f32 %v1355, %v1626
        %1628 = vmatmul.bf16.gmra.mxu0 %v1318
        %v1629 = vpop.f32.mrf.mxu0
        %v1630 = vadd.f32 %v1355, %v1629
        %v1631 = vpop.f32.mrf.mxu0
        %v1632 = vadd.f32 %v1355, %v1631
        %1633 = vdwg.mxu0
        %v1634 = vpack.c.bf16 %v1546, %v1497
        %v1635 = vpack.c.bf16 %v1595, %v1595
        %v1636 = vpack.c.bf16 %v1548, %v1499
        %v1637 = vpack.c.bf16 %v1597, %v1597
        %v1638 = vpack.c.bf16 %v1551, %v1502
        %v1639 = vpack.c.bf16 %v1600, %v1600
        %v1640 = vpack.c.bf16 %v1553, %v1504
        %v1641 = vpack.c.bf16 %v1602, %v1602
        %v1642 = vpack.c.bf16 %v1556, %v1507
        %v1643 = vpack.c.bf16 %v1605, %v1605
        %v1644 = vpack.c.bf16 %v1558, %v1509
        %v1645 = vpack.c.bf16 %v1607, %v1607
        %v1646 = vpack.c.bf16 %v1561, %v1512
        %v1647 = vpack.c.bf16 %v1610, %v1610
        %v1648 = vpack.c.bf16 %v1563, %v1514
        %v1649 = vpack.c.bf16 %v1612, %v1612
        %v1650 = vpack.c.bf16 %v1566, %v1517
        %v1651 = vpack.c.bf16 %v1615, %v1615
        %v1652 = vpack.c.bf16 %v1568, %v1519
        %v1653 = vpack.c.bf16 %v1617, %v1617
        %v1654 = vpack.c.bf16 %v1571, %v1522
        %v1655 = vpack.c.bf16 %v1620, %v1620
        %v1656 = vpack.c.bf16 %v1573, %v1524
        %v1657 = vpack.c.bf16 %v1622, %v1622
        %v1658 = vpack.c.bf16 %v1576, %v1527
        %v1659 = vpack.c.bf16 %v1625, %v1625
        %v1660 = vpack.c.bf16 %v1578, %v1529
        %v1661 = vpack.c.bf16 %v1627, %v1627
        %v1662 = vpack.c.bf16 %v1581, %v1532
        %v1663 = vpack.c.bf16 %v1630, %v1630
        %v1664 = vpack.c.bf16 %v1583, %v1534
        %v1665 = vpack.c.bf16 %v1632, %v1632
        %v1666 = vld [vmem:[%s916] sm:$0xff]
        %v1667 = vld [vmem:[%s916 + $0x8] sm:$0xff]
        %v1668 = vsub.f32 1.0, %v1666
        %v1669 = vsub.f32 1.0, %v1667
        %v1672 = vrot.slane %v1668, 1
        %v1673 = vrot.slane %v1668, 2
        %v1674 = vrot.slane %v1668, 3
        %v1675 = vrot.slane %v1668, 4
        %v1676 = vrot.slane %v1668, 5
        %v1677 = vrot.slane %v1668, 6
        %v1678 = vrot.slane %v1668, 7
        %v1679 = vrot.slane %v1669, 1
        %v1680 = vrot.slane %v1669, 2
        %v1681 = vrot.slane %v1669, 3
        %v1682 = vrot.slane %v1669, 4
        %v1683 = vrot.slane %v1669, 5
        %v1684 = vrot.slane %v1669, 6
        %v1685 = vrot.slane %v1669, 7
        %v1700 = vmul.f32 %v1668, -1e+09
        %v1701 = vmul.f32 %v1672, -1e+09
        %v1702 = vmul.f32 %v1673, -1e+09
        %v1703 = vmul.f32 %v1674, -1e+09
        %v1704 = vmul.f32 %v1675, -1e+09
        %v1705 = vmul.f32 %v1676, -1e+09
        %v1706 = vmul.f32 %v1677, -1e+09
        %v1707 = vmul.f32 %v1678, -1e+09
        %v1708 = vmul.f32 %v1669, -1e+09
        %v1709 = vmul.f32 %v1679, -1e+09
        %v1710 = vmul.f32 %v1680, -1e+09
        %v1711 = vmul.f32 %v1681, -1e+09
        %v1712 = vmul.f32 %v1682, -1e+09
        %v1713 = vmul.f32 %v1683, -1e+09
        %v1714 = vmul.f32 %v1684, -1e+09
        %v1715 = vmul.f32 %v1685, -1e+09
        %v1732 = vrot.slane %v1634, 4
        %v1733 = vrot.slane %v1636, 4
        %v1734 = vrot.slane %v1638, 4
        %v1735 = vrot.slane %v1640, 4
        %v1736 = vrot.slane %v1642, 4
        %v1737 = vrot.slane %v1644, 4
        %v1738 = vrot.slane %v1646, 4
        %v1739 = vrot.slane %v1648, 4
        %v1740 = vrot.slane %v1650, 4
        %v1741 = vrot.slane %v1652, 4
        %v1742 = vrot.slane %v1654, 4
        %v1743 = vrot.slane %v1656, 4
        %v1744 = vrot.slane %v1658, 4
        %v1745 = vrot.slane %v1660, 4
        %v1746 = vrot.slane %v1662, 4
        %v1747 = vrot.slane %v1664, 4
        %vm1748 = vcmask 261120
        %v1750 = vsel %vm1748, %v1634, 0
        %v1753 = vsel %vm1748, %v1732, 0
        %1755 = vmatpush.bf16.xpose.msra.mxu0 0
        %1756 = vmatpush.bf16.xpose.msra.mxu0 0
        %1757 = vmatpush.bf16.xpose.msra.mxu0 0
        %1758 = vmatpush.bf16.xpose.msra.mxu0 0
        %1759 = vmatpush.bf16.xpose.msra.mxu0 0
        %1760 = vmatpush.bf16.xpose.msra.mxu0 0
        %1761 = vmatpush.bf16.xpose.msra.mxu0 0
        %1762 = vmatpush.bf16.xpose.msra.mxu0 %v1753
        %1763 = vmatmul.bf16.gmra.mxu0 %v1750
        %v1764 = vpop.f32.mrf.mxu0
        %v1765 = vadd.f32 0.0, %v1764
        %v1766 = vpop.f32.mrf.mxu0
        %1767 = vdwg.mxu0
        %v1769 = vsel %vm1748, %v1636, 0
        %v1772 = vsel %vm1748, %v1733, 0
        %1774 = vmatpush.bf16.xpose.msra.mxu0 0
        %1775 = vmatpush.bf16.xpose.msra.mxu0 0
        %1776 = vmatpush.bf16.xpose.msra.mxu0 0
        %1777 = vmatpush.bf16.xpose.msra.mxu0 0
        %1778 = vmatpush.bf16.xpose.msra.mxu0 0
        %1779 = vmatpush.bf16.xpose.msra.mxu0 0
        %1780 = vmatpush.bf16.xpose.msra.mxu0 0
        %1781 = vmatpush.bf16.xpose.msra.mxu0 %v1772
        %1782 = vmatmul.bf16.gmra.mxu0 %v1769
        %v1783 = vpop.f32.mrf.mxu0
        %v1784 = vadd.f32 0.0, %v1783
        %v1785 = vpop.f32.mrf.mxu0
        %1786 = vdwg.mxu0
        %v1788 = vsel %vm1748, %v1638, 0
        %v1791 = vsel %vm1748, %v1734, 0
        %1793 = vmatpush.bf16.xpose.msra.mxu0 0
        %1794 = vmatpush.bf16.xpose.msra.mxu0 0
        %1795 = vmatpush.bf16.xpose.msra.mxu0 0
        %1796 = vmatpush.bf16.xpose.msra.mxu0 0
        %1797 = vmatpush.bf16.xpose.msra.mxu0 0
        %1798 = vmatpush.bf16.xpose.msra.mxu0 0
        %1799 = vmatpush.bf16.xpose.msra.mxu0 0
        %1800 = vmatpush.bf16.xpose.msra.mxu0 %v1791
        %1801 = vmatmul.bf16.gmra.mxu0 %v1788
        %v1802 = vpop.f32.mrf.mxu0
        %v1803 = vadd.f32 0.0, %v1802
        %v1804 = vpop.f32.mrf.mxu0
        %1805 = vdwg.mxu0
        %v1807 = vsel %vm1748, %v1640, 0
        %v1810 = vsel %vm1748, %v1735, 0
        %1812 = vmatpush.bf16.xpose.msra.mxu0 0
        %1813 = vmatpush.bf16.xpose.msra.mxu0 0
        %1814 = vmatpush.bf16.xpose.msra.mxu0 0
        %1815 = vmatpush.bf16.xpose.msra.mxu0 0
        %1816 = vmatpush.bf16.xpose.msra.mxu0 0
        %1817 = vmatpush.bf16.xpose.msra.mxu0 0
        %1818 = vmatpush.bf16.xpose.msra.mxu0 0
        %1819 = vmatpush.bf16.xpose.msra.mxu0 %v1810
        %1820 = vmatmul.bf16.gmra.mxu0 %v1807
        %v1821 = vpop.f32.mrf.mxu0
        %v1822 = vadd.f32 0.0, %v1821
        %v1823 = vpop.f32.mrf.mxu0
        %1824 = vdwg.mxu0
        %v1826 = vsel %vm1748, %v1642, 0
        %v1829 = vsel %vm1748, %v1736, 0
        %1831 = vmatpush.bf16.xpose.msra.mxu0 0
        %1832 = vmatpush.bf16.xpose.msra.mxu0 0
        %1833 = vmatpush.bf16.xpose.msra.mxu0 0
        %1834 = vmatpush.bf16.xpose.msra.mxu0 0
        %1835 = vmatpush.bf16.xpose.msra.mxu0 0
        %1836 = vmatpush.bf16.xpose.msra.mxu0 0
        %1837 = vmatpush.bf16.xpose.msra.mxu0 0
        %1838 = vmatpush.bf16.xpose.msra.mxu0 %v1829
        %1839 = vmatmul.bf16.gmra.mxu0 %v1826
        %v1840 = vpop.f32.mrf.mxu0
        %v1841 = vadd.f32 0.0, %v1840
        %v1842 = vpop.f32.mrf.mxu0
        %1843 = vdwg.mxu0
        %v1845 = vsel %vm1748, %v1644, 0
        %v1848 = vsel %vm1748, %v1737, 0
        %1850 = vmatpush.bf16.xpose.msra.mxu0 0
        %1851 = vmatpush.bf16.xpose.msra.mxu0 0
        %1852 = vmatpush.bf16.xpose.msra.mxu0 0
        %1853 = vmatpush.bf16.xpose.msra.mxu0 0
        %1854 = vmatpush.bf16.xpose.msra.mxu0 0
        %1855 = vmatpush.bf16.xpose.msra.mxu0 0
        %1856 = vmatpush.bf16.xpose.msra.mxu0 0
        %1857 = vmatpush.bf16.xpose.msra.mxu0 %v1848
        %1858 = vmatmul.bf16.gmra.mxu0 %v1845
        %v1859 = vpop.f32.mrf.mxu0
        %v1860 = vadd.f32 0.0, %v1859
        %v1861 = vpop.f32.mrf.mxu0
        %1862 = vdwg.mxu0
        %v1864 = vsel %vm1748, %v1646, 0
        %v1867 = vsel %vm1748, %v1738, 0
        %1869 = vmatpush.bf16.xpose.msra.mxu0 0
        %1870 = vmatpush.bf16.xpose.msra.mxu0 0
        %1871 = vmatpush.bf16.xpose.msra.mxu0 0
        %1872 = vmatpush.bf16.xpose.msra.mxu0 0
        %1873 = vmatpush.bf16.xpose.msra.mxu0 0
        %1874 = vmatpush.bf16.xpose.msra.mxu0 0
        %1875 = vmatpush.bf16.xpose.msra.mxu0 0
        %1876 = vmatpush.bf16.xpose.msra.mxu0 %v1867
        %1877 = vmatmul.bf16.gmra.mxu0 %v1864
        %v1878 = vpop.f32.mrf.mxu0
        %v1879 = vadd.f32 0.0, %v1878
        %v1880 = vpop.f32.mrf.mxu0
        %1881 = vdwg.mxu0
        %v1883 = vsel %vm1748, %v1648, 0
        %v1886 = vsel %vm1748, %v1739, 0
        %1888 = vmatpush.bf16.xpose.msra.mxu0 0
        %1889 = vmatpush.bf16.xpose.msra.mxu0 0
        %1890 = vmatpush.bf16.xpose.msra.mxu0 0
        %1891 = vmatpush.bf16.xpose.msra.mxu0 0
        %1892 = vmatpush.bf16.xpose.msra.mxu0 0
        %1893 = vmatpush.bf16.xpose.msra.mxu0 0
        %1894 = vmatpush.bf16.xpose.msra.mxu0 0
        %1895 = vmatpush.bf16.xpose.msra.mxu0 %v1886
        %1896 = vmatmul.bf16.gmra.mxu0 %v1883
        %v1897 = vpop.f32.mrf.mxu0
        %v1898 = vadd.f32 0.0, %v1897
        %v1899 = vpop.f32.mrf.mxu0
        %1900 = vdwg.mxu0
        %v1902 = vsel %vm1748, %v1650, 0
        %v1905 = vsel %vm1748, %v1740, 0
        %1907 = vmatpush.bf16.xpose.msra.mxu0 0
        %1908 = vmatpush.bf16.xpose.msra.mxu0 0
        %1909 = vmatpush.bf16.xpose.msra.mxu0 0
        %1910 = vmatpush.bf16.xpose.msra.mxu0 0
        %1911 = vmatpush.bf16.xpose.msra.mxu0 0
        %1912 = vmatpush.bf16.xpose.msra.mxu0 0
        %1913 = vmatpush.bf16.xpose.msra.mxu0 0
        %1914 = vmatpush.bf16.xpose.msra.mxu0 %v1905
        %1915 = vmatmul.bf16.gmra.mxu0 %v1902
        %v1916 = vpop.f32.mrf.mxu0
        %v1917 = vadd.f32 0.0, %v1916
        %v1918 = vpop.f32.mrf.mxu0
        %1919 = vdwg.mxu0
        %v1921 = vsel %vm1748, %v1652, 0
        %v1924 = vsel %vm1748, %v1741, 0
        %1926 = vmatpush.bf16.xpose.msra.mxu0 0
        %1927 = vmatpush.bf16.xpose.msra.mxu0 0
        %1928 = vmatpush.bf16.xpose.msra.mxu0 0
        %1929 = vmatpush.bf16.xpose.msra.mxu0 0
        %1930 = vmatpush.bf16.xpose.msra.mxu0 0
        %1931 = vmatpush.bf16.xpose.msra.mxu0 0
        %1932 = vmatpush.bf16.xpose.msra.mxu0 0
        %1933 = vmatpush.bf16.xpose.msra.mxu0 %v1924
        %1934 = vmatmul.bf16.gmra.mxu0 %v1921
        %v1935 = vpop.f32.mrf.mxu0
        %v1936 = vadd.f32 0.0, %v1935
        %v1937 = vpop.f32.mrf.mxu0
        %1938 = vdwg.mxu0
        %v1940 = vsel %vm1748, %v1654, 0
        %v1943 = vsel %vm1748, %v1742, 0
        %1945 = vmatpush.bf16.xpose.msra.mxu0 0
        %1946 = vmatpush.bf16.xpose.msra.mxu0 0
        %1947 = vmatpush.bf16.xpose.msra.mxu0 0
        %1948 = vmatpush.bf16.xpose.msra.mxu0 0
        %1949 = vmatpush.bf16.xpose.msra.mxu0 0
        %1950 = vmatpush.bf16.xpose.msra.mxu0 0
        %1951 = vmatpush.bf16.xpose.msra.mxu0 0
        %1952 = vmatpush.bf16.xpose.msra.mxu0 %v1943
        %1953 = vmatmul.bf16.gmra.mxu0 %v1940
        %v1954 = vpop.f32.mrf.mxu0
        %v1955 = vadd.f32 0.0, %v1954
        %v1956 = vpop.f32.mrf.mxu0
        %1957 = vdwg.mxu0
        %v1959 = vsel %vm1748, %v1656, 0
        %v1962 = vsel %vm1748, %v1743, 0
        %1964 = vmatpush.bf16.xpose.msra.mxu0 0
        %1965 = vmatpush.bf16.xpose.msra.mxu0 0
        %1966 = vmatpush.bf16.xpose.msra.mxu0 0
        %1967 = vmatpush.bf16.xpose.msra.mxu0 0
        %1968 = vmatpush.bf16.xpose.msra.mxu0 0
        %1969 = vmatpush.bf16.xpose.msra.mxu0 0
        %1970 = vmatpush.bf16.xpose.msra.mxu0 0
        %1971 = vmatpush.bf16.xpose.msra.mxu0 %v1962
        %1972 = vmatmul.bf16.gmra.mxu0 %v1959
        %v1973 = vpop.f32.mrf.mxu0
        %v1974 = vadd.f32 0.0, %v1973
        %v1975 = vpop.f32.mrf.mxu0
        %1976 = vdwg.mxu0
        %v1978 = vsel %vm1748, %v1658, 0
        %v1981 = vsel %vm1748, %v1744, 0
        %1983 = vmatpush.bf16.xpose.msra.mxu0 0
        %1984 = vmatpush.bf16.xpose.msra.mxu0 0
        %1985 = vmatpush.bf16.xpose.msra.mxu0 0
        %1986 = vmatpush.bf16.xpose.msra.mxu0 0
        %1987 = vmatpush.bf16.xpose.msra.mxu0 0
        %1988 = vmatpush.bf16.xpose.msra.mxu0 0
        %1989 = vmatpush.bf16.xpose.msra.mxu0 0
        %1990 = vmatpush.bf16.xpose.msra.mxu0 %v1981
        %1991 = vmatmul.bf16.gmra.mxu0 %v1978
        %v1992 = vpop.f32.mrf.mxu0
        %v1993 = vadd.f32 0.0, %v1992
        %v1994 = vpop.f32.mrf.mxu0
        %1995 = vdwg.mxu0
        %v1997 = vsel %vm1748, %v1660, 0
        %v2000 = vsel %vm1748, %v1745, 0
        %2002 = vmatpush.bf16.xpose.msra.mxu0 0
        %2003 = vmatpush.bf16.xpose.msra.mxu0 0
        %2004 = vmatpush.bf16.xpose.msra.mxu0 0
        %2005 = vmatpush.bf16.xpose.msra.mxu0 0
        %2006 = vmatpush.bf16.xpose.msra.mxu0 0
        %2007 = vmatpush.bf16.xpose.msra.mxu0 0
        %2008 = vmatpush.bf16.xpose.msra.mxu0 0
        %2009 = vmatpush.bf16.xpose.msra.mxu0 %v2000
        %2010 = vmatmul.bf16.gmra.mxu0 %v1997
        %v2011 = vpop.f32.mrf.mxu0
        %v2012 = vadd.f32 0.0, %v2011
        %v2013 = vpop.f32.mrf.mxu0
        %2014 = vdwg.mxu0
        %v2016 = vsel %vm1748, %v1662, 0
        %v2019 = vsel %vm1748, %v1746, 0
        %2021 = vmatpush.bf16.xpose.msra.mxu0 0
        %2022 = vmatpush.bf16.xpose.msra.mxu0 0
        %2023 = vmatpush.bf16.xpose.msra.mxu0 0
        %2024 = vmatpush.bf16.xpose.msra.mxu0 0
        %2025 = vmatpush.bf16.xpose.msra.mxu0 0
        %2026 = vmatpush.bf16.xpose.msra.mxu0 0
        %2027 = vmatpush.bf16.xpose.msra.mxu0 0
        %2028 = vmatpush.bf16.xpose.msra.mxu0 %v2019
        %2029 = vmatmul.bf16.gmra.mxu0 %v2016
        %v2030 = vpop.f32.mrf.mxu0
        %v2031 = vadd.f32 0.0, %v2030
        %v2032 = vpop.f32.mrf.mxu0
        %2033 = vdwg.mxu0
        %v2035 = vsel %vm1748, %v1664, 0
        %v2038 = vsel %vm1748, %v1747, 0
        %2040 = vmatpush.bf16.xpose.msra.mxu0 0
        %2041 = vmatpush.bf16.xpose.msra.mxu0 0
        %2042 = vmatpush.bf16.xpose.msra.mxu0 0
        %2043 = vmatpush.bf16.xpose.msra.mxu0 0
        %2044 = vmatpush.bf16.xpose.msra.mxu0 0
        %2045 = vmatpush.bf16.xpose.msra.mxu0 0
        %2046 = vmatpush.bf16.xpose.msra.mxu0 0
        %2047 = vmatpush.bf16.xpose.msra.mxu0 %v2038
        %2048 = vmatmul.bf16.gmra.mxu0 %v2035
        %v2049 = vpop.f32.mrf.mxu0
        %v2050 = vadd.f32 0.0, %v2049
        %v2051 = vpop.f32.mrf.mxu0
        %2052 = vdwg.mxu0
        %v2053 = vmul.f32 %v1765, 0.17677669
        %v2054 = vmul.f32 %v1784, 0.17677669
        %v2055 = vmul.f32 %v1803, 0.17677669
        %v2056 = vmul.f32 %v1822, 0.17677669
        %v2057 = vmul.f32 %v1841, 0.17677669
        %v2058 = vmul.f32 %v1860, 0.17677669
        %v2059 = vmul.f32 %v1879, 0.17677669
        %v2060 = vmul.f32 %v1898, 0.17677669
        %v2061 = vmul.f32 %v1917, 0.17677669
        %v2062 = vmul.f32 %v1936, 0.17677669
        %v2063 = vmul.f32 %v1955, 0.17677669
        %v2064 = vmul.f32 %v1974, 0.17677669
        %v2065 = vmul.f32 %v1993, 0.17677669
        %v2066 = vmul.f32 %v2012, 0.17677669
        %v2067 = vmul.f32 %v2031, 0.17677669
        %v2068 = vmul.f32 %v2050, 0.17677669
        %v2085 = vperm.slane %v1700, 0
        %v2086 = vperm.slane %v1701, 0
        %v2087 = vperm.slane %v1702, 0
        %v2088 = vperm.slane %v1703, 0
        %v2089 = vperm.slane %v1704, 0
        %v2090 = vperm.slane %v1705, 0
        %v2091 = vperm.slane %v1706, 0
        %v2092 = vperm.slane %v1707, 0
        %v2093 = vperm.slane %v1708, 0
        %v2094 = vperm.slane %v1709, 0
        %v2095 = vperm.slane %v1710, 0
        %v2096 = vperm.slane %v1711, 0
        %v2097 = vperm.slane %v1712, 0
        %v2098 = vperm.slane %v1713, 0
        %v2099 = vperm.slane %v1714, 0
        %v2100 = vperm.slane %v1715, 0
        %v2117 = vadd.f32 %v2053, %v2085
        %v2118 = vadd.f32 %v2054, %v2086
        %v2119 = vadd.f32 %v2055, %v2087
        %v2120 = vadd.f32 %v2056, %v2088
        %v2121 = vadd.f32 %v2057, %v2089
        %v2122 = vadd.f32 %v2058, %v2090
        %v2123 = vadd.f32 %v2059, %v2091
        %v2124 = vadd.f32 %v2060, %v2092
        %v2125 = vadd.f32 %v2061, %v2093
        %v2126 = vadd.f32 %v2062, %v2094
        %v2127 = vadd.f32 %v2063, %v2095
        %v2128 = vadd.f32 %v2064, %v2096
        %v2129 = vadd.f32 %v2065, %v2097
        %v2130 = vadd.f32 %v2066, %v2098
        %v2131 = vadd.f32 %v2067, %v2099
        %v2132 = vadd.f32 %v2068, %v2100
        %vm2133 = vcmask 64512
        %v2134 = vsel %vm2133, %v2117, -inf
        %2135 = vmax.xlane.f32.xlu0 %v2134
        %v2136 = vpop.xlane.xlu0 %2135
        %v2137 = vsel %vm2133, %v2118, -inf
        %2138 = vmax.xlane.f32.xlu0 %v2137
        %v2139 = vpop.xlane.xlu0 %2138
        %v2140 = vsel %vm2133, %v2119, -inf
        %2141 = vmax.xlane.f32.xlu0 %v2140
        %v2142 = vpop.xlane.xlu0 %2141
        %v2143 = vsel %vm2133, %v2120, -inf
        %2144 = vmax.xlane.f32.xlu0 %v2143
        %v2145 = vpop.xlane.xlu0 %2144
        %v2146 = vsel %vm2133, %v2121, -inf
        %2147 = vmax.xlane.f32.xlu0 %v2146
        %v2148 = vpop.xlane.xlu0 %2147
        %v2149 = vsel %vm2133, %v2122, -inf
        %2150 = vmax.xlane.f32.xlu0 %v2149
        %v2151 = vpop.xlane.xlu0 %2150
        %v2152 = vsel %vm2133, %v2123, -inf
        %2153 = vmax.xlane.f32.xlu0 %v2152
        %v2154 = vpop.xlane.xlu0 %2153
        %v2155 = vsel %vm2133, %v2124, -inf
        %2156 = vmax.xlane.f32.xlu0 %v2155
        %v2157 = vpop.xlane.xlu0 %2156
        %v2158 = vsel %vm2133, %v2125, -inf
        %2159 = vmax.xlane.f32.xlu0 %v2158
        %v2160 = vpop.xlane.xlu0 %2159
        %v2161 = vsel %vm2133, %v2126, -inf
        %2162 = vmax.xlane.f32.xlu0 %v2161
        %v2163 = vpop.xlane.xlu0 %2162
        %v2164 = vsel %vm2133, %v2127, -inf
        %2165 = vmax.xlane.f32.xlu0 %v2164
        %v2166 = vpop.xlane.xlu0 %2165
        %v2167 = vsel %vm2133, %v2128, -inf
        %2168 = vmax.xlane.f32.xlu0 %v2167
        %v2169 = vpop.xlane.xlu0 %2168
        %v2170 = vsel %vm2133, %v2129, -inf
        %2171 = vmax.xlane.f32.xlu0 %v2170
        %v2172 = vpop.xlane.xlu0 %2171
        %v2173 = vsel %vm2133, %v2130, -inf
        %2174 = vmax.xlane.f32.xlu0 %v2173
        %v2175 = vpop.xlane.xlu0 %2174
        %v2176 = vsel %vm2133, %v2131, -inf
        %2177 = vmax.xlane.f32.xlu0 %v2176
        %v2178 = vpop.xlane.xlu0 %2177
        %v2179 = vsel %vm2133, %v2132, -inf
        %2180 = vmax.xlane.f32.xlu0 %v2179
        %v2181 = vpop.xlane.xlu0 %2180
        %v2182 = vsub.f32 %v2117, %v2136
        %v2183 = vsub.f32 %v2118, %v2139
        %v2184 = vsub.f32 %v2119, %v2142
        %v2185 = vsub.f32 %v2120, %v2145
        %v2186 = vsub.f32 %v2121, %v2148
        %v2187 = vsub.f32 %v2122, %v2151
        %v2188 = vsub.f32 %v2123, %v2154
        %v2189 = vsub.f32 %v2124, %v2157
        %v2190 = vsub.f32 %v2125, %v2160
        %v2191 = vsub.f32 %v2126, %v2163
        %v2192 = vsub.f32 %v2127, %v2166
        %v2193 = vsub.f32 %v2128, %v2169
        %v2194 = vsub.f32 %v2129, %v2172
        %v2195 = vsub.f32 %v2130, %v2175
        %v2196 = vsub.f32 %v2131, %v2178
        %v2197 = vsub.f32 %v2132, %v2181
        %v2198 = vmul.f32 %v2182, 1.442695
        %v2199 = vpow.pop %v2198
        %v2200 = vmul.f32 %v2183, 1.442695
        %v2201 = vpow.pop %v2200
        %v2202 = vmul.f32 %v2184, 1.442695
        %v2203 = vpow.pop %v2202
        %v2204 = vmul.f32 %v2185, 1.442695
        %v2205 = vpow.pop %v2204
        %v2206 = vmul.f32 %v2186, 1.442695
        %v2207 = vpow.pop %v2206
        %v2208 = vmul.f32 %v2187, 1.442695
        %v2209 = vpow.pop %v2208
        %v2210 = vmul.f32 %v2188, 1.442695
        %v2211 = vpow.pop %v2210
        %v2212 = vmul.f32 %v2189, 1.442695
        %v2213 = vpow.pop %v2212
        %v2214 = vmul.f32 %v2190, 1.442695
        %v2215 = vpow.pop %v2214
        %v2216 = vmul.f32 %v2191, 1.442695
        %v2217 = vpow.pop %v2216
        %v2218 = vmul.f32 %v2192, 1.442695
        %v2219 = vpow.pop %v2218
        %v2220 = vmul.f32 %v2193, 1.442695
        %v2221 = vpow.pop %v2220
        %v2222 = vmul.f32 %v2194, 1.442695
        %v2223 = vpow.pop %v2222
        %v2224 = vmul.f32 %v2195, 1.442695
        %v2225 = vpow.pop %v2224
        %v2226 = vmul.f32 %v2196, 1.442695
        %v2227 = vpow.pop %v2226
        %v2228 = vmul.f32 %v2197, 1.442695
        %v2229 = vpow.pop %v2228
        %v2230 = vsel %vm2133, %v2199, 0.0
        %2231 = vadd.xlane.f32.xlu0 %v2230
        %v2232 = vpop.xlane.xlu0 %2231
        %v2233 = vsel %vm2133, %v2201, 0.0
        %2234 = vadd.xlane.f32.xlu0 %v2233
        %v2235 = vpop.xlane.xlu0 %2234
        %v2236 = vsel %vm2133, %v2203, 0.0
        %2237 = vadd.xlane.f32.xlu0 %v2236
        %v2238 = vpop.xlane.xlu0 %2237
        %v2239 = vsel %vm2133, %v2205, 0.0
        %2240 = vadd.xlane.f32.xlu0 %v2239
        %v2241 = vpop.xlane.xlu0 %2240
        %v2242 = vsel %vm2133, %v2207, 0.0
        %2243 = vadd.xlane.f32.xlu0 %v2242
        %v2244 = vpop.xlane.xlu0 %2243
        %v2245 = vsel %vm2133, %v2209, 0.0
        %2246 = vadd.xlane.f32.xlu0 %v2245
        %v2247 = vpop.xlane.xlu0 %2246
        %v2248 = vsel %vm2133, %v2211, 0.0
        %2249 = vadd.xlane.f32.xlu0 %v2248
        %v2250 = vpop.xlane.xlu0 %2249
        %v2251 = vsel %vm2133, %v2213, 0.0
        %2252 = vadd.xlane.f32.xlu0 %v2251
        %v2253 = vpop.xlane.xlu0 %2252
        %v2254 = vsel %vm2133, %v2215, 0.0
        %2255 = vadd.xlane.f32.xlu0 %v2254
        %v2256 = vpop.xlane.xlu0 %2255
        %v2257 = vsel %vm2133, %v2217, 0.0
        %2258 = vadd.xlane.f32.xlu0 %v2257
        %v2259 = vpop.xlane.xlu0 %2258
        %v2260 = vsel %vm2133, %v2219, 0.0
        %2261 = vadd.xlane.f32.xlu0 %v2260
        %v2262 = vpop.xlane.xlu0 %2261
        %v2263 = vsel %vm2133, %v2221, 0.0
        %2264 = vadd.xlane.f32.xlu0 %v2263
        %v2265 = vpop.xlane.xlu0 %2264
        %v2266 = vsel %vm2133, %v2223, 0.0
        %2267 = vadd.xlane.f32.xlu0 %v2266
        %v2268 = vpop.xlane.xlu0 %2267
        %v2269 = vsel %vm2133, %v2225, 0.0
        %2270 = vadd.xlane.f32.xlu0 %v2269
        %v2271 = vpop.xlane.xlu0 %2270
        %v2272 = vsel %vm2133, %v2227, 0.0
        %2273 = vadd.xlane.f32.xlu0 %v2272
        %v2274 = vpop.xlane.xlu0 %2273
        %v2275 = vsel %vm2133, %v2229, 0.0
        %2276 = vadd.xlane.f32.xlu0 %v2275
        %v2277 = vpop.xlane.xlu0 %2276
        %v2278 = vrcp.pop %v2232
        %v2279 = vrcp.pop %v2235
        %v2280 = vrcp.pop %v2238
        %v2281 = vrcp.pop %v2241
        %v2282 = vrcp.pop %v2244
        %v2283 = vrcp.pop %v2247
        %v2284 = vrcp.pop %v2250
        %v2285 = vrcp.pop %v2253
        %v2286 = vrcp.pop %v2256
        %v2287 = vrcp.pop %v2259
        %v2288 = vrcp.pop %v2262
        %v2289 = vrcp.pop %v2265
        %v2290 = vrcp.pop %v2268
        %v2291 = vrcp.pop %v2271
        %v2292 = vrcp.pop %v2274
        %v2293 = vrcp.pop %v2277
        %v2294 = vmul.f32 %v2199, %v2278
        %v2295 = vmul.f32 %v2201, %v2279
        %v2296 = vmul.f32 %v2203, %v2280
        %v2297 = vmul.f32 %v2205, %v2281
        %v2298 = vmul.f32 %v2207, %v2282
        %v2299 = vmul.f32 %v2209, %v2283
        %v2300 = vmul.f32 %v2211, %v2284
        %v2301 = vmul.f32 %v2213, %v2285
        %v2302 = vmul.f32 %v2215, %v2286
        %v2303 = vmul.f32 %v2217, %v2287
        %v2304 = vmul.f32 %v2219, %v2288
        %v2305 = vmul.f32 %v2221, %v2289
        %v2306 = vmul.f32 %v2223, %v2290
        %v2307 = vmul.f32 %v2225, %v2291
        %v2308 = vmul.f32 %v2227, %v2292
        %v2309 = vmul.f32 %v2229, %v2293
        %v2310 = vpack.c.bf16 %v2294, %v2294
        %v2311 = vpack.c.bf16 %v2295, %v2295
        %v2312 = vpack.c.bf16 %v2296, %v2296
        %v2313 = vpack.c.bf16 %v2297, %v2297
        %v2314 = vpack.c.bf16 %v2298, %v2298
        %v2315 = vpack.c.bf16 %v2299, %v2299
        %v2316 = vpack.c.bf16 %v2300, %v2300
        %v2317 = vpack.c.bf16 %v2301, %v2301
        %v2318 = vpack.c.bf16 %v2302, %v2302
        %v2319 = vpack.c.bf16 %v2303, %v2303
        %v2320 = vpack.c.bf16 %v2304, %v2304
        %v2321 = vpack.c.bf16 %v2305, %v2305
        %v2322 = vpack.c.bf16 %v2306, %v2306
        %v2323 = vpack.c.bf16 %v2307, %v2307
        %v2324 = vpack.c.bf16 %v2308, %v2308
        %v2325 = vpack.c.bf16 %v2309, %v2309
        %v2327 = vsel %vm2133, %v2310, 0
        %vm2329 = vcmask 1043456
        %v2331 = vsel %vm2329, %v1635, 0
        %2333 = vmatpush.bf16.msra.mxu0 0
        %2334 = vmatpush.bf16.msra.mxu0 0
        %2335 = vmatpush.bf16.msra.mxu0 0
        %2336 = vmatpush.bf16.msra.mxu0 0
        %2337 = vmatpush.bf16.msra.mxu0 0
        %2338 = vmatpush.bf16.msra.mxu0 0
        %2339 = vmatpush.bf16.msra.mxu0 0
        %2340 = vmatpush.bf16.msra.mxu0 %v2331
        %2341 = vmatmul.bf16.gmra.mxu0 %v2327
        %v2342 = vpop.f32.mrf.mxu0
        %v2343 = vadd.f32 0.0, %v2342
        %v2344 = vpop.f32.mrf.mxu0
        %2345 = vdwg.mxu0
        %v2347 = vsel %vm2133, %v2311, 0
        %v2350 = vsel %vm2329, %v1637, 0
        %2352 = vmatpush.bf16.msra.mxu0 0
        %2353 = vmatpush.bf16.msra.mxu0 0
        %2354 = vmatpush.bf16.msra.mxu0 0
        %2355 = vmatpush.bf16.msra.mxu0 0
        %2356 = vmatpush.bf16.msra.mxu0 0
        %2357 = vmatpush.bf16.msra.mxu0 0
        %2358 = vmatpush.bf16.msra.mxu0 0
        %2359 = vmatpush.bf16.msra.mxu0 %v2350
        %2360 = vmatmul.bf16.gmra.mxu0 %v2347
        %v2361 = vpop.f32.mrf.mxu0
        %v2362 = vadd.f32 0.0, %v2361
        %v2363 = vpop.f32.mrf.mxu0
        %2364 = vdwg.mxu0
        %v2366 = vsel %vm2133, %v2312, 0
        %v2369 = vsel %vm2329, %v1639, 0
        %2371 = vmatpush.bf16.msra.mxu0 0
        %2372 = vmatpush.bf16.msra.mxu0 0
        %2373 = vmatpush.bf16.msra.mxu0 0
        %2374 = vmatpush.bf16.msra.mxu0 0
        %2375 = vmatpush.bf16.msra.mxu0 0
        %2376 = vmatpush.bf16.msra.mxu0 0
        %2377 = vmatpush.bf16.msra.mxu0 0
        %2378 = vmatpush.bf16.msra.mxu0 %v2369
        %2379 = vmatmul.bf16.gmra.mxu0 %v2366
        %v2380 = vpop.f32.mrf.mxu0
        %v2381 = vadd.f32 0.0, %v2380
        %v2382 = vpop.f32.mrf.mxu0
        %2383 = vdwg.mxu0
        %v2385 = vsel %vm2133, %v2313, 0
        %v2388 = vsel %vm2329, %v1641, 0
        %2390 = vmatpush.bf16.msra.mxu0 0
        %2391 = vmatpush.bf16.msra.mxu0 0
        %2392 = vmatpush.bf16.msra.mxu0 0
        %2393 = vmatpush.bf16.msra.mxu0 0
        %2394 = vmatpush.bf16.msra.mxu0 0
        %2395 = vmatpush.bf16.msra.mxu0 0
        %2396 = vmatpush.bf16.msra.mxu0 0
        %2397 = vmatpush.bf16.msra.mxu0 %v2388
        %2398 = vmatmul.bf16.gmra.mxu0 %v2385
        %v2399 = vpop.f32.mrf.mxu0
        %v2400 = vadd.f32 0.0, %v2399
        %v2401 = vpop.f32.mrf.mxu0
        %2402 = vdwg.mxu0
        %v2404 = vsel %vm2133, %v2314, 0
        %v2407 = vsel %vm2329, %v1643, 0
        %2409 = vmatpush.bf16.msra.mxu0 0
        %2410 = vmatpush.bf16.msra.mxu0 0
        %2411 = vmatpush.bf16.msra.mxu0 0
        %2412 = vmatpush.bf16.msra.mxu0 0
        %2413 = vmatpush.bf16.msra.mxu0 0
        %2414 = vmatpush.bf16.msra.mxu0 0
        %2415 = vmatpush.bf16.msra.mxu0 0
        %2416 = vmatpush.bf16.msra.mxu0 %v2407
        %2417 = vmatmul.bf16.gmra.mxu0 %v2404
        %v2418 = vpop.f32.mrf.mxu0
        %v2419 = vadd.f32 0.0, %v2418
        %v2420 = vpop.f32.mrf.mxu0
        %2421 = vdwg.mxu0
        %v2423 = vsel %vm2133, %v2315, 0
        %v2426 = vsel %vm2329, %v1645, 0
        %2428 = vmatpush.bf16.msra.mxu0 0
        %2429 = vmatpush.bf16.msra.mxu0 0
        %2430 = vmatpush.bf16.msra.mxu0 0
        %2431 = vmatpush.bf16.msra.mxu0 0
        %2432 = vmatpush.bf16.msra.mxu0 0
        %2433 = vmatpush.bf16.msra.mxu0 0
        %2434 = vmatpush.bf16.msra.mxu0 0
        %2435 = vmatpush.bf16.msra.mxu0 %v2426
        %2436 = vmatmul.bf16.gmra.mxu0 %v2423
        %v2437 = vpop.f32.mrf.mxu0
        %v2438 = vadd.f32 0.0, %v2437
        %v2439 = vpop.f32.mrf.mxu0
        %2440 = vdwg.mxu0
        %v2442 = vsel %vm2133, %v2316, 0
        %v2445 = vsel %vm2329, %v1647, 0
        %2447 = vmatpush.bf16.msra.mxu0 0
        %2448 = vmatpush.bf16.msra.mxu0 0
        %2449 = vmatpush.bf16.msra.mxu0 0
        %2450 = vmatpush.bf16.msra.mxu0 0
        %2451 = vmatpush.bf16.msra.mxu0 0
        %2452 = vmatpush.bf16.msra.mxu0 0
        %2453 = vmatpush.bf16.msra.mxu0 0
        %2454 = vmatpush.bf16.msra.mxu0 %v2445
        %2455 = vmatmul.bf16.gmra.mxu0 %v2442
        %v2456 = vpop.f32.mrf.mxu0
        %v2457 = vadd.f32 0.0, %v2456
        %v2458 = vpop.f32.mrf.mxu0
        %2459 = vdwg.mxu0
        %v2461 = vsel %vm2133, %v2317, 0
        %v2464 = vsel %vm2329, %v1649, 0
        %2466 = vmatpush.bf16.msra.mxu0 0
        %2467 = vmatpush.bf16.msra.mxu0 0
        %2468 = vmatpush.bf16.msra.mxu0 0
        %2469 = vmatpush.bf16.msra.mxu0 0
        %2470 = vmatpush.bf16.msra.mxu0 0
        %2471 = vmatpush.bf16.msra.mxu0 0
        %2472 = vmatpush.bf16.msra.mxu0 0
        %2473 = vmatpush.bf16.msra.mxu0 %v2464
        %2474 = vmatmul.bf16.gmra.mxu0 %v2461
        %v2475 = vpop.f32.mrf.mxu0
        %v2476 = vadd.f32 0.0, %v2475
        %v2477 = vpop.f32.mrf.mxu0
        %2478 = vdwg.mxu0
        %v2480 = vsel %vm2133, %v2318, 0
        %v2483 = vsel %vm2329, %v1651, 0
        %2485 = vmatpush.bf16.msra.mxu0 0
        %2486 = vmatpush.bf16.msra.mxu0 0
        %2487 = vmatpush.bf16.msra.mxu0 0
        %2488 = vmatpush.bf16.msra.mxu0 0
        %2489 = vmatpush.bf16.msra.mxu0 0
        %2490 = vmatpush.bf16.msra.mxu0 0
        %2491 = vmatpush.bf16.msra.mxu0 0
        %2492 = vmatpush.bf16.msra.mxu0 %v2483
        %2493 = vmatmul.bf16.gmra.mxu0 %v2480
        %v2494 = vpop.f32.mrf.mxu0
        %v2495 = vadd.f32 0.0, %v2494
        %v2496 = vpop.f32.mrf.mxu0
        %2497 = vdwg.mxu0
        %v2499 = vsel %vm2133, %v2319, 0
        %v2502 = vsel %vm2329, %v1653, 0
        %2504 = vmatpush.bf16.msra.mxu0 0
        %2505 = vmatpush.bf16.msra.mxu0 0
        %2506 = vmatpush.bf16.msra.mxu0 0
        %2507 = vmatpush.bf16.msra.mxu0 0
        %2508 = vmatpush.bf16.msra.mxu0 0
        %2509 = vmatpush.bf16.msra.mxu0 0
        %2510 = vmatpush.bf16.msra.mxu0 0
        %2511 = vmatpush.bf16.msra.mxu0 %v2502
        %2512 = vmatmul.bf16.gmra.mxu0 %v2499
        %v2513 = vpop.f32.mrf.mxu0
        %v2514 = vadd.f32 0.0, %v2513
        %v2515 = vpop.f32.mrf.mxu0
        %2516 = vdwg.mxu0
        %v2518 = vsel %vm2133, %v2320, 0
        %v2521 = vsel %vm2329, %v1655, 0
        %2523 = vmatpush.bf16.msra.mxu0 0
        %2524 = vmatpush.bf16.msra.mxu0 0
        %2525 = vmatpush.bf16.msra.mxu0 0
        %2526 = vmatpush.bf16.msra.mxu0 0
        %2527 = vmatpush.bf16.msra.mxu0 0
        %2528 = vmatpush.bf16.msra.mxu0 0
        %2529 = vmatpush.bf16.msra.mxu0 0
        %2530 = vmatpush.bf16.msra.mxu0 %v2521
        %2531 = vmatmul.bf16.gmra.mxu0 %v2518
        %v2532 = vpop.f32.mrf.mxu0
        %v2533 = vadd.f32 0.0, %v2532
        %v2534 = vpop.f32.mrf.mxu0
        %2535 = vdwg.mxu0
        %v2537 = vsel %vm2133, %v2321, 0
        %v2540 = vsel %vm2329, %v1657, 0
        %2542 = vmatpush.bf16.msra.mxu0 0
        %2543 = vmatpush.bf16.msra.mxu0 0
        %2544 = vmatpush.bf16.msra.mxu0 0
        %2545 = vmatpush.bf16.msra.mxu0 0
        %2546 = vmatpush.bf16.msra.mxu0 0
        %2547 = vmatpush.bf16.msra.mxu0 0
        %2548 = vmatpush.bf16.msra.mxu0 0
        %2549 = vmatpush.bf16.msra.mxu0 %v2540
        %2550 = vmatmul.bf16.gmra.mxu0 %v2537
        %v2551 = vpop.f32.mrf.mxu0
        %v2552 = vadd.f32 0.0, %v2551
        %v2553 = vpop.f32.mrf.mxu0
        %2554 = vdwg.mxu0
        %v2556 = vsel %vm2133, %v2322, 0
        %v2559 = vsel %vm2329, %v1659, 0
        %2561 = vmatpush.bf16.msra.mxu0 0
        %2562 = vmatpush.bf16.msra.mxu0 0
        %2563 = vmatpush.bf16.msra.mxu0 0
        %2564 = vmatpush.bf16.msra.mxu0 0
        %2565 = vmatpush.bf16.msra.mxu0 0
        %2566 = vmatpush.bf16.msra.mxu0 0
        %2567 = vmatpush.bf16.msra.mxu0 0
        %2568 = vmatpush.bf16.msra.mxu0 %v2559
        %2569 = vmatmul.bf16.gmra.mxu0 %v2556
        %v2570 = vpop.f32.mrf.mxu0
        %v2571 = vadd.f32 0.0, %v2570
        %v2572 = vpop.f32.mrf.mxu0
        %2573 = vdwg.mxu0
        %v2575 = vsel %vm2133, %v2323, 0
        %v2578 = vsel %vm2329, %v1661, 0
        %2580 = vmatpush.bf16.msra.mxu0 0
        %2581 = vmatpush.bf16.msra.mxu0 0
        %2582 = vmatpush.bf16.msra.mxu0 0
        %2583 = vmatpush.bf16.msra.mxu0 0
        %2584 = vmatpush.bf16.msra.mxu0 0
        %2585 = vmatpush.bf16.msra.mxu0 0
        %2586 = vmatpush.bf16.msra.mxu0 0
        %2587 = vmatpush.bf16.msra.mxu0 %v2578
        %2588 = vmatmul.bf16.gmra.mxu0 %v2575
        %v2589 = vpop.f32.mrf.mxu0
        %v2590 = vadd.f32 0.0, %v2589
        %v2591 = vpop.f32.mrf.mxu0
        %2592 = vdwg.mxu0
        %v2594 = vsel %vm2133, %v2324, 0
        %v2597 = vsel %vm2329, %v1663, 0
        %2599 = vmatpush.bf16.msra.mxu0 0
        %2600 = vmatpush.bf16.msra.mxu0 0
        %2601 = vmatpush.bf16.msra.mxu0 0
        %2602 = vmatpush.bf16.msra.mxu0 0
        %2603 = vmatpush.bf16.msra.mxu0 0
        %2604 = vmatpush.bf16.msra.mxu0 0
        %2605 = vmatpush.bf16.msra.mxu0 0
        %2606 = vmatpush.bf16.msra.mxu0 %v2597
        %2607 = vmatmul.bf16.gmra.mxu0 %v2594
        %v2608 = vpop.f32.mrf.mxu0
        %v2609 = vadd.f32 0.0, %v2608
        %v2610 = vpop.f32.mrf.mxu0
        %2611 = vdwg.mxu0
        %v2613 = vsel %vm2133, %v2325, 0
        %v2616 = vsel %vm2329, %v1665, 0
        %2618 = vmatpush.bf16.msra.mxu0 0
        %2619 = vmatpush.bf16.msra.mxu0 0
        %2620 = vmatpush.bf16.msra.mxu0 0
        %2621 = vmatpush.bf16.msra.mxu0 0
        %2622 = vmatpush.bf16.msra.mxu0 0
        %2623 = vmatpush.bf16.msra.mxu0 0
        %2624 = vmatpush.bf16.msra.mxu0 0
        %2625 = vmatpush.bf16.msra.mxu0 %v2616
        %2626 = vmatmul.bf16.gmra.mxu0 %v2613
        %v2627 = vpop.f32.mrf.mxu0
        %v2628 = vadd.f32 0.0, %v2627
        %v2629 = vpop.f32.mrf.mxu0
        %2630 = vdwg.mxu0
        %2631 = vrot.lane.b32.xlu0 %v1634, 96
        %v2632 = vpop.permute.xlu0 %2631
        %2633 = vrot.lane.b32.xlu0 %v1636, 96
        %v2634 = vpop.permute.xlu0 %2633
        %2635 = vrot.lane.b32.xlu0 %v1638, 96
        %v2636 = vpop.permute.xlu0 %2635
        %2637 = vrot.lane.b32.xlu0 %v1640, 96
        %v2638 = vpop.permute.xlu0 %2637
        %2639 = vrot.lane.b32.xlu0 %v1642, 96
        %v2640 = vpop.permute.xlu0 %2639
        %2641 = vrot.lane.b32.xlu0 %v1644, 96
        %v2642 = vpop.permute.xlu0 %2641
        %2643 = vrot.lane.b32.xlu0 %v1646, 96
        %v2644 = vpop.permute.xlu0 %2643
        %2645 = vrot.lane.b32.xlu0 %v1648, 96
        %v2646 = vpop.permute.xlu0 %2645
        %2647 = vrot.lane.b32.xlu0 %v1650, 96
        %v2648 = vpop.permute.xlu0 %2647
        %2649 = vrot.lane.b32.xlu0 %v1652, 96
        %v2650 = vpop.permute.xlu0 %2649
        %2651 = vrot.lane.b32.xlu0 %v1654, 96
        %v2652 = vpop.permute.xlu0 %2651
        %2653 = vrot.lane.b32.xlu0 %v1656, 96
        %v2654 = vpop.permute.xlu0 %2653
        %2655 = vrot.lane.b32.xlu0 %v1658, 96
        %v2656 = vpop.permute.xlu0 %2655
        %2657 = vrot.lane.b32.xlu0 %v1660, 96
        %v2658 = vpop.permute.xlu0 %2657
        %2659 = vrot.lane.b32.xlu0 %v1662, 96
        %v2660 = vpop.permute.xlu0 %2659
        %2661 = vrot.lane.b32.xlu0 %v1664, 96
        %v2662 = vpop.permute.xlu0 %2661
        %v2663 = vrot.slane %v2632, 4
        %v2664 = vrot.slane %v2634, 4
        %v2665 = vrot.slane %v2636, 4
        %v2666 = vrot.slane %v2638, 4
        %v2667 = vrot.slane %v2640, 4
        %v2668 = vrot.slane %v2642, 4
        %v2669 = vrot.slane %v2644, 4
        %v2670 = vrot.slane %v2646, 4
        %v2671 = vrot.slane %v2648, 4
        %v2672 = vrot.slane %v2650, 4
        %v2673 = vrot.slane %v2652, 4
        %v2674 = vrot.slane %v2654, 4
        %v2675 = vrot.slane %v2656, 4
        %v2676 = vrot.slane %v2658, 4
        %v2677 = vrot.slane %v2660, 4
        %v2678 = vrot.slane %v2662, 4
        %v2679 = vunpack.c.l.b16 %v1634
        %v2680 = vpack.c.b16 %v2679, %v2679
        %2681 = vrot.lane.b32.xlu0 %v2680, 96
        %v2682 = vpop.permute.xlu0 %2681
        %v2684 = vsel %vm1748, %v2682, 0
        %v2687 = vsel %vm1748, %v2663, 0
        %2689 = vmatpush.bf16.xpose.msra.mxu0 0
        %2690 = vmatpush.bf16.xpose.msra.mxu0 0
        %2691 = vmatpush.bf16.xpose.msra.mxu0 0
        %2692 = vmatpush.bf16.xpose.msra.mxu0 0
        %2693 = vmatpush.bf16.xpose.msra.mxu0 0
        %2694 = vmatpush.bf16.xpose.msra.mxu0 0
        %2695 = vmatpush.bf16.xpose.msra.mxu0 0
        %2696 = vmatpush.bf16.xpose.msra.mxu0 %v2687
        %2697 = vmatmul.bf16.gmra.mxu0 %v2684
        %v2698 = vpop.f32.mrf.mxu0
        %v2699 = vadd.f32 0.0, %v2698
        %v2700 = vpop.f32.mrf.mxu0
        %2701 = vdwg.mxu0
        %v2702 = vunpack.c.l.b16 %v1636
        %v2703 = vpack.c.b16 %v2702, %v2702
        %2704 = vrot.lane.b32.xlu0 %v2703, 96
        %v2705 = vpop.permute.xlu0 %2704
        %v2707 = vsel %vm1748, %v2705, 0
        %v2710 = vsel %vm1748, %v2664, 0
        %2712 = vmatpush.bf16.xpose.msra.mxu0 0
        %2713 = vmatpush.bf16.xpose.msra.mxu0 0
        %2714 = vmatpush.bf16.xpose.msra.mxu0 0
        %2715 = vmatpush.bf16.xpose.msra.mxu0 0
        %2716 = vmatpush.bf16.xpose.msra.mxu0 0
        %2717 = vmatpush.bf16.xpose.msra.mxu0 0
        %2718 = vmatpush.bf16.xpose.msra.mxu0 0
        %2719 = vmatpush.bf16.xpose.msra.mxu0 %v2710
        %2720 = vmatmul.bf16.gmra.mxu0 %v2707
        %v2721 = vpop.f32.mrf.mxu0
        %v2722 = vadd.f32 0.0, %v2721
        %v2723 = vpop.f32.mrf.mxu0
        %2724 = vdwg.mxu0
        %v2725 = vunpack.c.l.b16 %v1638
        %v2726 = vpack.c.b16 %v2725, %v2725
        %2727 = vrot.lane.b32.xlu0 %v2726, 96
        %v2728 = vpop.permute.xlu0 %2727
        %v2730 = vsel %vm1748, %v2728, 0
        %v2733 = vsel %vm1748, %v2665, 0
        %2735 = vmatpush.bf16.xpose.msra.mxu0 0
        %2736 = vmatpush.bf16.xpose.msra.mxu0 0
        %2737 = vmatpush.bf16.xpose.msra.mxu0 0
        %2738 = vmatpush.bf16.xpose.msra.mxu0 0
        %2739 = vmatpush.bf16.xpose.msra.mxu0 0
        %2740 = vmatpush.bf16.xpose.msra.mxu0 0
        %2741 = vmatpush.bf16.xpose.msra.mxu0 0
        %2742 = vmatpush.bf16.xpose.msra.mxu0 %v2733
        %2743 = vmatmul.bf16.gmra.mxu0 %v2730
        %v2744 = vpop.f32.mrf.mxu0
        %v2745 = vadd.f32 0.0, %v2744
        %v2746 = vpop.f32.mrf.mxu0
        %2747 = vdwg.mxu0
        %v2748 = vunpack.c.l.b16 %v1640
        %v2749 = vpack.c.b16 %v2748, %v2748
        %2750 = vrot.lane.b32.xlu0 %v2749, 96
        %v2751 = vpop.permute.xlu0 %2750
        %v2753 = vsel %vm1748, %v2751, 0
        %v2756 = vsel %vm1748, %v2666, 0
        %2758 = vmatpush.bf16.xpose.msra.mxu0 0
        %2759 = vmatpush.bf16.xpose.msra.mxu0 0
        %2760 = vmatpush.bf16.xpose.msra.mxu0 0
        %2761 = vmatpush.bf16.xpose.msra.mxu0 0
        %2762 = vmatpush.bf16.xpose.msra.mxu0 0
        %2763 = vmatpush.bf16.xpose.msra.mxu0 0
        %2764 = vmatpush.bf16.xpose.msra.mxu0 0
        %2765 = vmatpush.bf16.xpose.msra.mxu0 %v2756
        %2766 = vmatmul.bf16.gmra.mxu0 %v2753
        %v2767 = vpop.f32.mrf.mxu0
        %v2768 = vadd.f32 0.0, %v2767
        %v2769 = vpop.f32.mrf.mxu0
        %2770 = vdwg.mxu0
        %v2771 = vunpack.c.l.b16 %v1642
        %v2772 = vpack.c.b16 %v2771, %v2771
        %2773 = vrot.lane.b32.xlu0 %v2772, 96
        %v2774 = vpop.permute.xlu0 %2773
        %v2776 = vsel %vm1748, %v2774, 0
        %v2779 = vsel %vm1748, %v2667, 0
        %2781 = vmatpush.bf16.xpose.msra.mxu0 0
        %2782 = vmatpush.bf16.xpose.msra.mxu0 0
        %2783 = vmatpush.bf16.xpose.msra.mxu0 0
        %2784 = vmatpush.bf16.xpose.msra.mxu0 0
        %2785 = vmatpush.bf16.xpose.msra.mxu0 0
        %2786 = vmatpush.bf16.xpose.msra.mxu0 0
        %2787 = vmatpush.bf16.xpose.msra.mxu0 0
        %2788 = vmatpush.bf16.xpose.msra.mxu0 %v2779
        %2789 = vmatmul.bf16.gmra.mxu0 %v2776
        %v2790 = vpop.f32.mrf.mxu0
        %v2791 = vadd.f32 0.0, %v2790
        %v2792 = vpop.f32.mrf.mxu0
        %2793 = vdwg.mxu0
        %v2794 = vunpack.c.l.b16 %v1644
        %v2795 = vpack.c.b16 %v2794, %v2794
        %2796 = vrot.lane.b32.xlu0 %v2795, 96
        %v2797 = vpop.permute.xlu0 %2796
        %v2799 = vsel %vm1748, %v2797, 0
        %v2802 = vsel %vm1748, %v2668, 0
        %2804 = vmatpush.bf16.xpose.msra.mxu0 0
        %2805 = vmatpush.bf16.xpose.msra.mxu0 0
        %2806 = vmatpush.bf16.xpose.msra.mxu0 0
        %2807 = vmatpush.bf16.xpose.msra.mxu0 0
        %2808 = vmatpush.bf16.xpose.msra.mxu0 0
        %2809 = vmatpush.bf16.xpose.msra.mxu0 0
        %2810 = vmatpush.bf16.xpose.msra.mxu0 0
        %2811 = vmatpush.bf16.xpose.msra.mxu0 %v2802
        %2812 = vmatmul.bf16.gmra.mxu0 %v2799
        %v2813 = vpop.f32.mrf.mxu0
        %v2814 = vadd.f32 0.0, %v2813
        %v2815 = vpop.f32.mrf.mxu0
        %2816 = vdwg.mxu0
        %v2817 = vunpack.c.l.b16 %v1646
        %v2818 = vpack.c.b16 %v2817, %v2817
        %2819 = vrot.lane.b32.xlu0 %v2818, 96
        %v2820 = vpop.permute.xlu0 %2819
        %v2822 = vsel %vm1748, %v2820, 0
        %v2825 = vsel %vm1748, %v2669, 0
        %2827 = vmatpush.bf16.xpose.msra.mxu0 0
        %2828 = vmatpush.bf16.xpose.msra.mxu0 0
        %2829 = vmatpush.bf16.xpose.msra.mxu0 0
        %2830 = vmatpush.bf16.xpose.msra.mxu0 0
        %2831 = vmatpush.bf16.xpose.msra.mxu0 0
        %2832 = vmatpush.bf16.xpose.msra.mxu0 0
        %2833 = vmatpush.bf16.xpose.msra.mxu0 0
        %2834 = vmatpush.bf16.xpose.msra.mxu0 %v2825
        %2835 = vmatmul.bf16.gmra.mxu0 %v2822
        %v2836 = vpop.f32.mrf.mxu0
        %v2837 = vadd.f32 0.0, %v2836
        %v2838 = vpop.f32.mrf.mxu0
        %2839 = vdwg.mxu0
        %v2840 = vunpack.c.l.b16 %v1648
        %v2841 = vpack.c.b16 %v2840, %v2840
        %2842 = vrot.lane.b32.xlu0 %v2841, 96
        %v2843 = vpop.permute.xlu0 %2842
        %v2845 = vsel %vm1748, %v2843, 0
        %v2848 = vsel %vm1748, %v2670, 0
        %2850 = vmatpush.bf16.xpose.msra.mxu0 0
        %2851 = vmatpush.bf16.xpose.msra.mxu0 0
        %2852 = vmatpush.bf16.xpose.msra.mxu0 0
        %2853 = vmatpush.bf16.xpose.msra.mxu0 0
        %2854 = vmatpush.bf16.xpose.msra.mxu0 0
        %2855 = vmatpush.bf16.xpose.msra.mxu0 0
        %2856 = vmatpush.bf16.xpose.msra.mxu0 0
        %2857 = vmatpush.bf16.xpose.msra.mxu0 %v2848
        %2858 = vmatmul.bf16.gmra.mxu0 %v2845
        %v2859 = vpop.f32.mrf.mxu0
        %v2860 = vadd.f32 0.0, %v2859
        %v2861 = vpop.f32.mrf.mxu0
        %2862 = vdwg.mxu0
        %v2863 = vunpack.c.l.b16 %v1650
        %v2864 = vpack.c.b16 %v2863, %v2863
        %2865 = vrot.lane.b32.xlu0 %v2864, 96
        %v2866 = vpop.permute.xlu0 %2865
        %v2868 = vsel %vm1748, %v2866, 0
        %v2871 = vsel %vm1748, %v2671, 0
        %2873 = vmatpush.bf16.xpose.msra.mxu0 0
        %2874 = vmatpush.bf16.xpose.msra.mxu0 0
        %2875 = vmatpush.bf16.xpose.msra.mxu0 0
        %2876 = vmatpush.bf16.xpose.msra.mxu0 0
        %2877 = vmatpush.bf16.xpose.msra.mxu0 0
        %2878 = vmatpush.bf16.xpose.msra.mxu0 0
        %2879 = vmatpush.bf16.xpose.msra.mxu0 0
        %2880 = vmatpush.bf16.xpose.msra.mxu0 %v2871
        %2881 = vmatmul.bf16.gmra.mxu0 %v2868
        %v2882 = vpop.f32.mrf.mxu0
        %v2883 = vadd.f32 0.0, %v2882
        %v2884 = vpop.f32.mrf.mxu0
        %2885 = vdwg.mxu0
        %v2886 = vunpack.c.l.b16 %v1652
        %v2887 = vpack.c.b16 %v2886, %v2886
        %2888 = vrot.lane.b32.xlu0 %v2887, 96
        %v2889 = vpop.permute.xlu0 %2888
        %v2891 = vsel %vm1748, %v2889, 0
        %v2894 = vsel %vm1748, %v2672, 0
        %2896 = vmatpush.bf16.xpose.msra.mxu0 0
        %2897 = vmatpush.bf16.xpose.msra.mxu0 0
        %2898 = vmatpush.bf16.xpose.msra.mxu0 0
        %2899 = vmatpush.bf16.xpose.msra.mxu0 0
        %2900 = vmatpush.bf16.xpose.msra.mxu0 0
        %2901 = vmatpush.bf16.xpose.msra.mxu0 0
        %2902 = vmatpush.bf16.xpose.msra.mxu0 0
        %2903 = vmatpush.bf16.xpose.msra.mxu0 %v2894
        %2904 = vmatmul.bf16.gmra.mxu0 %v2891
        %v2905 = vpop.f32.mrf.mxu0
        %v2906 = vadd.f32 0.0, %v2905
        %v2907 = vpop.f32.mrf.mxu0
        %2908 = vdwg.mxu0
        %v2909 = vunpack.c.l.b16 %v1654
        %v2910 = vpack.c.b16 %v2909, %v2909
        %2911 = vrot.lane.b32.xlu0 %v2910, 96
        %v2912 = vpop.permute.xlu0 %2911
        %v2914 = vsel %vm1748, %v2912, 0
        %v2917 = vsel %vm1748, %v2673, 0
        %2919 = vmatpush.bf16.xpose.msra.mxu0 0
        %2920 = vmatpush.bf16.xpose.msra.mxu0 0
        %2921 = vmatpush.bf16.xpose.msra.mxu0 0
        %2922 = vmatpush.bf16.xpose.msra.mxu0 0
        %2923 = vmatpush.bf16.xpose.msra.mxu0 0
        %2924 = vmatpush.bf16.xpose.msra.mxu0 0
        %2925 = vmatpush.bf16.xpose.msra.mxu0 0
        %2926 = vmatpush.bf16.xpose.msra.mxu0 %v2917
        %2927 = vmatmul.bf16.gmra.mxu0 %v2914
        %v2928 = vpop.f32.mrf.mxu0
        %v2929 = vadd.f32 0.0, %v2928
        %v2930 = vpop.f32.mrf.mxu0
        %2931 = vdwg.mxu0
        %v2932 = vunpack.c.l.b16 %v1656
        %v2933 = vpack.c.b16 %v2932, %v2932
        %2934 = vrot.lane.b32.xlu0 %v2933, 96
        %v2935 = vpop.permute.xlu0 %2934
        %v2937 = vsel %vm1748, %v2935, 0
        %v2940 = vsel %vm1748, %v2674, 0
        %2942 = vmatpush.bf16.xpose.msra.mxu0 0
        %2943 = vmatpush.bf16.xpose.msra.mxu0 0
        %2944 = vmatpush.bf16.xpose.msra.mxu0 0
        %2945 = vmatpush.bf16.xpose.msra.mxu0 0
        %2946 = vmatpush.bf16.xpose.msra.mxu0 0
        %2947 = vmatpush.bf16.xpose.msra.mxu0 0
        %2948 = vmatpush.bf16.xpose.msra.mxu0 0
        %2949 = vmatpush.bf16.xpose.msra.mxu0 %v2940
        %2950 = vmatmul.bf16.gmra.mxu0 %v2937
        %v2951 = vpop.f32.mrf.mxu0
        %v2952 = vadd.f32 0.0, %v2951
        %v2953 = vpop.f32.mrf.mxu0
        %2954 = vdwg.mxu0
        %v2955 = vunpack.c.l.b16 %v1658
        %v2956 = vpack.c.b16 %v2955, %v2955
        %2957 = vrot.lane.b32.xlu0 %v2956, 96
        %v2958 = vpop.permute.xlu0 %2957
        %v2960 = vsel %vm1748, %v2958, 0
        %v2963 = vsel %vm1748, %v2675, 0
        %2965 = vmatpush.bf16.xpose.msra.mxu0 0
        %2966 = vmatpush.bf16.xpose.msra.mxu0 0
        %2967 = vmatpush.bf16.xpose.msra.mxu0 0
        %2968 = vmatpush.bf16.xpose.msra.mxu0 0
        %2969 = vmatpush.bf16.xpose.msra.mxu0 0
        %2970 = vmatpush.bf16.xpose.msra.mxu0 0
        %2971 = vmatpush.bf16.xpose.msra.mxu0 0
        %2972 = vmatpush.bf16.xpose.msra.mxu0 %v2963
        %2973 = vmatmul.bf16.gmra.mxu0 %v2960
        %v2974 = vpop.f32.mrf.mxu0
        %v2975 = vadd.f32 0.0, %v2974
        %v2976 = vpop.f32.mrf.mxu0
        %2977 = vdwg.mxu0
        %v2978 = vunpack.c.l.b16 %v1660
        %v2979 = vpack.c.b16 %v2978, %v2978
        %2980 = vrot.lane.b32.xlu0 %v2979, 96
        %v2981 = vpop.permute.xlu0 %2980
        %v2983 = vsel %vm1748, %v2981, 0
        %v2986 = vsel %vm1748, %v2676, 0
        %2988 = vmatpush.bf16.xpose.msra.mxu0 0
        %2989 = vmatpush.bf16.xpose.msra.mxu0 0
        %2990 = vmatpush.bf16.xpose.msra.mxu0 0
        %2991 = vmatpush.bf16.xpose.msra.mxu0 0
        %2992 = vmatpush.bf16.xpose.msra.mxu0 0
        %2993 = vmatpush.bf16.xpose.msra.mxu0 0
        %2994 = vmatpush.bf16.xpose.msra.mxu0 0
        %2995 = vmatpush.bf16.xpose.msra.mxu0 %v2986
        %2996 = vmatmul.bf16.gmra.mxu0 %v2983
        %v2997 = vpop.f32.mrf.mxu0
        %v2998 = vadd.f32 0.0, %v2997
        %v2999 = vpop.f32.mrf.mxu0
        %3000 = vdwg.mxu0
        %v3001 = vunpack.c.l.b16 %v1662
        %v3002 = vpack.c.b16 %v3001, %v3001
        %3003 = vrot.lane.b32.xlu0 %v3002, 96
        %v3004 = vpop.permute.xlu0 %3003
        %v3006 = vsel %vm1748, %v3004, 0
        %v3009 = vsel %vm1748, %v2677, 0
        %3011 = vmatpush.bf16.xpose.msra.mxu0 0
        %3012 = vmatpush.bf16.xpose.msra.mxu0 0
        %3013 = vmatpush.bf16.xpose.msra.mxu0 0
        %3014 = vmatpush.bf16.xpose.msra.mxu0 0
        %3015 = vmatpush.bf16.xpose.msra.mxu0 0
        %3016 = vmatpush.bf16.xpose.msra.mxu0 0
        %3017 = vmatpush.bf16.xpose.msra.mxu0 0
        %3018 = vmatpush.bf16.xpose.msra.mxu0 %v3009
        %3019 = vmatmul.bf16.gmra.mxu0 %v3006
        %v3020 = vpop.f32.mrf.mxu0
        %v3021 = vadd.f32 0.0, %v3020
        %v3022 = vpop.f32.mrf.mxu0
        %3023 = vdwg.mxu0
        %v3024 = vunpack.c.l.b16 %v1664
        %v3025 = vpack.c.b16 %v3024, %v3024
        %3026 = vrot.lane.b32.xlu0 %v3025, 96
        %v3027 = vpop.permute.xlu0 %3026
        %v3029 = vsel %vm1748, %v3027, 0
        %v3032 = vsel %vm1748, %v2678, 0
        %3034 = vmatpush.bf16.xpose.msra.mxu0 0
        %3035 = vmatpush.bf16.xpose.msra.mxu0 0
        %3036 = vmatpush.bf16.xpose.msra.mxu0 0
        %3037 = vmatpush.bf16.xpose.msra.mxu0 0
        %3038 = vmatpush.bf16.xpose.msra.mxu0 0
        %3039 = vmatpush.bf16.xpose.msra.mxu0 0
        %3040 = vmatpush.bf16.xpose.msra.mxu0 0
        %3041 = vmatpush.bf16.xpose.msra.mxu0 %v3032
        %3042 = vmatmul.bf16.gmra.mxu0 %v3029
        %v3043 = vpop.f32.mrf.mxu0
        %v3044 = vadd.f32 0.0, %v3043
        %v3045 = vpop.f32.mrf.mxu0
        %3046 = vdwg.mxu0
        %v3047 = vmul.f32 %v2699, 0.17677669
        %v3048 = vmul.f32 %v2722, 0.17677669
        %v3049 = vmul.f32 %v2745, 0.17677669
        %v3050 = vmul.f32 %v2768, 0.17677669
        %v3051 = vmul.f32 %v2791, 0.17677669
        %v3052 = vmul.f32 %v2814, 0.17677669
        %v3053 = vmul.f32 %v2837, 0.17677669
        %v3054 = vmul.f32 %v2860, 0.17677669
        %v3055 = vmul.f32 %v2883, 0.17677669
        %v3056 = vmul.f32 %v2906, 0.17677669
        %v3057 = vmul.f32 %v2929, 0.17677669
        %v3058 = vmul.f32 %v2952, 0.17677669
        %v3059 = vmul.f32 %v2975, 0.17677669
        %v3060 = vmul.f32 %v2998, 0.17677669
        %v3061 = vmul.f32 %v3021, 0.17677669
        %v3062 = vmul.f32 %v3044, 0.17677669
        %v3063 = vadd.f32 %v3047, %v2085
        %v3064 = vadd.f32 %v3048, %v2086
        %v3065 = vadd.f32 %v3049, %v2087
        %v3066 = vadd.f32 %v3050, %v2088
        %v3067 = vadd.f32 %v3051, %v2089
        %v3068 = vadd.f32 %v3052, %v2090
        %v3069 = vadd.f32 %v3053, %v2091
        %v3070 = vadd.f32 %v3054, %v2092
        %v3071 = vadd.f32 %v3055, %v2093
        %v3072 = vadd.f32 %v3056, %v2094
        %v3073 = vadd.f32 %v3057, %v2095
        %v3074 = vadd.f32 %v3058, %v2096
        %v3075 = vadd.f32 %v3059, %v2097
        %v3076 = vadd.f32 %v3060, %v2098
        %v3077 = vadd.f32 %v3061, %v2099
        %v3078 = vadd.f32 %v3062, %v2100
        %v3079 = vsel %vm2133, %v3063, -inf
        %3080 = vmax.xlane.f32.xlu0 %v3079
        %v3081 = vpop.xlane.xlu0 %3080
        %v3082 = vsel %vm2133, %v3064, -inf
        %3083 = vmax.xlane.f32.xlu0 %v3082
        %v3084 = vpop.xlane.xlu0 %3083
        %v3085 = vsel %vm2133, %v3065, -inf
        %3086 = vmax.xlane.f32.xlu0 %v3085
        %v3087 = vpop.xlane.xlu0 %3086
        %v3088 = vsel %vm2133, %v3066, -inf
        %3089 = vmax.xlane.f32.xlu0 %v3088
        %v3090 = vpop.xlane.xlu0 %3089
        %v3091 = vsel %vm2133, %v3067, -inf
        %3092 = vmax.xlane.f32.xlu0 %v3091
        %v3093 = vpop.xlane.xlu0 %3092
        %v3094 = vsel %vm2133, %v3068, -inf
        %3095 = vmax.xlane.f32.xlu0 %v3094
        %v3096 = vpop.xlane.xlu0 %3095
        %v3097 = vsel %vm2133, %v3069, -inf
        %3098 = vmax.xlane.f32.xlu0 %v3097
        %v3099 = vpop.xlane.xlu0 %3098
        %v3100 = vsel %vm2133, %v3070, -inf
        %3101 = vmax.xlane.f32.xlu0 %v3100
        %v3102 = vpop.xlane.xlu0 %3101
        %v3103 = vsel %vm2133, %v3071, -inf
        %3104 = vmax.xlane.f32.xlu0 %v3103
        %v3105 = vpop.xlane.xlu0 %3104
        %v3106 = vsel %vm2133, %v3072, -inf
        %3107 = vmax.xlane.f32.xlu0 %v3106
        %v3108 = vpop.xlane.xlu0 %3107
        %v3109 = vsel %vm2133, %v3073, -inf
        %3110 = vmax.xlane.f32.xlu0 %v3109
        %v3111 = vpop.xlane.xlu0 %3110
        %v3112 = vsel %vm2133, %v3074, -inf
        %3113 = vmax.xlane.f32.xlu0 %v3112
        %v3114 = vpop.xlane.xlu0 %3113
        %v3115 = vsel %vm2133, %v3075, -inf
        %3116 = vmax.xlane.f32.xlu0 %v3115
        %v3117 = vpop.xlane.xlu0 %3116
        %v3118 = vsel %vm2133, %v3076, -inf
        %3119 = vmax.xlane.f32.xlu0 %v3118
        %v3120 = vpop.xlane.xlu0 %3119
        %v3121 = vsel %vm2133, %v3077, -inf
        %3122 = vmax.xlane.f32.xlu0 %v3121
        %v3123 = vpop.xlane.xlu0 %3122
        %v3124 = vsel %vm2133, %v3078, -inf
        %3125 = vmax.xlane.f32.xlu0 %v3124
        %v3126 = vpop.xlane.xlu0 %3125
        %v3127 = vsub.f32 %v3063, %v3081
        %v3128 = vsub.f32 %v3064, %v3084
        %v3129 = vsub.f32 %v3065, %v3087
        %v3130 = vsub.f32 %v3066, %v3090
        %v3131 = vsub.f32 %v3067, %v3093
        %v3132 = vsub.f32 %v3068, %v3096
        %v3133 = vsub.f32 %v3069, %v3099
        %v3134 = vsub.f32 %v3070, %v3102
        %v3135 = vsub.f32 %v3071, %v3105
        %v3136 = vsub.f32 %v3072, %v3108
        %v3137 = vsub.f32 %v3073, %v3111
        %v3138 = vsub.f32 %v3074, %v3114
        %v3139 = vsub.f32 %v3075, %v3117
        %v3140 = vsub.f32 %v3076, %v3120
        %v3141 = vsub.f32 %v3077, %v3123
        %v3142 = vsub.f32 %v3078, %v3126
        %v3143 = vmul.f32 %v3127, 1.442695
        %v3144 = vpow.pop %v3143
        %v3145 = vmul.f32 %v3128, 1.442695
        %v3146 = vpow.pop %v3145
        %v3147 = vmul.f32 %v3129, 1.442695
        %v3148 = vpow.pop %v3147
        %v3149 = vmul.f32 %v3130, 1.442695
        %v3150 = vpow.pop %v3149
        %v3151 = vmul.f32 %v3131, 1.442695
        %v3152 = vpow.pop %v3151
        %v3153 = vmul.f32 %v3132, 1.442695
        %v3154 = vpow.pop %v3153
        %v3155 = vmul.f32 %v3133, 1.442695
        %v3156 = vpow.pop %v3155
        %v3157 = vmul.f32 %v3134, 1.442695
        %v3158 = vpow.pop %v3157
        %v3159 = vmul.f32 %v3135, 1.442695
        %v3160 = vpow.pop %v3159
        %v3161 = vmul.f32 %v3136, 1.442695
        %v3162 = vpow.pop %v3161
        %v3163 = vmul.f32 %v3137, 1.442695
        %v3164 = vpow.pop %v3163
        %v3165 = vmul.f32 %v3138, 1.442695
        %v3166 = vpow.pop %v3165
        %v3167 = vmul.f32 %v3139, 1.442695
        %v3168 = vpow.pop %v3167
        %v3169 = vmul.f32 %v3140, 1.442695
        %v3170 = vpow.pop %v3169
        %v3171 = vmul.f32 %v3141, 1.442695
        %v3172 = vpow.pop %v3171
        %v3173 = vmul.f32 %v3142, 1.442695
        %v3174 = vpow.pop %v3173
        %v3175 = vsel %vm2133, %v3144, 0.0
        %3176 = vadd.xlane.f32.xlu0 %v3175
        %v3177 = vpop.xlane.xlu0 %3176
        %v3178 = vsel %vm2133, %v3146, 0.0
        %3179 = vadd.xlane.f32.xlu0 %v3178
        %v3180 = vpop.xlane.xlu0 %3179
        %v3181 = vsel %vm2133, %v3148, 0.0
        %3182 = vadd.xlane.f32.xlu0 %v3181
        %v3183 = vpop.xlane.xlu0 %3182
        %v3184 = vsel %vm2133, %v3150, 0.0
        %3185 = vadd.xlane.f32.xlu0 %v3184
        %v3186 = vpop.xlane.xlu0 %3185
        %v3187 = vsel %vm2133, %v3152, 0.0
        %3188 = vadd.xlane.f32.xlu0 %v3187
        %v3189 = vpop.xlane.xlu0 %3188
        %v3190 = vsel %vm2133, %v3154, 0.0
        %3191 = vadd.xlane.f32.xlu0 %v3190
        %v3192 = vpop.xlane.xlu0 %3191
        %v3193 = vsel %vm2133, %v3156, 0.0
        %3194 = vadd.xlane.f32.xlu0 %v3193
        %v3195 = vpop.xlane.xlu0 %3194
        %v3196 = vsel %vm2133, %v3158, 0.0
        %3197 = vadd.xlane.f32.xlu0 %v3196
        %v3198 = vpop.xlane.xlu0 %3197
        %v3199 = vsel %vm2133, %v3160, 0.0
        %3200 = vadd.xlane.f32.xlu0 %v3199
        %v3201 = vpop.xlane.xlu0 %3200
        %v3202 = vsel %vm2133, %v3162, 0.0
        %3203 = vadd.xlane.f32.xlu0 %v3202
        %v3204 = vpop.xlane.xlu0 %3203
        %v3205 = vsel %vm2133, %v3164, 0.0
        %3206 = vadd.xlane.f32.xlu0 %v3205
        %v3207 = vpop.xlane.xlu0 %3206
        %v3208 = vsel %vm2133, %v3166, 0.0
        %3209 = vadd.xlane.f32.xlu0 %v3208
        %v3210 = vpop.xlane.xlu0 %3209
        %v3211 = vsel %vm2133, %v3168, 0.0
        %3212 = vadd.xlane.f32.xlu0 %v3211
        %v3213 = vpop.xlane.xlu0 %3212
        %v3214 = vsel %vm2133, %v3170, 0.0
        %3215 = vadd.xlane.f32.xlu0 %v3214
        %v3216 = vpop.xlane.xlu0 %3215
        %v3217 = vsel %vm2133, %v3172, 0.0
        %3218 = vadd.xlane.f32.xlu0 %v3217
        %v3219 = vpop.xlane.xlu0 %3218
        %v3220 = vsel %vm2133, %v3174, 0.0
        %3221 = vadd.xlane.f32.xlu0 %v3220
        %v3222 = vpop.xlane.xlu0 %3221
        %v3223 = vrcp.pop %v3177
        %v3224 = vrcp.pop %v3180
        %v3225 = vrcp.pop %v3183
        %v3226 = vrcp.pop %v3186
        %v3227 = vrcp.pop %v3189
        %v3228 = vrcp.pop %v3192
        %v3229 = vrcp.pop %v3195
        %v3230 = vrcp.pop %v3198
        %v3231 = vrcp.pop %v3201
        %v3232 = vrcp.pop %v3204
        %v3233 = vrcp.pop %v3207
        %v3234 = vrcp.pop %v3210
        %v3235 = vrcp.pop %v3213
        %v3236 = vrcp.pop %v3216
        %v3237 = vrcp.pop %v3219
        %v3238 = vrcp.pop %v3222
        %v3239 = vmul.f32 %v3144, %v3223
        %v3240 = vmul.f32 %v3146, %v3224
        %v3241 = vmul.f32 %v3148, %v3225
        %v3242 = vmul.f32 %v3150, %v3226
        %v3243 = vmul.f32 %v3152, %v3227
        %v3244 = vmul.f32 %v3154, %v3228
        %v3245 = vmul.f32 %v3156, %v3229
        %v3246 = vmul.f32 %v3158, %v3230
        %v3247 = vmul.f32 %v3160, %v3231
        %v3248 = vmul.f32 %v3162, %v3232
        %v3249 = vmul.f32 %v3164, %v3233
        %v3250 = vmul.f32 %v3166, %v3234
        %v3251 = vmul.f32 %v3168, %v3235
        %v3252 = vmul.f32 %v3170, %v3236
        %v3253 = vmul.f32 %v3172, %v3237
        %v3254 = vmul.f32 %v3174, %v3238
        %v3255 = vpack.c.bf16 %v3239, %v3239
        %v3256 = vpack.c.bf16 %v3240, %v3240
        %v3257 = vpack.c.bf16 %v3241, %v3241
        %v3258 = vpack.c.bf16 %v3242, %v3242
        %v3259 = vpack.c.bf16 %v3243, %v3243
        %v3260 = vpack.c.bf16 %v3244, %v3244
        %v3261 = vpack.c.bf16 %v3245, %v3245
        %v3262 = vpack.c.bf16 %v3246, %v3246
        %v3263 = vpack.c.bf16 %v3247, %v3247
        %v3264 = vpack.c.bf16 %v3248, %v3248
        %v3265 = vpack.c.bf16 %v3249, %v3249
        %v3266 = vpack.c.bf16 %v3250, %v3250
        %v3267 = vpack.c.bf16 %v3251, %v3251
        %v3268 = vpack.c.bf16 %v3252, %v3252
        %v3269 = vpack.c.bf16 %v3253, %v3253
        %v3270 = vpack.c.bf16 %v3254, %v3254
        %v3272 = vunpack.c.l.b16 %v1635
        %v3273 = vpack.c.b16 %v3272, %v3272
        %3274 = vrot.lane.b32.xlu0 %v3273, 96
        %v3275 = vpop.permute.xlu0 %3274
        %v3277 = vsel %vm2133, %v3255, 0
        %v3280 = vsel %vm2329, %v3275, 0
        %3282 = vmatpush.bf16.msra.mxu0 0
        %3283 = vmatpush.bf16.msra.mxu0 0
        %3284 = vmatpush.bf16.msra.mxu0 0
        %3285 = vmatpush.bf16.msra.mxu0 0
        %3286 = vmatpush.bf16.msra.mxu0 0
        %3287 = vmatpush.bf16.msra.mxu0 0
        %3288 = vmatpush.bf16.msra.mxu0 0
        %3289 = vmatpush.bf16.msra.mxu0 %v3280
        %3290 = vmatmul.bf16.gmra.mxu0 %v3277
        %v3291 = vpop.f32.mrf.mxu0
        %v3292 = vadd.f32 0.0, %v3291
        %v3293 = vpop.f32.mrf.mxu0
        %3294 = vdwg.mxu0
        %v3296 = vunpack.c.l.b16 %v1637
        %v3297 = vpack.c.b16 %v3296, %v3296
        %3298 = vrot.lane.b32.xlu0 %v3297, 96
        %v3299 = vpop.permute.xlu0 %3298
        %v3301 = vsel %vm2133, %v3256, 0
        %v3304 = vsel %vm2329, %v3299, 0
        %3306 = vmatpush.bf16.msra.mxu0 0
        %3307 = vmatpush.bf16.msra.mxu0 0
        %3308 = vmatpush.bf16.msra.mxu0 0
        %3309 = vmatpush.bf16.msra.mxu0 0
        %3310 = vmatpush.bf16.msra.mxu0 0
        %3311 = vmatpush.bf16.msra.mxu0 0
        %3312 = vmatpush.bf16.msra.mxu0 0
        %3313 = vmatpush.bf16.msra.mxu0 %v3304
        %3314 = vmatmul.bf16.gmra.mxu0 %v3301
        %v3315 = vpop.f32.mrf.mxu0
        %v3316 = vadd.f32 0.0, %v3315
        %v3317 = vpop.f32.mrf.mxu0
        %3318 = vdwg.mxu0
        %v3320 = vunpack.c.l.b16 %v1639
        %v3321 = vpack.c.b16 %v3320, %v3320
        %3322 = vrot.lane.b32.xlu0 %v3321, 96
        %v3323 = vpop.permute.xlu0 %3322
        %v3325 = vsel %vm2133, %v3257, 0
        %v3328 = vsel %vm2329, %v3323, 0
        %3330 = vmatpush.bf16.msra.mxu0 0
        %3331 = vmatpush.bf16.msra.mxu0 0
        %3332 = vmatpush.bf16.msra.mxu0 0
        %3333 = vmatpush.bf16.msra.mxu0 0
        %3334 = vmatpush.bf16.msra.mxu0 0
        %3335 = vmatpush.bf16.msra.mxu0 0
        %3336 = vmatpush.bf16.msra.mxu0 0
        %3337 = vmatpush.bf16.msra.mxu0 %v3328
        %3338 = vmatmul.bf16.gmra.mxu0 %v3325
        %v3339 = vpop.f32.mrf.mxu0
        %v3340 = vadd.f32 0.0, %v3339
        %v3341 = vpop.f32.mrf.mxu0
        %3342 = vdwg.mxu0
        %v3344 = vunpack.c.l.b16 %v1641
        %v3345 = vpack.c.b16 %v3344, %v3344
        %3346 = vrot.lane.b32.xlu0 %v3345, 96
        %v3347 = vpop.permute.xlu0 %3346
        %v3349 = vsel %vm2133, %v3258, 0
        %v3352 = vsel %vm2329, %v3347, 0
        %3354 = vmatpush.bf16.msra.mxu0 0
        %3355 = vmatpush.bf16.msra.mxu0 0
        %3356 = vmatpush.bf16.msra.mxu0 0
        %3357 = vmatpush.bf16.msra.mxu0 0
        %3358 = vmatpush.bf16.msra.mxu0 0
        %3359 = vmatpush.bf16.msra.mxu0 0
        %3360 = vmatpush.bf16.msra.mxu0 0
        %3361 = vmatpush.bf16.msra.mxu0 %v3352
        %3362 = vmatmul.bf16.gmra.mxu0 %v3349
        %v3363 = vpop.f32.mrf.mxu0
        %v3364 = vadd.f32 0.0, %v3363
        %v3365 = vpop.f32.mrf.mxu0
        %3366 = vdwg.mxu0
        %v3368 = vunpack.c.l.b16 %v1643
        %v3369 = vpack.c.b16 %v3368, %v3368
        %3370 = vrot.lane.b32.xlu0 %v3369, 96
        %v3371 = vpop.permute.xlu0 %3370
        %v3373 = vsel %vm2133, %v3259, 0
        %v3376 = vsel %vm2329, %v3371, 0
        %3378 = vmatpush.bf16.msra.mxu0 0
        %3379 = vmatpush.bf16.msra.mxu0 0
        %3380 = vmatpush.bf16.msra.mxu0 0
        %3381 = vmatpush.bf16.msra.mxu0 0
        %3382 = vmatpush.bf16.msra.mxu0 0
        %3383 = vmatpush.bf16.msra.mxu0 0
        %3384 = vmatpush.bf16.msra.mxu0 0
        %3385 = vmatpush.bf16.msra.mxu0 %v3376
        %3386 = vmatmul.bf16.gmra.mxu0 %v3373
        %v3387 = vpop.f32.mrf.mxu0
        %v3388 = vadd.f32 0.0, %v3387
        %v3389 = vpop.f32.mrf.mxu0
        %3390 = vdwg.mxu0
        %v3392 = vunpack.c.l.b16 %v1645
        %v3393 = vpack.c.b16 %v3392, %v3392
        %3394 = vrot.lane.b32.xlu0 %v3393, 96
        %v3395 = vpop.permute.xlu0 %3394
        %v3397 = vsel %vm2133, %v3260, 0
        %v3400 = vsel %vm2329, %v3395, 0
        %3402 = vmatpush.bf16.msra.mxu0 0
        %3403 = vmatpush.bf16.msra.mxu0 0
        %3404 = vmatpush.bf16.msra.mxu0 0
        %3405 = vmatpush.bf16.msra.mxu0 0
        %3406 = vmatpush.bf16.msra.mxu0 0
        %3407 = vmatpush.bf16.msra.mxu0 0
        %3408 = vmatpush.bf16.msra.mxu0 0
        %3409 = vmatpush.bf16.msra.mxu0 %v3400
        %3410 = vmatmul.bf16.gmra.mxu0 %v3397
        %v3411 = vpop.f32.mrf.mxu0
        %v3412 = vadd.f32 0.0, %v3411
        %v3413 = vpop.f32.mrf.mxu0
        %3414 = vdwg.mxu0
        %v3416 = vunpack.c.l.b16 %v1647
        %v3417 = vpack.c.b16 %v3416, %v3416
        %3418 = vrot.lane.b32.xlu0 %v3417, 96
        %v3419 = vpop.permute.xlu0 %3418
        %v3421 = vsel %vm2133, %v3261, 0
        %v3424 = vsel %vm2329, %v3419, 0
        %3426 = vmatpush.bf16.msra.mxu0 0
        %3427 = vmatpush.bf16.msra.mxu0 0
        %3428 = vmatpush.bf16.msra.mxu0 0
        %3429 = vmatpush.bf16.msra.mxu0 0
        %3430 = vmatpush.bf16.msra.mxu0 0
        %3431 = vmatpush.bf16.msra.mxu0 0
        %3432 = vmatpush.bf16.msra.mxu0 0
        %3433 = vmatpush.bf16.msra.mxu0 %v3424
        %3434 = vmatmul.bf16.gmra.mxu0 %v3421
        %v3435 = vpop.f32.mrf.mxu0
        %v3436 = vadd.f32 0.0, %v3435
        %v3437 = vpop.f32.mrf.mxu0
        %3438 = vdwg.mxu0
        %v3440 = vunpack.c.l.b16 %v1649
        %v3441 = vpack.c.b16 %v3440, %v3440
        %3442 = vrot.lane.b32.xlu0 %v3441, 96
        %v3443 = vpop.permute.xlu0 %3442
        %v3445 = vsel %vm2133, %v3262, 0
        %v3448 = vsel %vm2329, %v3443, 0
        %3450 = vmatpush.bf16.msra.mxu0 0
        %3451 = vmatpush.bf16.msra.mxu0 0
        %3452 = vmatpush.bf16.msra.mxu0 0
        %3453 = vmatpush.bf16.msra.mxu0 0
        %3454 = vmatpush.bf16.msra.mxu0 0
        %3455 = vmatpush.bf16.msra.mxu0 0
        %3456 = vmatpush.bf16.msra.mxu0 0
        %3457 = vmatpush.bf16.msra.mxu0 %v3448
        %3458 = vmatmul.bf16.gmra.mxu0 %v3445
        %v3459 = vpop.f32.mrf.mxu0
        %v3460 = vadd.f32 0.0, %v3459
        %v3461 = vpop.f32.mrf.mxu0
        %3462 = vdwg.mxu0
        %v3464 = vunpack.c.l.b16 %v1651
        %v3465 = vpack.c.b16 %v3464, %v3464
        %3466 = vrot.lane.b32.xlu0 %v3465, 96
        %v3467 = vpop.permute.xlu0 %3466
        %v3469 = vsel %vm2133, %v3263, 0
        %v3472 = vsel %vm2329, %v3467, 0
        %3474 = vmatpush.bf16.msra.mxu0 0
        %3475 = vmatpush.bf16.msra.mxu0 0
        %3476 = vmatpush.bf16.msra.mxu0 0
        %3477 = vmatpush.bf16.msra.mxu0 0
        %3478 = vmatpush.bf16.msra.mxu0 0
        %3479 = vmatpush.bf16.msra.mxu0 0
        %3480 = vmatpush.bf16.msra.mxu0 0
        %3481 = vmatpush.bf16.msra.mxu0 %v3472
        %3482 = vmatmul.bf16.gmra.mxu0 %v3469
        %v3483 = vpop.f32.mrf.mxu0
        %v3484 = vadd.f32 0.0, %v3483
        %v3485 = vpop.f32.mrf.mxu0
        %3486 = vdwg.mxu0
        %v3488 = vunpack.c.l.b16 %v1653
        %v3489 = vpack.c.b16 %v3488, %v3488
        %3490 = vrot.lane.b32.xlu0 %v3489, 96
        %v3491 = vpop.permute.xlu0 %3490
        %v3493 = vsel %vm2133, %v3264, 0
        %v3496 = vsel %vm2329, %v3491, 0
        %3498 = vmatpush.bf16.msra.mxu0 0
        %3499 = vmatpush.bf16.msra.mxu0 0
        %3500 = vmatpush.bf16.msra.mxu0 0
        %3501 = vmatpush.bf16.msra.mxu0 0
        %3502 = vmatpush.bf16.msra.mxu0 0
        %3503 = vmatpush.bf16.msra.mxu0 0
        %3504 = vmatpush.bf16.msra.mxu0 0
        %3505 = vmatpush.bf16.msra.mxu0 %v3496
        %3506 = vmatmul.bf16.gmra.mxu0 %v3493
        %v3507 = vpop.f32.mrf.mxu0
        %v3508 = vadd.f32 0.0, %v3507
        %v3509 = vpop.f32.mrf.mxu0
        %3510 = vdwg.mxu0
        %v3512 = vunpack.c.l.b16 %v1655
        %v3513 = vpack.c.b16 %v3512, %v3512
        %3514 = vrot.lane.b32.xlu0 %v3513, 96
        %v3515 = vpop.permute.xlu0 %3514
        %v3517 = vsel %vm2133, %v3265, 0
        %v3520 = vsel %vm2329, %v3515, 0
        %3522 = vmatpush.bf16.msra.mxu0 0
        %3523 = vmatpush.bf16.msra.mxu0 0
        %3524 = vmatpush.bf16.msra.mxu0 0
        %3525 = vmatpush.bf16.msra.mxu0 0
        %3526 = vmatpush.bf16.msra.mxu0 0
        %3527 = vmatpush.bf16.msra.mxu0 0
        %3528 = vmatpush.bf16.msra.mxu0 0
        %3529 = vmatpush.bf16.msra.mxu0 %v3520
        %3530 = vmatmul.bf16.gmra.mxu0 %v3517
        %v3531 = vpop.f32.mrf.mxu0
        %v3532 = vadd.f32 0.0, %v3531
        %v3533 = vpop.f32.mrf.mxu0
        %3534 = vdwg.mxu0
        %v3536 = vunpack.c.l.b16 %v1657
        %v3537 = vpack.c.b16 %v3536, %v3536
        %3538 = vrot.lane.b32.xlu0 %v3537, 96
        %v3539 = vpop.permute.xlu0 %3538
        %v3541 = vsel %vm2133, %v3266, 0
        %v3544 = vsel %vm2329, %v3539, 0
        %3546 = vmatpush.bf16.msra.mxu0 0
        %3547 = vmatpush.bf16.msra.mxu0 0
        %3548 = vmatpush.bf16.msra.mxu0 0
        %3549 = vmatpush.bf16.msra.mxu0 0
        %3550 = vmatpush.bf16.msra.mxu0 0
        %3551 = vmatpush.bf16.msra.mxu0 0
        %3552 = vmatpush.bf16.msra.mxu0 0
        %3553 = vmatpush.bf16.msra.mxu0 %v3544
        %3554 = vmatmul.bf16.gmra.mxu0 %v3541
        %v3555 = vpop.f32.mrf.mxu0
        %v3556 = vadd.f32 0.0, %v3555
        %v3557 = vpop.f32.mrf.mxu0
        %3558 = vdwg.mxu0
        %v3560 = vunpack.c.l.b16 %v1659
        %v3561 = vpack.c.b16 %v3560, %v3560
        %3562 = vrot.lane.b32.xlu0 %v3561, 96
        %v3563 = vpop.permute.xlu0 %3562
        %v3565 = vsel %vm2133, %v3267, 0
        %v3568 = vsel %vm2329, %v3563, 0
        %3570 = vmatpush.bf16.msra.mxu0 0
        %3571 = vmatpush.bf16.msra.mxu0 0
        %3572 = vmatpush.bf16.msra.mxu0 0
        %3573 = vmatpush.bf16.msra.mxu0 0
        %3574 = vmatpush.bf16.msra.mxu0 0
        %3575 = vmatpush.bf16.msra.mxu0 0
        %3576 = vmatpush.bf16.msra.mxu0 0
        %3577 = vmatpush.bf16.msra.mxu0 %v3568
        %3578 = vmatmul.bf16.gmra.mxu0 %v3565
        %v3579 = vpop.f32.mrf.mxu0
        %v3580 = vadd.f32 0.0, %v3579
        %v3581 = vpop.f32.mrf.mxu0
        %3582 = vdwg.mxu0
        %v3584 = vunpack.c.l.b16 %v1661
        %v3585 = vpack.c.b16 %v3584, %v3584
        %3586 = vrot.lane.b32.xlu0 %v3585, 96
        %v3587 = vpop.permute.xlu0 %3586
        %v3589 = vsel %vm2133, %v3268, 0
        %v3592 = vsel %vm2329, %v3587, 0
        %3594 = vmatpush.bf16.msra.mxu0 0
        %3595 = vmatpush.bf16.msra.mxu0 0
        %3596 = vmatpush.bf16.msra.mxu0 0
        %3597 = vmatpush.bf16.msra.mxu0 0
        %3598 = vmatpush.bf16.msra.mxu0 0
        %3599 = vmatpush.bf16.msra.mxu0 0
        %3600 = vmatpush.bf16.msra.mxu0 0
        %3601 = vmatpush.bf16.msra.mxu0 %v3592
        %3602 = vmatmul.bf16.gmra.mxu0 %v3589
        %v3603 = vpop.f32.mrf.mxu0
        %v3604 = vadd.f32 0.0, %v3603
        %v3605 = vpop.f32.mrf.mxu0
        %3606 = vdwg.mxu0
        %v3608 = vunpack.c.l.b16 %v1663
        %v3609 = vpack.c.b16 %v3608, %v3608
        %3610 = vrot.lane.b32.xlu0 %v3609, 96
        %v3611 = vpop.permute.xlu0 %3610
        %v3613 = vsel %vm2133, %v3269, 0
        %v3616 = vsel %vm2329, %v3611, 0
        %3618 = vmatpush.bf16.msra.mxu0 0
        %3619 = vmatpush.bf16.msra.mxu0 0
        %3620 = vmatpush.bf16.msra.mxu0 0
        %3621 = vmatpush.bf16.msra.mxu0 0
        %3622 = vmatpush.bf16.msra.mxu0 0
        %3623 = vmatpush.bf16.msra.mxu0 0
        %3624 = vmatpush.bf16.msra.mxu0 0
        %3625 = vmatpush.bf16.msra.mxu0 %v3616
        %3626 = vmatmul.bf16.gmra.mxu0 %v3613
        %v3627 = vpop.f32.mrf.mxu0
        %v3628 = vadd.f32 0.0, %v3627
        %v3629 = vpop.f32.mrf.mxu0
        %3630 = vdwg.mxu0
        %v3632 = vunpack.c.l.b16 %v1665
        %v3633 = vpack.c.b16 %v3632, %v3632
        %3634 = vrot.lane.b32.xlu0 %v3633, 96
        %v3635 = vpop.permute.xlu0 %3634
        %v3637 = vsel %vm2133, %v3270, 0
        %v3640 = vsel %vm2329, %v3635, 0
        %3642 = vmatpush.bf16.msra.mxu0 0
        %3643 = vmatpush.bf16.msra.mxu0 0
        %3644 = vmatpush.bf16.msra.mxu0 0
        %3645 = vmatpush.bf16.msra.mxu0 0
        %3646 = vmatpush.bf16.msra.mxu0 0
        %3647 = vmatpush.bf16.msra.mxu0 0
        %3648 = vmatpush.bf16.msra.mxu0 0
        %3649 = vmatpush.bf16.msra.mxu0 %v3640
        %3650 = vmatmul.bf16.gmra.mxu0 %v3637
        %v3651 = vpop.f32.mrf.mxu0
        %v3652 = vadd.f32 0.0, %v3651
        %v3653 = vpop.f32.mrf.mxu0
        %3654 = vdwg.mxu0
        %3655 = vrot.lane.b32.xlu0 %v1634, 64
        %v3656 = vpop.permute.xlu0 %3655
        %3657 = vrot.lane.b32.xlu0 %v1636, 64
        %v3658 = vpop.permute.xlu0 %3657
        %3659 = vrot.lane.b32.xlu0 %v1638, 64
        %v3660 = vpop.permute.xlu0 %3659
        %3661 = vrot.lane.b32.xlu0 %v1640, 64
        %v3662 = vpop.permute.xlu0 %3661
        %3663 = vrot.lane.b32.xlu0 %v1642, 64
        %v3664 = vpop.permute.xlu0 %3663
        %3665 = vrot.lane.b32.xlu0 %v1644, 64
        %v3666 = vpop.permute.xlu0 %3665
        %3667 = vrot.lane.b32.xlu0 %v1646, 64
        %v3668 = vpop.permute.xlu0 %3667
        %3669 = vrot.lane.b32.xlu0 %v1648, 64
        %v3670 = vpop.permute.xlu0 %3669
        %3671 = vrot.lane.b32.xlu0 %v1650, 64
        %v3672 = vpop.permute.xlu0 %3671
        %3673 = vrot.lane.b32.xlu0 %v1652, 64
        %v3674 = vpop.permute.xlu0 %3673
        %3675 = vrot.lane.b32.xlu0 %v1654, 64
        %v3676 = vpop.permute.xlu0 %3675
        %3677 = vrot.lane.b32.xlu0 %v1656, 64
        %v3678 = vpop.permute.xlu0 %3677
        %3679 = vrot.lane.b32.xlu0 %v1658, 64
        %v3680 = vpop.permute.xlu0 %3679
        %3681 = vrot.lane.b32.xlu0 %v1660, 64
        %v3682 = vpop.permute.xlu0 %3681
        %3683 = vrot.lane.b32.xlu0 %v1662, 64
        %v3684 = vpop.permute.xlu0 %3683
        %3685 = vrot.lane.b32.xlu0 %v1664, 64
        %v3686 = vpop.permute.xlu0 %3685
        %v3687 = vrot.slane %v3656, 4
        %v3688 = vrot.slane %v3658, 4
        %v3689 = vrot.slane %v3660, 4
        %v3690 = vrot.slane %v3662, 4
        %v3691 = vrot.slane %v3664, 4
        %v3692 = vrot.slane %v3666, 4
        %v3693 = vrot.slane %v3668, 4
        %v3694 = vrot.slane %v3670, 4
        %v3695 = vrot.slane %v3672, 4
        %v3696 = vrot.slane %v3674, 4
        %v3697 = vrot.slane %v3676, 4
        %v3698 = vrot.slane %v3678, 4
        %v3699 = vrot.slane %v3680, 4
        %v3700 = vrot.slane %v3682, 4
        %v3701 = vrot.slane %v3684, 4
        %v3702 = vrot.slane %v3686, 4
        %3703 = vrot.lane.b32.xlu0 %v2680, 64
        %v3704 = vpop.permute.xlu0 %3703
        %v3706 = vsel %vm1748, %v3704, 0
        %v3709 = vsel %vm1748, %v3687, 0
        %3711 = vmatpush.bf16.xpose.msra.mxu0 0
        %3712 = vmatpush.bf16.xpose.msra.mxu0 0
        %3713 = vmatpush.bf16.xpose.msra.mxu0 0
        %3714 = vmatpush.bf16.xpose.msra.mxu0 0
        %3715 = vmatpush.bf16.xpose.msra.mxu0 0
        %3716 = vmatpush.bf16.xpose.msra.mxu0 0
        %3717 = vmatpush.bf16.xpose.msra.mxu0 0
        %3718 = vmatpush.bf16.xpose.msra.mxu0 %v3709
        %3719 = vmatmul.bf16.gmra.mxu0 %v3706
        %v3720 = vpop.f32.mrf.mxu0
        %v3721 = vadd.f32 0.0, %v3720
        %v3722 = vpop.f32.mrf.mxu0
        %3723 = vdwg.mxu0
        %3724 = vrot.lane.b32.xlu0 %v2703, 64
        %v3725 = vpop.permute.xlu0 %3724
        %v3727 = vsel %vm1748, %v3725, 0
        %v3730 = vsel %vm1748, %v3688, 0
        %3732 = vmatpush.bf16.xpose.msra.mxu0 0
        %3733 = vmatpush.bf16.xpose.msra.mxu0 0
        %3734 = vmatpush.bf16.xpose.msra.mxu0 0
        %3735 = vmatpush.bf16.xpose.msra.mxu0 0
        %3736 = vmatpush.bf16.xpose.msra.mxu0 0
        %3737 = vmatpush.bf16.xpose.msra.mxu0 0
        %3738 = vmatpush.bf16.xpose.msra.mxu0 0
        %3739 = vmatpush.bf16.xpose.msra.mxu0 %v3730
        %3740 = vmatmul.bf16.gmra.mxu0 %v3727
        %v3741 = vpop.f32.mrf.mxu0
        %v3742 = vadd.f32 0.0, %v3741
        %v3743 = vpop.f32.mrf.mxu0
        %3744 = vdwg.mxu0
        %3745 = vrot.lane.b32.xlu0 %v2726, 64
        %v3746 = vpop.permute.xlu0 %3745
        %v3748 = vsel %vm1748, %v3746, 0
        %v3751 = vsel %vm1748, %v3689, 0
        %3753 = vmatpush.bf16.xpose.msra.mxu0 0
        %3754 = vmatpush.bf16.xpose.msra.mxu0 0
        %3755 = vmatpush.bf16.xpose.msra.mxu0 0
        %3756 = vmatpush.bf16.xpose.msra.mxu0 0
        %3757 = vmatpush.bf16.xpose.msra.mxu0 0
        %3758 = vmatpush.bf16.xpose.msra.mxu0 0
        %3759 = vmatpush.bf16.xpose.msra.mxu0 0
        %3760 = vmatpush.bf16.xpose.msra.mxu0 %v3751
        %3761 = vmatmul.bf16.gmra.mxu0 %v3748
        %v3762 = vpop.f32.mrf.mxu0
        %v3763 = vadd.f32 0.0, %v3762
        %v3764 = vpop.f32.mrf.mxu0
        %3765 = vdwg.mxu0
        %3766 = vrot.lane.b32.xlu0 %v2749, 64
        %v3767 = vpop.permute.xlu0 %3766
        %v3769 = vsel %vm1748, %v3767, 0
        %v3772 = vsel %vm1748, %v3690, 0
        %3774 = vmatpush.bf16.xpose.msra.mxu0 0
        %3775 = vmatpush.bf16.xpose.msra.mxu0 0
        %3776 = vmatpush.bf16.xpose.msra.mxu0 0
        %3777 = vmatpush.bf16.xpose.msra.mxu0 0
        %3778 = vmatpush.bf16.xpose.msra.mxu0 0
        %3779 = vmatpush.bf16.xpose.msra.mxu0 0
        %3780 = vmatpush.bf16.xpose.msra.mxu0 0
        %3781 = vmatpush.bf16.xpose.msra.mxu0 %v3772
        %3782 = vmatmul.bf16.gmra.mxu0 %v3769
        %v3783 = vpop.f32.mrf.mxu0
        %v3784 = vadd.f32 0.0, %v3783
        %v3785 = vpop.f32.mrf.mxu0
        %3786 = vdwg.mxu0
        %3787 = vrot.lane.b32.xlu0 %v2772, 64
        %v3788 = vpop.permute.xlu0 %3787
        %v3790 = vsel %vm1748, %v3788, 0
        %v3793 = vsel %vm1748, %v3691, 0
        %3795 = vmatpush.bf16.xpose.msra.mxu0 0
        %3796 = vmatpush.bf16.xpose.msra.mxu0 0
        %3797 = vmatpush.bf16.xpose.msra.mxu0 0
        %3798 = vmatpush.bf16.xpose.msra.mxu0 0
        %3799 = vmatpush.bf16.xpose.msra.mxu0 0
        %3800 = vmatpush.bf16.xpose.msra.mxu0 0
        %3801 = vmatpush.bf16.xpose.msra.mxu0 0
        %3802 = vmatpush.bf16.xpose.msra.mxu0 %v3793
        %3803 = vmatmul.bf16.gmra.mxu0 %v3790
        %v3804 = vpop.f32.mrf.mxu0
        %v3805 = vadd.f32 0.0, %v3804
        %v3806 = vpop.f32.mrf.mxu0
        %3807 = vdwg.mxu0
        %3808 = vrot.lane.b32.xlu0 %v2795, 64
        %v3809 = vpop.permute.xlu0 %3808
        %v3811 = vsel %vm1748, %v3809, 0
        %v3814 = vsel %vm1748, %v3692, 0
        %3816 = vmatpush.bf16.xpose.msra.mxu0 0
        %3817 = vmatpush.bf16.xpose.msra.mxu0 0
        %3818 = vmatpush.bf16.xpose.msra.mxu0 0
        %3819 = vmatpush.bf16.xpose.msra.mxu0 0
        %3820 = vmatpush.bf16.xpose.msra.mxu0 0
        %3821 = vmatpush.bf16.xpose.msra.mxu0 0
        %3822 = vmatpush.bf16.xpose.msra.mxu0 0
        %3823 = vmatpush.bf16.xpose.msra.mxu0 %v3814
        %3824 = vmatmul.bf16.gmra.mxu0 %v3811
        %v3825 = vpop.f32.mrf.mxu0
        %v3826 = vadd.f32 0.0, %v3825
        %v3827 = vpop.f32.mrf.mxu0
        %3828 = vdwg.mxu0
        %3829 = vrot.lane.b32.xlu0 %v2818, 64
        %v3830 = vpop.permute.xlu0 %3829
        %v3832 = vsel %vm1748, %v3830, 0
        %v3835 = vsel %vm1748, %v3693, 0
        %3837 = vmatpush.bf16.xpose.msra.mxu0 0
        %3838 = vmatpush.bf16.xpose.msra.mxu0 0
        %3839 = vmatpush.bf16.xpose.msra.mxu0 0
        %3840 = vmatpush.bf16.xpose.msra.mxu0 0
        %3841 = vmatpush.bf16.xpose.msra.mxu0 0
        %3842 = vmatpush.bf16.xpose.msra.mxu0 0
        %3843 = vmatpush.bf16.xpose.msra.mxu0 0
        %3844 = vmatpush.bf16.xpose.msra.mxu0 %v3835
        %3845 = vmatmul.bf16.gmra.mxu0 %v3832
        %v3846 = vpop.f32.mrf.mxu0
        %v3847 = vadd.f32 0.0, %v3846
        %v3848 = vpop.f32.mrf.mxu0
        %3849 = vdwg.mxu0
        %3850 = vrot.lane.b32.xlu0 %v2841, 64
        %v3851 = vpop.permute.xlu0 %3850
        %v3853 = vsel %vm1748, %v3851, 0
        %v3856 = vsel %vm1748, %v3694, 0
        %3858 = vmatpush.bf16.xpose.msra.mxu0 0
        %3859 = vmatpush.bf16.xpose.msra.mxu0 0
        %3860 = vmatpush.bf16.xpose.msra.mxu0 0
        %3861 = vmatpush.bf16.xpose.msra.mxu0 0
        %3862 = vmatpush.bf16.xpose.msra.mxu0 0
        %3863 = vmatpush.bf16.xpose.msra.mxu0 0
        %3864 = vmatpush.bf16.xpose.msra.mxu0 0
        %3865 = vmatpush.bf16.xpose.msra.mxu0 %v3856
        %3866 = vmatmul.bf16.gmra.mxu0 %v3853
        %v3867 = vpop.f32.mrf.mxu0
        %v3868 = vadd.f32 0.0, %v3867
        %v3869 = vpop.f32.mrf.mxu0
        %3870 = vdwg.mxu0
        %3871 = vrot.lane.b32.xlu0 %v2864, 64
        %v3872 = vpop.permute.xlu0 %3871
        %v3874 = vsel %vm1748, %v3872, 0
        %v3877 = vsel %vm1748, %v3695, 0
        %3879 = vmatpush.bf16.xpose.msra.mxu0 0
        %3880 = vmatpush.bf16.xpose.msra.mxu0 0
        %3881 = vmatpush.bf16.xpose.msra.mxu0 0
        %3882 = vmatpush.bf16.xpose.msra.mxu0 0
        %3883 = vmatpush.bf16.xpose.msra.mxu0 0
        %3884 = vmatpush.bf16.xpose.msra.mxu0 0
        %3885 = vmatpush.bf16.xpose.msra.mxu0 0
        %3886 = vmatpush.bf16.xpose.msra.mxu0 %v3877
        %3887 = vmatmul.bf16.gmra.mxu0 %v3874
        %v3888 = vpop.f32.mrf.mxu0
        %v3889 = vadd.f32 0.0, %v3888
        %v3890 = vpop.f32.mrf.mxu0
        %3891 = vdwg.mxu0
        %3892 = vrot.lane.b32.xlu0 %v2887, 64
        %v3893 = vpop.permute.xlu0 %3892
        %v3895 = vsel %vm1748, %v3893, 0
        %v3898 = vsel %vm1748, %v3696, 0
        %3900 = vmatpush.bf16.xpose.msra.mxu0 0
        %3901 = vmatpush.bf16.xpose.msra.mxu0 0
        %3902 = vmatpush.bf16.xpose.msra.mxu0 0
        %3903 = vmatpush.bf16.xpose.msra.mxu0 0
        %3904 = vmatpush.bf16.xpose.msra.mxu0 0
        %3905 = vmatpush.bf16.xpose.msra.mxu0 0
        %3906 = vmatpush.bf16.xpose.msra.mxu0 0
        %3907 = vmatpush.bf16.xpose.msra.mxu0 %v3898
        %3908 = vmatmul.bf16.gmra.mxu0 %v3895
        %v3909 = vpop.f32.mrf.mxu0
        %v3910 = vadd.f32 0.0, %v3909
        %v3911 = vpop.f32.mrf.mxu0
        %3912 = vdwg.mxu0
        %3913 = vrot.lane.b32.xlu0 %v2910, 64
        %v3914 = vpop.permute.xlu0 %3913
        %v3916 = vsel %vm1748, %v3914, 0
        %v3919 = vsel %vm1748, %v3697, 0
        %3921 = vmatpush.bf16.xpose.msra.mxu0 0
        %3922 = vmatpush.bf16.xpose.msra.mxu0 0
        %3923 = vmatpush.bf16.xpose.msra.mxu0 0
        %3924 = vmatpush.bf16.xpose.msra.mxu0 0
        %3925 = vmatpush.bf16.xpose.msra.mxu0 0
        %3926 = vmatpush.bf16.xpose.msra.mxu0 0
        %3927 = vmatpush.bf16.xpose.msra.mxu0 0
        %3928 = vmatpush.bf16.xpose.msra.mxu0 %v3919
        %3929 = vmatmul.bf16.gmra.mxu0 %v3916
        %v3930 = vpop.f32.mrf.mxu0
        %v3931 = vadd.f32 0.0, %v3930
        %v3932 = vpop.f32.mrf.mxu0
        %3933 = vdwg.mxu0
        %3934 = vrot.lane.b32.xlu0 %v2933, 64
        %v3935 = vpop.permute.xlu0 %3934
        %v3937 = vsel %vm1748, %v3935, 0
        %v3940 = vsel %vm1748, %v3698, 0
        %3942 = vmatpush.bf16.xpose.msra.mxu0 0
        %3943 = vmatpush.bf16.xpose.msra.mxu0 0
        %3944 = vmatpush.bf16.xpose.msra.mxu0 0
        %3945 = vmatpush.bf16.xpose.msra.mxu0 0
        %3946 = vmatpush.bf16.xpose.msra.mxu0 0
        %3947 = vmatpush.bf16.xpose.msra.mxu0 0
        %3948 = vmatpush.bf16.xpose.msra.mxu0 0
        %3949 = vmatpush.bf16.xpose.msra.mxu0 %v3940
        %3950 = vmatmul.bf16.gmra.mxu0 %v3937
        %v3951 = vpop.f32.mrf.mxu0
        %v3952 = vadd.f32 0.0, %v3951
        %v3953 = vpop.f32.mrf.mxu0
        %3954 = vdwg.mxu0
        %3955 = vrot.lane.b32.xlu0 %v2956, 64
        %v3956 = vpop.permute.xlu0 %3955
        %v3958 = vsel %vm1748, %v3956, 0
        %v3961 = vsel %vm1748, %v3699, 0
        %3963 = vmatpush.bf16.xpose.msra.mxu0 0
        %3964 = vmatpush.bf16.xpose.msra.mxu0 0
        %3965 = vmatpush.bf16.xpose.msra.mxu0 0
        %3966 = vmatpush.bf16.xpose.msra.mxu0 0
        %3967 = vmatpush.bf16.xpose.msra.mxu0 0
        %3968 = vmatpush.bf16.xpose.msra.mxu0 0
        %3969 = vmatpush.bf16.xpose.msra.mxu0 0
        %3970 = vmatpush.bf16.xpose.msra.mxu0 %v3961
        %3971 = vmatmul.bf16.gmra.mxu0 %v3958
        %v3972 = vpop.f32.mrf.mxu0
        %v3973 = vadd.f32 0.0, %v3972
        %v3974 = vpop.f32.mrf.mxu0
        %3975 = vdwg.mxu0
        %3976 = vrot.lane.b32.xlu0 %v2979, 64
        %v3977 = vpop.permute.xlu0 %3976
        %v3979 = vsel %vm1748, %v3977, 0
        %v3982 = vsel %vm1748, %v3700, 0
        %3984 = vmatpush.bf16.xpose.msra.mxu0 0
        %3985 = vmatpush.bf16.xpose.msra.mxu0 0
        %3986 = vmatpush.bf16.xpose.msra.mxu0 0
        %3987 = vmatpush.bf16.xpose.msra.mxu0 0
        %3988 = vmatpush.bf16.xpose.msra.mxu0 0
        %3989 = vmatpush.bf16.xpose.msra.mxu0 0
        %3990 = vmatpush.bf16.xpose.msra.mxu0 0
        %3991 = vmatpush.bf16.xpose.msra.mxu0 %v3982
        %3992 = vmatmul.bf16.gmra.mxu0 %v3979
        %v3993 = vpop.f32.mrf.mxu0
        %v3994 = vadd.f32 0.0, %v3993
        %v3995 = vpop.f32.mrf.mxu0
        %3996 = vdwg.mxu0
        %3997 = vrot.lane.b32.xlu0 %v3002, 64
        %v3998 = vpop.permute.xlu0 %3997
        %v4000 = vsel %vm1748, %v3998, 0
        %v4003 = vsel %vm1748, %v3701, 0
        %4005 = vmatpush.bf16.xpose.msra.mxu0 0
        %4006 = vmatpush.bf16.xpose.msra.mxu0 0
        %4007 = vmatpush.bf16.xpose.msra.mxu0 0
        %4008 = vmatpush.bf16.xpose.msra.mxu0 0
        %4009 = vmatpush.bf16.xpose.msra.mxu0 0
        %4010 = vmatpush.bf16.xpose.msra.mxu0 0
        %4011 = vmatpush.bf16.xpose.msra.mxu0 0
        %4012 = vmatpush.bf16.xpose.msra.mxu0 %v4003
        %4013 = vmatmul.bf16.gmra.mxu0 %v4000
        %v4014 = vpop.f32.mrf.mxu0
        %v4015 = vadd.f32 0.0, %v4014
        %v4016 = vpop.f32.mrf.mxu0
        %4017 = vdwg.mxu0
        %4018 = vrot.lane.b32.xlu0 %v3025, 64
        %v4019 = vpop.permute.xlu0 %4018
        %v4021 = vsel %vm1748, %v4019, 0
        %v4024 = vsel %vm1748, %v3702, 0
        %4026 = vmatpush.bf16.xpose.msra.mxu0 0
        %4027 = vmatpush.bf16.xpose.msra.mxu0 0
        %4028 = vmatpush.bf16.xpose.msra.mxu0 0
        %4029 = vmatpush.bf16.xpose.msra.mxu0 0
        %4030 = vmatpush.bf16.xpose.msra.mxu0 0
        %4031 = vmatpush.bf16.xpose.msra.mxu0 0
        %4032 = vmatpush.bf16.xpose.msra.mxu0 0
        %4033 = vmatpush.bf16.xpose.msra.mxu0 %v4024
        %4034 = vmatmul.bf16.gmra.mxu0 %v4021
        %v4035 = vpop.f32.mrf.mxu0
        %v4036 = vadd.f32 0.0, %v4035
        %v4037 = vpop.f32.mrf.mxu0
        %4038 = vdwg.mxu0
        %v4039 = vmul.f32 %v3721, 0.17677669
        %v4040 = vmul.f32 %v3742, 0.17677669
        %v4041 = vmul.f32 %v3763, 0.17677669
        %v4042 = vmul.f32 %v3784, 0.17677669
        %v4043 = vmul.f32 %v3805, 0.17677669
        %v4044 = vmul.f32 %v3826, 0.17677669
        %v4045 = vmul.f32 %v3847, 0.17677669
        %v4046 = vmul.f32 %v3868, 0.17677669
        %v4047 = vmul.f32 %v3889, 0.17677669
        %v4048 = vmul.f32 %v3910, 0.17677669
        %v4049 = vmul.f32 %v3931, 0.17677669
        %v4050 = vmul.f32 %v3952, 0.17677669
        %v4051 = vmul.f32 %v3973, 0.17677669
        %v4052 = vmul.f32 %v3994, 0.17677669
        %v4053 = vmul.f32 %v4015, 0.17677669
        %v4054 = vmul.f32 %v4036, 0.17677669
        %v4055 = vadd.f32 %v4039, %v2085
        %v4056 = vadd.f32 %v4040, %v2086
        %v4057 = vadd.f32 %v4041, %v2087
        %v4058 = vadd.f32 %v4042, %v2088
        %v4059 = vadd.f32 %v4043, %v2089
        %v4060 = vadd.f32 %v4044, %v2090
        %v4061 = vadd.f32 %v4045, %v2091
        %v4062 = vadd.f32 %v4046, %v2092
        %v4063 = vadd.f32 %v4047, %v2093
        %v4064 = vadd.f32 %v4048, %v2094
        %v4065 = vadd.f32 %v4049, %v2095
        %v4066 = vadd.f32 %v4050, %v2096
        %v4067 = vadd.f32 %v4051, %v2097
        %v4068 = vadd.f32 %v4052, %v2098
        %v4069 = vadd.f32 %v4053, %v2099
        %v4070 = vadd.f32 %v4054, %v2100
        %v4071 = vsel %vm2133, %v4055, -inf
        %4072 = vmax.xlane.f32.xlu0 %v4071
        %v4073 = vpop.xlane.xlu0 %4072
        %v4074 = vsel %vm2133, %v4056, -inf
        %4075 = vmax.xlane.f32.xlu0 %v4074
        %v4076 = vpop.xlane.xlu0 %4075
        %v4077 = vsel %vm2133, %v4057, -inf
        %4078 = vmax.xlane.f32.xlu0 %v4077
        %v4079 = vpop.xlane.xlu0 %4078
        %v4080 = vsel %vm2133, %v4058, -inf
        %4081 = vmax.xlane.f32.xlu0 %v4080
        %v4082 = vpop.xlane.xlu0 %4081
        %v4083 = vsel %vm2133, %v4059, -inf
        %4084 = vmax.xlane.f32.xlu0 %v4083
        %v4085 = vpop.xlane.xlu0 %4084
        %v4086 = vsel %vm2133, %v4060, -inf
        %4087 = vmax.xlane.f32.xlu0 %v4086
        %v4088 = vpop.xlane.xlu0 %4087
        %v4089 = vsel %vm2133, %v4061, -inf
        %4090 = vmax.xlane.f32.xlu0 %v4089
        %v4091 = vpop.xlane.xlu0 %4090
        %v4092 = vsel %vm2133, %v4062, -inf
        %4093 = vmax.xlane.f32.xlu0 %v4092
        %v4094 = vpop.xlane.xlu0 %4093
        %v4095 = vsel %vm2133, %v4063, -inf
        %4096 = vmax.xlane.f32.xlu0 %v4095
        %v4097 = vpop.xlane.xlu0 %4096
        %v4098 = vsel %vm2133, %v4064, -inf
        %4099 = vmax.xlane.f32.xlu0 %v4098
        %v4100 = vpop.xlane.xlu0 %4099
        %v4101 = vsel %vm2133, %v4065, -inf
        %4102 = vmax.xlane.f32.xlu0 %v4101
        %v4103 = vpop.xlane.xlu0 %4102
        %v4104 = vsel %vm2133, %v4066, -inf
        %4105 = vmax.xlane.f32.xlu0 %v4104
        %v4106 = vpop.xlane.xlu0 %4105
        %v4107 = vsel %vm2133, %v4067, -inf
        %4108 = vmax.xlane.f32.xlu0 %v4107
        %v4109 = vpop.xlane.xlu0 %4108
        %v4110 = vsel %vm2133, %v4068, -inf
        %4111 = vmax.xlane.f32.xlu0 %v4110
        %v4112 = vpop.xlane.xlu0 %4111
        %v4113 = vsel %vm2133, %v4069, -inf
        %4114 = vmax.xlane.f32.xlu0 %v4113
        %v4115 = vpop.xlane.xlu0 %4114
        %v4116 = vsel %vm2133, %v4070, -inf
        %4117 = vmax.xlane.f32.xlu0 %v4116
        %v4118 = vpop.xlane.xlu0 %4117
        %v4119 = vsub.f32 %v4055, %v4073
        %v4120 = vsub.f32 %v4056, %v4076
        %v4121 = vsub.f32 %v4057, %v4079
        %v4122 = vsub.f32 %v4058, %v4082
        %v4123 = vsub.f32 %v4059, %v4085
        %v4124 = vsub.f32 %v4060, %v4088
        %v4125 = vsub.f32 %v4061, %v4091
        %v4126 = vsub.f32 %v4062, %v4094
        %v4127 = vsub.f32 %v4063, %v4097
        %v4128 = vsub.f32 %v4064, %v4100
        %v4129 = vsub.f32 %v4065, %v4103
        %v4130 = vsub.f32 %v4066, %v4106
        %v4131 = vsub.f32 %v4067, %v4109
        %v4132 = vsub.f32 %v4068, %v4112
        %v4133 = vsub.f32 %v4069, %v4115
        %v4134 = vsub.f32 %v4070, %v4118
        %v4135 = vmul.f32 %v4119, 1.442695
        %v4136 = vpow.pop %v4135
        %v4137 = vmul.f32 %v4120, 1.442695
        %v4138 = vpow.pop %v4137
        %v4139 = vmul.f32 %v4121, 1.442695
        %v4140 = vpow.pop %v4139
        %v4141 = vmul.f32 %v4122, 1.442695
        %v4142 = vpow.pop %v4141
        %v4143 = vmul.f32 %v4123, 1.442695
        %v4144 = vpow.pop %v4143
        %v4145 = vmul.f32 %v4124, 1.442695
        %v4146 = vpow.pop %v4145
        %v4147 = vmul.f32 %v4125, 1.442695
        %v4148 = vpow.pop %v4147
        %v4149 = vmul.f32 %v4126, 1.442695
        %v4150 = vpow.pop %v4149
        %v4151 = vmul.f32 %v4127, 1.442695
        %v4152 = vpow.pop %v4151
        %v4153 = vmul.f32 %v4128, 1.442695
        %v4154 = vpow.pop %v4153
        %v4155 = vmul.f32 %v4129, 1.442695
        %v4156 = vpow.pop %v4155
        %v4157 = vmul.f32 %v4130, 1.442695
        %v4158 = vpow.pop %v4157
        %v4159 = vmul.f32 %v4131, 1.442695
        %v4160 = vpow.pop %v4159
        %v4161 = vmul.f32 %v4132, 1.442695
        %v4162 = vpow.pop %v4161
        %v4163 = vmul.f32 %v4133, 1.442695
        %v4164 = vpow.pop %v4163
        %v4165 = vmul.f32 %v4134, 1.442695
        %v4166 = vpow.pop %v4165
        %v4167 = vsel %vm2133, %v4136, 0.0
        %4168 = vadd.xlane.f32.xlu0 %v4167
        %v4169 = vpop.xlane.xlu0 %4168
        %v4170 = vsel %vm2133, %v4138, 0.0
        %4171 = vadd.xlane.f32.xlu0 %v4170
        %v4172 = vpop.xlane.xlu0 %4171
        %v4173 = vsel %vm2133, %v4140, 0.0
        %4174 = vadd.xlane.f32.xlu0 %v4173
        %v4175 = vpop.xlane.xlu0 %4174
        %v4176 = vsel %vm2133, %v4142, 0.0
        %4177 = vadd.xlane.f32.xlu0 %v4176
        %v4178 = vpop.xlane.xlu0 %4177
        %v4179 = vsel %vm2133, %v4144, 0.0
        %4180 = vadd.xlane.f32.xlu0 %v4179
        %v4181 = vpop.xlane.xlu0 %4180
        %v4182 = vsel %vm2133, %v4146, 0.0
        %4183 = vadd.xlane.f32.xlu0 %v4182
        %v4184 = vpop.xlane.xlu0 %4183
        %v4185 = vsel %vm2133, %v4148, 0.0
        %4186 = vadd.xlane.f32.xlu0 %v4185
        %v4187 = vpop.xlane.xlu0 %4186
        %v4188 = vsel %vm2133, %v4150, 0.0
        %4189 = vadd.xlane.f32.xlu0 %v4188
        %v4190 = vpop.xlane.xlu0 %4189
        %v4191 = vsel %vm2133, %v4152, 0.0
        %4192 = vadd.xlane.f32.xlu0 %v4191
        %v4193 = vpop.xlane.xlu0 %4192
        %v4194 = vsel %vm2133, %v4154, 0.0
        %4195 = vadd.xlane.f32.xlu0 %v4194
        %v4196 = vpop.xlane.xlu0 %4195
        %v4197 = vsel %vm2133, %v4156, 0.0
        %4198 = vadd.xlane.f32.xlu0 %v4197
        %v4199 = vpop.xlane.xlu0 %4198
        %v4200 = vsel %vm2133, %v4158, 0.0
        %4201 = vadd.xlane.f32.xlu0 %v4200
        %v4202 = vpop.xlane.xlu0 %4201
        %v4203 = vsel %vm2133, %v4160, 0.0
        %4204 = vadd.xlane.f32.xlu0 %v4203
        %v4205 = vpop.xlane.xlu0 %4204
        %v4206 = vsel %vm2133, %v4162, 0.0
        %4207 = vadd.xlane.f32.xlu0 %v4206
        %v4208 = vpop.xlane.xlu0 %4207
        %v4209 = vsel %vm2133, %v4164, 0.0
        %4210 = vadd.xlane.f32.xlu0 %v4209
        %v4211 = vpop.xlane.xlu0 %4210
        %v4212 = vsel %vm2133, %v4166, 0.0
        %4213 = vadd.xlane.f32.xlu0 %v4212
        %v4214 = vpop.xlane.xlu0 %4213
        %v4215 = vrcp.pop %v4169
        %v4216 = vrcp.pop %v4172
        %v4217 = vrcp.pop %v4175
        %v4218 = vrcp.pop %v4178
        %v4219 = vrcp.pop %v4181
        %v4220 = vrcp.pop %v4184
        %v4221 = vrcp.pop %v4187
        %v4222 = vrcp.pop %v4190
        %v4223 = vrcp.pop %v4193
        %v4224 = vrcp.pop %v4196
        %v4225 = vrcp.pop %v4199
        %v4226 = vrcp.pop %v4202
        %v4227 = vrcp.pop %v4205
        %v4228 = vrcp.pop %v4208
        %v4229 = vrcp.pop %v4211
        %v4230 = vrcp.pop %v4214
        %v4231 = vmul.f32 %v4136, %v4215
        %v4232 = vmul.f32 %v4138, %v4216
        %v4233 = vmul.f32 %v4140, %v4217
        %v4234 = vmul.f32 %v4142, %v4218
        %v4235 = vmul.f32 %v4144, %v4219
        %v4236 = vmul.f32 %v4146, %v4220
        %v4237 = vmul.f32 %v4148, %v4221
        %v4238 = vmul.f32 %v4150, %v4222
        %v4239 = vmul.f32 %v4152, %v4223
        %v4240 = vmul.f32 %v4154, %v4224
        %v4241 = vmul.f32 %v4156, %v4225
        %v4242 = vmul.f32 %v4158, %v4226
        %v4243 = vmul.f32 %v4160, %v4227
        %v4244 = vmul.f32 %v4162, %v4228
        %v4245 = vmul.f32 %v4164, %v4229
        %v4246 = vmul.f32 %v4166, %v4230
        %v4247 = vpack.c.bf16 %v4231, %v4231
        %v4248 = vpack.c.bf16 %v4232, %v4232
        %v4249 = vpack.c.bf16 %v4233, %v4233
        %v4250 = vpack.c.bf16 %v4234, %v4234
        %v4251 = vpack.c.bf16 %v4235, %v4235
        %v4252 = vpack.c.bf16 %v4236, %v4236
        %v4253 = vpack.c.bf16 %v4237, %v4237
        %v4254 = vpack.c.bf16 %v4238, %v4238
        %v4255 = vpack.c.bf16 %v4239, %v4239
        %v4256 = vpack.c.bf16 %v4240, %v4240
        %v4257 = vpack.c.bf16 %v4241, %v4241
        %v4258 = vpack.c.bf16 %v4242, %v4242
        %v4259 = vpack.c.bf16 %v4243, %v4243
        %v4260 = vpack.c.bf16 %v4244, %v4244
        %v4261 = vpack.c.bf16 %v4245, %v4245
        %v4262 = vpack.c.bf16 %v4246, %v4246
        %4263 = vrot.lane.b32.xlu0 %v3273, 64
        %v4264 = vpop.permute.xlu0 %4263
        %v4266 = vsel %vm2133, %v4247, 0
        %v4269 = vsel %vm2329, %v4264, 0
        %4271 = vmatpush.bf16.msra.mxu0 0
        %4272 = vmatpush.bf16.msra.mxu0 0
        %4273 = vmatpush.bf16.msra.mxu0 0
        %4274 = vmatpush.bf16.msra.mxu0 0
        %4275 = vmatpush.bf16.msra.mxu0 0
        %4276 = vmatpush.bf16.msra.mxu0 0
        %4277 = vmatpush.bf16.msra.mxu0 0
        %4278 = vmatpush.bf16.msra.mxu0 %v4269
        %4279 = vmatmul.bf16.gmra.mxu0 %v4266
        %v4280 = vpop.f32.mrf.mxu0
        %v4281 = vadd.f32 0.0, %v4280
        %v4282 = vpop.f32.mrf.mxu0
        %4283 = vdwg.mxu0
        %4284 = vrot.lane.b32.xlu0 %v3297, 64
        %v4285 = vpop.permute.xlu0 %4284
        %v4287 = vsel %vm2133, %v4248, 0
        %v4290 = vsel %vm2329, %v4285, 0
        %4292 = vmatpush.bf16.msra.mxu0 0
        %4293 = vmatpush.bf16.msra.mxu0 0
        %4294 = vmatpush.bf16.msra.mxu0 0
        %4295 = vmatpush.bf16.msra.mxu0 0
        %4296 = vmatpush.bf16.msra.mxu0 0
        %4297 = vmatpush.bf16.msra.mxu0 0
        %4298 = vmatpush.bf16.msra.mxu0 0
        %4299 = vmatpush.bf16.msra.mxu0 %v4290
        %4300 = vmatmul.bf16.gmra.mxu0 %v4287
        %v4301 = vpop.f32.mrf.mxu0
        %v4302 = vadd.f32 0.0, %v4301
        %v4303 = vpop.f32.mrf.mxu0
        %4304 = vdwg.mxu0
        %4305 = vrot.lane.b32.xlu0 %v3321, 64
        %v4306 = vpop.permute.xlu0 %4305
        %v4308 = vsel %vm2133, %v4249, 0
        %v4311 = vsel %vm2329, %v4306, 0
        %4313 = vmatpush.bf16.msra.mxu0 0
        %4314 = vmatpush.bf16.msra.mxu0 0
        %4315 = vmatpush.bf16.msra.mxu0 0
        %4316 = vmatpush.bf16.msra.mxu0 0
        %4317 = vmatpush.bf16.msra.mxu0 0
        %4318 = vmatpush.bf16.msra.mxu0 0
        %4319 = vmatpush.bf16.msra.mxu0 0
        %4320 = vmatpush.bf16.msra.mxu0 %v4311
        %4321 = vmatmul.bf16.gmra.mxu0 %v4308
        %v4322 = vpop.f32.mrf.mxu0
        %v4323 = vadd.f32 0.0, %v4322
        %v4324 = vpop.f32.mrf.mxu0
        %4325 = vdwg.mxu0
        %4326 = vrot.lane.b32.xlu0 %v3345, 64
        %v4327 = vpop.permute.xlu0 %4326
        %v4329 = vsel %vm2133, %v4250, 0
        %v4332 = vsel %vm2329, %v4327, 0
        %4334 = vmatpush.bf16.msra.mxu0 0
        %4335 = vmatpush.bf16.msra.mxu0 0
        %4336 = vmatpush.bf16.msra.mxu0 0
        %4337 = vmatpush.bf16.msra.mxu0 0
        %4338 = vmatpush.bf16.msra.mxu0 0
        %4339 = vmatpush.bf16.msra.mxu0 0
        %4340 = vmatpush.bf16.msra.mxu0 0
        %4341 = vmatpush.bf16.msra.mxu0 %v4332
        %4342 = vmatmul.bf16.gmra.mxu0 %v4329
        %v4343 = vpop.f32.mrf.mxu0
        %v4344 = vadd.f32 0.0, %v4343
        %v4345 = vpop.f32.mrf.mxu0
        %4346 = vdwg.mxu0
        %4347 = vrot.lane.b32.xlu0 %v3369, 64
        %v4348 = vpop.permute.xlu0 %4347
        %v4350 = vsel %vm2133, %v4251, 0
        %v4353 = vsel %vm2329, %v4348, 0
        %4355 = vmatpush.bf16.msra.mxu0 0
        %4356 = vmatpush.bf16.msra.mxu0 0
        %4357 = vmatpush.bf16.msra.mxu0 0
        %4358 = vmatpush.bf16.msra.mxu0 0
        %4359 = vmatpush.bf16.msra.mxu0 0
        %4360 = vmatpush.bf16.msra.mxu0 0
        %4361 = vmatpush.bf16.msra.mxu0 0
        %4362 = vmatpush.bf16.msra.mxu0 %v4353
        %4363 = vmatmul.bf16.gmra.mxu0 %v4350
        %v4364 = vpop.f32.mrf.mxu0
        %v4365 = vadd.f32 0.0, %v4364
        %v4366 = vpop.f32.mrf.mxu0
        %4367 = vdwg.mxu0
        %4368 = vrot.lane.b32.xlu0 %v3393, 64
        %v4369 = vpop.permute.xlu0 %4368
        %v4371 = vsel %vm2133, %v4252, 0
        %v4374 = vsel %vm2329, %v4369, 0
        %4376 = vmatpush.bf16.msra.mxu0 0
        %4377 = vmatpush.bf16.msra.mxu0 0
        %4378 = vmatpush.bf16.msra.mxu0 0
        %4379 = vmatpush.bf16.msra.mxu0 0
        %4380 = vmatpush.bf16.msra.mxu0 0
        %4381 = vmatpush.bf16.msra.mxu0 0
        %4382 = vmatpush.bf16.msra.mxu0 0
        %4383 = vmatpush.bf16.msra.mxu0 %v4374
        %4384 = vmatmul.bf16.gmra.mxu0 %v4371
        %v4385 = vpop.f32.mrf.mxu0
        %v4386 = vadd.f32 0.0, %v4385
        %v4387 = vpop.f32.mrf.mxu0
        %4388 = vdwg.mxu0
        %4389 = vrot.lane.b32.xlu0 %v3417, 64
        %v4390 = vpop.permute.xlu0 %4389
        %v4392 = vsel %vm2133, %v4253, 0
        %v4395 = vsel %vm2329, %v4390, 0
        %4397 = vmatpush.bf16.msra.mxu0 0
        %4398 = vmatpush.bf16.msra.mxu0 0
        %4399 = vmatpush.bf16.msra.mxu0 0
        %4400 = vmatpush.bf16.msra.mxu0 0
        %4401 = vmatpush.bf16.msra.mxu0 0
        %4402 = vmatpush.bf16.msra.mxu0 0
        %4403 = vmatpush.bf16.msra.mxu0 0
        %4404 = vmatpush.bf16.msra.mxu0 %v4395
        %4405 = vmatmul.bf16.gmra.mxu0 %v4392
        %v4406 = vpop.f32.mrf.mxu0
        %v4407 = vadd.f32 0.0, %v4406
        %v4408 = vpop.f32.mrf.mxu0
        %4409 = vdwg.mxu0
        %4410 = vrot.lane.b32.xlu0 %v3441, 64
        %v4411 = vpop.permute.xlu0 %4410
        %v4413 = vsel %vm2133, %v4254, 0
        %v4416 = vsel %vm2329, %v4411, 0
        %4418 = vmatpush.bf16.msra.mxu0 0
        %4419 = vmatpush.bf16.msra.mxu0 0
        %4420 = vmatpush.bf16.msra.mxu0 0
        %4421 = vmatpush.bf16.msra.mxu0 0
        %4422 = vmatpush.bf16.msra.mxu0 0
        %4423 = vmatpush.bf16.msra.mxu0 0
        %4424 = vmatpush.bf16.msra.mxu0 0
        %4425 = vmatpush.bf16.msra.mxu0 %v4416
        %4426 = vmatmul.bf16.gmra.mxu0 %v4413
        %v4427 = vpop.f32.mrf.mxu0
        %v4428 = vadd.f32 0.0, %v4427
        %v4429 = vpop.f32.mrf.mxu0
        %4430 = vdwg.mxu0
        %4431 = vrot.lane.b32.xlu0 %v3465, 64
        %v4432 = vpop.permute.xlu0 %4431
        %v4434 = vsel %vm2133, %v4255, 0
        %v4437 = vsel %vm2329, %v4432, 0
        %4439 = vmatpush.bf16.msra.mxu0 0
        %4440 = vmatpush.bf16.msra.mxu0 0
        %4441 = vmatpush.bf16.msra.mxu0 0
        %4442 = vmatpush.bf16.msra.mxu0 0
        %4443 = vmatpush.bf16.msra.mxu0 0
        %4444 = vmatpush.bf16.msra.mxu0 0
        %4445 = vmatpush.bf16.msra.mxu0 0
        %4446 = vmatpush.bf16.msra.mxu0 %v4437
        %4447 = vmatmul.bf16.gmra.mxu0 %v4434
        %v4448 = vpop.f32.mrf.mxu0
        %v4449 = vadd.f32 0.0, %v4448
        %v4450 = vpop.f32.mrf.mxu0
        %4451 = vdwg.mxu0
        %4452 = vrot.lane.b32.xlu0 %v3489, 64
        %v4453 = vpop.permute.xlu0 %4452
        %v4455 = vsel %vm2133, %v4256, 0
        %v4458 = vsel %vm2329, %v4453, 0
        %4460 = vmatpush.bf16.msra.mxu0 0
        %4461 = vmatpush.bf16.msra.mxu0 0
        %4462 = vmatpush.bf16.msra.mxu0 0
        %4463 = vmatpush.bf16.msra.mxu0 0
        %4464 = vmatpush.bf16.msra.mxu0 0
        %4465 = vmatpush.bf16.msra.mxu0 0
        %4466 = vmatpush.bf16.msra.mxu0 0
        %4467 = vmatpush.bf16.msra.mxu0 %v4458
        %4468 = vmatmul.bf16.gmra.mxu0 %v4455
        %v4469 = vpop.f32.mrf.mxu0
        %v4470 = vadd.f32 0.0, %v4469
        %v4471 = vpop.f32.mrf.mxu0
        %4472 = vdwg.mxu0
        %4473 = vrot.lane.b32.xlu0 %v3513, 64
        %v4474 = vpop.permute.xlu0 %4473
        %v4476 = vsel %vm2133, %v4257, 0
        %v4479 = vsel %vm2329, %v4474, 0
        %4481 = vmatpush.bf16.msra.mxu0 0
        %4482 = vmatpush.bf16.msra.mxu0 0
        %4483 = vmatpush.bf16.msra.mxu0 0
        %4484 = vmatpush.bf16.msra.mxu0 0
        %4485 = vmatpush.bf16.msra.mxu0 0
        %4486 = vmatpush.bf16.msra.mxu0 0
        %4487 = vmatpush.bf16.msra.mxu0 0
        %4488 = vmatpush.bf16.msra.mxu0 %v4479
        %4489 = vmatmul.bf16.gmra.mxu0 %v4476
        %v4490 = vpop.f32.mrf.mxu0
        %v4491 = vadd.f32 0.0, %v4490
        %v4492 = vpop.f32.mrf.mxu0
        %4493 = vdwg.mxu0
        %4494 = vrot.lane.b32.xlu0 %v3537, 64
        %v4495 = vpop.permute.xlu0 %4494
        %v4497 = vsel %vm2133, %v4258, 0
        %v4500 = vsel %vm2329, %v4495, 0
        %4502 = vmatpush.bf16.msra.mxu0 0
        %4503 = vmatpush.bf16.msra.mxu0 0
        %4504 = vmatpush.bf16.msra.mxu0 0
        %4505 = vmatpush.bf16.msra.mxu0 0
        %4506 = vmatpush.bf16.msra.mxu0 0
        %4507 = vmatpush.bf16.msra.mxu0 0
        %4508 = vmatpush.bf16.msra.mxu0 0
        %4509 = vmatpush.bf16.msra.mxu0 %v4500
        %4510 = vmatmul.bf16.gmra.mxu0 %v4497
        %v4511 = vpop.f32.mrf.mxu0
        %v4512 = vadd.f32 0.0, %v4511
        %v4513 = vpop.f32.mrf.mxu0
        %4514 = vdwg.mxu0
        %4515 = vrot.lane.b32.xlu0 %v3561, 64
        %v4516 = vpop.permute.xlu0 %4515
        %v4518 = vsel %vm2133, %v4259, 0
        %v4521 = vsel %vm2329, %v4516, 0
        %4523 = vmatpush.bf16.msra.mxu0 0
        %4524 = vmatpush.bf16.msra.mxu0 0
        %4525 = vmatpush.bf16.msra.mxu0 0
        %4526 = vmatpush.bf16.msra.mxu0 0
        %4527 = vmatpush.bf16.msra.mxu0 0
        %4528 = vmatpush.bf16.msra.mxu0 0
        %4529 = vmatpush.bf16.msra.mxu0 0
        %4530 = vmatpush.bf16.msra.mxu0 %v4521
        %4531 = vmatmul.bf16.gmra.mxu0 %v4518
        %v4532 = vpop.f32.mrf.mxu0
        %v4533 = vadd.f32 0.0, %v4532
        %v4534 = vpop.f32.mrf.mxu0
        %4535 = vdwg.mxu0
        %4536 = vrot.lane.b32.xlu0 %v3585, 64
        %v4537 = vpop.permute.xlu0 %4536
        %v4539 = vsel %vm2133, %v4260, 0
        %v4542 = vsel %vm2329, %v4537, 0
        %4544 = vmatpush.bf16.msra.mxu0 0
        %4545 = vmatpush.bf16.msra.mxu0 0
        %4546 = vmatpush.bf16.msra.mxu0 0
        %4547 = vmatpush.bf16.msra.mxu0 0
        %4548 = vmatpush.bf16.msra.mxu0 0
        %4549 = vmatpush.bf16.msra.mxu0 0
        %4550 = vmatpush.bf16.msra.mxu0 0
        %4551 = vmatpush.bf16.msra.mxu0 %v4542
        %4552 = vmatmul.bf16.gmra.mxu0 %v4539
        %v4553 = vpop.f32.mrf.mxu0
        %v4554 = vadd.f32 0.0, %v4553
        %v4555 = vpop.f32.mrf.mxu0
        %4556 = vdwg.mxu0
        %4557 = vrot.lane.b32.xlu0 %v3609, 64
        %v4558 = vpop.permute.xlu0 %4557
        %v4560 = vsel %vm2133, %v4261, 0
        %v4563 = vsel %vm2329, %v4558, 0
        %4565 = vmatpush.bf16.msra.mxu0 0
        %4566 = vmatpush.bf16.msra.mxu0 0
        %4567 = vmatpush.bf16.msra.mxu0 0
        %4568 = vmatpush.bf16.msra.mxu0 0
        %4569 = vmatpush.bf16.msra.mxu0 0
        %4570 = vmatpush.bf16.msra.mxu0 0
        %4571 = vmatpush.bf16.msra.mxu0 0
        %4572 = vmatpush.bf16.msra.mxu0 %v4563
        %4573 = vmatmul.bf16.gmra.mxu0 %v4560
        %v4574 = vpop.f32.mrf.mxu0
        %v4575 = vadd.f32 0.0, %v4574
        %v4576 = vpop.f32.mrf.mxu0
        %4577 = vdwg.mxu0
        %4578 = vrot.lane.b32.xlu0 %v3633, 64
        %v4579 = vpop.permute.xlu0 %4578
        %v4581 = vsel %vm2133, %v4262, 0
        %v4584 = vsel %vm2329, %v4579, 0
        %4586 = vmatpush.bf16.msra.mxu0 0
        %4587 = vmatpush.bf16.msra.mxu0 0
        %4588 = vmatpush.bf16.msra.mxu0 0
        %4589 = vmatpush.bf16.msra.mxu0 0
        %4590 = vmatpush.bf16.msra.mxu0 0
        %4591 = vmatpush.bf16.msra.mxu0 0
        %4592 = vmatpush.bf16.msra.mxu0 0
        %4593 = vmatpush.bf16.msra.mxu0 %v4584
        %4594 = vmatmul.bf16.gmra.mxu0 %v4581
        %v4595 = vpop.f32.mrf.mxu0
        %v4596 = vadd.f32 0.0, %v4595
        %v4597 = vpop.f32.mrf.mxu0
        %4598 = vdwg.mxu0
        %4599 = vrot.lane.b32.xlu0 %v1634, 32
        %v4600 = vpop.permute.xlu0 %4599
        %4601 = vrot.lane.b32.xlu0 %v1636, 32
        %v4602 = vpop.permute.xlu0 %4601
        %4603 = vrot.lane.b32.xlu0 %v1638, 32
        %v4604 = vpop.permute.xlu0 %4603
        %4605 = vrot.lane.b32.xlu0 %v1640, 32
        %v4606 = vpop.permute.xlu0 %4605
        %4607 = vrot.lane.b32.xlu0 %v1642, 32
        %v4608 = vpop.permute.xlu0 %4607
        %4609 = vrot.lane.b32.xlu0 %v1644, 32
        %v4610 = vpop.permute.xlu0 %4609
        %4611 = vrot.lane.b32.xlu0 %v1646, 32
        %v4612 = vpop.permute.xlu0 %4611
        %4613 = vrot.lane.b32.xlu0 %v1648, 32
        %v4614 = vpop.permute.xlu0 %4613
        %4615 = vrot.lane.b32.xlu0 %v1650, 32
        %v4616 = vpop.permute.xlu0 %4615
        %4617 = vrot.lane.b32.xlu0 %v1652, 32
        %v4618 = vpop.permute.xlu0 %4617
        %4619 = vrot.lane.b32.xlu0 %v1654, 32
        %v4620 = vpop.permute.xlu0 %4619
        %4621 = vrot.lane.b32.xlu0 %v1656, 32
        %v4622 = vpop.permute.xlu0 %4621
        %4623 = vrot.lane.b32.xlu0 %v1658, 32
        %v4624 = vpop.permute.xlu0 %4623
        %4625 = vrot.lane.b32.xlu0 %v1660, 32
        %v4626 = vpop.permute.xlu0 %4625
        %4627 = vrot.lane.b32.xlu0 %v1662, 32
        %v4628 = vpop.permute.xlu0 %4627
        %4629 = vrot.lane.b32.xlu0 %v1664, 32
        %v4630 = vpop.permute.xlu0 %4629
        %v4631 = vrot.slane %v4600, 4
        %v4632 = vrot.slane %v4602, 4
        %v4633 = vrot.slane %v4604, 4
        %v4634 = vrot.slane %v4606, 4
        %v4635 = vrot.slane %v4608, 4
        %v4636 = vrot.slane %v4610, 4
        %v4637 = vrot.slane %v4612, 4
        %v4638 = vrot.slane %v4614, 4
        %v4639 = vrot.slane %v4616, 4
        %v4640 = vrot.slane %v4618, 4
        %v4641 = vrot.slane %v4620, 4
        %v4642 = vrot.slane %v4622, 4
        %v4643 = vrot.slane %v4624, 4
        %v4644 = vrot.slane %v4626, 4
        %v4645 = vrot.slane %v4628, 4
        %v4646 = vrot.slane %v4630, 4
        %4647 = vrot.lane.b32.xlu0 %v2680, 32
        %v4648 = vpop.permute.xlu0 %4647
        %v4650 = vsel %vm1748, %v4648, 0
        %v4653 = vsel %vm1748, %v4631, 0
        %4655 = vmatpush.bf16.xpose.msra.mxu0 0
        %4656 = vmatpush.bf16.xpose.msra.mxu0 0
        %4657 = vmatpush.bf16.xpose.msra.mxu0 0
        %4658 = vmatpush.bf16.xpose.msra.mxu0 0
        %4659 = vmatpush.bf16.xpose.msra.mxu0 0
        %4660 = vmatpush.bf16.xpose.msra.mxu0 0
        %4661 = vmatpush.bf16.xpose.msra.mxu0 0
        %4662 = vmatpush.bf16.xpose.msra.mxu0 %v4653
        %4663 = vmatmul.bf16.gmra.mxu0 %v4650
        %v4664 = vpop.f32.mrf.mxu0
        %v4665 = vadd.f32 0.0, %v4664
        %v4666 = vpop.f32.mrf.mxu0
        %4667 = vdwg.mxu0
        %4668 = vrot.lane.b32.xlu0 %v2703, 32
        %v4669 = vpop.permute.xlu0 %4668
        %v4671 = vsel %vm1748, %v4669, 0
        %v4674 = vsel %vm1748, %v4632, 0
        %4676 = vmatpush.bf16.xpose.msra.mxu0 0
        %4677 = vmatpush.bf16.xpose.msra.mxu0 0
        %4678 = vmatpush.bf16.xpose.msra.mxu0 0
        %4679 = vmatpush.bf16.xpose.msra.mxu0 0
        %4680 = vmatpush.bf16.xpose.msra.mxu0 0
        %4681 = vmatpush.bf16.xpose.msra.mxu0 0
        %4682 = vmatpush.bf16.xpose.msra.mxu0 0
        %4683 = vmatpush.bf16.xpose.msra.mxu0 %v4674
        %4684 = vmatmul.bf16.gmra.mxu0 %v4671
        %v4685 = vpop.f32.mrf.mxu0
        %v4686 = vadd.f32 0.0, %v4685
        %v4687 = vpop.f32.mrf.mxu0
        %4688 = vdwg.mxu0
        %4689 = vrot.lane.b32.xlu0 %v2726, 32
        %v4690 = vpop.permute.xlu0 %4689
        %v4692 = vsel %vm1748, %v4690, 0
        %v4695 = vsel %vm1748, %v4633, 0
        %4697 = vmatpush.bf16.xpose.msra.mxu0 0
        %4698 = vmatpush.bf16.xpose.msra.mxu0 0
        %4699 = vmatpush.bf16.xpose.msra.mxu0 0
        %4700 = vmatpush.bf16.xpose.msra.mxu0 0
        %4701 = vmatpush.bf16.xpose.msra.mxu0 0
        %4702 = vmatpush.bf16.xpose.msra.mxu0 0
        %4703 = vmatpush.bf16.xpose.msra.mxu0 0
        %4704 = vmatpush.bf16.xpose.msra.mxu0 %v4695
        %4705 = vmatmul.bf16.gmra.mxu0 %v4692
        %v4706 = vpop.f32.mrf.mxu0
        %v4707 = vadd.f32 0.0, %v4706
        %v4708 = vpop.f32.mrf.mxu0
        %4709 = vdwg.mxu0
        %4710 = vrot.lane.b32.xlu0 %v2749, 32
        %v4711 = vpop.permute.xlu0 %4710
        %v4713 = vsel %vm1748, %v4711, 0
        %v4716 = vsel %vm1748, %v4634, 0
        %4718 = vmatpush.bf16.xpose.msra.mxu0 0
        %4719 = vmatpush.bf16.xpose.msra.mxu0 0
        %4720 = vmatpush.bf16.xpose.msra.mxu0 0
        %4721 = vmatpush.bf16.xpose.msra.mxu0 0
        %4722 = vmatpush.bf16.xpose.msra.mxu0 0
        %4723 = vmatpush.bf16.xpose.msra.mxu0 0
        %4724 = vmatpush.bf16.xpose.msra.mxu0 0
        %4725 = vmatpush.bf16.xpose.msra.mxu0 %v4716
        %4726 = vmatmul.bf16.gmra.mxu0 %v4713
        %v4727 = vpop.f32.mrf.mxu0
        %v4728 = vadd.f32 0.0, %v4727
        %v4729 = vpop.f32.mrf.mxu0
        %4730 = vdwg.mxu0
        %4731 = vrot.lane.b32.xlu0 %v2772, 32
        %v4732 = vpop.permute.xlu0 %4731
        %v4734 = vsel %vm1748, %v4732, 0
        %v4737 = vsel %vm1748, %v4635, 0
        %4739 = vmatpush.bf16.xpose.msra.mxu0 0
        %4740 = vmatpush.bf16.xpose.msra.mxu0 0
        %4741 = vmatpush.bf16.xpose.msra.mxu0 0
        %4742 = vmatpush.bf16.xpose.msra.mxu0 0
        %4743 = vmatpush.bf16.xpose.msra.mxu0 0
        %4744 = vmatpush.bf16.xpose.msra.mxu0 0
        %4745 = vmatpush.bf16.xpose.msra.mxu0 0
        %4746 = vmatpush.bf16.xpose.msra.mxu0 %v4737
        %4747 = vmatmul.bf16.gmra.mxu0 %v4734
        %v4748 = vpop.f32.mrf.mxu0
        %v4749 = vadd.f32 0.0, %v4748
        %v4750 = vpop.f32.mrf.mxu0
        %4751 = vdwg.mxu0
        %4752 = vrot.lane.b32.xlu0 %v2795, 32
        %v4753 = vpop.permute.xlu0 %4752
        %v4755 = vsel %vm1748, %v4753, 0
        %v4758 = vsel %vm1748, %v4636, 0
        %4760 = vmatpush.bf16.xpose.msra.mxu0 0
        %4761 = vmatpush.bf16.xpose.msra.mxu0 0
        %4762 = vmatpush.bf16.xpose.msra.mxu0 0
        %4763 = vmatpush.bf16.xpose.msra.mxu0 0
        %4764 = vmatpush.bf16.xpose.msra.mxu0 0
        %4765 = vmatpush.bf16.xpose.msra.mxu0 0
        %4766 = vmatpush.bf16.xpose.msra.mxu0 0
        %4767 = vmatpush.bf16.xpose.msra.mxu0 %v4758
        %4768 = vmatmul.bf16.gmra.mxu0 %v4755
        %v4769 = vpop.f32.mrf.mxu0
        %v4770 = vadd.f32 0.0, %v4769
        %v4771 = vpop.f32.mrf.mxu0
        %4772 = vdwg.mxu0
        %4773 = vrot.lane.b32.xlu0 %v2818, 32
        %v4774 = vpop.permute.xlu0 %4773
        %v4776 = vsel %vm1748, %v4774, 0
        %v4779 = vsel %vm1748, %v4637, 0
        %4781 = vmatpush.bf16.xpose.msra.mxu0 0
        %4782 = vmatpush.bf16.xpose.msra.mxu0 0
        %4783 = vmatpush.bf16.xpose.msra.mxu0 0
        %4784 = vmatpush.bf16.xpose.msra.mxu0 0
        %4785 = vmatpush.bf16.xpose.msra.mxu0 0
        %4786 = vmatpush.bf16.xpose.msra.mxu0 0
        %4787 = vmatpush.bf16.xpose.msra.mxu0 0
        %4788 = vmatpush.bf16.xpose.msra.mxu0 %v4779
        %4789 = vmatmul.bf16.gmra.mxu0 %v4776
        %v4790 = vpop.f32.mrf.mxu0
        %v4791 = vadd.f32 0.0, %v4790
        %v4792 = vpop.f32.mrf.mxu0
        %4793 = vdwg.mxu0
        %4794 = vrot.lane.b32.xlu0 %v2841, 32
        %v4795 = vpop.permute.xlu0 %4794
        %v4797 = vsel %vm1748, %v4795, 0
        %v4800 = vsel %vm1748, %v4638, 0
        %4802 = vmatpush.bf16.xpose.msra.mxu0 0
        %4803 = vmatpush.bf16.xpose.msra.mxu0 0
        %4804 = vmatpush.bf16.xpose.msra.mxu0 0
        %4805 = vmatpush.bf16.xpose.msra.mxu0 0
        %4806 = vmatpush.bf16.xpose.msra.mxu0 0
        %4807 = vmatpush.bf16.xpose.msra.mxu0 0
        %4808 = vmatpush.bf16.xpose.msra.mxu0 0
        %4809 = vmatpush.bf16.xpose.msra.mxu0 %v4800
        %4810 = vmatmul.bf16.gmra.mxu0 %v4797
        %v4811 = vpop.f32.mrf.mxu0
        %v4812 = vadd.f32 0.0, %v4811
        %v4813 = vpop.f32.mrf.mxu0
        %4814 = vdwg.mxu0
        %4815 = vrot.lane.b32.xlu0 %v2864, 32
        %v4816 = vpop.permute.xlu0 %4815
        %v4818 = vsel %vm1748, %v4816, 0
        %v4821 = vsel %vm1748, %v4639, 0
        %4823 = vmatpush.bf16.xpose.msra.mxu0 0
        %4824 = vmatpush.bf16.xpose.msra.mxu0 0
        %4825 = vmatpush.bf16.xpose.msra.mxu0 0
        %4826 = vmatpush.bf16.xpose.msra.mxu0 0
        %4827 = vmatpush.bf16.xpose.msra.mxu0 0
        %4828 = vmatpush.bf16.xpose.msra.mxu0 0
        %4829 = vmatpush.bf16.xpose.msra.mxu0 0
        %4830 = vmatpush.bf16.xpose.msra.mxu0 %v4821
        %4831 = vmatmul.bf16.gmra.mxu0 %v4818
        %v4832 = vpop.f32.mrf.mxu0
        %v4833 = vadd.f32 0.0, %v4832
        %v4834 = vpop.f32.mrf.mxu0
        %4835 = vdwg.mxu0
        %4836 = vrot.lane.b32.xlu0 %v2887, 32
        %v4837 = vpop.permute.xlu0 %4836
        %v4839 = vsel %vm1748, %v4837, 0
        %v4842 = vsel %vm1748, %v4640, 0
        %4844 = vmatpush.bf16.xpose.msra.mxu0 0
        %4845 = vmatpush.bf16.xpose.msra.mxu0 0
        %4846 = vmatpush.bf16.xpose.msra.mxu0 0
        %4847 = vmatpush.bf16.xpose.msra.mxu0 0
        %4848 = vmatpush.bf16.xpose.msra.mxu0 0
        %4849 = vmatpush.bf16.xpose.msra.mxu0 0
        %4850 = vmatpush.bf16.xpose.msra.mxu0 0
        %4851 = vmatpush.bf16.xpose.msra.mxu0 %v4842
        %4852 = vmatmul.bf16.gmra.mxu0 %v4839
        %v4853 = vpop.f32.mrf.mxu0
        %v4854 = vadd.f32 0.0, %v4853
        %v4855 = vpop.f32.mrf.mxu0
        %4856 = vdwg.mxu0
        %4857 = vrot.lane.b32.xlu0 %v2910, 32
        %v4858 = vpop.permute.xlu0 %4857
        %v4860 = vsel %vm1748, %v4858, 0
        %v4863 = vsel %vm1748, %v4641, 0
        %4865 = vmatpush.bf16.xpose.msra.mxu0 0
        %4866 = vmatpush.bf16.xpose.msra.mxu0 0
        %4867 = vmatpush.bf16.xpose.msra.mxu0 0
        %4868 = vmatpush.bf16.xpose.msra.mxu0 0
        %4869 = vmatpush.bf16.xpose.msra.mxu0 0
        %4870 = vmatpush.bf16.xpose.msra.mxu0 0
        %4871 = vmatpush.bf16.xpose.msra.mxu0 0
        %4872 = vmatpush.bf16.xpose.msra.mxu0 %v4863
        %4873 = vmatmul.bf16.gmra.mxu0 %v4860
        %v4874 = vpop.f32.mrf.mxu0
        %v4875 = vadd.f32 0.0, %v4874
        %v4876 = vpop.f32.mrf.mxu0
        %4877 = vdwg.mxu0
        %4878 = vrot.lane.b32.xlu0 %v2933, 32
        %v4879 = vpop.permute.xlu0 %4878
        %v4881 = vsel %vm1748, %v4879, 0
        %v4884 = vsel %vm1748, %v4642, 0
        %4886 = vmatpush.bf16.xpose.msra.mxu0 0
        %4887 = vmatpush.bf16.xpose.msra.mxu0 0
        %4888 = vmatpush.bf16.xpose.msra.mxu0 0
        %4889 = vmatpush.bf16.xpose.msra.mxu0 0
        %4890 = vmatpush.bf16.xpose.msra.mxu0 0
        %4891 = vmatpush.bf16.xpose.msra.mxu0 0
        %4892 = vmatpush.bf16.xpose.msra.mxu0 0
        %4893 = vmatpush.bf16.xpose.msra.mxu0 %v4884
        %4894 = vmatmul.bf16.gmra.mxu0 %v4881
        %v4895 = vpop.f32.mrf.mxu0
        %v4896 = vadd.f32 0.0, %v4895
        %v4897 = vpop.f32.mrf.mxu0
        %4898 = vdwg.mxu0
        %4899 = vrot.lane.b32.xlu0 %v2956, 32
        %v4900 = vpop.permute.xlu0 %4899
        %v4902 = vsel %vm1748, %v4900, 0
        %v4905 = vsel %vm1748, %v4643, 0
        %4907 = vmatpush.bf16.xpose.msra.mxu0 0
        %4908 = vmatpush.bf16.xpose.msra.mxu0 0
        %4909 = vmatpush.bf16.xpose.msra.mxu0 0
        %4910 = vmatpush.bf16.xpose.msra.mxu0 0
        %4911 = vmatpush.bf16.xpose.msra.mxu0 0
        %4912 = vmatpush.bf16.xpose.msra.mxu0 0
        %4913 = vmatpush.bf16.xpose.msra.mxu0 0
        %4914 = vmatpush.bf16.xpose.msra.mxu0 %v4905
        %4915 = vmatmul.bf16.gmra.mxu0 %v4902
        %v4916 = vpop.f32.mrf.mxu0
        %v4917 = vadd.f32 0.0, %v4916
        %v4918 = vpop.f32.mrf.mxu0
        %4919 = vdwg.mxu0
        %4920 = vrot.lane.b32.xlu0 %v2979, 32
        %v4921 = vpop.permute.xlu0 %4920
        %v4923 = vsel %vm1748, %v4921, 0
        %v4926 = vsel %vm1748, %v4644, 0
        %4928 = vmatpush.bf16.xpose.msra.mxu0 0
        %4929 = vmatpush.bf16.xpose.msra.mxu0 0
        %4930 = vmatpush.bf16.xpose.msra.mxu0 0
        %4931 = vmatpush.bf16.xpose.msra.mxu0 0
        %4932 = vmatpush.bf16.xpose.msra.mxu0 0
        %4933 = vmatpush.bf16.xpose.msra.mxu0 0
        %4934 = vmatpush.bf16.xpose.msra.mxu0 0
        %4935 = vmatpush.bf16.xpose.msra.mxu0 %v4926
        %4936 = vmatmul.bf16.gmra.mxu0 %v4923
        %v4937 = vpop.f32.mrf.mxu0
        %v4938 = vadd.f32 0.0, %v4937
        %v4939 = vpop.f32.mrf.mxu0
        %4940 = vdwg.mxu0
        %4941 = vrot.lane.b32.xlu0 %v3002, 32
        %v4942 = vpop.permute.xlu0 %4941
        %v4944 = vsel %vm1748, %v4942, 0
        %v4947 = vsel %vm1748, %v4645, 0
        %4949 = vmatpush.bf16.xpose.msra.mxu0 0
        %4950 = vmatpush.bf16.xpose.msra.mxu0 0
        %4951 = vmatpush.bf16.xpose.msra.mxu0 0
        %4952 = vmatpush.bf16.xpose.msra.mxu0 0
        %4953 = vmatpush.bf16.xpose.msra.mxu0 0
        %4954 = vmatpush.bf16.xpose.msra.mxu0 0
        %4955 = vmatpush.bf16.xpose.msra.mxu0 0
        %4956 = vmatpush.bf16.xpose.msra.mxu0 %v4947
        %4957 = vmatmul.bf16.gmra.mxu0 %v4944
        %v4958 = vpop.f32.mrf.mxu0
        %v4959 = vadd.f32 0.0, %v4958
        %v4960 = vpop.f32.mrf.mxu0
        %4961 = vdwg.mxu0
        %4962 = vrot.lane.b32.xlu0 %v3025, 32
        %v4963 = vpop.permute.xlu0 %4962
        %v4965 = vsel %vm1748, %v4963, 0
        %v4968 = vsel %vm1748, %v4646, 0
        %4970 = vmatpush.bf16.xpose.msra.mxu0 0
        %4971 = vmatpush.bf16.xpose.msra.mxu0 0
        %4972 = vmatpush.bf16.xpose.msra.mxu0 0
        %4973 = vmatpush.bf16.xpose.msra.mxu0 0
        %4974 = vmatpush.bf16.xpose.msra.mxu0 0
        %4975 = vmatpush.bf16.xpose.msra.mxu0 0
        %4976 = vmatpush.bf16.xpose.msra.mxu0 0
        %4977 = vmatpush.bf16.xpose.msra.mxu0 %v4968
        %4978 = vmatmul.bf16.gmra.mxu0 %v4965
        %v4979 = vpop.f32.mrf.mxu0
        %v4980 = vadd.f32 0.0, %v4979
        %v4981 = vpop.f32.mrf.mxu0
        %4982 = vdwg.mxu0
        %v4983 = vmul.f32 %v4665, 0.17677669
        %v4984 = vmul.f32 %v4686, 0.17677669
        %v4985 = vmul.f32 %v4707, 0.17677669
        %v4986 = vmul.f32 %v4728, 0.17677669
        %v4987 = vmul.f32 %v4749, 0.17677669
        %v4988 = vmul.f32 %v4770, 0.17677669
        %v4989 = vmul.f32 %v4791, 0.17677669
        %v4990 = vmul.f32 %v4812, 0.17677669
        %v4991 = vmul.f32 %v4833, 0.17677669
        %v4992 = vmul.f32 %v4854, 0.17677669
        %v4993 = vmul.f32 %v4875, 0.17677669
        %v4994 = vmul.f32 %v4896, 0.17677669
        %v4995 = vmul.f32 %v4917, 0.17677669
        %v4996 = vmul.f32 %v4938, 0.17677669
        %v4997 = vmul.f32 %v4959, 0.17677669
        %v4998 = vmul.f32 %v4980, 0.17677669
        %v4999 = vadd.f32 %v4983, %v2085
        %v5000 = vadd.f32 %v4984, %v2086
        %v5001 = vadd.f32 %v4985, %v2087
        %v5002 = vadd.f32 %v4986, %v2088
        %v5003 = vadd.f32 %v4987, %v2089
        %v5004 = vadd.f32 %v4988, %v2090
        %v5005 = vadd.f32 %v4989, %v2091
        %v5006 = vadd.f32 %v4990, %v2092
        %v5007 = vadd.f32 %v4991, %v2093
        %v5008 = vadd.f32 %v4992, %v2094
        %v5009 = vadd.f32 %v4993, %v2095
        %v5010 = vadd.f32 %v4994, %v2096
        %v5011 = vadd.f32 %v4995, %v2097
        %v5012 = vadd.f32 %v4996, %v2098
        %v5013 = vadd.f32 %v4997, %v2099
        %v5014 = vadd.f32 %v4998, %v2100
        %v5015 = vsel %vm2133, %v4999, -inf
        %5016 = vmax.xlane.f32.xlu0 %v5015
        %v5017 = vpop.xlane.xlu0 %5016
        %v5018 = vsel %vm2133, %v5000, -inf
        %5019 = vmax.xlane.f32.xlu0 %v5018
        %v5020 = vpop.xlane.xlu0 %5019
        %v5021 = vsel %vm2133, %v5001, -inf
        %5022 = vmax.xlane.f32.xlu0 %v5021
        %v5023 = vpop.xlane.xlu0 %5022
        %v5024 = vsel %vm2133, %v5002, -inf
        %5025 = vmax.xlane.f32.xlu0 %v5024
        %v5026 = vpop.xlane.xlu0 %5025
        %v5027 = vsel %vm2133, %v5003, -inf
        %5028 = vmax.xlane.f32.xlu0 %v5027
        %v5029 = vpop.xlane.xlu0 %5028
        %v5030 = vsel %vm2133, %v5004, -inf
        %5031 = vmax.xlane.f32.xlu0 %v5030
        %v5032 = vpop.xlane.xlu0 %5031
        %v5033 = vsel %vm2133, %v5005, -inf
        %5034 = vmax.xlane.f32.xlu0 %v5033
        %v5035 = vpop.xlane.xlu0 %5034
        %v5036 = vsel %vm2133, %v5006, -inf
        %5037 = vmax.xlane.f32.xlu0 %v5036
        %v5038 = vpop.xlane.xlu0 %5037
        %v5039 = vsel %vm2133, %v5007, -inf
        %5040 = vmax.xlane.f32.xlu0 %v5039
        %v5041 = vpop.xlane.xlu0 %5040
        %v5042 = vsel %vm2133, %v5008, -inf
        %5043 = vmax.xlane.f32.xlu0 %v5042
        %v5044 = vpop.xlane.xlu0 %5043
        %v5045 = vsel %vm2133, %v5009, -inf
        %5046 = vmax.xlane.f32.xlu0 %v5045
        %v5047 = vpop.xlane.xlu0 %5046
        %v5048 = vsel %vm2133, %v5010, -inf
        %5049 = vmax.xlane.f32.xlu0 %v5048
        %v5050 = vpop.xlane.xlu0 %5049
        %v5051 = vsel %vm2133, %v5011, -inf
        %5052 = vmax.xlane.f32.xlu0 %v5051
        %v5053 = vpop.xlane.xlu0 %5052
        %v5054 = vsel %vm2133, %v5012, -inf
        %5055 = vmax.xlane.f32.xlu0 %v5054
        %v5056 = vpop.xlane.xlu0 %5055
        %v5057 = vsel %vm2133, %v5013, -inf
        %5058 = vmax.xlane.f32.xlu0 %v5057
        %v5059 = vpop.xlane.xlu0 %5058
        %v5060 = vsel %vm2133, %v5014, -inf
        %5061 = vmax.xlane.f32.xlu0 %v5060
        %v5062 = vpop.xlane.xlu0 %5061
        %v5063 = vsub.f32 %v4999, %v5017
        %v5064 = vsub.f32 %v5000, %v5020
        %v5065 = vsub.f32 %v5001, %v5023
        %v5066 = vsub.f32 %v5002, %v5026
        %v5067 = vsub.f32 %v5003, %v5029
        %v5068 = vsub.f32 %v5004, %v5032
        %v5069 = vsub.f32 %v5005, %v5035
        %v5070 = vsub.f32 %v5006, %v5038
        %v5071 = vsub.f32 %v5007, %v5041
        %v5072 = vsub.f32 %v5008, %v5044
        %v5073 = vsub.f32 %v5009, %v5047
        %v5074 = vsub.f32 %v5010, %v5050
        %v5075 = vsub.f32 %v5011, %v5053
        %v5076 = vsub.f32 %v5012, %v5056
        %v5077 = vsub.f32 %v5013, %v5059
        %v5078 = vsub.f32 %v5014, %v5062
        %v5079 = vmul.f32 %v5063, 1.442695
        %v5080 = vpow.pop %v5079
        %v5081 = vmul.f32 %v5064, 1.442695
        %v5082 = vpow.pop %v5081
        %v5083 = vmul.f32 %v5065, 1.442695
        %v5084 = vpow.pop %v5083
        %v5085 = vmul.f32 %v5066, 1.442695
        %v5086 = vpow.pop %v5085
        %v5087 = vmul.f32 %v5067, 1.442695
        %v5088 = vpow.pop %v5087
        %v5089 = vmul.f32 %v5068, 1.442695
        %v5090 = vpow.pop %v5089
        %v5091 = vmul.f32 %v5069, 1.442695
        %v5092 = vpow.pop %v5091
        %v5093 = vmul.f32 %v5070, 1.442695
        %v5094 = vpow.pop %v5093
        %v5095 = vmul.f32 %v5071, 1.442695
        %v5096 = vpow.pop %v5095
        %v5097 = vmul.f32 %v5072, 1.442695
        %v5098 = vpow.pop %v5097
        %v5099 = vmul.f32 %v5073, 1.442695
        %v5100 = vpow.pop %v5099
        %v5101 = vmul.f32 %v5074, 1.442695
        %v5102 = vpow.pop %v5101
        %v5103 = vmul.f32 %v5075, 1.442695
        %v5104 = vpow.pop %v5103
        %v5105 = vmul.f32 %v5076, 1.442695
        %v5106 = vpow.pop %v5105
        %v5107 = vmul.f32 %v5077, 1.442695
        %v5108 = vpow.pop %v5107
        %v5109 = vmul.f32 %v5078, 1.442695
        %v5110 = vpow.pop %v5109
        %v5111 = vsel %vm2133, %v5080, 0.0
        %5112 = vadd.xlane.f32.xlu0 %v5111
        %v5113 = vpop.xlane.xlu0 %5112
        %v5114 = vsel %vm2133, %v5082, 0.0
        %5115 = vadd.xlane.f32.xlu0 %v5114
        %v5116 = vpop.xlane.xlu0 %5115
        %v5117 = vsel %vm2133, %v5084, 0.0
        %5118 = vadd.xlane.f32.xlu0 %v5117
        %v5119 = vpop.xlane.xlu0 %5118
        %v5120 = vsel %vm2133, %v5086, 0.0
        %5121 = vadd.xlane.f32.xlu0 %v5120
        %v5122 = vpop.xlane.xlu0 %5121
        %v5123 = vsel %vm2133, %v5088, 0.0
        %5124 = vadd.xlane.f32.xlu0 %v5123
        %v5125 = vpop.xlane.xlu0 %5124
        %v5126 = vsel %vm2133, %v5090, 0.0
        %5127 = vadd.xlane.f32.xlu0 %v5126
        %v5128 = vpop.xlane.xlu0 %5127
        %v5129 = vsel %vm2133, %v5092, 0.0
        %5130 = vadd.xlane.f32.xlu0 %v5129
        %v5131 = vpop.xlane.xlu0 %5130
        %v5132 = vsel %vm2133, %v5094, 0.0
        %5133 = vadd.xlane.f32.xlu0 %v5132
        %v5134 = vpop.xlane.xlu0 %5133
        %v5135 = vsel %vm2133, %v5096, 0.0
        %5136 = vadd.xlane.f32.xlu0 %v5135
        %v5137 = vpop.xlane.xlu0 %5136
        %v5138 = vsel %vm2133, %v5098, 0.0
        %5139 = vadd.xlane.f32.xlu0 %v5138
        %v5140 = vpop.xlane.xlu0 %5139
        %v5141 = vsel %vm2133, %v5100, 0.0
        %5142 = vadd.xlane.f32.xlu0 %v5141
        %v5143 = vpop.xlane.xlu0 %5142
        %v5144 = vsel %vm2133, %v5102, 0.0
        %5145 = vadd.xlane.f32.xlu0 %v5144
        %v5146 = vpop.xlane.xlu0 %5145
        %v5147 = vsel %vm2133, %v5104, 0.0
        %5148 = vadd.xlane.f32.xlu0 %v5147
        %v5149 = vpop.xlane.xlu0 %5148
        %v5150 = vsel %vm2133, %v5106, 0.0
        %5151 = vadd.xlane.f32.xlu0 %v5150
        %v5152 = vpop.xlane.xlu0 %5151
        %v5153 = vsel %vm2133, %v5108, 0.0
        %5154 = vadd.xlane.f32.xlu0 %v5153
        %v5155 = vpop.xlane.xlu0 %5154
        %v5156 = vsel %vm2133, %v5110, 0.0
        %5157 = vadd.xlane.f32.xlu0 %v5156
        %v5158 = vpop.xlane.xlu0 %5157
        %v5159 = vrcp.pop %v5113
        %v5160 = vrcp.pop %v5116
        %v5161 = vrcp.pop %v5119
        %v5162 = vrcp.pop %v5122
        %v5163 = vrcp.pop %v5125
        %v5164 = vrcp.pop %v5128
        %v5165 = vrcp.pop %v5131
        %v5166 = vrcp.pop %v5134
        %v5167 = vrcp.pop %v5137
        %v5168 = vrcp.pop %v5140
        %v5169 = vrcp.pop %v5143
        %v5170 = vrcp.pop %v5146
        %v5171 = vrcp.pop %v5149
        %v5172 = vrcp.pop %v5152
        %v5173 = vrcp.pop %v5155
        %v5174 = vrcp.pop %v5158
        %v5175 = vmul.f32 %v5080, %v5159
        %v5176 = vmul.f32 %v5082, %v5160
        %v5177 = vmul.f32 %v5084, %v5161
        %v5178 = vmul.f32 %v5086, %v5162
        %v5179 = vmul.f32 %v5088, %v5163
        %v5180 = vmul.f32 %v5090, %v5164
        %v5181 = vmul.f32 %v5092, %v5165
        %v5182 = vmul.f32 %v5094, %v5166
        %v5183 = vmul.f32 %v5096, %v5167
        %v5184 = vmul.f32 %v5098, %v5168
        %v5185 = vmul.f32 %v5100, %v5169
        %v5186 = vmul.f32 %v5102, %v5170
        %v5187 = vmul.f32 %v5104, %v5171
        %v5188 = vmul.f32 %v5106, %v5172
        %v5189 = vmul.f32 %v5108, %v5173
        %v5190 = vmul.f32 %v5110, %v5174
        %v5191 = vpack.c.bf16 %v5175, %v5175
        %v5192 = vpack.c.bf16 %v5176, %v5176
        %v5193 = vpack.c.bf16 %v5177, %v5177
        %v5194 = vpack.c.bf16 %v5178, %v5178
        %v5195 = vpack.c.bf16 %v5179, %v5179
        %v5196 = vpack.c.bf16 %v5180, %v5180
        %v5197 = vpack.c.bf16 %v5181, %v5181
        %v5198 = vpack.c.bf16 %v5182, %v5182
        %v5199 = vpack.c.bf16 %v5183, %v5183
        %v5200 = vpack.c.bf16 %v5184, %v5184
        %v5201 = vpack.c.bf16 %v5185, %v5185
        %v5202 = vpack.c.bf16 %v5186, %v5186
        %v5203 = vpack.c.bf16 %v5187, %v5187
        %v5204 = vpack.c.bf16 %v5188, %v5188
        %v5205 = vpack.c.bf16 %v5189, %v5189
        %v5206 = vpack.c.bf16 %v5190, %v5190
        %5207 = vrot.lane.b32.xlu0 %v3273, 32
        %v5208 = vpop.permute.xlu0 %5207
        %v5210 = vsel %vm2133, %v5191, 0
        %v5213 = vsel %vm2329, %v5208, 0
        %5215 = vmatpush.bf16.msra.mxu0 0
        %5216 = vmatpush.bf16.msra.mxu0 0
        %5217 = vmatpush.bf16.msra.mxu0 0
        %5218 = vmatpush.bf16.msra.mxu0 0
        %5219 = vmatpush.bf16.msra.mxu0 0
        %5220 = vmatpush.bf16.msra.mxu0 0
        %5221 = vmatpush.bf16.msra.mxu0 0
        %5222 = vmatpush.bf16.msra.mxu0 %v5213
        %5223 = vmatmul.bf16.gmra.mxu0 %v5210
        %v5224 = vpop.f32.mrf.mxu0
        %v5225 = vadd.f32 0.0, %v5224
        %v5226 = vpop.f32.mrf.mxu0
        %5227 = vdwg.mxu0
        %5228 = vrot.lane.b32.xlu0 %v3297, 32
        %v5229 = vpop.permute.xlu0 %5228
        %v5231 = vsel %vm2133, %v5192, 0
        %v5234 = vsel %vm2329, %v5229, 0
        %5236 = vmatpush.bf16.msra.mxu0 0
        %5237 = vmatpush.bf16.msra.mxu0 0
        %5238 = vmatpush.bf16.msra.mxu0 0
        %5239 = vmatpush.bf16.msra.mxu0 0
        %5240 = vmatpush.bf16.msra.mxu0 0
        %5241 = vmatpush.bf16.msra.mxu0 0
        %5242 = vmatpush.bf16.msra.mxu0 0
        %5243 = vmatpush.bf16.msra.mxu0 %v5234
        %5244 = vmatmul.bf16.gmra.mxu0 %v5231
        %v5245 = vpop.f32.mrf.mxu0
        %v5246 = vadd.f32 0.0, %v5245
        %v5247 = vpop.f32.mrf.mxu0
        %5248 = vdwg.mxu0
        %5249 = vrot.lane.b32.xlu0 %v3321, 32
        %v5250 = vpop.permute.xlu0 %5249
        %v5252 = vsel %vm2133, %v5193, 0
        %v5255 = vsel %vm2329, %v5250, 0
        %5257 = vmatpush.bf16.msra.mxu0 0
        %5258 = vmatpush.bf16.msra.mxu0 0
        %5259 = vmatpush.bf16.msra.mxu0 0
        %5260 = vmatpush.bf16.msra.mxu0 0
        %5261 = vmatpush.bf16.msra.mxu0 0
        %5262 = vmatpush.bf16.msra.mxu0 0
        %5263 = vmatpush.bf16.msra.mxu0 0
        %5264 = vmatpush.bf16.msra.mxu0 %v5255
        %5265 = vmatmul.bf16.gmra.mxu0 %v5252
        %v5266 = vpop.f32.mrf.mxu0
        %v5267 = vadd.f32 0.0, %v5266
        %v5268 = vpop.f32.mrf.mxu0
        %5269 = vdwg.mxu0
        %5270 = vrot.lane.b32.xlu0 %v3345, 32
        %v5271 = vpop.permute.xlu0 %5270
        %v5273 = vsel %vm2133, %v5194, 0
        %v5276 = vsel %vm2329, %v5271, 0
        %5278 = vmatpush.bf16.msra.mxu0 0
        %5279 = vmatpush.bf16.msra.mxu0 0
        %5280 = vmatpush.bf16.msra.mxu0 0
        %5281 = vmatpush.bf16.msra.mxu0 0
        %5282 = vmatpush.bf16.msra.mxu0 0
        %5283 = vmatpush.bf16.msra.mxu0 0
        %5284 = vmatpush.bf16.msra.mxu0 0
        %5285 = vmatpush.bf16.msra.mxu0 %v5276
        %5286 = vmatmul.bf16.gmra.mxu0 %v5273
        %v5287 = vpop.f32.mrf.mxu0
        %v5288 = vadd.f32 0.0, %v5287
        %v5289 = vpop.f32.mrf.mxu0
        %5290 = vdwg.mxu0
        %5291 = vrot.lane.b32.xlu0 %v3369, 32
        %v5292 = vpop.permute.xlu0 %5291
        %v5294 = vsel %vm2133, %v5195, 0
        %v5297 = vsel %vm2329, %v5292, 0
        %5299 = vmatpush.bf16.msra.mxu0 0
        %5300 = vmatpush.bf16.msra.mxu0 0
        %5301 = vmatpush.bf16.msra.mxu0 0
        %5302 = vmatpush.bf16.msra.mxu0 0
        %5303 = vmatpush.bf16.msra.mxu0 0
        %5304 = vmatpush.bf16.msra.mxu0 0
        %5305 = vmatpush.bf16.msra.mxu0 0
        %5306 = vmatpush.bf16.msra.mxu0 %v5297
        %5307 = vmatmul.bf16.gmra.mxu0 %v5294
        %v5308 = vpop.f32.mrf.mxu0
        %v5309 = vadd.f32 0.0, %v5308
        %v5310 = vpop.f32.mrf.mxu0
        %5311 = vdwg.mxu0
        %5312 = vrot.lane.b32.xlu0 %v3393, 32
        %v5313 = vpop.permute.xlu0 %5312
        %v5315 = vsel %vm2133, %v5196, 0
        %v5318 = vsel %vm2329, %v5313, 0
        %5320 = vmatpush.bf16.msra.mxu0 0
        %5321 = vmatpush.bf16.msra.mxu0 0
        %5322 = vmatpush.bf16.msra.mxu0 0
        %5323 = vmatpush.bf16.msra.mxu0 0
        %5324 = vmatpush.bf16.msra.mxu0 0
        %5325 = vmatpush.bf16.msra.mxu0 0
        %5326 = vmatpush.bf16.msra.mxu0 0
        %5327 = vmatpush.bf16.msra.mxu0 %v5318
        %5328 = vmatmul.bf16.gmra.mxu0 %v5315
        %v5329 = vpop.f32.mrf.mxu0
        %v5330 = vadd.f32 0.0, %v5329
        %v5331 = vpop.f32.mrf.mxu0
        %5332 = vdwg.mxu0
        %5333 = vrot.lane.b32.xlu0 %v3417, 32
        %v5334 = vpop.permute.xlu0 %5333
        %v5336 = vsel %vm2133, %v5197, 0
        %v5339 = vsel %vm2329, %v5334, 0
        %5341 = vmatpush.bf16.msra.mxu0 0
        %5342 = vmatpush.bf16.msra.mxu0 0
        %5343 = vmatpush.bf16.msra.mxu0 0
        %5344 = vmatpush.bf16.msra.mxu0 0
        %5345 = vmatpush.bf16.msra.mxu0 0
        %5346 = vmatpush.bf16.msra.mxu0 0
        %5347 = vmatpush.bf16.msra.mxu0 0
        %5348 = vmatpush.bf16.msra.mxu0 %v5339
        %5349 = vmatmul.bf16.gmra.mxu0 %v5336
        %v5350 = vpop.f32.mrf.mxu0
        %v5351 = vadd.f32 0.0, %v5350
        %v5352 = vpop.f32.mrf.mxu0
        %5353 = vdwg.mxu0
        %5354 = vrot.lane.b32.xlu0 %v3441, 32
        %v5355 = vpop.permute.xlu0 %5354
        %v5357 = vsel %vm2133, %v5198, 0
        %v5360 = vsel %vm2329, %v5355, 0
        %5362 = vmatpush.bf16.msra.mxu0 0
        %5363 = vmatpush.bf16.msra.mxu0 0
        %5364 = vmatpush.bf16.msra.mxu0 0
        %5365 = vmatpush.bf16.msra.mxu0 0
        %5366 = vmatpush.bf16.msra.mxu0 0
        %5367 = vmatpush.bf16.msra.mxu0 0
        %5368 = vmatpush.bf16.msra.mxu0 0
        %5369 = vmatpush.bf16.msra.mxu0 %v5360
        %5370 = vmatmul.bf16.gmra.mxu0 %v5357
        %v5371 = vpop.f32.mrf.mxu0
        %v5372 = vadd.f32 0.0, %v5371
        %v5373 = vpop.f32.mrf.mxu0
        %5374 = vdwg.mxu0
        %5375 = vrot.lane.b32.xlu0 %v3465, 32
        %v5376 = vpop.permute.xlu0 %5375
        %v5378 = vsel %vm2133, %v5199, 0
        %v5381 = vsel %vm2329, %v5376, 0
        %5383 = vmatpush.bf16.msra.mxu0 0
        %5384 = vmatpush.bf16.msra.mxu0 0
        %5385 = vmatpush.bf16.msra.mxu0 0
        %5386 = vmatpush.bf16.msra.mxu0 0
        %5387 = vmatpush.bf16.msra.mxu0 0
        %5388 = vmatpush.bf16.msra.mxu0 0
        %5389 = vmatpush.bf16.msra.mxu0 0
        %5390 = vmatpush.bf16.msra.mxu0 %v5381
        %5391 = vmatmul.bf16.gmra.mxu0 %v5378
        %v5392 = vpop.f32.mrf.mxu0
        %v5393 = vadd.f32 0.0, %v5392
        %v5394 = vpop.f32.mrf.mxu0
        %5395 = vdwg.mxu0
        %5396 = vrot.lane.b32.xlu0 %v3489, 32
        %v5397 = vpop.permute.xlu0 %5396
        %v5399 = vsel %vm2133, %v5200, 0
        %v5402 = vsel %vm2329, %v5397, 0
        %5404 = vmatpush.bf16.msra.mxu0 0
        %5405 = vmatpush.bf16.msra.mxu0 0
        %5406 = vmatpush.bf16.msra.mxu0 0
        %5407 = vmatpush.bf16.msra.mxu0 0
        %5408 = vmatpush.bf16.msra.mxu0 0
        %5409 = vmatpush.bf16.msra.mxu0 0
        %5410 = vmatpush.bf16.msra.mxu0 0
        %5411 = vmatpush.bf16.msra.mxu0 %v5402
        %5412 = vmatmul.bf16.gmra.mxu0 %v5399
        %v5413 = vpop.f32.mrf.mxu0
        %v5414 = vadd.f32 0.0, %v5413
        %v5415 = vpop.f32.mrf.mxu0
        %5416 = vdwg.mxu0
        %5417 = vrot.lane.b32.xlu0 %v3513, 32
        %v5418 = vpop.permute.xlu0 %5417
        %v5420 = vsel %vm2133, %v5201, 0
        %v5423 = vsel %vm2329, %v5418, 0
        %5425 = vmatpush.bf16.msra.mxu0 0
        %5426 = vmatpush.bf16.msra.mxu0 0
        %5427 = vmatpush.bf16.msra.mxu0 0
        %5428 = vmatpush.bf16.msra.mxu0 0
        %5429 = vmatpush.bf16.msra.mxu0 0
        %5430 = vmatpush.bf16.msra.mxu0 0
        %5431 = vmatpush.bf16.msra.mxu0 0
        %5432 = vmatpush.bf16.msra.mxu0 %v5423
        %5433 = vmatmul.bf16.gmra.mxu0 %v5420
        %v5434 = vpop.f32.mrf.mxu0
        %v5435 = vadd.f32 0.0, %v5434
        %v5436 = vpop.f32.mrf.mxu0
        %5437 = vdwg.mxu0
        %5438 = vrot.lane.b32.xlu0 %v3537, 32
        %v5439 = vpop.permute.xlu0 %5438
        %v5441 = vsel %vm2133, %v5202, 0
        %v5444 = vsel %vm2329, %v5439, 0
        %5446 = vmatpush.bf16.msra.mxu0 0
        %5447 = vmatpush.bf16.msra.mxu0 0
        %5448 = vmatpush.bf16.msra.mxu0 0
        %5449 = vmatpush.bf16.msra.mxu0 0
        %5450 = vmatpush.bf16.msra.mxu0 0
        %5451 = vmatpush.bf16.msra.mxu0 0
        %5452 = vmatpush.bf16.msra.mxu0 0
        %5453 = vmatpush.bf16.msra.mxu0 %v5444
        %5454 = vmatmul.bf16.gmra.mxu0 %v5441
        %v5455 = vpop.f32.mrf.mxu0
        %v5456 = vadd.f32 0.0, %v5455
        %v5457 = vpop.f32.mrf.mxu0
        %5458 = vdwg.mxu0
        %5459 = vrot.lane.b32.xlu0 %v3561, 32
        %v5460 = vpop.permute.xlu0 %5459
        %v5462 = vsel %vm2133, %v5203, 0
        %v5465 = vsel %vm2329, %v5460, 0
        %5467 = vmatpush.bf16.msra.mxu0 0
        %5468 = vmatpush.bf16.msra.mxu0 0
        %5469 = vmatpush.bf16.msra.mxu0 0
        %5470 = vmatpush.bf16.msra.mxu0 0
        %5471 = vmatpush.bf16.msra.mxu0 0
        %5472 = vmatpush.bf16.msra.mxu0 0
        %5473 = vmatpush.bf16.msra.mxu0 0
        %5474 = vmatpush.bf16.msra.mxu0 %v5465
        %5475 = vmatmul.bf16.gmra.mxu0 %v5462
        %v5476 = vpop.f32.mrf.mxu0
        %v5477 = vadd.f32 0.0, %v5476
        %v5478 = vpop.f32.mrf.mxu0
        %5479 = vdwg.mxu0
        %5480 = vrot.lane.b32.xlu0 %v3585, 32
        %v5481 = vpop.permute.xlu0 %5480
        %v5483 = vsel %vm2133, %v5204, 0
        %v5486 = vsel %vm2329, %v5481, 0
        %5488 = vmatpush.bf16.msra.mxu0 0
        %5489 = vmatpush.bf16.msra.mxu0 0
        %5490 = vmatpush.bf16.msra.mxu0 0
        %5491 = vmatpush.bf16.msra.mxu0 0
        %5492 = vmatpush.bf16.msra.mxu0 0
        %5493 = vmatpush.bf16.msra.mxu0 0
        %5494 = vmatpush.bf16.msra.mxu0 0
        %5495 = vmatpush.bf16.msra.mxu0 %v5486
        %5496 = vmatmul.bf16.gmra.mxu0 %v5483
        %v5497 = vpop.f32.mrf.mxu0
        %v5498 = vadd.f32 0.0, %v5497
        %v5499 = vpop.f32.mrf.mxu0
        %5500 = vdwg.mxu0
        %5501 = vrot.lane.b32.xlu0 %v3609, 32
        %v5502 = vpop.permute.xlu0 %5501
        %v5504 = vsel %vm2133, %v5205, 0
        %v5507 = vsel %vm2329, %v5502, 0
        %5509 = vmatpush.bf16.msra.mxu0 0
        %5510 = vmatpush.bf16.msra.mxu0 0
        %5511 = vmatpush.bf16.msra.mxu0 0
        %5512 = vmatpush.bf16.msra.mxu0 0
        %5513 = vmatpush.bf16.msra.mxu0 0
        %5514 = vmatpush.bf16.msra.mxu0 0
        %5515 = vmatpush.bf16.msra.mxu0 0
        %5516 = vmatpush.bf16.msra.mxu0 %v5507
        %5517 = vmatmul.bf16.gmra.mxu0 %v5504
        %v5518 = vpop.f32.mrf.mxu0
        %v5519 = vadd.f32 0.0, %v5518
        %v5520 = vpop.f32.mrf.mxu0
        %5521 = vdwg.mxu0
        %5522 = vrot.lane.b32.xlu0 %v3633, 32
        %v5523 = vpop.permute.xlu0 %5522
        %v5525 = vsel %vm2133, %v5206, 0
        %v5528 = vsel %vm2329, %v5523, 0
        %5530 = vmatpush.bf16.msra.mxu0 0
        %5531 = vmatpush.bf16.msra.mxu0 0
        %5532 = vmatpush.bf16.msra.mxu0 0
        %5533 = vmatpush.bf16.msra.mxu0 0
        %5534 = vmatpush.bf16.msra.mxu0 0
        %5535 = vmatpush.bf16.msra.mxu0 0
        %5536 = vmatpush.bf16.msra.mxu0 0
        %5537 = vmatpush.bf16.msra.mxu0 %v5528
        %5538 = vmatmul.bf16.gmra.mxu0 %v5525
        %v5539 = vpop.f32.mrf.mxu0
        %v5540 = vadd.f32 0.0, %v5539
        %v5541 = vpop.f32.mrf.mxu0
        %5542 = vdwg.mxu0
        %5559 = vrot.lane.b32.xlu0 %v3292, 32
        %v5560 = vpop.permute.xlu0 %5559
        %5561 = vrot.lane.b32.xlu0 %v3316, 32
        %v5562 = vpop.permute.xlu0 %5561
        %5563 = vrot.lane.b32.xlu0 %v3340, 32
        %v5564 = vpop.permute.xlu0 %5563
        %5565 = vrot.lane.b32.xlu0 %v3364, 32
        %v5566 = vpop.permute.xlu0 %5565
        %5567 = vrot.lane.b32.xlu0 %v3388, 32
        %v5568 = vpop.permute.xlu0 %5567
        %5569 = vrot.lane.b32.xlu0 %v3412, 32
        %v5570 = vpop.permute.xlu0 %5569
        %5571 = vrot.lane.b32.xlu0 %v3436, 32
        %v5572 = vpop.permute.xlu0 %5571
        %5573 = vrot.lane.b32.xlu0 %v3460, 32
        %v5574 = vpop.permute.xlu0 %5573
        %5575 = vrot.lane.b32.xlu0 %v3484, 32
        %v5576 = vpop.permute.xlu0 %5575
        %5577 = vrot.lane.b32.xlu0 %v3508, 32
        %v5578 = vpop.permute.xlu0 %5577
        %5579 = vrot.lane.b32.xlu0 %v3532, 32
        %v5580 = vpop.permute.xlu0 %5579
        %5581 = vrot.lane.b32.xlu0 %v3556, 32
        %v5582 = vpop.permute.xlu0 %5581
        %5583 = vrot.lane.b32.xlu0 %v3580, 32
        %v5584 = vpop.permute.xlu0 %5583
        %5585 = vrot.lane.b32.xlu0 %v3604, 32
        %v5586 = vpop.permute.xlu0 %5585
        %5587 = vrot.lane.b32.xlu0 %v3628, 32
        %v5588 = vpop.permute.xlu0 %5587
        %5589 = vrot.lane.b32.xlu0 %v3652, 32
        %v5590 = vpop.permute.xlu0 %5589
        %5623 = vrot.lane.b32.xlu0 %v4281, 64
        %v5624 = vpop.permute.xlu0 %5623
        %5625 = vrot.lane.b32.xlu0 %v4302, 64
        %v5626 = vpop.permute.xlu0 %5625
        %5627 = vrot.lane.b32.xlu0 %v4323, 64
        %v5628 = vpop.permute.xlu0 %5627
        %5629 = vrot.lane.b32.xlu0 %v4344, 64
        %v5630 = vpop.permute.xlu0 %5629
        %5631 = vrot.lane.b32.xlu0 %v4365, 64
        %v5632 = vpop.permute.xlu0 %5631
        %5633 = vrot.lane.b32.xlu0 %v4386, 64
        %v5634 = vpop.permute.xlu0 %5633
        %5635 = vrot.lane.b32.xlu0 %v4407, 64
        %v5636 = vpop.permute.xlu0 %5635
        %5637 = vrot.lane.b32.xlu0 %v4428, 64
        %v5638 = vpop.permute.xlu0 %5637
        %5639 = vrot.lane.b32.xlu0 %v4449, 64
        %v5640 = vpop.permute.xlu0 %5639
        %5641 = vrot.lane.b32.xlu0 %v4470, 64
        %v5642 = vpop.permute.xlu0 %5641
        %5643 = vrot.lane.b32.xlu0 %v4491, 64
        %v5644 = vpop.permute.xlu0 %5643
        %5645 = vrot.lane.b32.xlu0 %v4512, 64
        %v5646 = vpop.permute.xlu0 %5645
        %5647 = vrot.lane.b32.xlu0 %v4533, 64
        %v5648 = vpop.permute.xlu0 %5647
        %5649 = vrot.lane.b32.xlu0 %v4554, 64
        %v5650 = vpop.permute.xlu0 %5649
        %5651 = vrot.lane.b32.xlu0 %v4575, 64
        %v5652 = vpop.permute.xlu0 %5651
        %5653 = vrot.lane.b32.xlu0 %v4596, 64
        %v5654 = vpop.permute.xlu0 %5653
        %5687 = vrot.lane.b32.xlu0 %v5225, 96
        %v5688 = vpop.permute.xlu0 %5687
        %5689 = vrot.lane.b32.xlu0 %v5246, 96
        %v5690 = vpop.permute.xlu0 %5689
        %5691 = vrot.lane.b32.xlu0 %v5267, 96
        %v5692 = vpop.permute.xlu0 %5691
        %5693 = vrot.lane.b32.xlu0 %v5288, 96
        %v5694 = vpop.permute.xlu0 %5693
        %5695 = vrot.lane.b32.xlu0 %v5309, 96
        %v5696 = vpop.permute.xlu0 %5695
        %5697 = vrot.lane.b32.xlu0 %v5330, 96
        %v5698 = vpop.permute.xlu0 %5697
        %5699 = vrot.lane.b32.xlu0 %v5351, 96
        %v5700 = vpop.permute.xlu0 %5699
        %5701 = vrot.lane.b32.xlu0 %v5372, 96
        %v5702 = vpop.permute.xlu0 %5701
        %5703 = vrot.lane.b32.xlu0 %v5393, 96
        %v5704 = vpop.permute.xlu0 %5703
        %5705 = vrot.lane.b32.xlu0 %v5414, 96
        %v5706 = vpop.permute.xlu0 %5705
        %5707 = vrot.lane.b32.xlu0 %v5435, 96
        %v5708 = vpop.permute.xlu0 %5707
        %5709 = vrot.lane.b32.xlu0 %v5456, 96
        %v5710 = vpop.permute.xlu0 %5709
        %5711 = vrot.lane.b32.xlu0 %v5477, 96
        %v5712 = vpop.permute.xlu0 %5711
        %5713 = vrot.lane.b32.xlu0 %v5498, 96
        %v5714 = vpop.permute.xlu0 %5713
        %5715 = vrot.lane.b32.xlu0 %v5519, 96
        %v5716 = vpop.permute.xlu0 %5715
        %5717 = vrot.lane.b32.xlu0 %v5540, 96
        %v5718 = vpop.permute.xlu0 %5717
        %v5735 = vsel %vm1748, %v2343, %v5560
        %v5736 = vsel %vm1748, %v2362, %v5562
        %v5737 = vsel %vm1748, %v2381, %v5564
        %v5738 = vsel %vm1748, %v2400, %v5566
        %v5739 = vsel %vm1748, %v2419, %v5568
        %v5740 = vsel %vm1748, %v2438, %v5570
        %v5741 = vsel %vm1748, %v2457, %v5572
        %v5742 = vsel %vm1748, %v2476, %v5574
        %v5743 = vsel %vm1748, %v2495, %v5576
        %v5744 = vsel %vm1748, %v2514, %v5578
        %v5745 = vsel %vm1748, %v2533, %v5580
        %v5746 = vsel %vm1748, %v2552, %v5582
        %v5747 = vsel %vm1748, %v2571, %v5584
        %v5748 = vsel %vm1748, %v2590, %v5586
        %v5749 = vsel %vm1748, %v2609, %v5588
        %v5750 = vsel %vm1748, %v2628, %v5590
        %vm5751 = vcmask 523264
        %v5752 = vsel %vm5751, %v5735, %v5624
        %v5753 = vsel %vm5751, %v5736, %v5626
        %v5754 = vsel %vm5751, %v5737, %v5628
        %v5755 = vsel %vm5751, %v5738, %v5630
        %v5756 = vsel %vm5751, %v5739, %v5632
        %v5757 = vsel %vm5751, %v5740, %v5634
        %v5758 = vsel %vm5751, %v5741, %v5636
        %v5759 = vsel %vm5751, %v5742, %v5638
        %v5760 = vsel %vm5751, %v5743, %v5640
        %v5761 = vsel %vm5751, %v5744, %v5642
        %v5762 = vsel %vm5751, %v5745, %v5644
        %v5763 = vsel %vm5751, %v5746, %v5646
        %v5764 = vsel %vm5751, %v5747, %v5648
        %v5765 = vsel %vm5751, %v5748, %v5650
        %v5766 = vsel %vm5751, %v5749, %v5652
        %v5767 = vsel %vm5751, %v5750, %v5654
        %vm5768 = vcmask 785408
        %v5769 = vsel %vm5768, %v5752, %v5688
        %v5770 = vsel %vm5768, %v5753, %v5690
        %v5771 = vsel %vm5768, %v5754, %v5692
        %v5772 = vsel %vm5768, %v5755, %v5694
        %v5773 = vsel %vm5768, %v5756, %v5696
        %v5774 = vsel %vm5768, %v5757, %v5698
        %v5775 = vsel %vm5768, %v5758, %v5700
        %v5776 = vsel %vm5768, %v5759, %v5702
        %v5777 = vsel %vm5768, %v5760, %v5704
        %v5778 = vsel %vm5768, %v5761, %v5706
        %v5779 = vsel %vm5768, %v5762, %v5708
        %v5780 = vsel %vm5768, %v5763, %v5710
        %v5781 = vsel %vm5768, %v5764, %v5712
        %v5782 = vsel %vm5768, %v5765, %v5714
        %v5783 = vsel %vm5768, %v5766, %v5716
        %v5784 = vsel %vm5768, %v5767, %v5718
        %v5785 = vpack.c.bf16 %v5770, %v5769
        %v5786 = vpack.c.bf16 %v5772, %v5771
        %v5787 = vpack.c.bf16 %v5774, %v5773
        %v5788 = vpack.c.bf16 %v5776, %v5775
        %v5789 = vpack.c.bf16 %v5778, %v5777
        %v5790 = vpack.c.bf16 %v5780, %v5779
        %v5791 = vpack.c.bf16 %v5782, %v5781
        %v5792 = vpack.c.bf16 %v5784, %v5783
        %v5793 = vld [vmem:[%s7] sm:$0xf]
        %v5794 = vld [vmem:[%s7 + $0x4] sm:$0xf]
        %v5795 = vld [vmem:[%s7 + $0x8] sm:$0xf]
        %v5796 = vld [vmem:[%s7 + $0xc] sm:$0xf]
        %v5797 = vld [vmem:[%s7 + $0x10] sm:$0xf]
        %v5798 = vld [vmem:[%s7 + $0x14] sm:$0xf]
        %v5799 = vld [vmem:[%s7 + $0x18] sm:$0xf]
        %v5800 = vld [vmem:[%s7 + $0x1c] sm:$0xf]
        %v5801 = vld [vmem:[%s7 + $0x20] sm:$0xf]
        %v5802 = vld [vmem:[%s7 + $0x24] sm:$0xf]
        %v5803 = vld [vmem:[%s7 + $0x28] sm:$0xf]
        %v5804 = vld [vmem:[%s7 + $0x2c] sm:$0xf]
        %v5805 = vld [vmem:[%s7 + $0x30] sm:$0xf]
        %v5806 = vld [vmem:[%s7 + $0x34] sm:$0xf]
        %v5807 = vld [vmem:[%s7 + $0x38] sm:$0xf]
        %v5808 = vld [vmem:[%s7 + $0x3c] sm:$0xf]
        %v5809 = vld [vmem:[%s8] sm:$0x1]
        %v5811 = vperm.slane %v5809, 0
        %v5829 = vunpack.c.l.b16 %v5793
        %v5830 = vunpack.c.l.b16 %v5794
        %v5831 = vunpack.c.l.b16 %v5795
        %v5832 = vunpack.c.l.b16 %v5796
        %v5833 = vunpack.c.l.b16 %v5797
        %v5834 = vunpack.c.l.b16 %v5798
        %v5835 = vunpack.c.l.b16 %v5799
        %v5836 = vunpack.c.l.b16 %v5800
        %v5837 = vunpack.c.l.b16 %v5801
        %v5838 = vunpack.c.l.b16 %v5802
        %v5839 = vunpack.c.l.b16 %v5803
        %v5840 = vunpack.c.l.b16 %v5804
        %v5841 = vunpack.c.l.b16 %v5805
        %v5842 = vunpack.c.l.b16 %v5806
        %v5843 = vunpack.c.l.b16 %v5807
        %v5844 = vunpack.c.l.b16 %v5808
        %v5845 = vpack.c.b16 %v5830, %v5829
        %v5846 = vpack.c.b16 %v5832, %v5831
        %v5847 = vpack.c.b16 %v5834, %v5833
        %v5848 = vpack.c.b16 %v5836, %v5835
        %v5849 = vpack.c.b16 %v5838, %v5837
        %v5850 = vpack.c.b16 %v5840, %v5839
        %v5851 = vpack.c.b16 %v5842, %v5841
        %v5852 = vpack.c.b16 %v5844, %v5843
        %5861 = vmatpush.bf16.msra.mxu0 %v5852
        %5862 = vmatpush.bf16.msra.mxu0 %v5851
        %5863 = vmatpush.bf16.msra.mxu0 %v5850
        %5864 = vmatpush.bf16.msra.mxu0 %v5849
        %5865 = vmatpush.bf16.msra.mxu0 %v5848
        %5866 = vmatpush.bf16.msra.mxu0 %v5847
        %5867 = vmatpush.bf16.msra.mxu0 %v5846
        %5868 = vmatpush.bf16.msra.mxu0 %v5845
        %5869 = vmatmul.bf16.gmra.mxu0 %v5785
        %v5870 = vpop.f32.mrf.mxu0
        %v5871 = vadd.f32 %v5811, %v5870
        %v5872 = vpop.f32.mrf.mxu0
        %v5873 = vadd.f32 %v5811, %v5872
        %5874 = vmatmul.bf16.gmra.mxu0 %v5786
        %v5875 = vpop.f32.mrf.mxu0
        %v5876 = vadd.f32 %v5811, %v5875
        %v5877 = vpop.f32.mrf.mxu0
        %v5878 = vadd.f32 %v5811, %v5877
        %5879 = vmatmul.bf16.gmra.mxu0 %v5787
        %v5880 = vpop.f32.mrf.mxu0
        %v5881 = vadd.f32 %v5811, %v5880
        %v5882 = vpop.f32.mrf.mxu0
        %v5883 = vadd.f32 %v5811, %v5882
        %5884 = vmatmul.bf16.gmra.mxu0 %v5788
        %v5885 = vpop.f32.mrf.mxu0
        %v5886 = vadd.f32 %v5811, %v5885
        %v5887 = vpop.f32.mrf.mxu0
        %v5888 = vadd.f32 %v5811, %v5887
        %5889 = vmatmul.bf16.gmra.mxu0 %v5789
        %v5890 = vpop.f32.mrf.mxu0
        %v5891 = vadd.f32 %v5811, %v5890
        %v5892 = vpop.f32.mrf.mxu0
        %v5893 = vadd.f32 %v5811, %v5892
        %5894 = vmatmul.bf16.gmra.mxu0 %v5790
        %v5895 = vpop.f32.mrf.mxu0
        %v5896 = vadd.f32 %v5811, %v5895
        %v5897 = vpop.f32.mrf.mxu0
        %v5898 = vadd.f32 %v5811, %v5897
        %5899 = vmatmul.bf16.gmra.mxu0 %v5791
        %v5900 = vpop.f32.mrf.mxu0
        %v5901 = vadd.f32 %v5811, %v5900
        %v5902 = vpop.f32.mrf.mxu0
        %v5903 = vadd.f32 %v5811, %v5902
        %5904 = vmatmul.bf16.gmra.mxu0 %v5792
        %v5905 = vpop.f32.mrf.mxu0
        %v5906 = vadd.f32 %v5811, %v5905
        %v5907 = vpop.f32.mrf.mxu0
        %v5908 = vadd.f32 %v5811, %v5907
        %5909 = vdwg.mxu0
        %v5910 = vadd.f32 %v1295, %v5871
        %v5911 = vadd.f32 %v1296, %v5873
        %v5912 = vadd.f32 %v1297, %v5876
        %v5913 = vadd.f32 %v1298, %v5878
        %v5914 = vadd.f32 %v1299, %v5881
        %v5915 = vadd.f32 %v1300, %v5883
        %v5916 = vadd.f32 %v1301, %v5886
        %v5917 = vadd.f32 %v1302, %v5888
        %v5918 = vadd.f32 %v1303, %v5891
        %v5919 = vadd.f32 %v1304, %v5893
        %v5920 = vadd.f32 %v1305, %v5896
        %v5921 = vadd.f32 %v1306, %v5898
        %v5922 = vadd.f32 %v1307, %v5901
        %v5923 = vadd.f32 %v1308, %v5903
        %v5924 = vadd.f32 %v1309, %v5906
        %v5925 = vadd.f32 %v1310, %v5908
        %v5926 = vld [vmem:[%s9] sm:$0x1]
        %v5927 = vld [vmem:[%s10] sm:$0x1]
        %5928 = vadd.xlane.f32.xlu0 %v5910
        %v5929 = vpop.xlane.xlu0 %5928
        %5930 = vadd.xlane.f32.xlu0 %v5911
        %v5931 = vpop.xlane.xlu0 %5930
        %5932 = vadd.xlane.f32.xlu0 %v5912
        %v5933 = vpop.xlane.xlu0 %5932
        %5934 = vadd.xlane.f32.xlu0 %v5913
        %v5935 = vpop.xlane.xlu0 %5934
        %5936 = vadd.xlane.f32.xlu0 %v5914
        %v5937 = vpop.xlane.xlu0 %5936
        %5938 = vadd.xlane.f32.xlu0 %v5915
        %v5939 = vpop.xlane.xlu0 %5938
        %5940 = vadd.xlane.f32.xlu0 %v5916
        %v5941 = vpop.xlane.xlu0 %5940
        %5942 = vadd.xlane.f32.xlu0 %v5917
        %v5943 = vpop.xlane.xlu0 %5942
        %5944 = vadd.xlane.f32.xlu0 %v5918
        %v5945 = vpop.xlane.xlu0 %5944
        %5946 = vadd.xlane.f32.xlu0 %v5919
        %v5947 = vpop.xlane.xlu0 %5946
        %5948 = vadd.xlane.f32.xlu0 %v5920
        %v5949 = vpop.xlane.xlu0 %5948
        %5950 = vadd.xlane.f32.xlu0 %v5921
        %v5951 = vpop.xlane.xlu0 %5950
        %5952 = vadd.xlane.f32.xlu0 %v5922
        %v5953 = vpop.xlane.xlu0 %5952
        %5954 = vadd.xlane.f32.xlu0 %v5923
        %v5955 = vpop.xlane.xlu0 %5954
        %5956 = vadd.xlane.f32.xlu0 %v5924
        %v5957 = vpop.xlane.xlu0 %5956
        %5958 = vadd.xlane.f32.xlu0 %v5925
        %v5959 = vpop.xlane.xlu0 %5958
        %v5960 = vmul.f32 %v5929, %v984
        %v5961 = vmul.f32 %v5931, %v984
        %v5962 = vmul.f32 %v5933, %v984
        %v5963 = vmul.f32 %v5935, %v984
        %v5964 = vmul.f32 %v5937, %v984
        %v5965 = vmul.f32 %v5939, %v984
        %v5966 = vmul.f32 %v5941, %v984
        %v5967 = vmul.f32 %v5943, %v984
        %v5968 = vmul.f32 %v5945, %v984
        %v5969 = vmul.f32 %v5947, %v984
        %v5970 = vmul.f32 %v5949, %v984
        %v5971 = vmul.f32 %v5951, %v984
        %v5972 = vmul.f32 %v5953, %v984
        %v5973 = vmul.f32 %v5955, %v984
        %v5974 = vmul.f32 %v5957, %v984
        %v5975 = vmul.f32 %v5959, %v984
        %v5976 = vsub.f32 %v5910, %v5960
        %v5977 = vsub.f32 %v5911, %v5961
        %v5978 = vsub.f32 %v5912, %v5962
        %v5979 = vsub.f32 %v5913, %v5963
        %v5980 = vsub.f32 %v5914, %v5964
        %v5981 = vsub.f32 %v5915, %v5965
        %v5982 = vsub.f32 %v5916, %v5966
        %v5983 = vsub.f32 %v5917, %v5967
        %v5984 = vsub.f32 %v5918, %v5968
        %v5985 = vsub.f32 %v5919, %v5969
        %v5986 = vsub.f32 %v5920, %v5970
        %v5987 = vsub.f32 %v5921, %v5971
        %v5988 = vsub.f32 %v5922, %v5972
        %v5989 = vsub.f32 %v5923, %v5973
        %v5990 = vsub.f32 %v5924, %v5974
        %v5991 = vsub.f32 %v5925, %v5975
        %v5992 = vmul.f32 %v5976, %v5976
        %v5993 = vmul.f32 %v5977, %v5977
        %v5994 = vmul.f32 %v5978, %v5978
        %v5995 = vmul.f32 %v5979, %v5979
        %v5996 = vmul.f32 %v5980, %v5980
        %v5997 = vmul.f32 %v5981, %v5981
        %v5998 = vmul.f32 %v5982, %v5982
        %v5999 = vmul.f32 %v5983, %v5983
        %v6000 = vmul.f32 %v5984, %v5984
        %v6001 = vmul.f32 %v5985, %v5985
        %v6002 = vmul.f32 %v5986, %v5986
        %v6003 = vmul.f32 %v5987, %v5987
        %v6004 = vmul.f32 %v5988, %v5988
        %v6005 = vmul.f32 %v5989, %v5989
        %v6006 = vmul.f32 %v5990, %v5990
        %v6007 = vmul.f32 %v5991, %v5991
        %6008 = vadd.xlane.f32.xlu0 %v5992
        %v6009 = vpop.xlane.xlu0 %6008
        %6010 = vadd.xlane.f32.xlu0 %v5993
        %v6011 = vpop.xlane.xlu0 %6010
        %6012 = vadd.xlane.f32.xlu0 %v5994
        %v6013 = vpop.xlane.xlu0 %6012
        %6014 = vadd.xlane.f32.xlu0 %v5995
        %v6015 = vpop.xlane.xlu0 %6014
        %6016 = vadd.xlane.f32.xlu0 %v5996
        %v6017 = vpop.xlane.xlu0 %6016
        %6018 = vadd.xlane.f32.xlu0 %v5997
        %v6019 = vpop.xlane.xlu0 %6018
        %6020 = vadd.xlane.f32.xlu0 %v5998
        %v6021 = vpop.xlane.xlu0 %6020
        %6022 = vadd.xlane.f32.xlu0 %v5999
        %v6023 = vpop.xlane.xlu0 %6022
        %6024 = vadd.xlane.f32.xlu0 %v6000
        %v6025 = vpop.xlane.xlu0 %6024
        %6026 = vadd.xlane.f32.xlu0 %v6001
        %v6027 = vpop.xlane.xlu0 %6026
        %6028 = vadd.xlane.f32.xlu0 %v6002
        %v6029 = vpop.xlane.xlu0 %6028
        %6030 = vadd.xlane.f32.xlu0 %v6003
        %v6031 = vpop.xlane.xlu0 %6030
        %6032 = vadd.xlane.f32.xlu0 %v6004
        %v6033 = vpop.xlane.xlu0 %6032
        %6034 = vadd.xlane.f32.xlu0 %v6005
        %v6035 = vpop.xlane.xlu0 %6034
        %6036 = vadd.xlane.f32.xlu0 %v6006
        %v6037 = vpop.xlane.xlu0 %6036
        %6038 = vadd.xlane.f32.xlu0 %v6007
        %v6039 = vpop.xlane.xlu0 %6038
        %v6040 = vmul.f32 %v6009, %v984
        %v6041 = vmul.f32 %v6011, %v984
        %v6042 = vmul.f32 %v6013, %v984
        %v6043 = vmul.f32 %v6015, %v984
        %v6044 = vmul.f32 %v6017, %v984
        %v6045 = vmul.f32 %v6019, %v984
        %v6046 = vmul.f32 %v6021, %v984
        %v6047 = vmul.f32 %v6023, %v984
        %v6048 = vmul.f32 %v6025, %v984
        %v6049 = vmul.f32 %v6027, %v984
        %v6050 = vmul.f32 %v6029, %v984
        %v6051 = vmul.f32 %v6031, %v984
        %v6052 = vmul.f32 %v6033, %v984
        %v6053 = vmul.f32 %v6035, %v984
        %v6054 = vmul.f32 %v6037, %v984
        %v6055 = vmul.f32 %v6039, %v984
        %v6056 = vadd.f32 %v6040, 1e-05
        %v6057 = vadd.f32 %v6041, 1e-05
        %v6058 = vadd.f32 %v6042, 1e-05
        %v6059 = vadd.f32 %v6043, 1e-05
        %v6060 = vadd.f32 %v6044, 1e-05
        %v6061 = vadd.f32 %v6045, 1e-05
        %v6062 = vadd.f32 %v6046, 1e-05
        %v6063 = vadd.f32 %v6047, 1e-05
        %v6064 = vadd.f32 %v6048, 1e-05
        %v6065 = vadd.f32 %v6049, 1e-05
        %v6066 = vadd.f32 %v6050, 1e-05
        %v6067 = vadd.f32 %v6051, 1e-05
        %v6068 = vadd.f32 %v6052, 1e-05
        %v6069 = vadd.f32 %v6053, 1e-05
        %v6070 = vadd.f32 %v6054, 1e-05
        %v6071 = vadd.f32 %v6055, 1e-05
        %v6072 = vrsqrt.pop %v6056
        %v6073 = vmul.f32 %v6072, %v6056
        %v6074 = vmul.f32 %v6073, %v6072
        %v6075 = vmul.f32 0.5, %v6074
        %v6076 = vsub.f32 1.5, %v6075
        %v6077 = vmul.f32 %v6072, %v6076
        %vm6078 = vweird.f32 %v6056
        %vm6079 = vweird.f32 %v6072
        %vm6080 = vmor %vm6078, %vm6079
        %v6081 = vsel %vm6080, %v6072, %v6077
        %v6082 = vrsqrt.pop %v6057
        %v6083 = vmul.f32 %v6082, %v6057
        %v6084 = vmul.f32 %v6083, %v6082
        %v6085 = vmul.f32 0.5, %v6084
        %v6086 = vsub.f32 1.5, %v6085
        %v6087 = vmul.f32 %v6082, %v6086
        %vm6088 = vweird.f32 %v6057
        %vm6089 = vweird.f32 %v6082
        %vm6090 = vmor %vm6088, %vm6089
        %v6091 = vsel %vm6090, %v6082, %v6087
        %v6092 = vrsqrt.pop %v6058
        %v6093 = vmul.f32 %v6092, %v6058
        %v6094 = vmul.f32 %v6093, %v6092
        %v6095 = vmul.f32 0.5, %v6094
        %v6096 = vsub.f32 1.5, %v6095
        %v6097 = vmul.f32 %v6092, %v6096
        %vm6098 = vweird.f32 %v6058
        %vm6099 = vweird.f32 %v6092
        %vm6100 = vmor %vm6098, %vm6099
        %v6101 = vsel %vm6100, %v6092, %v6097
        %v6102 = vrsqrt.pop %v6059
        %v6103 = vmul.f32 %v6102, %v6059
        %v6104 = vmul.f32 %v6103, %v6102
        %v6105 = vmul.f32 0.5, %v6104
        %v6106 = vsub.f32 1.5, %v6105
        %v6107 = vmul.f32 %v6102, %v6106
        %vm6108 = vweird.f32 %v6059
        %vm6109 = vweird.f32 %v6102
        %vm6110 = vmor %vm6108, %vm6109
        %v6111 = vsel %vm6110, %v6102, %v6107
        %v6112 = vrsqrt.pop %v6060
        %v6113 = vmul.f32 %v6112, %v6060
        %v6114 = vmul.f32 %v6113, %v6112
        %v6115 = vmul.f32 0.5, %v6114
        %v6116 = vsub.f32 1.5, %v6115
        %v6117 = vmul.f32 %v6112, %v6116
        %vm6118 = vweird.f32 %v6060
        %vm6119 = vweird.f32 %v6112
        %vm6120 = vmor %vm6118, %vm6119
        %v6121 = vsel %vm6120, %v6112, %v6117
        %v6122 = vrsqrt.pop %v6061
        %v6123 = vmul.f32 %v6122, %v6061
        %v6124 = vmul.f32 %v6123, %v6122
        %v6125 = vmul.f32 0.5, %v6124
        %v6126 = vsub.f32 1.5, %v6125
        %v6127 = vmul.f32 %v6122, %v6126
        %vm6128 = vweird.f32 %v6061
        %vm6129 = vweird.f32 %v6122
        %vm6130 = vmor %vm6128, %vm6129
        %v6131 = vsel %vm6130, %v6122, %v6127
        %v6132 = vrsqrt.pop %v6062
        %v6133 = vmul.f32 %v6132, %v6062
        %v6134 = vmul.f32 %v6133, %v6132
        %v6135 = vmul.f32 0.5, %v6134
        %v6136 = vsub.f32 1.5, %v6135
        %v6137 = vmul.f32 %v6132, %v6136
        %vm6138 = vweird.f32 %v6062
        %vm6139 = vweird.f32 %v6132
        %vm6140 = vmor %vm6138, %vm6139
        %v6141 = vsel %vm6140, %v6132, %v6137
        %v6142 = vrsqrt.pop %v6063
        %v6143 = vmul.f32 %v6142, %v6063
        %v6144 = vmul.f32 %v6143, %v6142
        %v6145 = vmul.f32 0.5, %v6144
        %v6146 = vsub.f32 1.5, %v6145
        %v6147 = vmul.f32 %v6142, %v6146
        %vm6148 = vweird.f32 %v6063
        %vm6149 = vweird.f32 %v6142
        %vm6150 = vmor %vm6148, %vm6149
        %v6151 = vsel %vm6150, %v6142, %v6147
        %v6152 = vrsqrt.pop %v6064
        %v6153 = vmul.f32 %v6152, %v6064
        %v6154 = vmul.f32 %v6153, %v6152
        %v6155 = vmul.f32 0.5, %v6154
        %v6156 = vsub.f32 1.5, %v6155
        %v6157 = vmul.f32 %v6152, %v6156
        %vm6158 = vweird.f32 %v6064
        %vm6159 = vweird.f32 %v6152
        %vm6160 = vmor %vm6158, %vm6159
        %v6161 = vsel %vm6160, %v6152, %v6157
        %v6162 = vrsqrt.pop %v6065
        %v6163 = vmul.f32 %v6162, %v6065
        %v6164 = vmul.f32 %v6163, %v6162
        %v6165 = vmul.f32 0.5, %v6164
        %v6166 = vsub.f32 1.5, %v6165
        %v6167 = vmul.f32 %v6162, %v6166
        %vm6168 = vweird.f32 %v6065
        %vm6169 = vweird.f32 %v6162
        %vm6170 = vmor %vm6168, %vm6169
        %v6171 = vsel %vm6170, %v6162, %v6167
        %v6172 = vrsqrt.pop %v6066
        %v6173 = vmul.f32 %v6172, %v6066
        %v6174 = vmul.f32 %v6173, %v6172
        %v6175 = vmul.f32 0.5, %v6174
        %v6176 = vsub.f32 1.5, %v6175
        %v6177 = vmul.f32 %v6172, %v6176
        %vm6178 = vweird.f32 %v6066
        %vm6179 = vweird.f32 %v6172
        %vm6180 = vmor %vm6178, %vm6179
        %v6181 = vsel %vm6180, %v6172, %v6177
        %v6182 = vrsqrt.pop %v6067
        %v6183 = vmul.f32 %v6182, %v6067
        %v6184 = vmul.f32 %v6183, %v6182
        %v6185 = vmul.f32 0.5, %v6184
        %v6186 = vsub.f32 1.5, %v6185
        %v6187 = vmul.f32 %v6182, %v6186
        %vm6188 = vweird.f32 %v6067
        %vm6189 = vweird.f32 %v6182
        %vm6190 = vmor %vm6188, %vm6189
        %v6191 = vsel %vm6190, %v6182, %v6187
        %v6192 = vrsqrt.pop %v6068
        %v6193 = vmul.f32 %v6192, %v6068
        %v6194 = vmul.f32 %v6193, %v6192
        %v6195 = vmul.f32 0.5, %v6194
        %v6196 = vsub.f32 1.5, %v6195
        %v6197 = vmul.f32 %v6192, %v6196
        %vm6198 = vweird.f32 %v6068
        %vm6199 = vweird.f32 %v6192
        %vm6200 = vmor %vm6198, %vm6199
        %v6201 = vsel %vm6200, %v6192, %v6197
        %v6202 = vrsqrt.pop %v6069
        %v6203 = vmul.f32 %v6202, %v6069
        %v6204 = vmul.f32 %v6203, %v6202
        %v6205 = vmul.f32 0.5, %v6204
        %v6206 = vsub.f32 1.5, %v6205
        %v6207 = vmul.f32 %v6202, %v6206
        %vm6208 = vweird.f32 %v6069
        %vm6209 = vweird.f32 %v6202
        %vm6210 = vmor %vm6208, %vm6209
        %v6211 = vsel %vm6210, %v6202, %v6207
        %v6212 = vrsqrt.pop %v6070
        %v6213 = vmul.f32 %v6212, %v6070
        %v6214 = vmul.f32 %v6213, %v6212
        %v6215 = vmul.f32 0.5, %v6214
        %v6216 = vsub.f32 1.5, %v6215
        %v6217 = vmul.f32 %v6212, %v6216
        %vm6218 = vweird.f32 %v6070
        %vm6219 = vweird.f32 %v6212
        %vm6220 = vmor %vm6218, %vm6219
        %v6221 = vsel %vm6220, %v6212, %v6217
        %v6222 = vrsqrt.pop %v6071
        %v6223 = vmul.f32 %v6222, %v6071
        %v6224 = vmul.f32 %v6223, %v6222
        %v6225 = vmul.f32 0.5, %v6224
        %v6226 = vsub.f32 1.5, %v6225
        %v6227 = vmul.f32 %v6222, %v6226
        %vm6228 = vweird.f32 %v6071
        %vm6229 = vweird.f32 %v6222
        %vm6230 = vmor %vm6228, %vm6229
        %v6231 = vsel %vm6230, %v6222, %v6227
        %v6232 = vmul.f32 %v5976, %v6081
        %v6233 = vmul.f32 %v5977, %v6091
        %v6234 = vmul.f32 %v5978, %v6101
        %v6235 = vmul.f32 %v5979, %v6111
        %v6236 = vmul.f32 %v5980, %v6121
        %v6237 = vmul.f32 %v5981, %v6131
        %v6238 = vmul.f32 %v5982, %v6141
        %v6239 = vmul.f32 %v5983, %v6151
        %v6240 = vmul.f32 %v5984, %v6161
        %v6241 = vmul.f32 %v5985, %v6171
        %v6242 = vmul.f32 %v5986, %v6181
        %v6243 = vmul.f32 %v5987, %v6191
        %v6244 = vmul.f32 %v5988, %v6201
        %v6245 = vmul.f32 %v5989, %v6211
        %v6246 = vmul.f32 %v5990, %v6221
        %v6247 = vmul.f32 %v5991, %v6231
        %v6249 = vperm.slane %v5926, 0
        %v6251 = vmul.f32 %v6232, %v6249
        %v6252 = vmul.f32 %v6233, %v6249
        %v6253 = vmul.f32 %v6234, %v6249
        %v6254 = vmul.f32 %v6235, %v6249
        %v6255 = vmul.f32 %v6236, %v6249
        %v6256 = vmul.f32 %v6237, %v6249
        %v6257 = vmul.f32 %v6238, %v6249
        %v6258 = vmul.f32 %v6239, %v6249
        %v6259 = vmul.f32 %v6240, %v6249
        %v6260 = vmul.f32 %v6241, %v6249
        %v6261 = vmul.f32 %v6242, %v6249
        %v6262 = vmul.f32 %v6243, %v6249
        %v6263 = vmul.f32 %v6244, %v6249
        %v6264 = vmul.f32 %v6245, %v6249
        %v6265 = vmul.f32 %v6246, %v6249
        %v6266 = vmul.f32 %v6247, %v6249
        %v6268 = vperm.slane %v5927, 0
        %v6270 = vadd.f32 %v6251, %v6268
        %v6271 = vadd.f32 %v6252, %v6268
        %v6272 = vadd.f32 %v6253, %v6268
        %v6273 = vadd.f32 %v6254, %v6268
        %v6274 = vadd.f32 %v6255, %v6268
        %v6275 = vadd.f32 %v6256, %v6268
        %v6276 = vadd.f32 %v6257, %v6268
        %v6277 = vadd.f32 %v6258, %v6268
        %v6278 = vadd.f32 %v6259, %v6268
        %v6279 = vadd.f32 %v6260, %v6268
        %v6280 = vadd.f32 %v6261, %v6268
        %v6281 = vadd.f32 %v6262, %v6268
        %v6282 = vadd.f32 %v6263, %v6268
        %v6283 = vadd.f32 %v6264, %v6268
        %v6284 = vadd.f32 %v6265, %v6268
        %v6285 = vadd.f32 %v6266, %v6268
        %v6286 = vpack.c.bf16 %v6271, %v6270
        %v6287 = vpack.c.bf16 %v6273, %v6272
        %v6288 = vpack.c.bf16 %v6275, %v6274
        %v6289 = vpack.c.bf16 %v6277, %v6276
        %v6290 = vpack.c.bf16 %v6279, %v6278
        %v6291 = vpack.c.bf16 %v6281, %v6280
        %v6292 = vpack.c.bf16 %v6283, %v6282
        %v6293 = vpack.c.bf16 %v6285, %v6284
        %v6294 = vld [vmem:[#allocation7] sm:$0xff]
        %v6295 = vld [vmem:[#allocation7 + $0x8] sm:$0xff]
        %v6296 = vld [vmem:[#allocation7 + $0x10] sm:$0xff]
        %v6297 = vld [vmem:[#allocation7 + $0x18] sm:$0xff]
        %v6298 = vld [vmem:[#allocation7 + $0x20] sm:$0xff]
        %v6299 = vld [vmem:[#allocation7 + $0x28] sm:$0xff]
        %v6300 = vld [vmem:[#allocation7 + $0x30] sm:$0xff]
        %v6301 = vld [vmem:[#allocation7 + $0x38] sm:$0xff]
        %v6302 = vld [vmem:[#allocation7 + $0x40] sm:$0xff]
        %v6303 = vld [vmem:[#allocation7 + $0x48] sm:$0xff]
        %v6304 = vld [vmem:[#allocation7 + $0x50] sm:$0xff]
        %v6305 = vld [vmem:[#allocation7 + $0x58] sm:$0xff]
        %v6306 = vld [vmem:[#allocation7 + $0x60] sm:$0xff]
        %v6307 = vld [vmem:[#allocation7 + $0x68] sm:$0xff]
        %v6308 = vld [vmem:[#allocation7 + $0x70] sm:$0xff]
        %v6309 = vld [vmem:[#allocation7 + $0x78] sm:$0xff]
        %v6310 = vld [vmem:[%s12] sm:$0x3]
        %v6312 = vperm.slane %v6310, 0
        %v6313 = vperm.slane %v6310, 1
        %v6332 = vunpack.c.l.b16 %v6294
        %v6333 = vunpack.c.h.b16 %v6294
        %v6334 = vunpack.c.l.b16 %v6295
        %v6335 = vunpack.c.h.b16 %v6295
        %v6336 = vunpack.c.l.b16 %v6296
        %v6337 = vunpack.c.h.b16 %v6296
        %v6338 = vunpack.c.l.b16 %v6297
        %v6339 = vunpack.c.h.b16 %v6297
        %v6340 = vunpack.c.l.b16 %v6298
        %v6341 = vunpack.c.h.b16 %v6298
        %v6342 = vunpack.c.l.b16 %v6299
        %v6343 = vunpack.c.h.b16 %v6299
        %v6344 = vunpack.c.l.b16 %v6300
        %v6345 = vunpack.c.h.b16 %v6300
        %v6346 = vunpack.c.l.b16 %v6301
        %v6347 = vunpack.c.h.b16 %v6301
        %v6348 = vunpack.c.l.b16 %v6302
        %v6349 = vunpack.c.h.b16 %v6302
        %v6350 = vunpack.c.l.b16 %v6303
        %v6351 = vunpack.c.h.b16 %v6303
        %v6352 = vunpack.c.l.b16 %v6304
        %v6353 = vunpack.c.h.b16 %v6304
        %v6354 = vunpack.c.l.b16 %v6305
        %v6355 = vunpack.c.h.b16 %v6305
        %v6356 = vunpack.c.l.b16 %v6306
        %v6357 = vunpack.c.h.b16 %v6306
        %v6358 = vunpack.c.l.b16 %v6307
        %v6359 = vunpack.c.h.b16 %v6307
        %v6360 = vunpack.c.l.b16 %v6308
        %v6361 = vunpack.c.h.b16 %v6308
        %v6362 = vunpack.c.l.b16 %v6309
        %v6363 = vunpack.c.h.b16 %v6309
        %v6364 = vpack.c.b16 %v6334, %v6332
        %v6365 = vpack.c.b16 %v6335, %v6333
        %v6366 = vpack.c.b16 %v6338, %v6336
        %v6367 = vpack.c.b16 %v6339, %v6337
        %v6368 = vpack.c.b16 %v6342, %v6340
        %v6369 = vpack.c.b16 %v6343, %v6341
        %v6370 = vpack.c.b16 %v6346, %v6344
        %v6371 = vpack.c.b16 %v6347, %v6345
        %v6372 = vpack.c.b16 %v6350, %v6348
        %v6373 = vpack.c.b16 %v6351, %v6349
        %v6374 = vpack.c.b16 %v6354, %v6352
        %v6375 = vpack.c.b16 %v6355, %v6353
        %v6376 = vpack.c.b16 %v6358, %v6356
        %v6377 = vpack.c.b16 %v6359, %v6357
        %v6378 = vpack.c.b16 %v6362, %v6360
        %v6379 = vpack.c.b16 %v6363, %v6361
        %6396 = vmatpush.bf16.msra.mxu0 %v6378
        %6397 = vmatpush.bf16.msra.mxu0 %v6376
        %6398 = vmatpush.bf16.msra.mxu0 %v6374
        %6399 = vmatpush.bf16.msra.mxu0 %v6372
        %6400 = vmatpush.bf16.msra.mxu0 %v6370
        %6401 = vmatpush.bf16.msra.mxu0 %v6368
        %6402 = vmatpush.bf16.msra.mxu0 %v6366
        %6403 = vmatpush.bf16.msra.mxu0 %v6364
        %6404 = vmatmul.bf16.gmra.mxu0 %v6286
        %v6405 = vpop.f32.mrf.mxu0
        %v6406 = vadd.f32 %v6312, %v6405
        %v6407 = vpop.f32.mrf.mxu0
        %v6408 = vadd.f32 %v6312, %v6407
        %6409 = vmatmul.bf16.gmra.mxu0 %v6287
        %v6410 = vpop.f32.mrf.mxu0
        %v6411 = vadd.f32 %v6312, %v6410
        %v6412 = vpop.f32.mrf.mxu0
        %v6413 = vadd.f32 %v6312, %v6412
        %6414 = vmatmul.bf16.gmra.mxu0 %v6288
        %v6415 = vpop.f32.mrf.mxu0
        %v6416 = vadd.f32 %v6312, %v6415
        %v6417 = vpop.f32.mrf.mxu0
        %v6418 = vadd.f32 %v6312, %v6417
        %6419 = vmatmul.bf16.gmra.mxu0 %v6289
        %v6420 = vpop.f32.mrf.mxu0
        %v6421 = vadd.f32 %v6312, %v6420
        %v6422 = vpop.f32.mrf.mxu0
        %v6423 = vadd.f32 %v6312, %v6422
        %6424 = vmatmul.bf16.gmra.mxu0 %v6290
        %v6425 = vpop.f32.mrf.mxu0
        %v6426 = vadd.f32 %v6312, %v6425
        %v6427 = vpop.f32.mrf.mxu0
        %v6428 = vadd.f32 %v6312, %v6427
        %6429 = vmatmul.bf16.gmra.mxu0 %v6291
        %v6430 = vpop.f32.mrf.mxu0
        %v6431 = vadd.f32 %v6312, %v6430
        %v6432 = vpop.f32.mrf.mxu0
        %v6433 = vadd.f32 %v6312, %v6432
        %6434 = vmatmul.bf16.gmra.mxu0 %v6292
        %v6435 = vpop.f32.mrf.mxu0
        %v6436 = vadd.f32 %v6312, %v6435
        %v6437 = vpop.f32.mrf.mxu0
        %v6438 = vadd.f32 %v6312, %v6437
        %6439 = vmatmul.bf16.gmra.mxu0 %v6293
        %v6440 = vpop.f32.mrf.mxu0
        %v6441 = vadd.f32 %v6312, %v6440
        %v6442 = vpop.f32.mrf.mxu0
        %v6443 = vadd.f32 %v6312, %v6442
        %6444 = vdwg.mxu0
        %6445 = vmatpush.bf16.msra.mxu0 %v6379
        %6446 = vmatpush.bf16.msra.mxu0 %v6377
        %6447 = vmatpush.bf16.msra.mxu0 %v6375
        %6448 = vmatpush.bf16.msra.mxu0 %v6373
        %6449 = vmatpush.bf16.msra.mxu0 %v6371
        %6450 = vmatpush.bf16.msra.mxu0 %v6369
        %6451 = vmatpush.bf16.msra.mxu0 %v6367
        %6452 = vmatpush.bf16.msra.mxu0 %v6365
        %6453 = vmatmul.bf16.gmra.mxu0 %v6286
        %v6454 = vpop.f32.mrf.mxu0
        %v6455 = vadd.f32 %v6313, %v6454
        %v6456 = vpop.f32.mrf.mxu0
        %v6457 = vadd.f32 %v6313, %v6456
        %6458 = vmatmul.bf16.gmra.mxu0 %v6287
        %v6459 = vpop.f32.mrf.mxu0
        %v6460 = vadd.f32 %v6313, %v6459
        %v6461 = vpop.f32.mrf.mxu0
        %v6462 = vadd.f32 %v6313, %v6461
        %6463 = vmatmul.bf16.gmra.mxu0 %v6288
        %v6464 = vpop.f32.mrf.mxu0
        %v6465 = vadd.f32 %v6313, %v6464
        %v6466 = vpop.f32.mrf.mxu0
        %v6467 = vadd.f32 %v6313, %v6466
        %6468 = vmatmul.bf16.gmra.mxu0 %v6289
        %v6469 = vpop.f32.mrf.mxu0
        %v6470 = vadd.f32 %v6313, %v6469
        %v6471 = vpop.f32.mrf.mxu0
        %v6472 = vadd.f32 %v6313, %v6471
        %6473 = vmatmul.bf16.gmra.mxu0 %v6290
        %v6474 = vpop.f32.mrf.mxu0
        %v6475 = vadd.f32 %v6313, %v6474
        %v6476 = vpop.f32.mrf.mxu0
        %v6477 = vadd.f32 %v6313, %v6476
        %6478 = vmatmul.bf16.gmra.mxu0 %v6291
        %v6479 = vpop.f32.mrf.mxu0
        %v6480 = vadd.f32 %v6313, %v6479
        %v6481 = vpop.f32.mrf.mxu0
        %v6482 = vadd.f32 %v6313, %v6481
        %6483 = vmatmul.bf16.gmra.mxu0 %v6292
        %v6484 = vpop.f32.mrf.mxu0
        %v6485 = vadd.f32 %v6313, %v6484
        %v6486 = vpop.f32.mrf.mxu0
        %v6487 = vadd.f32 %v6313, %v6486
        %6488 = vmatmul.bf16.gmra.mxu0 %v6293
        %v6489 = vpop.f32.mrf.mxu0
        %v6490 = vadd.f32 %v6313, %v6489
        %v6491 = vpop.f32.mrf.mxu0
        %v6492 = vadd.f32 %v6313, %v6491
        %6493 = vdwg.mxu0
        %v6494 = vmul.f32 %v6406, 0.5
        %v6495 = vmul.f32 %v6455, 0.5
        %v6496 = vmul.f32 %v6408, 0.5
        %v6497 = vmul.f32 %v6457, 0.5
        %v6498 = vmul.f32 %v6411, 0.5
        %v6499 = vmul.f32 %v6460, 0.5
        %v6500 = vmul.f32 %v6413, 0.5
        %v6501 = vmul.f32 %v6462, 0.5
        %v6502 = vmul.f32 %v6416, 0.5
        %v6503 = vmul.f32 %v6465, 0.5
        %v6504 = vmul.f32 %v6418, 0.5
        %v6505 = vmul.f32 %v6467, 0.5
        %v6506 = vmul.f32 %v6421, 0.5
        %v6507 = vmul.f32 %v6470, 0.5
        %v6508 = vmul.f32 %v6423, 0.5
        %v6509 = vmul.f32 %v6472, 0.5
        %v6510 = vmul.f32 %v6426, 0.5
        %v6511 = vmul.f32 %v6475, 0.5
        %v6512 = vmul.f32 %v6428, 0.5
        %v6513 = vmul.f32 %v6477, 0.5
        %v6514 = vmul.f32 %v6431, 0.5
        %v6515 = vmul.f32 %v6480, 0.5
        %v6516 = vmul.f32 %v6433, 0.5
        %v6517 = vmul.f32 %v6482, 0.5
        %v6518 = vmul.f32 %v6436, 0.5
        %v6519 = vmul.f32 %v6485, 0.5
        %v6520 = vmul.f32 %v6438, 0.5
        %v6521 = vmul.f32 %v6487, 0.5
        %v6522 = vmul.f32 %v6441, 0.5
        %v6523 = vmul.f32 %v6490, 0.5
        %v6524 = vmul.f32 %v6443, 0.5
        %v6525 = vmul.f32 %v6492, 0.5
        %v6526 = vmul.f32 %v6406, 0.044715
        %v6527 = vmul.f32 %v6455, 0.044715
        %v6528 = vmul.f32 %v6408, 0.044715
        %v6529 = vmul.f32 %v6457, 0.044715
        %v6530 = vmul.f32 %v6411, 0.044715
        %v6531 = vmul.f32 %v6460, 0.044715
        %v6532 = vmul.f32 %v6413, 0.044715
        %v6533 = vmul.f32 %v6462, 0.044715
        %v6534 = vmul.f32 %v6416, 0.044715
        %v6535 = vmul.f32 %v6465, 0.044715
        %v6536 = vmul.f32 %v6418, 0.044715
        %v6537 = vmul.f32 %v6467, 0.044715
        %v6538 = vmul.f32 %v6421, 0.044715
        %v6539 = vmul.f32 %v6470, 0.044715
        %v6540 = vmul.f32 %v6423, 0.044715
        %v6541 = vmul.f32 %v6472, 0.044715
        %v6542 = vmul.f32 %v6426, 0.044715
        %v6543 = vmul.f32 %v6475, 0.044715
        %v6544 = vmul.f32 %v6428, 0.044715
        %v6545 = vmul.f32 %v6477, 0.044715
        %v6546 = vmul.f32 %v6431, 0.044715
        %v6547 = vmul.f32 %v6480, 0.044715
        %v6548 = vmul.f32 %v6433, 0.044715
        %v6549 = vmul.f32 %v6482, 0.044715
        %v6550 = vmul.f32 %v6436, 0.044715
        %v6551 = vmul.f32 %v6485, 0.044715
        %v6552 = vmul.f32 %v6438, 0.044715
        %v6553 = vmul.f32 %v6487, 0.044715
        %v6554 = vmul.f32 %v6441, 0.044715
        %v6555 = vmul.f32 %v6490, 0.044715
        %v6556 = vmul.f32 %v6443, 0.044715
        %v6557 = vmul.f32 %v6492, 0.044715
        %v6558 = vmul.f32 %v6526, %v6406
        %v6559 = vmul.f32 %v6527, %v6455
        %v6560 = vmul.f32 %v6528, %v6408
        %v6561 = vmul.f32 %v6529, %v6457
        %v6562 = vmul.f32 %v6530, %v6411
        %v6563 = vmul.f32 %v6531, %v6460
        %v6564 = vmul.f32 %v6532, %v6413
        %v6565 = vmul.f32 %v6533, %v6462
        %v6566 = vmul.f32 %v6534, %v6416
        %v6567 = vmul.f32 %v6535, %v6465
        %v6568 = vmul.f32 %v6536, %v6418
        %v6569 = vmul.f32 %v6537, %v6467
        %v6570 = vmul.f32 %v6538, %v6421
        %v6571 = vmul.f32 %v6539, %v6470
        %v6572 = vmul.f32 %v6540, %v6423
        %v6573 = vmul.f32 %v6541, %v6472
        %v6574 = vmul.f32 %v6542, %v6426
        %v6575 = vmul.f32 %v6543, %v6475
        %v6576 = vmul.f32 %v6544, %v6428
        %v6577 = vmul.f32 %v6545, %v6477
        %v6578 = vmul.f32 %v6546, %v6431
        %v6579 = vmul.f32 %v6547, %v6480
        %v6580 = vmul.f32 %v6548, %v6433
        %v6581 = vmul.f32 %v6549, %v6482
        %v6582 = vmul.f32 %v6550, %v6436
        %v6583 = vmul.f32 %v6551, %v6485
        %v6584 = vmul.f32 %v6552, %v6438
        %v6585 = vmul.f32 %v6553, %v6487
        %v6586 = vmul.f32 %v6554, %v6441
        %v6587 = vmul.f32 %v6555, %v6490
        %v6588 = vmul.f32 %v6556, %v6443
        %v6589 = vmul.f32 %v6557, %v6492
        %v6590 = vmul.f32 %v6558, %v6406
        %v6591 = vmul.f32 %v6559, %v6455
        %v6592 = vmul.f32 %v6560, %v6408
        %v6593 = vmul.f32 %v6561, %v6457
        %v6594 = vmul.f32 %v6562, %v6411
        %v6595 = vmul.f32 %v6563, %v6460
        %v6596 = vmul.f32 %v6564, %v6413
        %v6597 = vmul.f32 %v6565, %v6462
        %v6598 = vmul.f32 %v6566, %v6416
        %v6599 = vmul.f32 %v6567, %v6465
        %v6600 = vmul.f32 %v6568, %v6418
        %v6601 = vmul.f32 %v6569, %v6467
        %v6602 = vmul.f32 %v6570, %v6421
        %v6603 = vmul.f32 %v6571, %v6470
        %v6604 = vmul.f32 %v6572, %v6423
        %v6605 = vmul.f32 %v6573, %v6472
        %v6606 = vmul.f32 %v6574, %v6426
        %v6607 = vmul.f32 %v6575, %v6475
        %v6608 = vmul.f32 %v6576, %v6428
        %v6609 = vmul.f32 %v6577, %v6477
        %v6610 = vmul.f32 %v6578, %v6431
        %v6611 = vmul.f32 %v6579, %v6480
        %v6612 = vmul.f32 %v6580, %v6433
        %v6613 = vmul.f32 %v6581, %v6482
        %v6614 = vmul.f32 %v6582, %v6436
        %v6615 = vmul.f32 %v6583, %v6485
        %v6616 = vmul.f32 %v6584, %v6438
        %v6617 = vmul.f32 %v6585, %v6487
        %v6618 = vmul.f32 %v6586, %v6441
        %v6619 = vmul.f32 %v6587, %v6490
        %v6620 = vmul.f32 %v6588, %v6443
        %v6621 = vmul.f32 %v6589, %v6492
        %v6622 = vadd.f32 %v6406, %v6590
        %v6623 = vadd.f32 %v6455, %v6591
        %v6624 = vadd.f32 %v6408, %v6592
        %v6625 = vadd.f32 %v6457, %v6593
        %v6626 = vadd.f32 %v6411, %v6594
        %v6627 = vadd.f32 %v6460, %v6595
        %v6628 = vadd.f32 %v6413, %v6596
        %v6629 = vadd.f32 %v6462, %v6597
        %v6630 = vadd.f32 %v6416, %v6598
        %v6631 = vadd.f32 %v6465, %v6599
        %v6632 = vadd.f32 %v6418, %v6600
        %v6633 = vadd.f32 %v6467, %v6601
        %v6634 = vadd.f32 %v6421, %v6602
        %v6635 = vadd.f32 %v6470, %v6603
        %v6636 = vadd.f32 %v6423, %v6604
        %v6637 = vadd.f32 %v6472, %v6605
        %v6638 = vadd.f32 %v6426, %v6606
        %v6639 = vadd.f32 %v6475, %v6607
        %v6640 = vadd.f32 %v6428, %v6608
        %v6641 = vadd.f32 %v6477, %v6609
        %v6642 = vadd.f32 %v6431, %v6610
        %v6643 = vadd.f32 %v6480, %v6611
        %v6644 = vadd.f32 %v6433, %v6612
        %v6645 = vadd.f32 %v6482, %v6613
        %v6646 = vadd.f32 %v6436, %v6614
        %v6647 = vadd.f32 %v6485, %v6615
        %v6648 = vadd.f32 %v6438, %v6616
        %v6649 = vadd.f32 %v6487, %v6617
        %v6650 = vadd.f32 %v6441, %v6618
        %v6651 = vadd.f32 %v6490, %v6619
        %v6652 = vadd.f32 %v6443, %v6620
        %v6653 = vadd.f32 %v6492, %v6621
        %v6654 = vmul.f32 %v6622, 0.7978846
        %v6655 = vmul.f32 %v6623, 0.7978846
        %v6656 = vmul.f32 %v6624, 0.7978846
        %v6657 = vmul.f32 %v6625, 0.7978846
        %v6658 = vmul.f32 %v6626, 0.7978846
        %v6659 = vmul.f32 %v6627, 0.7978846
        %v6660 = vmul.f32 %v6628, 0.7978846
        %v6661 = vmul.f32 %v6629, 0.7978846
        %v6662 = vmul.f32 %v6630, 0.7978846
        %v6663 = vmul.f32 %v6631, 0.7978846
        %v6664 = vmul.f32 %v6632, 0.7978846
        %v6665 = vmul.f32 %v6633, 0.7978846
        %v6666 = vmul.f32 %v6634, 0.7978846
        %v6667 = vmul.f32 %v6635, 0.7978846
        %v6668 = vmul.f32 %v6636, 0.7978846
        %v6669 = vmul.f32 %v6637, 0.7978846
        %v6670 = vmul.f32 %v6638, 0.7978846
        %v6671 = vmul.f32 %v6639, 0.7978846
        %v6672 = vmul.f32 %v6640, 0.7978846
        %v6673 = vmul.f32 %v6641, 0.7978846
        %v6674 = vmul.f32 %v6642, 0.7978846
        %v6675 = vmul.f32 %v6643, 0.7978846
        %v6676 = vmul.f32 %v6644, 0.7978846
        %v6677 = vmul.f32 %v6645, 0.7978846
        %v6678 = vmul.f32 %v6646, 0.7978846
        %v6679 = vmul.f32 %v6647, 0.7978846
        %v6680 = vmul.f32 %v6648, 0.7978846
        %v6681 = vmul.f32 %v6649, 0.7978846
        %v6682 = vmul.f32 %v6650, 0.7978846
        %v6683 = vmul.f32 %v6651, 0.7978846
        %v6684 = vmul.f32 %v6652, 0.7978846
        %v6685 = vmul.f32 %v6653, 0.7978846
        %v6686 = vtanh.pop %v6654
        %v6687 = vtanh.pop %v6655
        %v6688 = vtanh.pop %v6656
        %v6689 = vtanh.pop %v6657
        %v6690 = vtanh.pop %v6658
        %v6691 = vtanh.pop %v6659
        %v6692 = vtanh.pop %v6660
        %v6693 = vtanh.pop %v6661
        %v6694 = vtanh.pop %v6662
        %v6695 = vtanh.pop %v6663
        %v6696 = vtanh.pop %v6664
        %v6697 = vtanh.pop %v6665
        %v6698 = vtanh.pop %v6666
        %v6699 = vtanh.pop %v6667
        %v6700 = vtanh.pop %v6668
        %v6701 = vtanh.pop %v6669
        %v6702 = vtanh.pop %v6670
        %v6703 = vtanh.pop %v6671
        %v6704 = vtanh.pop %v6672
        %v6705 = vtanh.pop %v6673
        %v6706 = vtanh.pop %v6674
        %v6707 = vtanh.pop %v6675
        %v6708 = vtanh.pop %v6676
        %v6709 = vtanh.pop %v6677
        %v6710 = vtanh.pop %v6678
        %v6711 = vtanh.pop %v6679
        %v6712 = vtanh.pop %v6680
        %v6713 = vtanh.pop %v6681
        %v6714 = vtanh.pop %v6682
        %v6715 = vtanh.pop %v6683
        %v6716 = vtanh.pop %v6684
        %v6717 = vtanh.pop %v6685
        %v6718 = vadd.f32 %v6686, 1.0
        %v6719 = vadd.f32 %v6687, 1.0
        %v6720 = vadd.f32 %v6688, 1.0
        %v6721 = vadd.f32 %v6689, 1.0
        %v6722 = vadd.f32 %v6690, 1.0
        %v6723 = vadd.f32 %v6691, 1.0
        %v6724 = vadd.f32 %v6692, 1.0
        %v6725 = vadd.f32 %v6693, 1.0
        %v6726 = vadd.f32 %v6694, 1.0
        %v6727 = vadd.f32 %v6695, 1.0
        %v6728 = vadd.f32 %v6696, 1.0
        %v6729 = vadd.f32 %v6697, 1.0
        %v6730 = vadd.f32 %v6698, 1.0
        %v6731 = vadd.f32 %v6699, 1.0
        %v6732 = vadd.f32 %v6700, 1.0
        %v6733 = vadd.f32 %v6701, 1.0
        %v6734 = vadd.f32 %v6702, 1.0
        %v6735 = vadd.f32 %v6703, 1.0
        %v6736 = vadd.f32 %v6704, 1.0
        %v6737 = vadd.f32 %v6705, 1.0
        %v6738 = vadd.f32 %v6706, 1.0
        %v6739 = vadd.f32 %v6707, 1.0
        %v6740 = vadd.f32 %v6708, 1.0
        %v6741 = vadd.f32 %v6709, 1.0
        %v6742 = vadd.f32 %v6710, 1.0
        %v6743 = vadd.f32 %v6711, 1.0
        %v6744 = vadd.f32 %v6712, 1.0
        %v6745 = vadd.f32 %v6713, 1.0
        %v6746 = vadd.f32 %v6714, 1.0
        %v6747 = vadd.f32 %v6715, 1.0
        %v6748 = vadd.f32 %v6716, 1.0
        %v6749 = vadd.f32 %v6717, 1.0
        %v6750 = vmul.f32 %v6494, %v6718
        %v6751 = vmul.f32 %v6495, %v6719
        %v6752 = vmul.f32 %v6496, %v6720
        %v6753 = vmul.f32 %v6497, %v6721
        %v6754 = vmul.f32 %v6498, %v6722
        %v6755 = vmul.f32 %v6499, %v6723
        %v6756 = vmul.f32 %v6500, %v6724
        %v6757 = vmul.f32 %v6501, %v6725
        %v6758 = vmul.f32 %v6502, %v6726
        %v6759 = vmul.f32 %v6503, %v6727
        %v6760 = vmul.f32 %v6504, %v6728
        %v6761 = vmul.f32 %v6505, %v6729
        %v6762 = vmul.f32 %v6506, %v6730
        %v6763 = vmul.f32 %v6507, %v6731
        %v6764 = vmul.f32 %v6508, %v6732
        %v6765 = vmul.f32 %v6509, %v6733
        %v6766 = vmul.f32 %v6510, %v6734
        %v6767 = vmul.f32 %v6511, %v6735
        %v6768 = vmul.f32 %v6512, %v6736
        %v6769 = vmul.f32 %v6513, %v6737
        %v6770 = vmul.f32 %v6514, %v6738
        %v6771 = vmul.f32 %v6515, %v6739
        %v6772 = vmul.f32 %v6516, %v6740
        %v6773 = vmul.f32 %v6517, %v6741
        %v6774 = vmul.f32 %v6518, %v6742
        %v6775 = vmul.f32 %v6519, %v6743
        %v6776 = vmul.f32 %v6520, %v6744
        %v6777 = vmul.f32 %v6521, %v6745
        %v6778 = vmul.f32 %v6522, %v6746
        %v6779 = vmul.f32 %v6523, %v6747
        %v6780 = vmul.f32 %v6524, %v6748
        %v6781 = vmul.f32 %v6525, %v6749
        %v6782 = vpack.c.bf16 %v6752, %v6750
        %v6783 = vpack.c.bf16 %v6753, %v6751
        %v6784 = vpack.c.bf16 %v6756, %v6754
        %v6785 = vpack.c.bf16 %v6757, %v6755
        %v6786 = vpack.c.bf16 %v6760, %v6758
        %v6787 = vpack.c.bf16 %v6761, %v6759
        %v6788 = vpack.c.bf16 %v6764, %v6762
        %v6789 = vpack.c.bf16 %v6765, %v6763
        %v6790 = vpack.c.bf16 %v6768, %v6766
        %v6791 = vpack.c.bf16 %v6769, %v6767
        %v6792 = vpack.c.bf16 %v6772, %v6770
        %v6793 = vpack.c.bf16 %v6773, %v6771
        %v6794 = vpack.c.bf16 %v6776, %v6774
        %v6795 = vpack.c.bf16 %v6777, %v6775
        %v6796 = vpack.c.bf16 %v6780, %v6778
        %v6797 = vpack.c.bf16 %v6781, %v6779
        %v6798 = vld [vmem:[#allocation8] sm:$0xf]
        %v6799 = vld [vmem:[#allocation8 + $0x4] sm:$0xf]
        %v6800 = vld [vmem:[#allocation8 + $0x8] sm:$0xf]
        %v6801 = vld [vmem:[#allocation8 + $0xc] sm:$0xf]
        %v6802 = vld [vmem:[#allocation8 + $0x10] sm:$0xf]
        %v6803 = vld [vmem:[#allocation8 + $0x14] sm:$0xf]
        %v6804 = vld [vmem:[#allocation8 + $0x18] sm:$0xf]
        %v6805 = vld [vmem:[#allocation8 + $0x1c] sm:$0xf]
        %v6806 = vld [vmem:[#allocation8 + $0x20] sm:$0xf]
        %v6807 = vld [vmem:[#allocation8 + $0x24] sm:$0xf]
        %v6808 = vld [vmem:[#allocation8 + $0x28] sm:$0xf]
        %v6809 = vld [vmem:[#allocation8 + $0x2c] sm:$0xf]
        %v6810 = vld [vmem:[#allocation8 + $0x30] sm:$0xf]
        %v6811 = vld [vmem:[#allocation8 + $0x34] sm:$0xf]
        %v6812 = vld [vmem:[#allocation8 + $0x38] sm:$0xf]
        %v6813 = vld [vmem:[#allocation8 + $0x3c] sm:$0xf]
        %v6814 = vld [vmem:[#allocation8 + $0x40] sm:$0xf]
        %v6815 = vld [vmem:[#allocation8 + $0x44] sm:$0xf]
        %v6816 = vld [vmem:[#allocation8 + $0x48] sm:$0xf]
        %v6817 = vld [vmem:[#allocation8 + $0x4c] sm:$0xf]
        %v6818 = vld [vmem:[#allocation8 + $0x50] sm:$0xf]
        %v6819 = vld [vmem:[#allocation8 + $0x54] sm:$0xf]
        %v6820 = vld [vmem:[#allocation8 + $0x58] sm:$0xf]
        %v6821 = vld [vmem:[#allocation8 + $0x5c] sm:$0xf]
        %v6822 = vld [vmem:[#allocation8 + $0x60] sm:$0xf]
        %v6823 = vld [vmem:[#allocation8 + $0x64] sm:$0xf]
        %v6824 = vld [vmem:[#allocation8 + $0x68] sm:$0xf]
        %v6825 = vld [vmem:[#allocation8 + $0x6c] sm:$0xf]
        %v6826 = vld [vmem:[#allocation8 + $0x70] sm:$0xf]
        %v6827 = vld [vmem:[#allocation8 + $0x74] sm:$0xf]
        %v6828 = vld [vmem:[#allocation8 + $0x78] sm:$0xf]
        %v6829 = vld [vmem:[#allocation8 + $0x7c] sm:$0xf]
        %v6830 = vld [vmem:[%s14] sm:$0x1]
        %v6832 = vperm.slane %v6830, 0
        %v6866 = vunpack.c.l.b16 %v6798
        %v6867 = vunpack.c.l.b16 %v6799
        %v6868 = vunpack.c.l.b16 %v6800
        %v6869 = vunpack.c.l.b16 %v6801
        %v6870 = vunpack.c.l.b16 %v6802
        %v6871 = vunpack.c.l.b16 %v6803
        %v6872 = vunpack.c.l.b16 %v6804
        %v6873 = vunpack.c.l.b16 %v6805
        %v6874 = vunpack.c.l.b16 %v6806
        %v6875 = vunpack.c.l.b16 %v6807
        %v6876 = vunpack.c.l.b16 %v6808
        %v6877 = vunpack.c.l.b16 %v6809
        %v6878 = vunpack.c.l.b16 %v6810
        %v6879 = vunpack.c.l.b16 %v6811
        %v6880 = vunpack.c.l.b16 %v6812
        %v6881 = vunpack.c.l.b16 %v6813
        %v6882 = vunpack.c.l.b16 %v6814
        %v6883 = vunpack.c.l.b16 %v6815
        %v6884 = vunpack.c.l.b16 %v6816
        %v6885 = vunpack.c.l.b16 %v6817
        %v6886 = vunpack.c.l.b16 %v6818
        %v6887 = vunpack.c.l.b16 %v6819
        %v6888 = vunpack.c.l.b16 %v6820
        %v6889 = vunpack.c.l.b16 %v6821
        %v6890 = vunpack.c.l.b16 %v6822
        %v6891 = vunpack.c.l.b16 %v6823
        %v6892 = vunpack.c.l.b16 %v6824
        %v6893 = vunpack.c.l.b16 %v6825
        %v6894 = vunpack.c.l.b16 %v6826
        %v6895 = vunpack.c.l.b16 %v6827
        %v6896 = vunpack.c.l.b16 %v6828
        %v6897 = vunpack.c.l.b16 %v6829
        %v6898 = vpack.c.b16 %v6867, %v6866
        %v6899 = vpack.c.b16 %v6869, %v6868
        %v6900 = vpack.c.b16 %v6871, %v6870
        %v6901 = vpack.c.b16 %v6873, %v6872
        %v6902 = vpack.c.b16 %v6875, %v6874
        %v6903 = vpack.c.b16 %v6877, %v6876
        %v6904 = vpack.c.b16 %v6879, %v6878
        %v6905 = vpack.c.b16 %v6881, %v6880
        %v6906 = vpack.c.b16 %v6883, %v6882
        %v6907 = vpack.c.b16 %v6885, %v6884
        %v6908 = vpack.c.b16 %v6887, %v6886
        %v6909 = vpack.c.b16 %v6889, %v6888
        %v6910 = vpack.c.b16 %v6891, %v6890
        %v6911 = vpack.c.b16 %v6893, %v6892
        %v6912 = vpack.c.b16 %v6895, %v6894
        %v6913 = vpack.c.b16 %v6897, %v6896
        %6930 = vmatpush.bf16.msra.mxu0 %v6905
        %6931 = vmatpush.bf16.msra.mxu0 %v6904
        %6932 = vmatpush.bf16.msra.mxu0 %v6903
        %6933 = vmatpush.bf16.msra.mxu0 %v6902
        %6934 = vmatpush.bf16.msra.mxu0 %v6901
        %6935 = vmatpush.bf16.msra.mxu0 %v6900
        %6936 = vmatpush.bf16.msra.mxu0 %v6899
        %6937 = vmatpush.bf16.msra.mxu0 %v6898
        %6938 = vmatmul.bf16.gmra.mxu0 %v6782
        %v6939 = vpop.f32.mrf.mxu0
        %v6940 = vadd.f32 %v6832, %v6939
        %v6941 = vpop.f32.mrf.mxu0
        %v6942 = vadd.f32 %v6832, %v6941
        %6943 = vmatmul.bf16.gmra.mxu0 %v6784
        %v6944 = vpop.f32.mrf.mxu0
        %v6945 = vadd.f32 %v6832, %v6944
        %v6946 = vpop.f32.mrf.mxu0
        %v6947 = vadd.f32 %v6832, %v6946
        %6948 = vmatmul.bf16.gmra.mxu0 %v6786
        %v6949 = vpop.f32.mrf.mxu0
        %v6950 = vadd.f32 %v6832, %v6949
        %v6951 = vpop.f32.mrf.mxu0
        %v6952 = vadd.f32 %v6832, %v6951
        %6953 = vmatmul.bf16.gmra.mxu0 %v6788
        %v6954 = vpop.f32.mrf.mxu0
        %v6955 = vadd.f32 %v6832, %v6954
        %v6956 = vpop.f32.mrf.mxu0
        %v6957 = vadd.f32 %v6832, %v6956
        %6958 = vmatmul.bf16.gmra.mxu0 %v6790
        %v6959 = vpop.f32.mrf.mxu0
        %v6960 = vadd.f32 %v6832, %v6959
        %v6961 = vpop.f32.mrf.mxu0
        %v6962 = vadd.f32 %v6832, %v6961
        %6963 = vmatmul.bf16.gmra.mxu0 %v6792
        %v6964 = vpop.f32.mrf.mxu0
        %v6965 = vadd.f32 %v6832, %v6964
        %v6966 = vpop.f32.mrf.mxu0
        %v6967 = vadd.f32 %v6832, %v6966
        %6968 = vmatmul.bf16.gmra.mxu0 %v6794
        %v6969 = vpop.f32.mrf.mxu0
        %v6970 = vadd.f32 %v6832, %v6969
        %v6971 = vpop.f32.mrf.mxu0
        %v6972 = vadd.f32 %v6832, %v6971
        %6973 = vmatmul.bf16.gmra.mxu0 %v6796
        %v6974 = vpop.f32.mrf.mxu0
        %v6975 = vadd.f32 %v6832, %v6974
        %v6976 = vpop.f32.mrf.mxu0
        %v6977 = vadd.f32 %v6832, %v6976
        %6978 = vdwg.mxu0
        %6979 = vmatpush.bf16.msra.mxu0 %v6913
        %6980 = vmatpush.bf16.msra.mxu0 %v6912
        %6981 = vmatpush.bf16.msra.mxu0 %v6911
        %6982 = vmatpush.bf16.msra.mxu0 %v6910
        %6983 = vmatpush.bf16.msra.mxu0 %v6909
        %6984 = vmatpush.bf16.msra.mxu0 %v6908
        %6985 = vmatpush.bf16.msra.mxu0 %v6907
        %6986 = vmatpush.bf16.msra.mxu0 %v6906
        %6987 = vmatmul.bf16.gmra.mxu0 %v6783
        %v6988 = vpop.f32.mrf.mxu0
        %v6989 = vadd.f32 %v6940, %v6988
        %v6990 = vpop.f32.mrf.mxu0
        %v6991 = vadd.f32 %v6942, %v6990
        %6992 = vmatmul.bf16.gmra.mxu0 %v6785
        %v6993 = vpop.f32.mrf.mxu0
        %v6994 = vadd.f32 %v6945, %v6993
        %v6995 = vpop.f32.mrf.mxu0
        %v6996 = vadd.f32 %v6947, %v6995
        %6997 = vmatmul.bf16.gmra.mxu0 %v6787
        %v6998 = vpop.f32.mrf.mxu0
        %v6999 = vadd.f32 %v6950, %v6998
        %v7000 = vpop.f32.mrf.mxu0
        %v7001 = vadd.f32 %v6952, %v7000
        %7002 = vmatmul.bf16.gmra.mxu0 %v6789
        %v7003 = vpop.f32.mrf.mxu0
        %v7004 = vadd.f32 %v6955, %v7003
        %v7005 = vpop.f32.mrf.mxu0
        %v7006 = vadd.f32 %v6957, %v7005
        %7007 = vmatmul.bf16.gmra.mxu0 %v6791
        %v7008 = vpop.f32.mrf.mxu0
        %v7009 = vadd.f32 %v6960, %v7008
        %v7010 = vpop.f32.mrf.mxu0
        %v7011 = vadd.f32 %v6962, %v7010
        %7012 = vmatmul.bf16.gmra.mxu0 %v6793
        %v7013 = vpop.f32.mrf.mxu0
        %v7014 = vadd.f32 %v6965, %v7013
        %v7015 = vpop.f32.mrf.mxu0
        %v7016 = vadd.f32 %v6967, %v7015
        %7017 = vmatmul.bf16.gmra.mxu0 %v6795
        %v7018 = vpop.f32.mrf.mxu0
        %v7019 = vadd.f32 %v6970, %v7018
        %v7020 = vpop.f32.mrf.mxu0
        %v7021 = vadd.f32 %v6972, %v7020
        %7022 = vmatmul.bf16.gmra.mxu0 %v6797
        %v7023 = vpop.f32.mrf.mxu0
        %v7024 = vadd.f32 %v6975, %v7023
        %v7025 = vpop.f32.mrf.mxu0
        %v7026 = vadd.f32 %v6977, %v7025
        %7027 = vdwg.mxu0
        %v7028 = vadd.f32 %v6270, %v6989
        %v7029 = vadd.f32 %v6271, %v6991
        %v7030 = vadd.f32 %v6272, %v6994
        %v7031 = vadd.f32 %v6273, %v6996
        %v7032 = vadd.f32 %v6274, %v6999
        %v7033 = vadd.f32 %v6275, %v7001
        %v7034 = vadd.f32 %v6276, %v7004
        %v7035 = vadd.f32 %v6277, %v7006
        %v7036 = vadd.f32 %v6278, %v7009
        %v7037 = vadd.f32 %v6279, %v7011
        %v7038 = vadd.f32 %v6280, %v7014
        %v7039 = vadd.f32 %v6281, %v7016
        %v7040 = vadd.f32 %v6282, %v7019
        %v7041 = vadd.f32 %v6283, %v7021
        %v7042 = vadd.f32 %v6284, %v7024
        %v7043 = vadd.f32 %v6285, %v7026
        %v7044 = vld [vmem:[%s15] sm:$0x1]
        %v7045 = vld [vmem:[%s16] sm:$0x1]
        %7046 = vadd.xlane.f32.xlu0 %v7028
        %v7047 = vpop.xlane.xlu0 %7046
        %7048 = vadd.xlane.f32.xlu0 %v7029
        %v7049 = vpop.xlane.xlu0 %7048
        %7050 = vadd.xlane.f32.xlu0 %v7030
        %v7051 = vpop.xlane.xlu0 %7050
        %7052 = vadd.xlane.f32.xlu0 %v7031
        %v7053 = vpop.xlane.xlu0 %7052
        %7054 = vadd.xlane.f32.xlu0 %v7032
        %v7055 = vpop.xlane.xlu0 %7054
        %7056 = vadd.xlane.f32.xlu0 %v7033
        %v7057 = vpop.xlane.xlu0 %7056
        %7058 = vadd.xlane.f32.xlu0 %v7034
        %v7059 = vpop.xlane.xlu0 %7058
        %7060 = vadd.xlane.f32.xlu0 %v7035
        %v7061 = vpop.xlane.xlu0 %7060
        %7062 = vadd.xlane.f32.xlu0 %v7036
        %v7063 = vpop.xlane.xlu0 %7062
        %7064 = vadd.xlane.f32.xlu0 %v7037
        %v7065 = vpop.xlane.xlu0 %7064
        %7066 = vadd.xlane.f32.xlu0 %v7038
        %v7067 = vpop.xlane.xlu0 %7066
        %7068 = vadd.xlane.f32.xlu0 %v7039
        %v7069 = vpop.xlane.xlu0 %7068
        %7070 = vadd.xlane.f32.xlu0 %v7040
        %v7071 = vpop.xlane.xlu0 %7070
        %7072 = vadd.xlane.f32.xlu0 %v7041
        %v7073 = vpop.xlane.xlu0 %7072
        %7074 = vadd.xlane.f32.xlu0 %v7042
        %v7075 = vpop.xlane.xlu0 %7074
        %7076 = vadd.xlane.f32.xlu0 %v7043
        %v7077 = vpop.xlane.xlu0 %7076
        %v7078 = vmul.f32 %v7047, %v984
        %v7079 = vmul.f32 %v7049, %v984
        %v7080 = vmul.f32 %v7051, %v984
        %v7081 = vmul.f32 %v7053, %v984
        %v7082 = vmul.f32 %v7055, %v984
        %v7083 = vmul.f32 %v7057, %v984
        %v7084 = vmul.f32 %v7059, %v984
        %v7085 = vmul.f32 %v7061, %v984
        %v7086 = vmul.f32 %v7063, %v984
        %v7087 = vmul.f32 %v7065, %v984
        %v7088 = vmul.f32 %v7067, %v984
        %v7089 = vmul.f32 %v7069, %v984
        %v7090 = vmul.f32 %v7071, %v984
        %v7091 = vmul.f32 %v7073, %v984
        %v7092 = vmul.f32 %v7075, %v984
        %v7093 = vmul.f32 %v7077, %v984
        %v7094 = vsub.f32 %v7028, %v7078
        %v7095 = vsub.f32 %v7029, %v7079
        %v7096 = vsub.f32 %v7030, %v7080
        %v7097 = vsub.f32 %v7031, %v7081
        %v7098 = vsub.f32 %v7032, %v7082
        %v7099 = vsub.f32 %v7033, %v7083
        %v7100 = vsub.f32 %v7034, %v7084
        %v7101 = vsub.f32 %v7035, %v7085
        %v7102 = vsub.f32 %v7036, %v7086
        %v7103 = vsub.f32 %v7037, %v7087
        %v7104 = vsub.f32 %v7038, %v7088
        %v7105 = vsub.f32 %v7039, %v7089
        %v7106 = vsub.f32 %v7040, %v7090
        %v7107 = vsub.f32 %v7041, %v7091
        %v7108 = vsub.f32 %v7042, %v7092
        %v7109 = vsub.f32 %v7043, %v7093
        %v7110 = vmul.f32 %v7094, %v7094
        %v7111 = vmul.f32 %v7095, %v7095
        %v7112 = vmul.f32 %v7096, %v7096
        %v7113 = vmul.f32 %v7097, %v7097
        %v7114 = vmul.f32 %v7098, %v7098
        %v7115 = vmul.f32 %v7099, %v7099
        %v7116 = vmul.f32 %v7100, %v7100
        %v7117 = vmul.f32 %v7101, %v7101
        %v7118 = vmul.f32 %v7102, %v7102
        %v7119 = vmul.f32 %v7103, %v7103
        %v7120 = vmul.f32 %v7104, %v7104
        %v7121 = vmul.f32 %v7105, %v7105
        %v7122 = vmul.f32 %v7106, %v7106
        %v7123 = vmul.f32 %v7107, %v7107
        %v7124 = vmul.f32 %v7108, %v7108
        %v7125 = vmul.f32 %v7109, %v7109
        %7126 = vadd.xlane.f32.xlu0 %v7110
        %v7127 = vpop.xlane.xlu0 %7126
        %7128 = vadd.xlane.f32.xlu0 %v7111
        %v7129 = vpop.xlane.xlu0 %7128
        %7130 = vadd.xlane.f32.xlu0 %v7112
        %v7131 = vpop.xlane.xlu0 %7130
        %7132 = vadd.xlane.f32.xlu0 %v7113
        %v7133 = vpop.xlane.xlu0 %7132
        %7134 = vadd.xlane.f32.xlu0 %v7114
        %v7135 = vpop.xlane.xlu0 %7134
        %7136 = vadd.xlane.f32.xlu0 %v7115
        %v7137 = vpop.xlane.xlu0 %7136
        %7138 = vadd.xlane.f32.xlu0 %v7116
        %v7139 = vpop.xlane.xlu0 %7138
        %7140 = vadd.xlane.f32.xlu0 %v7117
        %v7141 = vpop.xlane.xlu0 %7140
        %7142 = vadd.xlane.f32.xlu0 %v7118
        %v7143 = vpop.xlane.xlu0 %7142
        %7144 = vadd.xlane.f32.xlu0 %v7119
        %v7145 = vpop.xlane.xlu0 %7144
        %7146 = vadd.xlane.f32.xlu0 %v7120
        %v7147 = vpop.xlane.xlu0 %7146
        %7148 = vadd.xlane.f32.xlu0 %v7121
        %v7149 = vpop.xlane.xlu0 %7148
        %7150 = vadd.xlane.f32.xlu0 %v7122
        %v7151 = vpop.xlane.xlu0 %7150
        %7152 = vadd.xlane.f32.xlu0 %v7123
        %v7153 = vpop.xlane.xlu0 %7152
        %7154 = vadd.xlane.f32.xlu0 %v7124
        %v7155 = vpop.xlane.xlu0 %7154
        %7156 = vadd.xlane.f32.xlu0 %v7125
        %v7157 = vpop.xlane.xlu0 %7156
        %v7158 = vmul.f32 %v7127, %v984
        %v7159 = vmul.f32 %v7129, %v984
        %v7160 = vmul.f32 %v7131, %v984
        %v7161 = vmul.f32 %v7133, %v984
        %v7162 = vmul.f32 %v7135, %v984
        %v7163 = vmul.f32 %v7137, %v984
        %v7164 = vmul.f32 %v7139, %v984
        %v7165 = vmul.f32 %v7141, %v984
        %v7166 = vmul.f32 %v7143, %v984
        %v7167 = vmul.f32 %v7145, %v984
        %v7168 = vmul.f32 %v7147, %v984
        %v7169 = vmul.f32 %v7149, %v984
        %v7170 = vmul.f32 %v7151, %v984
        %v7171 = vmul.f32 %v7153, %v984
        %v7172 = vmul.f32 %v7155, %v984
        %v7173 = vmul.f32 %v7157, %v984
        %v7174 = vadd.f32 %v7158, 1e-05
        %v7175 = vadd.f32 %v7159, 1e-05
        %v7176 = vadd.f32 %v7160, 1e-05
        %v7177 = vadd.f32 %v7161, 1e-05
        %v7178 = vadd.f32 %v7162, 1e-05
        %v7179 = vadd.f32 %v7163, 1e-05
        %v7180 = vadd.f32 %v7164, 1e-05
        %v7181 = vadd.f32 %v7165, 1e-05
        %v7182 = vadd.f32 %v7166, 1e-05
        %v7183 = vadd.f32 %v7167, 1e-05
        %v7184 = vadd.f32 %v7168, 1e-05
        %v7185 = vadd.f32 %v7169, 1e-05
        %v7186 = vadd.f32 %v7170, 1e-05
        %v7187 = vadd.f32 %v7171, 1e-05
        %v7188 = vadd.f32 %v7172, 1e-05
        %v7189 = vadd.f32 %v7173, 1e-05
        %v7190 = vrsqrt.pop %v7174
        %v7191 = vmul.f32 %v7190, %v7174
        %v7192 = vmul.f32 %v7191, %v7190
        %v7193 = vmul.f32 0.5, %v7192
        %v7194 = vsub.f32 1.5, %v7193
        %v7195 = vmul.f32 %v7190, %v7194
        %vm7196 = vweird.f32 %v7174
        %vm7197 = vweird.f32 %v7190
        %vm7198 = vmor %vm7196, %vm7197
        %v7199 = vsel %vm7198, %v7190, %v7195
        %v7200 = vrsqrt.pop %v7175
        %v7201 = vmul.f32 %v7200, %v7175
        %v7202 = vmul.f32 %v7201, %v7200
        %v7203 = vmul.f32 0.5, %v7202
        %v7204 = vsub.f32 1.5, %v7203
        %v7205 = vmul.f32 %v7200, %v7204
        %vm7206 = vweird.f32 %v7175
        %vm7207 = vweird.f32 %v7200
        %vm7208 = vmor %vm7206, %vm7207
        %v7209 = vsel %vm7208, %v7200, %v7205
        %v7210 = vrsqrt.pop %v7176
        %v7211 = vmul.f32 %v7210, %v7176
        %v7212 = vmul.f32 %v7211, %v7210
        %v7213 = vmul.f32 0.5, %v7212
        %v7214 = vsub.f32 1.5, %v7213
        %v7215 = vmul.f32 %v7210, %v7214
        %vm7216 = vweird.f32 %v7176
        %vm7217 = vweird.f32 %v7210
        %vm7218 = vmor %vm7216, %vm7217
        %v7219 = vsel %vm7218, %v7210, %v7215
        %v7220 = vrsqrt.pop %v7177
        %v7221 = vmul.f32 %v7220, %v7177
        %v7222 = vmul.f32 %v7221, %v7220
        %v7223 = vmul.f32 0.5, %v7222
        %v7224 = vsub.f32 1.5, %v7223
        %v7225 = vmul.f32 %v7220, %v7224
        %vm7226 = vweird.f32 %v7177
        %vm7227 = vweird.f32 %v7220
        %vm7228 = vmor %vm7226, %vm7227
        %v7229 = vsel %vm7228, %v7220, %v7225
        %v7230 = vrsqrt.pop %v7178
        %v7231 = vmul.f32 %v7230, %v7178
        %v7232 = vmul.f32 %v7231, %v7230
        %v7233 = vmul.f32 0.5, %v7232
        %v7234 = vsub.f32 1.5, %v7233
        %v7235 = vmul.f32 %v7230, %v7234
        %vm7236 = vweird.f32 %v7178
        %vm7237 = vweird.f32 %v7230
        %vm7238 = vmor %vm7236, %vm7237
        %v7239 = vsel %vm7238, %v7230, %v7235
        %v7240 = vrsqrt.pop %v7179
        %v7241 = vmul.f32 %v7240, %v7179
        %v7242 = vmul.f32 %v7241, %v7240
        %v7243 = vmul.f32 0.5, %v7242
        %v7244 = vsub.f32 1.5, %v7243
        %v7245 = vmul.f32 %v7240, %v7244
        %vm7246 = vweird.f32 %v7179
        %vm7247 = vweird.f32 %v7240
        %vm7248 = vmor %vm7246, %vm7247
        %v7249 = vsel %vm7248, %v7240, %v7245
        %v7250 = vrsqrt.pop %v7180
        %v7251 = vmul.f32 %v7250, %v7180
        %v7252 = vmul.f32 %v7251, %v7250
        %v7253 = vmul.f32 0.5, %v7252
        %v7254 = vsub.f32 1.5, %v7253
        %v7255 = vmul.f32 %v7250, %v7254
        %vm7256 = vweird.f32 %v7180
        %vm7257 = vweird.f32 %v7250
        %vm7258 = vmor %vm7256, %vm7257
        %v7259 = vsel %vm7258, %v7250, %v7255
        %v7260 = vrsqrt.pop %v7181
        %v7261 = vmul.f32 %v7260, %v7181
        %v7262 = vmul.f32 %v7261, %v7260
        %v7263 = vmul.f32 0.5, %v7262
        %v7264 = vsub.f32 1.5, %v7263
        %v7265 = vmul.f32 %v7260, %v7264
        %vm7266 = vweird.f32 %v7181
        %vm7267 = vweird.f32 %v7260
        %vm7268 = vmor %vm7266, %vm7267
        %v7269 = vsel %vm7268, %v7260, %v7265
        %v7270 = vrsqrt.pop %v7182
        %v7271 = vmul.f32 %v7270, %v7182
        %v7272 = vmul.f32 %v7271, %v7270
        %v7273 = vmul.f32 0.5, %v7272
        %v7274 = vsub.f32 1.5, %v7273
        %v7275 = vmul.f32 %v7270, %v7274
        %vm7276 = vweird.f32 %v7182
        %vm7277 = vweird.f32 %v7270
        %vm7278 = vmor %vm7276, %vm7277
        %v7279 = vsel %vm7278, %v7270, %v7275
        %v7280 = vrsqrt.pop %v7183
        %v7281 = vmul.f32 %v7280, %v7183
        %v7282 = vmul.f32 %v7281, %v7280
        %v7283 = vmul.f32 0.5, %v7282
        %v7284 = vsub.f32 1.5, %v7283
        %v7285 = vmul.f32 %v7280, %v7284
        %vm7286 = vweird.f32 %v7183
        %vm7287 = vweird.f32 %v7280
        %vm7288 = vmor %vm7286, %vm7287
        %v7289 = vsel %vm7288, %v7280, %v7285
        %v7290 = vrsqrt.pop %v7184
        %v7291 = vmul.f32 %v7290, %v7184
        %v7292 = vmul.f32 %v7291, %v7290
        %v7293 = vmul.f32 0.5, %v7292
        %v7294 = vsub.f32 1.5, %v7293
        %v7295 = vmul.f32 %v7290, %v7294
        %vm7296 = vweird.f32 %v7184
        %vm7297 = vweird.f32 %v7290
        %vm7298 = vmor %vm7296, %vm7297
        %v7299 = vsel %vm7298, %v7290, %v7295
        %v7300 = vrsqrt.pop %v7185
        %v7301 = vmul.f32 %v7300, %v7185
        %v7302 = vmul.f32 %v7301, %v7300
        %v7303 = vmul.f32 0.5, %v7302
        %v7304 = vsub.f32 1.5, %v7303
        %v7305 = vmul.f32 %v7300, %v7304
        %vm7306 = vweird.f32 %v7185
        %vm7307 = vweird.f32 %v7300
        %vm7308 = vmor %vm7306, %vm7307
        %v7309 = vsel %vm7308, %v7300, %v7305
        %v7310 = vrsqrt.pop %v7186
        %v7311 = vmul.f32 %v7310, %v7186
        %v7312 = vmul.f32 %v7311, %v7310
        %v7313 = vmul.f32 0.5, %v7312
        %v7314 = vsub.f32 1.5, %v7313
        %v7315 = vmul.f32 %v7310, %v7314
        %vm7316 = vweird.f32 %v7186
        %vm7317 = vweird.f32 %v7310
        %vm7318 = vmor %vm7316, %vm7317
        %v7319 = vsel %vm7318, %v7310, %v7315
        %v7320 = vrsqrt.pop %v7187
        %v7321 = vmul.f32 %v7320, %v7187
        %v7322 = vmul.f32 %v7321, %v7320
        %v7323 = vmul.f32 0.5, %v7322
        %v7324 = vsub.f32 1.5, %v7323
        %v7325 = vmul.f32 %v7320, %v7324
        %vm7326 = vweird.f32 %v7187
        %vm7327 = vweird.f32 %v7320
        %vm7328 = vmor %vm7326, %vm7327
        %v7329 = vsel %vm7328, %v7320, %v7325
        %v7330 = vrsqrt.pop %v7188
        %v7331 = vmul.f32 %v7330, %v7188
        %v7332 = vmul.f32 %v7331, %v7330
        %v7333 = vmul.f32 0.5, %v7332
        %v7334 = vsub.f32 1.5, %v7333
        %v7335 = vmul.f32 %v7330, %v7334
        %vm7336 = vweird.f32 %v7188
        %vm7337 = vweird.f32 %v7330
        %vm7338 = vmor %vm7336, %vm7337
        %v7339 = vsel %vm7338, %v7330, %v7335
        %v7340 = vrsqrt.pop %v7189
        %v7341 = vmul.f32 %v7340, %v7189
        %v7342 = vmul.f32 %v7341, %v7340
        %v7343 = vmul.f32 0.5, %v7342
        %v7344 = vsub.f32 1.5, %v7343
        %v7345 = vmul.f32 %v7340, %v7344
        %vm7346 = vweird.f32 %v7189
        %vm7347 = vweird.f32 %v7340
        %vm7348 = vmor %vm7346, %vm7347
        %v7349 = vsel %vm7348, %v7340, %v7345
        %v7350 = vmul.f32 %v7094, %v7199
        %v7351 = vmul.f32 %v7095, %v7209
        %v7352 = vmul.f32 %v7096, %v7219
        %v7353 = vmul.f32 %v7097, %v7229
        %v7354 = vmul.f32 %v7098, %v7239
        %v7355 = vmul.f32 %v7099, %v7249
        %v7356 = vmul.f32 %v7100, %v7259
        %v7357 = vmul.f32 %v7101, %v7269
        %v7358 = vmul.f32 %v7102, %v7279
        %v7359 = vmul.f32 %v7103, %v7289
        %v7360 = vmul.f32 %v7104, %v7299
        %v7361 = vmul.f32 %v7105, %v7309
        %v7362 = vmul.f32 %v7106, %v7319
        %v7363 = vmul.f32 %v7107, %v7329
        %v7364 = vmul.f32 %v7108, %v7339
        %v7365 = vmul.f32 %v7109, %v7349
        %v7367 = vperm.slane %v7044, 0
        %v7369 = vmul.f32 %v7350, %v7367
        %v7370 = vmul.f32 %v7351, %v7367
        %v7371 = vmul.f32 %v7352, %v7367
        %v7372 = vmul.f32 %v7353, %v7367
        %v7373 = vmul.f32 %v7354, %v7367
        %v7374 = vmul.f32 %v7355, %v7367
        %v7375 = vmul.f32 %v7356, %v7367
        %v7376 = vmul.f32 %v7357, %v7367
        %v7377 = vmul.f32 %v7358, %v7367
        %v7378 = vmul.f32 %v7359, %v7367
        %v7379 = vmul.f32 %v7360, %v7367
        %v7380 = vmul.f32 %v7361, %v7367
        %v7381 = vmul.f32 %v7362, %v7367
        %v7382 = vmul.f32 %v7363, %v7367
        %v7383 = vmul.f32 %v7364, %v7367
        %v7384 = vmul.f32 %v7365, %v7367
        %v7386 = vperm.slane %v7045, 0
        %v7388 = vadd.f32 %v7369, %v7386
        %v7389 = vadd.f32 %v7370, %v7386
        %v7390 = vadd.f32 %v7371, %v7386
        %v7391 = vadd.f32 %v7372, %v7386
        %v7392 = vadd.f32 %v7373, %v7386
        %v7393 = vadd.f32 %v7374, %v7386
        %v7394 = vadd.f32 %v7375, %v7386
        %v7395 = vadd.f32 %v7376, %v7386
        %v7396 = vadd.f32 %v7377, %v7386
        %v7397 = vadd.f32 %v7378, %v7386
        %v7398 = vadd.f32 %v7379, %v7386
        %v7399 = vadd.f32 %v7380, %v7386
        %v7400 = vadd.f32 %v7381, %v7386
        %v7401 = vadd.f32 %v7382, %v7386
        %v7402 = vadd.f32 %v7383, %v7386
        %v7403 = vadd.f32 %v7384, %v7386
        %v7404 = vld [vmem:[%s922] sm:$0xff]
        %v7405 = vld [vmem:[%s922 + $0x8] sm:$0xff]
        %v7406 = vperm.slane %v7404, 0
        %v7407 = vlaneseq
        %v7408 = vshrl.u32 %v7407, 7
        %7410 = vset.pattern.permute.xlu0 %v7408
        %7411 = vperm.xlu0 %7410, %v7406
        %v7412 = vpop.permute.xlu0 %7411
        %v7413 = vperm.slane %v7404, 1
        %v7414 = vlaneseq
        %v7415 = vshrl.u32 %v7414, 7
        %7417 = vset.pattern.permute.xlu0 %v7415
        %7418 = vperm.xlu0 %7417, %v7413
        %v7419 = vpop.permute.xlu0 %7418
        %v7420 = vperm.slane %v7404, 2
        %v7421 = vlaneseq
        %v7422 = vshrl.u32 %v7421, 7
        %7424 = vset.pattern.permute.xlu0 %v7422
        %7425 = vperm.xlu0 %7424, %v7420
        %v7426 = vpop.permute.xlu0 %7425
        %v7427 = vperm.slane %v7404, 3
        %v7428 = vlaneseq
        %v7429 = vshrl.u32 %v7428, 7
        %7431 = vset.pattern.permute.xlu0 %v7429
        %7432 = vperm.xlu0 %7431, %v7427
        %v7433 = vpop.permute.xlu0 %7432
        %v7434 = vperm.slane %v7404, 4
        %v7435 = vlaneseq
        %v7436 = vshrl.u32 %v7435, 7
        %7438 = vset.pattern.permute.xlu0 %v7436
        %7439 = vperm.xlu0 %7438, %v7434
        %v7440 = vpop.permute.xlu0 %7439
        %v7441 = vperm.slane %v7404, 5
        %v7442 = vlaneseq
        %v7443 = vshrl.u32 %v7442, 7
        %7445 = vset.pattern.permute.xlu0 %v7443
        %7446 = vperm.xlu0 %7445, %v7441
        %v7447 = vpop.permute.xlu0 %7446
        %v7448 = vperm.slane %v7404, 6
        %v7449 = vlaneseq
        %v7450 = vshrl.u32 %v7449, 7
        %7452 = vset.pattern.permute.xlu0 %v7450
        %7453 = vperm.xlu0 %7452, %v7448
        %v7454 = vpop.permute.xlu0 %7453
        %v7455 = vperm.slane %v7404, 7
        %v7456 = vlaneseq
        %v7457 = vshrl.u32 %v7456, 7
        %7459 = vset.pattern.permute.xlu0 %v7457
        %7460 = vperm.xlu0 %7459, %v7455
        %v7461 = vpop.permute.xlu0 %7460
        %v7462 = vperm.slane %v7405, 0
        %v7463 = vlaneseq
        %v7464 = vshrl.u32 %v7463, 7
        %7466 = vset.pattern.permute.xlu0 %v7464
        %7467 = vperm.xlu0 %7466, %v7462
        %v7468 = vpop.permute.xlu0 %7467
        %v7469 = vperm.slane %v7405, 1
        %v7470 = vlaneseq
        %v7471 = vshrl.u32 %v7470, 7
        %7473 = vset.pattern.permute.xlu0 %v7471
        %7474 = vperm.xlu0 %7473, %v7469
        %v7475 = vpop.permute.xlu0 %7474
        %v7476 = vperm.slane %v7405, 2
        %v7477 = vlaneseq
        %v7478 = vshrl.u32 %v7477, 7
        %7480 = vset.pattern.permute.xlu0 %v7478
        %7481 = vperm.xlu0 %7480, %v7476
        %v7482 = vpop.permute.xlu0 %7481
        %v7483 = vperm.slane %v7405, 3
        %v7484 = vlaneseq
        %v7485 = vshrl.u32 %v7484, 7
        %7487 = vset.pattern.permute.xlu0 %v7485
        %7488 = vperm.xlu0 %7487, %v7483
        %v7489 = vpop.permute.xlu0 %7488
        %v7490 = vperm.slane %v7405, 4
        %v7491 = vlaneseq
        %v7492 = vshrl.u32 %v7491, 7
        %7494 = vset.pattern.permute.xlu0 %v7492
        %7495 = vperm.xlu0 %7494, %v7490
        %v7496 = vpop.permute.xlu0 %7495
        %v7497 = vperm.slane %v7405, 5
        %v7498 = vlaneseq
        %v7499 = vshrl.u32 %v7498, 7
        %7501 = vset.pattern.permute.xlu0 %v7499
        %7502 = vperm.xlu0 %7501, %v7497
        %v7503 = vpop.permute.xlu0 %7502
        %v7504 = vperm.slane %v7405, 6
        %v7505 = vlaneseq
        %v7506 = vshrl.u32 %v7505, 7
        %7508 = vset.pattern.permute.xlu0 %v7506
        %7509 = vperm.xlu0 %7508, %v7504
        %v7510 = vpop.permute.xlu0 %7509
        %v7511 = vperm.slane %v7405, 7
        %v7512 = vlaneseq
        %v7513 = vshrl.u32 %v7512, 7
        %7515 = vset.pattern.permute.xlu0 %v7513
        %7516 = vperm.xlu0 %7515, %v7511
        %v7517 = vpop.permute.xlu0 %7516
        %v7518 = vmul.f32 %v7388, %v7412
        %v7519 = vmul.f32 %v7389, %v7419
        %v7520 = vmul.f32 %v7390, %v7426
        %v7521 = vmul.f32 %v7391, %v7433
        %v7522 = vmul.f32 %v7392, %v7440
        %v7523 = vmul.f32 %v7393, %v7447
        %v7524 = vmul.f32 %v7394, %v7454
        %v7525 = vmul.f32 %v7395, %v7461
        %v7526 = vmul.f32 %v7396, %v7468
        %v7527 = vmul.f32 %v7397, %v7475
        %v7528 = vmul.f32 %v7398, %v7482
        %v7529 = vmul.f32 %v7399, %v7489
        %v7530 = vmul.f32 %v7400, %v7496
        %v7531 = vmul.f32 %v7401, %v7503
        %v7532 = vmul.f32 %v7402, %v7510
        %v7533 = vmul.f32 %v7403, %v7517
        %v7534 = vrot.slane %v7518, 4
        %v7535 = vadd.f32 %v7518, %v7534
        %v7536 = vrot.slane %v7535, 2
        %v7537 = vadd.f32 %v7535, %v7536
        %v7538 = vrot.slane %v7537, 1
        %v7539 = vadd.f32 %v7537, %v7538
        %v7540 = vrot.slane %v7519, 4
        %v7541 = vadd.f32 %v7519, %v7540
        %v7542 = vrot.slane %v7541, 2
        %v7543 = vadd.f32 %v7541, %v7542
        %v7544 = vrot.slane %v7543, 1
        %v7545 = vadd.f32 %v7543, %v7544
        %v7546 = vrot.slane %v7520, 4
        %v7547 = vadd.f32 %v7520, %v7546
        %v7548 = vrot.slane %v7547, 2
        %v7549 = vadd.f32 %v7547, %v7548
        %v7550 = vrot.slane %v7549, 1
        %v7551 = vadd.f32 %v7549, %v7550
        %v7552 = vrot.slane %v7521, 4
        %v7553 = vadd.f32 %v7521, %v7552
        %v7554 = vrot.slane %v7553, 2
        %v7555 = vadd.f32 %v7553, %v7554
        %v7556 = vrot.slane %v7555, 1
        %v7557 = vadd.f32 %v7555, %v7556
        %v7558 = vrot.slane %v7522, 4
        %v7559 = vadd.f32 %v7522, %v7558
        %v7560 = vrot.slane %v7559, 2
        %v7561 = vadd.f32 %v7559, %v7560
        %v7562 = vrot.slane %v7561, 1
        %v7563 = vadd.f32 %v7561, %v7562
        %v7564 = vrot.slane %v7523, 4
        %v7565 = vadd.f32 %v7523, %v7564
        %v7566 = vrot.slane %v7565, 2
        %v7567 = vadd.f32 %v7565, %v7566
        %v7568 = vrot.slane %v7567, 1
        %v7569 = vadd.f32 %v7567, %v7568
        %v7570 = vrot.slane %v7524, 4
        %v7571 = vadd.f32 %v7524, %v7570
        %v7572 = vrot.slane %v7571, 2
        %v7573 = vadd.f32 %v7571, %v7572
        %v7574 = vrot.slane %v7573, 1
        %v7575 = vadd.f32 %v7573, %v7574
        %v7576 = vrot.slane %v7525, 4
        %v7577 = vadd.f32 %v7525, %v7576
        %v7578 = vrot.slane %v7577, 2
        %v7579 = vadd.f32 %v7577, %v7578
        %v7580 = vrot.slane %v7579, 1
        %v7581 = vadd.f32 %v7579, %v7580
        %v7582 = vrot.slane %v7526, 4
        %v7583 = vadd.f32 %v7526, %v7582
        %v7584 = vrot.slane %v7583, 2
        %v7585 = vadd.f32 %v7583, %v7584
        %v7586 = vrot.slane %v7585, 1
        %v7587 = vadd.f32 %v7585, %v7586
        %v7588 = vrot.slane %v7527, 4
        %v7589 = vadd.f32 %v7527, %v7588
        %v7590 = vrot.slane %v7589, 2
        %v7591 = vadd.f32 %v7589, %v7590
        %v7592 = vrot.slane %v7591, 1
        %v7593 = vadd.f32 %v7591, %v7592
        %v7594 = vrot.slane %v7528, 4
        %v7595 = vadd.f32 %v7528, %v7594
        %v7596 = vrot.slane %v7595, 2
        %v7597 = vadd.f32 %v7595, %v7596
        %v7598 = vrot.slane %v7597, 1
        %v7599 = vadd.f32 %v7597, %v7598
        %v7600 = vrot.slane %v7529, 4
        %v7601 = vadd.f32 %v7529, %v7600
        %v7602 = vrot.slane %v7601, 2
        %v7603 = vadd.f32 %v7601, %v7602
        %v7604 = vrot.slane %v7603, 1
        %v7605 = vadd.f32 %v7603, %v7604
        %v7606 = vrot.slane %v7530, 4
        %v7607 = vadd.f32 %v7530, %v7606
        %v7608 = vrot.slane %v7607, 2
        %v7609 = vadd.f32 %v7607, %v7608
        %v7610 = vrot.slane %v7609, 1
        %v7611 = vadd.f32 %v7609, %v7610
        %v7612 = vrot.slane %v7531, 4
        %v7613 = vadd.f32 %v7531, %v7612
        %v7614 = vrot.slane %v7613, 2
        %v7615 = vadd.f32 %v7613, %v7614
        %v7616 = vrot.slane %v7615, 1
        %v7617 = vadd.f32 %v7615, %v7616
        %v7618 = vrot.slane %v7532, 4
        %v7619 = vadd.f32 %v7532, %v7618
        %v7620 = vrot.slane %v7619, 2
        %v7621 = vadd.f32 %v7619, %v7620
        %v7622 = vrot.slane %v7621, 1
        %v7623 = vadd.f32 %v7621, %v7622
        %v7624 = vrot.slane %v7533, 4
        %v7625 = vadd.f32 %v7533, %v7624
        %v7626 = vrot.slane %v7625, 2
        %v7627 = vadd.f32 %v7625, %v7626
        %v7628 = vrot.slane %v7627, 1
        %v7629 = vadd.f32 %v7627, %v7628
        %v7630 = vpack.c.bf16 %v7539, %v7539
        %v7631 = vpack.c.bf16 %v7545, %v7545
        %v7632 = vpack.c.bf16 %v7551, %v7551
        %v7633 = vpack.c.bf16 %v7557, %v7557
        %v7634 = vpack.c.bf16 %v7563, %v7563
        %v7635 = vpack.c.bf16 %v7569, %v7569
        %v7636 = vpack.c.bf16 %v7575, %v7575
        %v7637 = vpack.c.bf16 %v7581, %v7581
        %v7638 = vpack.c.bf16 %v7587, %v7587
        %v7639 = vpack.c.bf16 %v7593, %v7593
        %v7640 = vpack.c.bf16 %v7599, %v7599
        %v7641 = vpack.c.bf16 %v7605, %v7605
        %v7642 = vpack.c.bf16 %v7611, %v7611
        %v7643 = vpack.c.bf16 %v7617, %v7617
        %v7644 = vpack.c.bf16 %v7623, %v7623
        %v7645 = vpack.c.bf16 %v7629, %v7629
        %v7646 = vld [vmem:[#allocation10] sm:$0xf]
        %v7647 = vld [vmem:[#allocation10 + $0x4] sm:$0xf]
        %v7648 = vld [vmem:[#allocation10 + $0x8] sm:$0xf]
        %v7649 = vld [vmem:[#allocation10 + $0xc] sm:$0xf]
        %v7650 = vld [vmem:[#allocation10 + $0x10] sm:$0xf]
        %v7651 = vld [vmem:[#allocation10 + $0x14] sm:$0xf]
        %v7652 = vld [vmem:[#allocation10 + $0x18] sm:$0xf]
        %v7653 = vld [vmem:[#allocation10 + $0x1c] sm:$0xf]
        %v7654 = vld [vmem:[#allocation10 + $0x20] sm:$0xf]
        %v7655 = vld [vmem:[#allocation10 + $0x24] sm:$0xf]
        %v7656 = vld [vmem:[#allocation10 + $0x28] sm:$0xf]
        %v7657 = vld [vmem:[#allocation10 + $0x2c] sm:$0xf]
        %v7658 = vld [vmem:[#allocation10 + $0x30] sm:$0xf]
        %v7659 = vld [vmem:[#allocation10 + $0x34] sm:$0xf]
        %v7660 = vld [vmem:[#allocation10 + $0x38] sm:$0xf]
        %v7661 = vld [vmem:[#allocation10 + $0x3c] sm:$0xf]
        %v7662 = vld [vmem:[%s18] sm:$0x1]
        %v7664 = vperm.slane %v7662, 0
        %v7682 = vunpack.c.l.b16 %v7630
        %v7683 = vunpack.c.l.b16 %v7631
        %v7684 = vunpack.c.l.b16 %v7632
        %v7685 = vunpack.c.l.b16 %v7633
        %v7686 = vunpack.c.l.b16 %v7634
        %v7687 = vunpack.c.l.b16 %v7635
        %v7688 = vunpack.c.l.b16 %v7636
        %v7689 = vunpack.c.l.b16 %v7637
        %v7690 = vunpack.c.l.b16 %v7638
        %v7691 = vunpack.c.l.b16 %v7639
        %v7692 = vunpack.c.l.b16 %v7640
        %v7693 = vunpack.c.l.b16 %v7641
        %v7694 = vunpack.c.l.b16 %v7642
        %v7695 = vunpack.c.l.b16 %v7643
        %v7696 = vunpack.c.l.b16 %v7644
        %v7697 = vunpack.c.l.b16 %v7645
        %vm7698 = vcmask 1041409
        %v7699 = vsel %vm7698, %v7683, %v7682
        %vm7700 = vcmask 1042434
        %v7701 = vsel %vm7700, %v7684, %v7699
        %vm7702 = vcmask 1043459
        %v7703 = vsel %vm7702, %v7685, %v7701
        %vm7704 = vcmask 1044484
        %v7705 = vsel %vm7704, %v7686, %v7703
        %vm7706 = vcmask 1045509
        %v7707 = vsel %vm7706, %v7687, %v7705
        %vm7708 = vcmask 1046534
        %v7709 = vsel %vm7708, %v7688, %v7707
        %vm7710 = vcmask 1047559
        %v7711 = vsel %vm7710, %v7689, %v7709
        %v7712 = vsel %vm7698, %v7691, %v7690
        %v7713 = vsel %vm7700, %v7692, %v7712
        %v7714 = vsel %vm7702, %v7693, %v7713
        %v7715 = vsel %vm7704, %v7694, %v7714
        %v7716 = vsel %vm7706, %v7695, %v7715
        %v7717 = vsel %vm7708, %v7696, %v7716
        %v7718 = vsel %vm7710, %v7697, %v7717
        %v7719 = vpack.c.b16 %v7718, %v7711
        %v7737 = vunpack.c.l.b16 %v7646
        %v7738 = vunpack.c.l.b16 %v7647
        %v7739 = vunpack.c.l.b16 %v7648
        %v7740 = vunpack.c.l.b16 %v7649
        %v7741 = vunpack.c.l.b16 %v7650
        %v7742 = vunpack.c.l.b16 %v7651
        %v7743 = vunpack.c.l.b16 %v7652
        %v7744 = vunpack.c.l.b16 %v7653
        %v7745 = vunpack.c.l.b16 %v7654
        %v7746 = vunpack.c.l.b16 %v7655
        %v7747 = vunpack.c.l.b16 %v7656
        %v7748 = vunpack.c.l.b16 %v7657
        %v7749 = vunpack.c.l.b16 %v7658
        %v7750 = vunpack.c.l.b16 %v7659
        %v7751 = vunpack.c.l.b16 %v7660
        %v7752 = vunpack.c.l.b16 %v7661
        %v7753 = vpack.c.b16 %v7738, %v7737
        %v7754 = vpack.c.b16 %v7740, %v7739
        %v7755 = vpack.c.b16 %v7742, %v7741
        %v7756 = vpack.c.b16 %v7744, %v7743
        %v7757 = vpack.c.b16 %v7746, %v7745
        %v7758 = vpack.c.b16 %v7748, %v7747
        %v7759 = vpack.c.b16 %v7750, %v7749
        %v7760 = vpack.c.b16 %v7752, %v7751
        %7769 = vmatpush.bf16.msra.mxu0 %v7760
        %7770 = vmatpush.bf16.msra.mxu0 %v7759
        %7771 = vmatpush.bf16.msra.mxu0 %v7758
        %7772 = vmatpush.bf16.msra.mxu0 %v7757
        %7773 = vmatpush.bf16.msra.mxu0 %v7756
        %7774 = vmatpush.bf16.msra.mxu0 %v7755
        %7775 = vmatpush.bf16.msra.mxu0 %v7754
        %7776 = vmatpush.bf16.msra.mxu0 %v7753
        %7777 = vmatmul.bf16.gmra.mxu0 %v7719
        %v7778 = vpop.f32.mrf.mxu0
        %v7779 = vadd.f32 %v7664, %v7778
        %v7780 = vpop.f32.mrf.mxu0
        %v7781 = vadd.f32 %v7664, %v7780
        %7782 = vdwg.mxu0
        %v7783 = vmul.f32 %v7779, 0.5
        %v7784 = vmul.f32 %v7781, 0.5
        %v7785 = vmul.f32 %v7779, 0.044715
        %v7786 = vmul.f32 %v7781, 0.044715
        %v7787 = vmul.f32 %v7785, %v7779
        %v7788 = vmul.f32 %v7786, %v7781
        %v7789 = vmul.f32 %v7787, %v7779
        %v7790 = vmul.f32 %v7788, %v7781
        %v7791 = vadd.f32 %v7779, %v7789
        %v7792 = vadd.f32 %v7781, %v7790
        %v7793 = vmul.f32 %v7791, 0.7978846
        %v7794 = vmul.f32 %v7792, 0.7978846
        %v7795 = vtanh.pop %v7793
        %v7796 = vtanh.pop %v7794
        %v7797 = vadd.f32 %v7795, 1.0
        %v7798 = vadd.f32 %v7796, 1.0
        %v7799 = vmul.f32 %v7783, %v7797
        %v7800 = vmul.f32 %v7784, %v7798
        %v7801 = vld [vmem:[%s19] sm:$0x1]
        %v7802 = vld [vmem:[%s20] sm:$0x1]
        %7803 = vadd.xlane.f32.xlu0 %v7799
        %v7804 = vpop.xlane.xlu0 %7803
        %7805 = vadd.xlane.f32.xlu0 %v7800
        %v7806 = vpop.xlane.xlu0 %7805
        %v7807 = vmul.f32 %v7804, %v984
        %v7808 = vmul.f32 %v7806, %v984
        %v7809 = vsub.f32 %v7799, %v7807
        %v7810 = vsub.f32 %v7800, %v7808
        %v7811 = vmul.f32 %v7809, %v7809
        %v7812 = vmul.f32 %v7810, %v7810
        %7813 = vadd.xlane.f32.xlu0 %v7811
        %v7814 = vpop.xlane.xlu0 %7813
        %7815 = vadd.xlane.f32.xlu0 %v7812
        %v7816 = vpop.xlane.xlu0 %7815
        %v7817 = vmul.f32 %v7814, %v984
        %v7818 = vmul.f32 %v7816, %v984
        %v7819 = vadd.f32 %v7817, 1e-05
        %v7820 = vadd.f32 %v7818, 1e-05
        %v7821 = vrsqrt.pop %v7819
        %v7822 = vmul.f32 %v7821, %v7819
        %v7823 = vmul.f32 %v7822, %v7821
        %v7824 = vmul.f32 0.5, %v7823
        %v7825 = vsub.f32 1.5, %v7824
        %v7826 = vmul.f32 %v7821, %v7825
        %vm7827 = vweird.f32 %v7819
        %vm7828 = vweird.f32 %v7821
        %vm7829 = vmor %vm7827, %vm7828
        %v7830 = vsel %vm7829, %v7821, %v7826
        %v7831 = vrsqrt.pop %v7820
        %v7832 = vmul.f32 %v7831, %v7820
        %v7833 = vmul.f32 %v7832, %v7831
        %v7834 = vmul.f32 0.5, %v7833
        %v7835 = vsub.f32 1.5, %v7834
        %v7836 = vmul.f32 %v7831, %v7835
        %vm7837 = vweird.f32 %v7820
        %vm7838 = vweird.f32 %v7831
        %vm7839 = vmor %vm7837, %vm7838
        %v7840 = vsel %vm7839, %v7831, %v7836
        %v7841 = vmul.f32 %v7809, %v7830
        %v7842 = vmul.f32 %v7810, %v7840
        %v7844 = vperm.slane %v7801, 0
        %v7846 = vmul.f32 %v7841, %v7844
        %v7847 = vmul.f32 %v7842, %v7844
        %v7849 = vperm.slane %v7802, 0
        %v7851 = vadd.f32 %v7846, %v7849
        %v7852 = vadd.f32 %v7847, %v7849
        %v7855 = vrot.slane %v7851, 1
        %v7856 = vrot.slane %v7851, 2
        %v7857 = vrot.slane %v7851, 3
        %v7858 = vrot.slane %v7851, 4
        %v7859 = vrot.slane %v7851, 5
        %v7860 = vrot.slane %v7851, 6
        %v7861 = vrot.slane %v7851, 7
        %v7862 = vrot.slane %v7852, 1
        %v7863 = vrot.slane %v7852, 2
        %v7864 = vrot.slane %v7852, 3
        %v7865 = vrot.slane %v7852, 4
        %v7866 = vrot.slane %v7852, 5
        %v7867 = vrot.slane %v7852, 6
        %v7868 = vrot.slane %v7852, 7
        %v7883 = vpack.c.bf16 %v7851, %v7851
        %v7884 = vpack.c.bf16 %v7855, %v7855
        %v7885 = vpack.c.bf16 %v7856, %v7856
        %v7886 = vpack.c.bf16 %v7857, %v7857
        %v7887 = vpack.c.bf16 %v7858, %v7858
        %v7888 = vpack.c.bf16 %v7859, %v7859
        %v7889 = vpack.c.bf16 %v7860, %v7860
        %v7890 = vpack.c.bf16 %v7861, %v7861
        %v7891 = vpack.c.bf16 %v7852, %v7852
        %v7892 = vpack.c.bf16 %v7862, %v7862
        %v7893 = vpack.c.bf16 %v7863, %v7863
        %v7894 = vpack.c.bf16 %v7864, %v7864
        %v7895 = vpack.c.bf16 %v7865, %v7865
        %v7896 = vpack.c.bf16 %v7866, %v7866
        %v7897 = vpack.c.bf16 %v7867, %v7867
        %v7898 = vpack.c.bf16 %v7868, %v7868
        %v7899 = vld [vmem:[%s817] sm:$0xf]
        %v7900 = vld [vmem:[%s817 + $0x4] sm:$0xf]
        %v7901 = vld [vmem:[%s817 + $0x8] sm:$0xf]
        %v7902 = vld [vmem:[%s817 + $0xc] sm:$0xf]
        %v7903 = vld [vmem:[%s817 + $0x10] sm:$0xf]
        %v7904 = vld [vmem:[%s817 + $0x14] sm:$0xf]
        %v7905 = vld [vmem:[%s817 + $0x18] sm:$0xf]
        %v7906 = vld [vmem:[%s817 + $0x1c] sm:$0xf]
        %v7907 = vld [vmem:[%s817 + $0x20] sm:$0xf]
        %v7908 = vld [vmem:[%s817 + $0x24] sm:$0xf]
        %v7909 = vld [vmem:[%s817 + $0x28] sm:$0xf]
        %v7910 = vld [vmem:[%s817 + $0x2c] sm:$0xf]
        %v7911 = vld [vmem:[%s817 + $0x30] sm:$0xf]
        %v7912 = vld [vmem:[%s817 + $0x34] sm:$0xf]
        %v7913 = vld [vmem:[%s817 + $0x38] sm:$0xf]
        %v7914 = vld [vmem:[%s817 + $0x3c] sm:$0xf]
        %v7915 = vld [vmem:[%s817 + $0x40] sm:$0xf]
        %v7916 = vld [vmem:[%s817 + $0x44] sm:$0xf]
        %v7917 = vld [vmem:[%s817 + $0x48] sm:$0xf]
        %v7918 = vld [vmem:[%s817 + $0x4c] sm:$0xf]
        %v7919 = vld [vmem:[%s817 + $0x50] sm:$0xf]
        %v7920 = vld [vmem:[%s817 + $0x54] sm:$0xf]
        %v7921 = vld [vmem:[%s817 + $0x58] sm:$0xf]
        %v7922 = vld [vmem:[%s817 + $0x5c] sm:$0xf]
        %v7923 = vld [vmem:[%s817 + $0x60] sm:$0xf]
        %v7924 = vld [vmem:[%s817 + $0x64] sm:$0xf]
        %v7925 = vld [vmem:[%s817 + $0x68] sm:$0xf]
        %v7926 = vld [vmem:[%s817 + $0x6c] sm:$0xf]
        %v7927 = vld [vmem:[%s817 + $0x70] sm:$0xf]
        %v7928 = vld [vmem:[%s817 + $0x74] sm:$0xf]
        %v7929 = vld [vmem:[%s817 + $0x78] sm:$0xf]
        %v7930 = vld [vmem:[%s817 + $0x7c] sm:$0xf]
        %v7931 = vld [vmem:[%s817 + $0x80] sm:$0xf]
        %v7932 = vld [vmem:[%s817 + $0x84] sm:$0xf]
        %v7933 = vld [vmem:[%s817 + $0x88] sm:$0xf]
        %v7934 = vld [vmem:[%s817 + $0x8c] sm:$0xf]
        %v7935 = vld [vmem:[%s817 + $0x90] sm:$0xf]
        %v7936 = vld [vmem:[%s817 + $0x94] sm:$0xf]
        %v7937 = vld [vmem:[%s817 + $0x98] sm:$0xf]
        %v7938 = vld [vmem:[%s817 + $0x9c] sm:$0xf]
        %v7939 = vld [vmem:[%s817 + $0xa0] sm:$0xf]
        %v7940 = vld [vmem:[%s817 + $0xa4] sm:$0xf]
        %v7941 = vld [vmem:[%s817 + $0xa8] sm:$0xf]
        %v7942 = vld [vmem:[%s817 + $0xac] sm:$0xf]
        %v7943 = vld [vmem:[%s817 + $0xb0] sm:$0xf]
        %v7944 = vld [vmem:[%s817 + $0xb4] sm:$0xf]
        %v7945 = vld [vmem:[%s817 + $0xb8] sm:$0xf]
        %v7946 = vld [vmem:[%s817 + $0xbc] sm:$0xf]
        %v7947 = vld [vmem:[%s817 + $0xc0] sm:$0xf]
        %v7948 = vld [vmem:[%s817 + $0xc4] sm:$0xf]
        %v7949 = vld [vmem:[%s817 + $0xc8] sm:$0xf]
        %v7950 = vld [vmem:[%s817 + $0xcc] sm:$0xf]
        %v7951 = vld [vmem:[%s817 + $0xd0] sm:$0xf]
        %v7952 = vld [vmem:[%s817 + $0xd4] sm:$0xf]
        %v7953 = vld [vmem:[%s817 + $0xd8] sm:$0xf]
        %v7954 = vld [vmem:[%s817 + $0xdc] sm:$0xf]
        %v7955 = vld [vmem:[%s817 + $0xe0] sm:$0xf]
        %v7956 = vld [vmem:[%s817 + $0xe4] sm:$0xf]
        %v7957 = vld [vmem:[%s817 + $0xe8] sm:$0xf]
        %v7958 = vld [vmem:[%s817 + $0xec] sm:$0xf]
        %v7959 = vld [vmem:[%s817 + $0xf0] sm:$0xf]
        %v7960 = vld [vmem:[%s817 + $0xf4] sm:$0xf]
        %v7961 = vld [vmem:[%s817 + $0xf8] sm:$0xf]
        %v7962 = vld [vmem:[%s817 + $0xfc] sm:$0xf]
        %v7963 = vld [vmem:[%s817 + $0x100] sm:$0xf]
        %v7964 = vld [vmem:[%s817 + $0x104] sm:$0xf]
        %v7965 = vld [vmem:[%s817 + $0x108] sm:$0xf]
        %v7966 = vld [vmem:[%s817 + $0x10c] sm:$0xf]
        %v7967 = vld [vmem:[%s817 + $0x110] sm:$0xf]
        %v7968 = vld [vmem:[%s817 + $0x114] sm:$0xf]
        %v7969 = vld [vmem:[%s817 + $0x118] sm:$0xf]
        %v7970 = vld [vmem:[%s817 + $0x11c] sm:$0xf]
        %v7971 = vld [vmem:[%s817 + $0x120] sm:$0xf]
        %v7972 = vld [vmem:[%s817 + $0x124] sm:$0xf]
        %v7973 = vld [vmem:[%s817 + $0x128] sm:$0xf]
        %v7974 = vld [vmem:[%s817 + $0x12c] sm:$0xf]
        %v7975 = vld [vmem:[%s817 + $0x130] sm:$0xf]
        %v7976 = vld [vmem:[%s817 + $0x134] sm:$0xf]
        %v7977 = vld [vmem:[%s817 + $0x138] sm:$0xf]
        %v7978 = vld [vmem:[%s817 + $0x13c] sm:$0xf]
        %v7979 = vld [vmem:[%s817 + $0x140] sm:$0xf]
        %v7980 = vld [vmem:[%s817 + $0x144] sm:$0xf]
        %v7981 = vld [vmem:[%s817 + $0x148] sm:$0xf]
        %v7982 = vld [vmem:[%s817 + $0x14c] sm:$0xf]
        %v7983 = vld [vmem:[%s817 + $0x150] sm:$0xf]
        %v7984 = vld [vmem:[%s817 + $0x154] sm:$0xf]
        %v7985 = vld [vmem:[%s817 + $0x158] sm:$0xf]
        %v7986 = vld [vmem:[%s817 + $0x15c] sm:$0xf]
        %v7987 = vld [vmem:[%s817 + $0x160] sm:$0xf]
        %v7988 = vld [vmem:[%s817 + $0x164] sm:$0xf]
        %v7989 = vld [vmem:[%s817 + $0x168] sm:$0xf]
        %v7990 = vld [vmem:[%s817 + $0x16c] sm:$0xf]
        %v7991 = vld [vmem:[%s817 + $0x170] sm:$0xf]
        %v7992 = vld [vmem:[%s817 + $0x174] sm:$0xf]
        %v7993 = vld [vmem:[%s817 + $0x178] sm:$0xf]
        %v7994 = vld [vmem:[%s817 + $0x17c] sm:$0xf]
        %v7995 = vld [vmem:[%s817 + $0x180] sm:$0xf]
        %v7996 = vld [vmem:[%s817 + $0x184] sm:$0xf]
        %v7997 = vld [vmem:[%s817 + $0x188] sm:$0xf]
        %v7998 = vld [vmem:[%s817 + $0x18c] sm:$0xf]
        %v7999 = vld [vmem:[%s817 + $0x190] sm:$0xf]
        %v8000 = vld [vmem:[%s817 + $0x194] sm:$0xf]
        %v8001 = vld [vmem:[%s817 + $0x198] sm:$0xf]
        %v8002 = vld [vmem:[%s817 + $0x19c] sm:$0xf]
        %v8003 = vld [vmem:[%s817 + $0x1a0] sm:$0xf]
        %v8004 = vld [vmem:[%s817 + $0x1a4] sm:$0xf]
        %v8005 = vld [vmem:[%s817 + $0x1a8] sm:$0xf]
        %v8006 = vld [vmem:[%s817 + $0x1ac] sm:$0xf]
        %v8007 = vld [vmem:[%s817 + $0x1b0] sm:$0xf]
        %v8008 = vld [vmem:[%s817 + $0x1b4] sm:$0xf]
        %v8009 = vld [vmem:[%s817 + $0x1b8] sm:$0xf]
        %v8010 = vld [vmem:[%s817 + $0x1bc] sm:$0xf]
        %v8011 = vld [vmem:[%s817 + $0x1c0] sm:$0xf]
        %v8012 = vld [vmem:[%s817 + $0x1c4] sm:$0xf]
        %v8013 = vld [vmem:[%s817 + $0x1c8] sm:$0xf]
        %v8014 = vld [vmem:[%s817 + $0x1cc] sm:$0xf]
        %v8015 = vld [vmem:[%s817 + $0x1d0] sm:$0xf]
        %v8016 = vld [vmem:[%s817 + $0x1d4] sm:$0xf]
        %v8017 = vld [vmem:[%s817 + $0x1d8] sm:$0xf]
        %v8018 = vld [vmem:[%s817 + $0x1dc] sm:$0xf]
        %v8019 = vld [vmem:[%s817 + $0x1e0] sm:$0xf]
        %v8020 = vld [vmem:[%s817 + $0x1e4] sm:$0xf]
        %v8021 = vld [vmem:[%s817 + $0x1e8] sm:$0xf]
        %v8022 = vld [vmem:[%s817 + $0x1ec] sm:$0xf]
        %v8023 = vld [vmem:[%s817 + $0x1f0] sm:$0xf]
        %v8024 = vld [vmem:[%s817 + $0x1f4] sm:$0xf]
        %v8025 = vld [vmem:[%s817 + $0x1f8] sm:$0xf]
        %v8026 = vld [vmem:[%s817 + $0x1fc] sm:$0xf]
        %v8027 = vld [vmem:[%s817 + $0x200] sm:$0xf]
        %v8028 = vld [vmem:[%s817 + $0x204] sm:$0xf]
        %v8029 = vld [vmem:[%s817 + $0x208] sm:$0xf]
        %v8030 = vld [vmem:[%s817 + $0x20c] sm:$0xf]
        %v8031 = vld [vmem:[%s817 + $0x210] sm:$0xf]
        %v8032 = vld [vmem:[%s817 + $0x214] sm:$0xf]
        %v8033 = vld [vmem:[%s817 + $0x218] sm:$0xf]
        %v8034 = vld [vmem:[%s817 + $0x21c] sm:$0xf]
        %v8035 = vld [vmem:[%s817 + $0x220] sm:$0xf]
        %v8036 = vld [vmem:[%s817 + $0x224] sm:$0xf]
        %v8037 = vld [vmem:[%s817 + $0x228] sm:$0xf]
        %v8038 = vld [vmem:[%s817 + $0x22c] sm:$0xf]
        %v8039 = vld [vmem:[%s817 + $0x230] sm:$0xf]
        %v8040 = vld [vmem:[%s817 + $0x234] sm:$0xf]
        %v8041 = vld [vmem:[%s817 + $0x238] sm:$0xf]
        %v8042 = vld [vmem:[%s817 + $0x23c] sm:$0xf]
        %v8043 = vld [vmem:[%s817 + $0x240] sm:$0xf]
        %v8044 = vld [vmem:[%s817 + $0x244] sm:$0xf]
        %v8045 = vld [vmem:[%s817 + $0x248] sm:$0xf]
        %v8046 = vld [vmem:[%s817 + $0x24c] sm:$0xf]
        %v8047 = vld [vmem:[%s817 + $0x250] sm:$0xf]
        %v8048 = vld [vmem:[%s817 + $0x254] sm:$0xf]
        %v8049 = vld [vmem:[%s817 + $0x258] sm:$0xf]
        %v8050 = vld [vmem:[%s817 + $0x25c] sm:$0xf]
        %v8051 = vld [vmem:[%s817 + $0x260] sm:$0xf]
        %v8052 = vld [vmem:[%s817 + $0x264] sm:$0xf]
        %v8053 = vld [vmem:[%s817 + $0x268] sm:$0xf]
        %v8054 = vld [vmem:[%s817 + $0x26c] sm:$0xf]
        %v8055 = vld [vmem:[%s817 + $0x270] sm:$0xf]
        %v8056 = vld [vmem:[%s817 + $0x274] sm:$0xf]
        %v8057 = vld [vmem:[%s817 + $0x278] sm:$0xf]
        %v8058 = vld [vmem:[%s817 + $0x27c] sm:$0xf]
        %v8059 = vld [vmem:[%s817 + $0x280] sm:$0xf]
        %v8060 = vld [vmem:[%s817 + $0x284] sm:$0xf]
        %v8061 = vld [vmem:[%s817 + $0x288] sm:$0xf]
        %v8062 = vld [vmem:[%s817 + $0x28c] sm:$0xf]
        %v8063 = vld [vmem:[%s817 + $0x290] sm:$0xf]
        %v8064 = vld [vmem:[%s817 + $0x294] sm:$0xf]
        %v8065 = vld [vmem:[%s817 + $0x298] sm:$0xf]
        %v8066 = vld [vmem:[%s817 + $0x29c] sm:$0xf]
        %v8067 = vld [vmem:[%s817 + $0x2a0] sm:$0xf]
        %v8068 = vld [vmem:[%s817 + $0x2a4] sm:$0xf]
        %v8069 = vld [vmem:[%s817 + $0x2a8] sm:$0xf]
        %v8070 = vld [vmem:[%s817 + $0x2ac] sm:$0xf]
        %v8071 = vld [vmem:[%s817 + $0x2b0] sm:$0xf]
        %v8072 = vld [vmem:[%s817 + $0x2b4] sm:$0xf]
        %v8073 = vld [vmem:[%s817 + $0x2b8] sm:$0xf]
        %v8074 = vld [vmem:[%s817 + $0x2bc] sm:$0xf]
        %v8075 = vld [vmem:[%s817 + $0x2c0] sm:$0xf]
        %v8076 = vld [vmem:[%s817 + $0x2c4] sm:$0xf]
        %v8077 = vld [vmem:[%s817 + $0x2c8] sm:$0xf]
        %v8078 = vld [vmem:[%s817 + $0x2cc] sm:$0xf]
        %v8079 = vld [vmem:[%s817 + $0x2d0] sm:$0xf]
        %v8080 = vld [vmem:[%s817 + $0x2d4] sm:$0xf]
        %v8081 = vld [vmem:[%s817 + $0x2d8] sm:$0xf]
        %v8082 = vld [vmem:[%s817 + $0x2dc] sm:$0xf]
        %v8083 = vld [vmem:[%s817 + $0x2e0] sm:$0xf]
        %v8084 = vld [vmem:[%s817 + $0x2e4] sm:$0xf]
        %v8085 = vld [vmem:[%s817 + $0x2e8] sm:$0xf]
        %v8086 = vld [vmem:[%s817 + $0x2ec] sm:$0xf]
        %v8087 = vld [vmem:[%s817 + $0x2f0] sm:$0xf]
        %v8088 = vld [vmem:[%s817 + $0x2f4] sm:$0xf]
        %v8089 = vld [vmem:[%s817 + $0x2f8] sm:$0xf]
        %v8090 = vld [vmem:[%s817 + $0x2fc] sm:$0xf]
        %v8091 = vld [vmem:[%s817 + $0x300] sm:$0xf]
        %v8092 = vld [vmem:[%s817 + $0x304] sm:$0xf]
        %v8093 = vld [vmem:[%s817 + $0x308] sm:$0xf]
        %v8094 = vld [vmem:[%s817 + $0x30c] sm:$0xf]
        %v8095 = vld [vmem:[%s817 + $0x310] sm:$0xf]
        %v8096 = vld [vmem:[%s817 + $0x314] sm:$0xf]
        %v8097 = vld [vmem:[%s817 + $0x318] sm:$0xf]
        %v8098 = vld [vmem:[%s817 + $0x31c] sm:$0xf]
        %v8099 = vld [vmem:[%s817 + $0x320] sm:$0xf]
        %v8100 = vld [vmem:[%s817 + $0x324] sm:$0xf]
        %v8101 = vld [vmem:[%s817 + $0x328] sm:$0xf]
        %v8102 = vld [vmem:[%s817 + $0x32c] sm:$0xf]
        %v8103 = vld [vmem:[%s817 + $0x330] sm:$0xf]
        %v8104 = vld [vmem:[%s817 + $0x334] sm:$0xf]
        %v8105 = vld [vmem:[%s817 + $0x338] sm:$0xf]
        %v8106 = vld [vmem:[%s817 + $0x33c] sm:$0xf]
        %v8107 = vld [vmem:[%s817 + $0x340] sm:$0xf]
        %v8108 = vld [vmem:[%s817 + $0x344] sm:$0xf]
        %v8109 = vld [vmem:[%s817 + $0x348] sm:$0xf]
        %v8110 = vld [vmem:[%s817 + $0x34c] sm:$0xf]
        %v8111 = vld [vmem:[%s817 + $0x350] sm:$0xf]
        %v8112 = vld [vmem:[%s817 + $0x354] sm:$0xf]
        %v8113 = vld [vmem:[%s817 + $0x358] sm:$0xf]
        %v8114 = vld [vmem:[%s817 + $0x35c] sm:$0xf]
        %v8115 = vld [vmem:[%s817 + $0x360] sm:$0xf]
        %v8116 = vld [vmem:[%s817 + $0x364] sm:$0xf]
        %v8117 = vld [vmem:[%s817 + $0x368] sm:$0xf]
        %v8118 = vld [vmem:[%s817 + $0x36c] sm:$0xf]
        %v8119 = vld [vmem:[%s817 + $0x370] sm:$0xf]
        %v8120 = vld [vmem:[%s817 + $0x374] sm:$0xf]
        %v8121 = vld [vmem:[%s817 + $0x378] sm:$0xf]
        %v8122 = vld [vmem:[%s817 + $0x37c] sm:$0xf]
        %v8123 = vld [vmem:[%s817 + $0x380] sm:$0xf]
        %v8124 = vld [vmem:[%s817 + $0x384] sm:$0xf]
        %v8125 = vld [vmem:[%s817 + $0x388] sm:$0xf]
        %v8126 = vld [vmem:[%s817 + $0x38c] sm:$0xf]
        %v8127 = vld [vmem:[%s817 + $0x390] sm:$0xf]
        %v8128 = vld [vmem:[%s817 + $0x394] sm:$0xf]
        %v8129 = vld [vmem:[%s817 + $0x398] sm:$0xf]
        %v8130 = vld [vmem:[%s817 + $0x39c] sm:$0xf]
        %v8131 = vld [vmem:[%s817 + $0x3a0] sm:$0xf]
        %v8132 = vld [vmem:[%s817 + $0x3a4] sm:$0xf]
        %v8133 = vld [vmem:[%s817 + $0x3a8] sm:$0xf]
        %v8134 = vld [vmem:[%s817 + $0x3ac] sm:$0xf]
        %v8135 = vld [vmem:[%s817 + $0x3b0] sm:$0xf]
        %v8136 = vld [vmem:[%s817 + $0x3b4] sm:$0xf]
        %v8137 = vld [vmem:[%s817 + $0x3b8] sm:$0xf]
        %v8138 = vld [vmem:[%s817 + $0x3bc] sm:$0xf]
        %v8139 = vld [vmem:[%s817 + $0x3c0] sm:$0xf]
        %v8140 = vld [vmem:[%s817 + $0x3c4] sm:$0xf]
        %v8141 = vld [vmem:[%s817 + $0x3c8] sm:$0xf]
        %v8142 = vld [vmem:[%s817 + $0x3cc] sm:$0xf]
        %v8143 = vld [vmem:[%s817 + $0x3d0] sm:$0xf]
        %v8144 = vld [vmem:[%s817 + $0x3d4] sm:$0xf]
        %v8145 = vld [vmem:[%s817 + $0x3d8] sm:$0xf]
        %v8146 = vld [vmem:[%s817 + $0x3dc] sm:$0xf]
        %v8147 = vld [vmem:[%s817 + $0x3e0] sm:$0xf]
        %v8148 = vld [vmem:[%s817 + $0x3e4] sm:$0xf]
        %v8149 = vld [vmem:[%s817 + $0x3e8] sm:$0xf]
        %v8150 = vld [vmem:[%s817 + $0x3ec] sm:$0xf]
        %v8151 = vld [vmem:[%s817 + $0x3f0] sm:$0xf]
        %v8152 = vld [vmem:[%s817 + $0x3f4] sm:$0xf]
        %v8153 = vld [vmem:[%s817 + $0x3f8] sm:$0xf]
        %v8154 = vld [vmem:[%s817 + $0x3fc] sm:$0xf]
        %v8171 = vunpack.c.l.b16 %v7899
        %v8172 = vunpack.c.l.b16 %v7900
        %v8173 = vunpack.c.l.b16 %v7901
        %v8174 = vunpack.c.l.b16 %v7902
        %v8175 = vunpack.c.l.b16 %v7903
        %v8176 = vunpack.c.l.b16 %v7904
        %v8177 = vunpack.c.l.b16 %v7905
        %v8178 = vunpack.c.l.b16 %v7906
        %v8179 = vunpack.c.l.b16 %v7907
        %v8180 = vunpack.c.l.b16 %v7908
        %v8181 = vunpack.c.l.b16 %v7909
        %v8182 = vunpack.c.l.b16 %v7910
        %v8183 = vunpack.c.l.b16 %v7911
        %v8184 = vunpack.c.l.b16 %v7912
        %v8185 = vunpack.c.l.b16 %v7913
        %v8186 = vunpack.c.l.b16 %v7914
        %v8187 = vpack.c.b16 %v8172, %v8171
        %v8188 = vpack.c.b16 %v8174, %v8173
        %v8189 = vpack.c.b16 %v8176, %v8175
        %v8190 = vpack.c.b16 %v8178, %v8177
        %v8191 = vpack.c.b16 %v8180, %v8179
        %v8192 = vpack.c.b16 %v8182, %v8181
        %v8193 = vpack.c.b16 %v8184, %v8183
        %v8194 = vpack.c.b16 %v8186, %v8185
        %8203 = vmatpush.bf16.msra.mxu0 %v8194
        %8204 = vmatpush.bf16.msra.mxu0 %v8193
        %8205 = vmatpush.bf16.msra.mxu0 %v8192
        %8206 = vmatpush.bf16.msra.mxu0 %v8191
        %8207 = vmatpush.bf16.msra.mxu0 %v8190
        %8208 = vmatpush.bf16.msra.mxu0 %v8189
        %8209 = vmatpush.bf16.msra.mxu0 %v8188
        %8210 = vmatpush.bf16.msra.mxu0 %v8187
        %8211 = vmatmul.bf16.gmra.mxu0 %v7883
        %v8212 = vpop.f32.mrf.mxu0
        %v8213 = vadd.f32 0.0, %v8212
        %v8214 = vpop.f32.mrf.mxu0
        %8215 = vdwg.mxu0
        %v8232 = vunpack.c.l.b16 %v7915
        %v8233 = vunpack.c.l.b16 %v7916
        %v8234 = vunpack.c.l.b16 %v7917
        %v8235 = vunpack.c.l.b16 %v7918
        %v8236 = vunpack.c.l.b16 %v7919
        %v8237 = vunpack.c.l.b16 %v7920
        %v8238 = vunpack.c.l.b16 %v7921
        %v8239 = vunpack.c.l.b16 %v7922
        %v8240 = vunpack.c.l.b16 %v7923
        %v8241 = vunpack.c.l.b16 %v7924
        %v8242 = vunpack.c.l.b16 %v7925
        %v8243 = vunpack.c.l.b16 %v7926
        %v8244 = vunpack.c.l.b16 %v7927
        %v8245 = vunpack.c.l.b16 %v7928
        %v8246 = vunpack.c.l.b16 %v7929
        %v8247 = vunpack.c.l.b16 %v7930
        %v8248 = vpack.c.b16 %v8233, %v8232
        %v8249 = vpack.c.b16 %v8235, %v8234
        %v8250 = vpack.c.b16 %v8237, %v8236
        %v8251 = vpack.c.b16 %v8239, %v8238
        %v8252 = vpack.c.b16 %v8241, %v8240
        %v8253 = vpack.c.b16 %v8243, %v8242
        %v8254 = vpack.c.b16 %v8245, %v8244
        %v8255 = vpack.c.b16 %v8247, %v8246
        %8264 = vmatpush.bf16.msra.mxu0 %v8255
        %8265 = vmatpush.bf16.msra.mxu0 %v8254
        %8266 = vmatpush.bf16.msra.mxu0 %v8253
        %8267 = vmatpush.bf16.msra.mxu0 %v8252
        %8268 = vmatpush.bf16.msra.mxu0 %v8251
        %8269 = vmatpush.bf16.msra.mxu0 %v8250
        %8270 = vmatpush.bf16.msra.mxu0 %v8249
        %8271 = vmatpush.bf16.msra.mxu0 %v8248
        %8272 = vmatmul.bf16.gmra.mxu0 %v7884
        %v8273 = vpop.f32.mrf.mxu0
        %v8274 = vadd.f32 0.0, %v8273
        %v8275 = vpop.f32.mrf.mxu0
        %8276 = vdwg.mxu0
        %v8293 = vunpack.c.l.b16 %v7931
        %v8294 = vunpack.c.l.b16 %v7932
        %v8295 = vunpack.c.l.b16 %v7933
        %v8296 = vunpack.c.l.b16 %v7934
        %v8297 = vunpack.c.l.b16 %v7935
        %v8298 = vunpack.c.l.b16 %v7936
        %v8299 = vunpack.c.l.b16 %v7937
        %v8300 = vunpack.c.l.b16 %v7938
        %v8301 = vunpack.c.l.b16 %v7939
        %v8302 = vunpack.c.l.b16 %v7940
        %v8303 = vunpack.c.l.b16 %v7941
        %v8304 = vunpack.c.l.b16 %v7942
        %v8305 = vunpack.c.l.b16 %v7943
        %v8306 = vunpack.c.l.b16 %v7944
        %v8307 = vunpack.c.l.b16 %v7945
        %v8308 = vunpack.c.l.b16 %v7946
        %v8309 = vpack.c.b16 %v8294, %v8293
        %v8310 = vpack.c.b16 %v8296, %v8295
        %v8311 = vpack.c.b16 %v8298, %v8297
        %v8312 = vpack.c.b16 %v8300, %v8299
        %v8313 = vpack.c.b16 %v8302, %v8301
        %v8314 = vpack.c.b16 %v8304, %v8303
        %v8315 = vpack.c.b16 %v8306, %v8305
        %v8316 = vpack.c.b16 %v8308, %v8307
        %8325 = vmatpush.bf16.msra.mxu0 %v8316
        %8326 = vmatpush.bf16.msra.mxu0 %v8315
        %8327 = vmatpush.bf16.msra.mxu0 %v8314
        %8328 = vmatpush.bf16.msra.mxu0 %v8313
        %8329 = vmatpush.bf16.msra.mxu0 %v8312
        %8330 = vmatpush.bf16.msra.mxu0 %v8311
        %8331 = vmatpush.bf16.msra.mxu0 %v8310
        %8332 = vmatpush.bf16.msra.mxu0 %v8309
        %8333 = vmatmul.bf16.gmra.mxu0 %v7885
        %v8334 = vpop.f32.mrf.mxu0
        %v8335 = vadd.f32 0.0, %v8334
        %v8336 = vpop.f32.mrf.mxu0
        %8337 = vdwg.mxu0
        %v8354 = vunpack.c.l.b16 %v7947
        %v8355 = vunpack.c.l.b16 %v7948
        %v8356 = vunpack.c.l.b16 %v7949
        %v8357 = vunpack.c.l.b16 %v7950
        %v8358 = vunpack.c.l.b16 %v7951
        %v8359 = vunpack.c.l.b16 %v7952
        %v8360 = vunpack.c.l.b16 %v7953
        %v8361 = vunpack.c.l.b16 %v7954
        %v8362 = vunpack.c.l.b16 %v7955
        %v8363 = vunpack.c.l.b16 %v7956
        %v8364 = vunpack.c.l.b16 %v7957
        %v8365 = vunpack.c.l.b16 %v7958
        %v8366 = vunpack.c.l.b16 %v7959
        %v8367 = vunpack.c.l.b16 %v7960
        %v8368 = vunpack.c.l.b16 %v7961
        %v8369 = vunpack.c.l.b16 %v7962
        %v8370 = vpack.c.b16 %v8355, %v8354
        %v8371 = vpack.c.b16 %v8357, %v8356
        %v8372 = vpack.c.b16 %v8359, %v8358
        %v8373 = vpack.c.b16 %v8361, %v8360
        %v8374 = vpack.c.b16 %v8363, %v8362
        %v8375 = vpack.c.b16 %v8365, %v8364
        %v8376 = vpack.c.b16 %v8367, %v8366
        %v8377 = vpack.c.b16 %v8369, %v8368
        %8386 = vmatpush.bf16.msra.mxu0 %v8377
        %8387 = vmatpush.bf16.msra.mxu0 %v8376
        %8388 = vmatpush.bf16.msra.mxu0 %v8375
        %8389 = vmatpush.bf16.msra.mxu0 %v8374
        %8390 = vmatpush.bf16.msra.mxu0 %v8373
        %8391 = vmatpush.bf16.msra.mxu0 %v8372
        %8392 = vmatpush.bf16.msra.mxu0 %v8371
        %8393 = vmatpush.bf16.msra.mxu0 %v8370
        %8394 = vmatmul.bf16.gmra.mxu0 %v7886
        %v8395 = vpop.f32.mrf.mxu0
        %v8396 = vadd.f32 0.0, %v8395
        %v8397 = vpop.f32.mrf.mxu0
        %8398 = vdwg.mxu0
        %v8415 = vunpack.c.l.b16 %v7963
        %v8416 = vunpack.c.l.b16 %v7964
        %v8417 = vunpack.c.l.b16 %v7965
        %v8418 = vunpack.c.l.b16 %v7966
        %v8419 = vunpack.c.l.b16 %v7967
        %v8420 = vunpack.c.l.b16 %v7968
        %v8421 = vunpack.c.l.b16 %v7969
        %v8422 = vunpack.c.l.b16 %v7970
        %v8423 = vunpack.c.l.b16 %v7971
        %v8424 = vunpack.c.l.b16 %v7972
        %v8425 = vunpack.c.l.b16 %v7973
        %v8426 = vunpack.c.l.b16 %v7974
        %v8427 = vunpack.c.l.b16 %v7975
        %v8428 = vunpack.c.l.b16 %v7976
        %v8429 = vunpack.c.l.b16 %v7977
        %v8430 = vunpack.c.l.b16 %v7978
        %v8431 = vpack.c.b16 %v8416, %v8415
        %v8432 = vpack.c.b16 %v8418, %v8417
        %v8433 = vpack.c.b16 %v8420, %v8419
        %v8434 = vpack.c.b16 %v8422, %v8421
        %v8435 = vpack.c.b16 %v8424, %v8423
        %v8436 = vpack.c.b16 %v8426, %v8425
        %v8437 = vpack.c.b16 %v8428, %v8427
        %v8438 = vpack.c.b16 %v8430, %v8429
        %8447 = vmatpush.bf16.msra.mxu0 %v8438
        %8448 = vmatpush.bf16.msra.mxu0 %v8437
        %8449 = vmatpush.bf16.msra.mxu0 %v8436
        %8450 = vmatpush.bf16.msra.mxu0 %v8435
        %8451 = vmatpush.bf16.msra.mxu0 %v8434
        %8452 = vmatpush.bf16.msra.mxu0 %v8433
        %8453 = vmatpush.bf16.msra.mxu0 %v8432
        %8454 = vmatpush.bf16.msra.mxu0 %v8431
        %8455 = vmatmul.bf16.gmra.mxu0 %v7887
        %v8456 = vpop.f32.mrf.mxu0
        %v8457 = vadd.f32 0.0, %v8456
        %v8458 = vpop.f32.mrf.mxu0
        %8459 = vdwg.mxu0
        %v8476 = vunpack.c.l.b16 %v7979
        %v8477 = vunpack.c.l.b16 %v7980
        %v8478 = vunpack.c.l.b16 %v7981
        %v8479 = vunpack.c.l.b16 %v7982
        %v8480 = vunpack.c.l.b16 %v7983
        %v8481 = vunpack.c.l.b16 %v7984
        %v8482 = vunpack.c.l.b16 %v7985
        %v8483 = vunpack.c.l.b16 %v7986
        %v8484 = vunpack.c.l.b16 %v7987
        %v8485 = vunpack.c.l.b16 %v7988
        %v8486 = vunpack.c.l.b16 %v7989
        %v8487 = vunpack.c.l.b16 %v7990
        %v8488 = vunpack.c.l.b16 %v7991
        %v8489 = vunpack.c.l.b16 %v7992
        %v8490 = vunpack.c.l.b16 %v7993
        %v8491 = vunpack.c.l.b16 %v7994
        %v8492 = vpack.c.b16 %v8477, %v8476
        %v8493 = vpack.c.b16 %v8479, %v8478
        %v8494 = vpack.c.b16 %v8481, %v8480
        %v8495 = vpack.c.b16 %v8483, %v8482
        %v8496 = vpack.c.b16 %v8485, %v8484
        %v8497 = vpack.c.b16 %v8487, %v8486
        %v8498 = vpack.c.b16 %v8489, %v8488
        %v8499 = vpack.c.b16 %v8491, %v8490
        %8508 = vmatpush.bf16.msra.mxu0 %v8499
        %8509 = vmatpush.bf16.msra.mxu0 %v8498
        %8510 = vmatpush.bf16.msra.mxu0 %v8497
        %8511 = vmatpush.bf16.msra.mxu0 %v8496
        %8512 = vmatpush.bf16.msra.mxu0 %v8495
        %8513 = vmatpush.bf16.msra.mxu0 %v8494
        %8514 = vmatpush.bf16.msra.mxu0 %v8493
        %8515 = vmatpush.bf16.msra.mxu0 %v8492
        %8516 = vmatmul.bf16.gmra.mxu0 %v7888
        %v8517 = vpop.f32.mrf.mxu0
        %v8518 = vadd.f32 0.0, %v8517
        %v8519 = vpop.f32.mrf.mxu0
        %8520 = vdwg.mxu0
        %v8537 = vunpack.c.l.b16 %v7995
        %v8538 = vunpack.c.l.b16 %v7996
        %v8539 = vunpack.c.l.b16 %v7997
        %v8540 = vunpack.c.l.b16 %v7998
        %v8541 = vunpack.c.l.b16 %v7999
        %v8542 = vunpack.c.l.b16 %v8000
        %v8543 = vunpack.c.l.b16 %v8001
        %v8544 = vunpack.c.l.b16 %v8002
        %v8545 = vunpack.c.l.b16 %v8003
        %v8546 = vunpack.c.l.b16 %v8004
        %v8547 = vunpack.c.l.b16 %v8005
        %v8548 = vunpack.c.l.b16 %v8006
        %v8549 = vunpack.c.l.b16 %v8007
        %v8550 = vunpack.c.l.b16 %v8008
        %v8551 = vunpack.c.l.b16 %v8009
        %v8552 = vunpack.c.l.b16 %v8010
        %v8553 = vpack.c.b16 %v8538, %v8537
        %v8554 = vpack.c.b16 %v8540, %v8539
        %v8555 = vpack.c.b16 %v8542, %v8541
        %v8556 = vpack.c.b16 %v8544, %v8543
        %v8557 = vpack.c.b16 %v8546, %v8545
        %v8558 = vpack.c.b16 %v8548, %v8547
        %v8559 = vpack.c.b16 %v8550, %v8549
        %v8560 = vpack.c.b16 %v8552, %v8551
        %8569 = vmatpush.bf16.msra.mxu0 %v8560
        %8570 = vmatpush.bf16.msra.mxu0 %v8559
        %8571 = vmatpush.bf16.msra.mxu0 %v8558
        %8572 = vmatpush.bf16.msra.mxu0 %v8557
        %8573 = vmatpush.bf16.msra.mxu0 %v8556
        %8574 = vmatpush.bf16.msra.mxu0 %v8555
        %8575 = vmatpush.bf16.msra.mxu0 %v8554
        %8576 = vmatpush.bf16.msra.mxu0 %v8553
        %8577 = vmatmul.bf16.gmra.mxu0 %v7889
        %v8578 = vpop.f32.mrf.mxu0
        %v8579 = vadd.f32 0.0, %v8578
        %v8580 = vpop.f32.mrf.mxu0
        %8581 = vdwg.mxu0
        %v8598 = vunpack.c.l.b16 %v8011
        %v8599 = vunpack.c.l.b16 %v8012
        %v8600 = vunpack.c.l.b16 %v8013
        %v8601 = vunpack.c.l.b16 %v8014
        %v8602 = vunpack.c.l.b16 %v8015
        %v8603 = vunpack.c.l.b16 %v8016
        %v8604 = vunpack.c.l.b16 %v8017
        %v8605 = vunpack.c.l.b16 %v8018
        %v8606 = vunpack.c.l.b16 %v8019
        %v8607 = vunpack.c.l.b16 %v8020
        %v8608 = vunpack.c.l.b16 %v8021
        %v8609 = vunpack.c.l.b16 %v8022
        %v8610 = vunpack.c.l.b16 %v8023
        %v8611 = vunpack.c.l.b16 %v8024
        %v8612 = vunpack.c.l.b16 %v8025
        %v8613 = vunpack.c.l.b16 %v8026
        %v8614 = vpack.c.b16 %v8599, %v8598
        %v8615 = vpack.c.b16 %v8601, %v8600
        %v8616 = vpack.c.b16 %v8603, %v8602
        %v8617 = vpack.c.b16 %v8605, %v8604
        %v8618 = vpack.c.b16 %v8607, %v8606
        %v8619 = vpack.c.b16 %v8609, %v8608
        %v8620 = vpack.c.b16 %v8611, %v8610
        %v8621 = vpack.c.b16 %v8613, %v8612
        %8630 = vmatpush.bf16.msra.mxu0 %v8621
        %8631 = vmatpush.bf16.msra.mxu0 %v8620
        %8632 = vmatpush.bf16.msra.mxu0 %v8619
        %8633 = vmatpush.bf16.msra.mxu0 %v8618
        %8634 = vmatpush.bf16.msra.mxu0 %v8617
        %8635 = vmatpush.bf16.msra.mxu0 %v8616
        %8636 = vmatpush.bf16.msra.mxu0 %v8615
        %8637 = vmatpush.bf16.msra.mxu0 %v8614
        %8638 = vmatmul.bf16.gmra.mxu0 %v7890
        %v8639 = vpop.f32.mrf.mxu0
        %v8640 = vadd.f32 0.0, %v8639
        %v8641 = vpop.f32.mrf.mxu0
        %8642 = vdwg.mxu0
        %v8659 = vunpack.c.l.b16 %v8027
        %v8660 = vunpack.c.l.b16 %v8028
        %v8661 = vunpack.c.l.b16 %v8029
        %v8662 = vunpack.c.l.b16 %v8030
        %v8663 = vunpack.c.l.b16 %v8031
        %v8664 = vunpack.c.l.b16 %v8032
        %v8665 = vunpack.c.l.b16 %v8033
        %v8666 = vunpack.c.l.b16 %v8034
        %v8667 = vunpack.c.l.b16 %v8035
        %v8668 = vunpack.c.l.b16 %v8036
        %v8669 = vunpack.c.l.b16 %v8037
        %v8670 = vunpack.c.l.b16 %v8038
        %v8671 = vunpack.c.l.b16 %v8039
        %v8672 = vunpack.c.l.b16 %v8040
        %v8673 = vunpack.c.l.b16 %v8041
        %v8674 = vunpack.c.l.b16 %v8042
        %v8675 = vpack.c.b16 %v8660, %v8659
        %v8676 = vpack.c.b16 %v8662, %v8661
        %v8677 = vpack.c.b16 %v8664, %v8663
        %v8678 = vpack.c.b16 %v8666, %v8665
        %v8679 = vpack.c.b16 %v8668, %v8667
        %v8680 = vpack.c.b16 %v8670, %v8669
        %v8681 = vpack.c.b16 %v8672, %v8671
        %v8682 = vpack.c.b16 %v8674, %v8673
        %8691 = vmatpush.bf16.msra.mxu0 %v8682
        %8692 = vmatpush.bf16.msra.mxu0 %v8681
        %8693 = vmatpush.bf16.msra.mxu0 %v8680
        %8694 = vmatpush.bf16.msra.mxu0 %v8679
        %8695 = vmatpush.bf16.msra.mxu0 %v8678
        %8696 = vmatpush.bf16.msra.mxu0 %v8677
        %8697 = vmatpush.bf16.msra.mxu0 %v8676
        %8698 = vmatpush.bf16.msra.mxu0 %v8675
        %8699 = vmatmul.bf16.gmra.mxu0 %v7891
        %v8700 = vpop.f32.mrf.mxu0
        %v8701 = vadd.f32 0.0, %v8700
        %v8702 = vpop.f32.mrf.mxu0
        %8703 = vdwg.mxu0
        %v8720 = vunpack.c.l.b16 %v8043
        %v8721 = vunpack.c.l.b16 %v8044
        %v8722 = vunpack.c.l.b16 %v8045
        %v8723 = vunpack.c.l.b16 %v8046
        %v8724 = vunpack.c.l.b16 %v8047
        %v8725 = vunpack.c.l.b16 %v8048
        %v8726 = vunpack.c.l.b16 %v8049
        %v8727 = vunpack.c.l.b16 %v8050
        %v8728 = vunpack.c.l.b16 %v8051
        %v8729 = vunpack.c.l.b16 %v8052
        %v8730 = vunpack.c.l.b16 %v8053
        %v8731 = vunpack.c.l.b16 %v8054
        %v8732 = vunpack.c.l.b16 %v8055
        %v8733 = vunpack.c.l.b16 %v8056
        %v8734 = vunpack.c.l.b16 %v8057
        %v8735 = vunpack.c.l.b16 %v8058
        %v8736 = vpack.c.b16 %v8721, %v8720
        %v8737 = vpack.c.b16 %v8723, %v8722
        %v8738 = vpack.c.b16 %v8725, %v8724
        %v8739 = vpack.c.b16 %v8727, %v8726
        %v8740 = vpack.c.b16 %v8729, %v8728
        %v8741 = vpack.c.b16 %v8731, %v8730
        %v8742 = vpack.c.b16 %v8733, %v8732
        %v8743 = vpack.c.b16 %v8735, %v8734
        %8752 = vmatpush.bf16.msra.mxu0 %v8743
        %8753 = vmatpush.bf16.msra.mxu0 %v8742
        %8754 = vmatpush.bf16.msra.mxu0 %v8741
        %8755 = vmatpush.bf16.msra.mxu0 %v8740
        %8756 = vmatpush.bf16.msra.mxu0 %v8739
        %8757 = vmatpush.bf16.msra.mxu0 %v8738
        %8758 = vmatpush.bf16.msra.mxu0 %v8737
        %8759 = vmatpush.bf16.msra.mxu0 %v8736
        %8760 = vmatmul.bf16.gmra.mxu0 %v7892
        %v8761 = vpop.f32.mrf.mxu0
        %v8762 = vadd.f32 0.0, %v8761
        %v8763 = vpop.f32.mrf.mxu0
        %8764 = vdwg.mxu0
        %v8781 = vunpack.c.l.b16 %v8059
        %v8782 = vunpack.c.l.b16 %v8060
        %v8783 = vunpack.c.l.b16 %v8061
        %v8784 = vunpack.c.l.b16 %v8062
        %v8785 = vunpack.c.l.b16 %v8063
        %v8786 = vunpack.c.l.b16 %v8064
        %v8787 = vunpack.c.l.b16 %v8065
        %v8788 = vunpack.c.l.b16 %v8066
        %v8789 = vunpack.c.l.b16 %v8067
        %v8790 = vunpack.c.l.b16 %v8068
        %v8791 = vunpack.c.l.b16 %v8069
        %v8792 = vunpack.c.l.b16 %v8070
        %v8793 = vunpack.c.l.b16 %v8071
        %v8794 = vunpack.c.l.b16 %v8072
        %v8795 = vunpack.c.l.b16 %v8073
        %v8796 = vunpack.c.l.b16 %v8074
        %v8797 = vpack.c.b16 %v8782, %v8781
        %v8798 = vpack.c.b16 %v8784, %v8783
        %v8799 = vpack.c.b16 %v8786, %v8785
        %v8800 = vpack.c.b16 %v8788, %v8787
        %v8801 = vpack.c.b16 %v8790, %v8789
        %v8802 = vpack.c.b16 %v8792, %v8791
        %v8803 = vpack.c.b16 %v8794, %v8793
        %v8804 = vpack.c.b16 %v8796, %v8795
        %8813 = vmatpush.bf16.msra.mxu0 %v8804
        %8814 = vmatpush.bf16.msra.mxu0 %v8803
        %8815 = vmatpush.bf16.msra.mxu0 %v8802
        %8816 = vmatpush.bf16.msra.mxu0 %v8801
        %8817 = vmatpush.bf16.msra.mxu0 %v8800
        %8818 = vmatpush.bf16.msra.mxu0 %v8799
        %8819 = vmatpush.bf16.msra.mxu0 %v8798
        %8820 = vmatpush.bf16.msra.mxu0 %v8797
        %8821 = vmatmul.bf16.gmra.mxu0 %v7893
        %v8822 = vpop.f32.mrf.mxu0
        %v8823 = vadd.f32 0.0, %v8822
        %v8824 = vpop.f32.mrf.mxu0
        %8825 = vdwg.mxu0
        %v8842 = vunpack.c.l.b16 %v8075
        %v8843 = vunpack.c.l.b16 %v8076
        %v8844 = vunpack.c.l.b16 %v8077
        %v8845 = vunpack.c.l.b16 %v8078
        %v8846 = vunpack.c.l.b16 %v8079
        %v8847 = vunpack.c.l.b16 %v8080
        %v8848 = vunpack.c.l.b16 %v8081
        %v8849 = vunpack.c.l.b16 %v8082
        %v8850 = vunpack.c.l.b16 %v8083
        %v8851 = vunpack.c.l.b16 %v8084
        %v8852 = vunpack.c.l.b16 %v8085
        %v8853 = vunpack.c.l.b16 %v8086
        %v8854 = vunpack.c.l.b16 %v8087
        %v8855 = vunpack.c.l.b16 %v8088
        %v8856 = vunpack.c.l.b16 %v8089
        %v8857 = vunpack.c.l.b16 %v8090
        %v8858 = vpack.c.b16 %v8843, %v8842
        %v8859 = vpack.c.b16 %v8845, %v8844
        %v8860 = vpack.c.b16 %v8847, %v8846
        %v8861 = vpack.c.b16 %v8849, %v8848
        %v8862 = vpack.c.b16 %v8851, %v8850
        %v8863 = vpack.c.b16 %v8853, %v8852
        %v8864 = vpack.c.b16 %v8855, %v8854
        %v8865 = vpack.c.b16 %v8857, %v8856
        %8874 = vmatpush.bf16.msra.mxu0 %v8865
        %8875 = vmatpush.bf16.msra.mxu0 %v8864
        %8876 = vmatpush.bf16.msra.mxu0 %v8863
        %8877 = vmatpush.bf16.msra.mxu0 %v8862
        %8878 = vmatpush.bf16.msra.mxu0 %v8861
        %8879 = vmatpush.bf16.msra.mxu0 %v8860
        %8880 = vmatpush.bf16.msra.mxu0 %v8859
        %8881 = vmatpush.bf16.msra.mxu0 %v8858
        %8882 = vmatmul.bf16.gmra.mxu0 %v7894
        %v8883 = vpop.f32.mrf.mxu0
        %v8884 = vadd.f32 0.0, %v8883
        %v8885 = vpop.f32.mrf.mxu0
        %8886 = vdwg.mxu0
        %v8903 = vunpack.c.l.b16 %v8091
        %v8904 = vunpack.c.l.b16 %v8092
        %v8905 = vunpack.c.l.b16 %v8093
        %v8906 = vunpack.c.l.b16 %v8094
        %v8907 = vunpack.c.l.b16 %v8095
        %v8908 = vunpack.c.l.b16 %v8096
        %v8909 = vunpack.c.l.b16 %v8097
        %v8910 = vunpack.c.l.b16 %v8098
        %v8911 = vunpack.c.l.b16 %v8099
        %v8912 = vunpack.c.l.b16 %v8100
        %v8913 = vunpack.c.l.b16 %v8101
        %v8914 = vunpack.c.l.b16 %v8102
        %v8915 = vunpack.c.l.b16 %v8103
        %v8916 = vunpack.c.l.b16 %v8104
        %v8917 = vunpack.c.l.b16 %v8105
        %v8918 = vunpack.c.l.b16 %v8106
        %v8919 = vpack.c.b16 %v8904, %v8903
        %v8920 = vpack.c.b16 %v8906, %v8905
        %v8921 = vpack.c.b16 %v8908, %v8907
        %v8922 = vpack.c.b16 %v8910, %v8909
        %v8923 = vpack.c.b16 %v8912, %v8911
        %v8924 = vpack.c.b16 %v8914, %v8913
        %v8925 = vpack.c.b16 %v8916, %v8915
        %v8926 = vpack.c.b16 %v8918, %v8917
        %8935 = vmatpush.bf16.msra.mxu0 %v8926
        %8936 = vmatpush.bf16.msra.mxu0 %v8925
        %8937 = vmatpush.bf16.msra.mxu0 %v8924
        %8938 = vmatpush.bf16.msra.mxu0 %v8923
        %8939 = vmatpush.bf16.msra.mxu0 %v8922
        %8940 = vmatpush.bf16.msra.mxu0 %v8921
        %8941 = vmatpush.bf16.msra.mxu0 %v8920
        %8942 = vmatpush.bf16.msra.mxu0 %v8919
        %8943 = vmatmul.bf16.gmra.mxu0 %v7895
        %v8944 = vpop.f32.mrf.mxu0
        %v8945 = vadd.f32 0.0, %v8944
        %v8946 = vpop.f32.mrf.mxu0
        %8947 = vdwg.mxu0
        %v8964 = vunpack.c.l.b16 %v8107
        %v8965 = vunpack.c.l.b16 %v8108
        %v8966 = vunpack.c.l.b16 %v8109
        %v8967 = vunpack.c.l.b16 %v8110
        %v8968 = vunpack.c.l.b16 %v8111
        %v8969 = vunpack.c.l.b16 %v8112
        %v8970 = vunpack.c.l.b16 %v8113
        %v8971 = vunpack.c.l.b16 %v8114
        %v8972 = vunpack.c.l.b16 %v8115
        %v8973 = vunpack.c.l.b16 %v8116
        %v8974 = vunpack.c.l.b16 %v8117
        %v8975 = vunpack.c.l.b16 %v8118
        %v8976 = vunpack.c.l.b16 %v8119
        %v8977 = vunpack.c.l.b16 %v8120
        %v8978 = vunpack.c.l.b16 %v8121
        %v8979 = vunpack.c.l.b16 %v8122
        %v8980 = vpack.c.b16 %v8965, %v8964
        %v8981 = vpack.c.b16 %v8967, %v8966
        %v8982 = vpack.c.b16 %v8969, %v8968
        %v8983 = vpack.c.b16 %v8971, %v8970
        %v8984 = vpack.c.b16 %v8973, %v8972
        %v8985 = vpack.c.b16 %v8975, %v8974
        %v8986 = vpack.c.b16 %v8977, %v8976
        %v8987 = vpack.c.b16 %v8979, %v8978
        %8996 = vmatpush.bf16.msra.mxu0 %v8987
        %8997 = vmatpush.bf16.msra.mxu0 %v8986
        %8998 = vmatpush.bf16.msra.mxu0 %v8985
        %8999 = vmatpush.bf16.msra.mxu0 %v8984
        %9000 = vmatpush.bf16.msra.mxu0 %v8983
        %9001 = vmatpush.bf16.msra.mxu0 %v8982
        %9002 = vmatpush.bf16.msra.mxu0 %v8981
        %9003 = vmatpush.bf16.msra.mxu0 %v8980
        %9004 = vmatmul.bf16.gmra.mxu0 %v7896
        %v9005 = vpop.f32.mrf.mxu0
        %v9006 = vadd.f32 0.0, %v9005
        %v9007 = vpop.f32.mrf.mxu0
        %9008 = vdwg.mxu0
        %v9025 = vunpack.c.l.b16 %v8123
        %v9026 = vunpack.c.l.b16 %v8124
        %v9027 = vunpack.c.l.b16 %v8125
        %v9028 = vunpack.c.l.b16 %v8126
        %v9029 = vunpack.c.l.b16 %v8127
        %v9030 = vunpack.c.l.b16 %v8128
        %v9031 = vunpack.c.l.b16 %v8129
        %v9032 = vunpack.c.l.b16 %v8130
        %v9033 = vunpack.c.l.b16 %v8131
        %v9034 = vunpack.c.l.b16 %v8132
        %v9035 = vunpack.c.l.b16 %v8133
        %v9036 = vunpack.c.l.b16 %v8134
        %v9037 = vunpack.c.l.b16 %v8135
        %v9038 = vunpack.c.l.b16 %v8136
        %v9039 = vunpack.c.l.b16 %v8137
        %v9040 = vunpack.c.l.b16 %v8138
        %v9041 = vpack.c.b16 %v9026, %v9025
        %v9042 = vpack.c.b16 %v9028, %v9027
        %v9043 = vpack.c.b16 %v9030, %v9029
        %v9044 = vpack.c.b16 %v9032, %v9031
        %v9045 = vpack.c.b16 %v9034, %v9033
        %v9046 = vpack.c.b16 %v9036, %v9035
        %v9047 = vpack.c.b16 %v9038, %v9037
        %v9048 = vpack.c.b16 %v9040, %v9039
        %9057 = vmatpush.bf16.msra.mxu0 %v9048
        %9058 = vmatpush.bf16.msra.mxu0 %v9047
        %9059 = vmatpush.bf16.msra.mxu0 %v9046
        %9060 = vmatpush.bf16.msra.mxu0 %v9045
        %9061 = vmatpush.bf16.msra.mxu0 %v9044
        %9062 = vmatpush.bf16.msra.mxu0 %v9043
        %9063 = vmatpush.bf16.msra.mxu0 %v9042
        %9064 = vmatpush.bf16.msra.mxu0 %v9041
        %9065 = vmatmul.bf16.gmra.mxu0 %v7897
        %v9066 = vpop.f32.mrf.mxu0
        %v9067 = vadd.f32 0.0, %v9066
        %v9068 = vpop.f32.mrf.mxu0
        %9069 = vdwg.mxu0
        %v9086 = vunpack.c.l.b16 %v8139
        %v9087 = vunpack.c.l.b16 %v8140
        %v9088 = vunpack.c.l.b16 %v8141
        %v9089 = vunpack.c.l.b16 %v8142
        %v9090 = vunpack.c.l.b16 %v8143
        %v9091 = vunpack.c.l.b16 %v8144
        %v9092 = vunpack.c.l.b16 %v8145
        %v9093 = vunpack.c.l.b16 %v8146
        %v9094 = vunpack.c.l.b16 %v8147
        %v9095 = vunpack.c.l.b16 %v8148
        %v9096 = vunpack.c.l.b16 %v8149
        %v9097 = vunpack.c.l.b16 %v8150
        %v9098 = vunpack.c.l.b16 %v8151
        %v9099 = vunpack.c.l.b16 %v8152
        %v9100 = vunpack.c.l.b16 %v8153
        %v9101 = vunpack.c.l.b16 %v8154
        %v9102 = vpack.c.b16 %v9087, %v9086
        %v9103 = vpack.c.b16 %v9089, %v9088
        %v9104 = vpack.c.b16 %v9091, %v9090
        %v9105 = vpack.c.b16 %v9093, %v9092
        %v9106 = vpack.c.b16 %v9095, %v9094
        %v9107 = vpack.c.b16 %v9097, %v9096
        %v9108 = vpack.c.b16 %v9099, %v9098
        %v9109 = vpack.c.b16 %v9101, %v9100
        %9118 = vmatpush.bf16.msra.mxu0 %v9109
        %9119 = vmatpush.bf16.msra.mxu0 %v9108
        %9120 = vmatpush.bf16.msra.mxu0 %v9107
        %9121 = vmatpush.bf16.msra.mxu0 %v9106
        %9122 = vmatpush.bf16.msra.mxu0 %v9105
        %9123 = vmatpush.bf16.msra.mxu0 %v9104
        %9124 = vmatpush.bf16.msra.mxu0 %v9103
        %9125 = vmatpush.bf16.msra.mxu0 %v9102
        %9126 = vmatmul.bf16.gmra.mxu0 %v7898
        %v9127 = vpop.f32.mrf.mxu0
        %v9128 = vadd.f32 0.0, %v9127
        %v9129 = vpop.f32.mrf.mxu0
        %9130 = vdwg.mxu0
        %v9131 = vld [vmem:[%s827] sm:$0xff]
        %v9132 = vld [vmem:[%s827 + $0x8] sm:$0xff]
        %v9135 = vrot.slane %v9131, 1
        %v9136 = vrot.slane %v9131, 2
        %v9137 = vrot.slane %v9131, 3
        %v9138 = vrot.slane %v9131, 4
        %v9139 = vrot.slane %v9131, 5
        %v9140 = vrot.slane %v9131, 6
        %v9141 = vrot.slane %v9131, 7
        %v9142 = vrot.slane %v9132, 1
        %v9143 = vrot.slane %v9132, 2
        %v9144 = vrot.slane %v9132, 3
        %v9145 = vrot.slane %v9132, 4
        %v9146 = vrot.slane %v9132, 5
        %v9147 = vrot.slane %v9132, 6
        %v9148 = vrot.slane %v9132, 7
        %v9165 = vadd.f32 %v8213, %v9131
        %v9166 = vadd.f32 %v8274, %v9135
        %v9167 = vadd.f32 %v8335, %v9136
        %v9168 = vadd.f32 %v8396, %v9137
        %v9169 = vadd.f32 %v8457, %v9138
        %v9170 = vadd.f32 %v8518, %v9139
        %v9171 = vadd.f32 %v8579, %v9140
        %v9172 = vadd.f32 %v8640, %v9141
        %v9173 = vadd.f32 %v8701, %v9132
        %v9174 = vadd.f32 %v8762, %v9142
        %v9175 = vadd.f32 %v8823, %v9143
        %v9176 = vadd.f32 %v8884, %v9144
        %v9177 = vadd.f32 %v8945, %v9145
        %v9178 = vadd.f32 %v9006, %v9146
        %v9179 = vadd.f32 %v9067, %v9147
        %v9180 = vadd.f32 %v9128, %v9148
        %v9197 = vrot.slane %v9166, 7
        %v9198 = vsel %vm7698, %v9197, %v9165
        %v9199 = vrot.slane %v9167, 6
        %v9200 = vsel %vm7700, %v9199, %v9198
        %v9201 = vrot.slane %v9168, 5
        %v9202 = vsel %vm7702, %v9201, %v9200
        %v9203 = vrot.slane %v9169, 4
        %v9204 = vsel %vm7704, %v9203, %v9202
        %v9205 = vrot.slane %v9170, 3
        %v9206 = vsel %vm7706, %v9205, %v9204
        %v9207 = vrot.slane %v9171, 2
        %v9208 = vsel %vm7708, %v9207, %v9206
        %v9209 = vrot.slane %v9172, 1
        %v9210 = vsel %vm7710, %v9209, %v9208
        %v9211 = vrot.slane %v9174, 7
        %v9212 = vsel %vm7698, %v9211, %v9173
        %v9213 = vrot.slane %v9175, 6
        %v9214 = vsel %vm7700, %v9213, %v9212
        %v9215 = vrot.slane %v9176, 5
        %v9216 = vsel %vm7702, %v9215, %v9214
        %v9217 = vrot.slane %v9177, 4
        %v9218 = vsel %vm7704, %v9217, %v9216
        %v9219 = vrot.slane %v9178, 3
        %v9220 = vsel %vm7706, %v9219, %v9218
        %v9221 = vrot.slane %v9179, 2
        %v9222 = vsel %vm7708, %v9221, %v9220
        %v9223 = vrot.slane %v9180, 1
        %v9224 = vsel %vm7710, %v9223, %v9222
        %9227 = vst [vmem:[%s910] sm:$0xff] %v9210
        %9228 = vst [vmem:[%s910 + $0x8] sm:$0xff] %v9224
        %s9229 = sand.u32 %s561, 1
        %s9230 = scalar_lea.sflag [#allocation4], %s9229
        %s9231 = sand.u32 %s561, 1
        %s9232 = smul.addr %s9231, 16
        %s9233 = scalar_lea.vmem [#allocation14], %s9232
        // Predicated region
        $region141: #{tpu_custom_call.1} parent=111 // pred_check
          %p9234 = pneg %p571
        $region142: #{tpu_custom_call.1} parent=111 // pred_check_branch
          %9236 = sbr.rel (%p9234) target = $region144
        $region143: #{tpu_custom_call.1} parent=111 // pred_region
          %s9237 = smul.u32 2, %s45
          %9239 = vsyncadd %s9230, 0
          %s9240 = smul.addr %s9237, 8
          %s9241 = scalar_lea.hbm %s23, %s9240
          %s9242 = sshll.u32 %s9233, 4
          %s9243 = int_to_ptr.vmem [resolvable:$true] %s9242
          %s9244 = sshll.u32 %s9241, 4
          %s9245 = int_to_ptr.hbm [resolvable:$true] %s9244
          %9250 = dma.vmem_to_hbm [thread:$0]  %s9243, 256, %s9245, %s9230, 128, 128, 8
        $region144: #{tpu_custom_call.1} parent=111 // pred_fallthru
          _
      $region112: #{tpu_custom_call.1} parent=5 // pred_fallthru
        _
      %p9251 = scmp.le.s32.totalorder 2, %s40
      // Predicated region
      $region145: #{tpu_custom_call.1} parent=5 // pred_check
        %p9252 = pneg %p9251
      $region146: #{tpu_custom_call.1} parent=5 // pred_check_branch
        %9254 = sbr.rel (%p9252) target = $region148
      $region147: #{tpu_custom_call.1} parent=5 // pred_region
        %s9255 = ssub.s32 %s40, 2
        // Predicated region
        $region149: #{tpu_custom_call.1} parent=147 // pred_check
          %p9256 = pneg %p577
        $region150: #{tpu_custom_call.1} parent=147 // pred_check_branch
          %9258 = sbr.rel (%p9256) target = $region152
        $region151: #{tpu_custom_call.1} parent=147 // pred_region
          %s9259 = sand.u32 %s562, 1
          %s9260 = scalar_lea.sflag [#allocation4], %s9259
          %s9261 = sand.u32 %s562, 1
          %s9262 = smul.addr %s9261, 16
          %s9263 = scalar_lea.vmem [#allocation14], %s9262
          %9265 = dma.done %s9260, 256
        $region152: #{tpu_custom_call.1} parent=147 // pred_fallthru
          _
      $region148: #{tpu_custom_call.1} parent=5 // pred_fallthru
        _
    $region6: #{tpu_custom_call.1} parent=1 // loop_footer
      %s44 = sadd.s32 1, %s40
    $region7: #{tpu_custom_call.1} parent=1 // loop_footer_branch
      %39 = sbr.rel target = $region3
    $region8: #{tpu_custom_call.1} parent=1 // loop_exit
      _
    %9266 = vsyncpa [#allocation3], 1
    %s9267 = scalar_lea.sflag [#allocation3], 1
    %9268 = vsyncpa %s9267, 1
    %9269 = vsyncpa [#allocation6], 1
    %9270 = vsyncpa [#allocation9], 1
    %9271 = vsyncpa [#allocation12], 1
    %s9272 = scalar_lea.sflag [#allocation12], 1
    %9273 = vsyncpa %s9272, 1
    %9274 = vsyncpa [#allocation4], 1
    %s9275 = scalar_lea.sflag [#allocation4], 1
    %9276 = vsyncpa %s9275, 1

</llo_original>
